<compile_context>
chip_gen: v7x
topology: tpu7x:2x2x1
jax: 0.10.0
libtpu: 0.0.40
codegen_flags: <defaults>
</compile_context>

<pallas_src>
import math

import jax
import jax.numpy as jnp
from jax.experimental import pallas as pl
from jax.experimental.pallas import tpu as pltpu

# ---- module hyperparameters (TemplatePointwiseAttention.__init__) ----
C_T = 16        # template embedding channels (c_t)
C_Z = 32        # pair embedding channels (c_z)
C_HIDDEN = 16   # per-head hidden dim (c_hidden)
NO_HEADS = 4    # no_heads
INF = 1e9       # inf

# ---- demo problem sizes ----
N_TEMPL = 4
N_RES = 48      # P = N_res^2 = 2304 pair rows -> tile 1152, 2 grid steps, no pad
MAX_TILE_P = 2048   # cap so f32 intermediates fit v7x's 64 MiB VMEM per TC


def _tpa_kernel(zt_ref, bias_ref, win_ref, glog_ref, gsum_ref, gbc_ref, wov_ref,
                bo_ref, out_ref):
    """One tile of pair positions; fully vectorized over templates and heads.

    zt_ref   [T, C_z + S*C_t]   bf16   fused [z | t] pair rows (templates on lanes)
    bias_ref [1, S*H]           f32    inf*(mask-1) per (template, head)
    win_ref  [C_z+S*C_t, 3*S*Hc] bf16  fused block weight: q (tiled) | k | v (block-diag)
    glog_ref [S*Hc, S*H]        bf16   0/1 per-(template,head) group-sum
    gsum_ref [S*H, S*H]         bf16   0/1 sum-over-templates (same head)
    gbc_ref  [S*H, S*Hc]        bf16   0/1 broadcast group -> lanes
    wov_ref  [S*Hc, C_z]        bf16   value reduction fused with Wo (= tile(Wo) over S)
    bo_ref   [1, C_z]           f32
    out_ref  [T, C_z]           f32
    """
    f32, bf16 = jnp.float32, jnp.bfloat16

    # Fused Q/K/V projection: one bf16 MXU dot, f32 accumulation.
    qkv = jnp.dot(zt_ref[...], win_ref[...], preferred_element_type=f32)   # [T, 3*S*Hc]
    s_hc = qkv.shape[-1] // 3
    q = qkv[:, :s_hc]                        # lane slices at multiples of 256 (aligned)
    k = qkv[:, s_hc:2 * s_hc]
    v = qkv[:, 2 * s_hc:].astype(bf16)

    # logits[p, s*H+h] = <q_h, k_{s,h}>/sqrt(c_h) + inf*(mask_s - 1)
    qk = (q * k).astype(bf16)
    logits = jnp.dot(qk, glog_ref[...], preferred_element_type=f32) + bias_ref[...]

    # Softmax over templates per head.  A single global row max is a valid and
    # numerically safe shift: the mask offset is identical for every head.
    m = jnp.max(logits, axis=-1, keepdims=True)
    e = jnp.exp(logits - m)                                                 # [T, S*H] f32
    den = jnp.dot(e.astype(bf16), gsum_ref[...], preferred_element_type=f32)
    a = (e * pl.reciprocal(den, approx=True)).astype(bf16)                  # normalized weights

    # Broadcast weights to (s, h, c) lanes, then value-reduction fused with Wo.
    w = jnp.dot(a, gbc_ref[...], preferred_element_type=f32).astype(bf16)   # [T, S*Hc]
    out = jnp.dot(w * v, wov_ref[...], preferred_element_type=f32)          # [T, C_z]
    out_ref[...] = (out + bo_ref[...]).astype(out_ref.dtype)
    # TODO(synk): optional lane-dense output repack ([T,32] -> [T/4,128] slabs) if
    # masked 32-wide stores ever show up as the bottleneck in the bundle profile.


def _choose_tile_p(p, max_tile=MAX_TILE_P):
    """Largest tile <= max_tile that is a multiple of 8 and divides p exactly
    (no pad rows), preferring an even grid-step count (v7x 2-TC balance).
    Falls back to a padded grid when p has no usable divisor."""
    best = None
    t = 8
    while t <= min(p, max_tile):
        if p % t == 0:
            key = ((p // t) % 2, -t)       # even step count first, then biggest tile
            if best is None or key < best[0]:
                best = (key, t)
        t += 8
    if best is not None:
        return best[1]
    return min(max_tile, pl.cdiv(p, 8) * 8)


def prepare_weights(params, n_templ, no_heads=NO_HEADS):
    """Build the fused/block-structured kernel constants ONCE (hoisted out of the
    per-call path).  All 0/1 group matrices are exact in bf16."""
    wq, wk, wv, wo, bo = params
    f32, bf16 = jnp.float32, jnp.bfloat16
    c_z, hc = wq.shape
    c_t = wk.shape[0]
    c_h = hc // no_heads
    s = n_templ
    s_hc = s * hc
    s_h = s * no_heads
    scale = 1.0 / math.sqrt(c_h)

    eye_s = jnp.eye(s, dtype=f32)
    # fused input projection: [z | t_0..t_{S-1}] -> [q (tiled S times) | k | v (block-diag)]
    top = jnp.concatenate([jnp.tile(wq.astype(f32) * scale, (1, s)),
                           jnp.zeros((c_z, 2 * s_hc), f32)], axis=1)
    bot = jnp.concatenate([jnp.zeros((s * c_t, s_hc), f32),
                           jnp.kron(eye_s, wk.astype(f32)),
                           jnp.kron(eye_s, wv.astype(f32))], axis=1)
    w_in = jnp.concatenate([top, bot], axis=0).astype(bf16)          # [C_z+S*C_t, 3*S*Hc]

    lane = jnp.arange(s_hc)
    grp = (lane // hc) * no_heads + (lane % hc) // c_h               # lane -> group g = s*H + h
    g_logit = (grp[:, None] == jnp.arange(s_h)[None, :]).astype(bf16)   # [S*Hc, S*H]
    g_bcast = g_logit.T                                                  # [S*H, S*Hc]
    g_sumt = ((jnp.arange(s_h) % no_heads)[:, None]
              == (jnp.arange(s_h) % no_heads)[None, :]).astype(bf16)     # [S*H, S*H]

    wov = jnp.tile(wo.astype(f32), (s, 1)).astype(bf16)                  # [S*Hc, C_z] = G_value @ Wo
    bo2d = bo.reshape(1, c_z).astype(f32)
    return (w_in, g_logit, g_sumt, g_bcast, wov, bo2d)


def template_pointwise_attention(t, z, template_mask, prepped, *, max_tile_p=MAX_TILE_P):
    """Pallas forward of TemplatePointwiseAttention (no leading batch dims)."""
    w_in, g_logit, g_sumt, g_bcast, wov, bo2d = prepped
    s, n_i, n_j, c_t = t.shape
    c_z = z.shape[-1]
    n_heads = NO_HEADS
    s_h = s * n_heads

    p = n_i * n_j
    tile_p = _choose_tile_p(p, max_tile=max_tile_p)
    p_pad = pl.cdiv(p, tile_p) * tile_p

    # Channels-last pair rows; templates packed onto lanes; single fused [z|t]
    # stream.  XLA fuses the transpose + concat + bf16 cast into one pass.
    # TODO(synk): at production N_res, pre-store t upstream as [N_res, N_res, S*C_t]
    # bf16 (or tile the pair grid 2-D with in-kernel relayout) to drop this pass.
    t_cat = jnp.transpose(t, (1, 2, 0, 3)).reshape(p, s * c_t)
    zt = jnp.concatenate([z.reshape(p, c_z), t_cat], axis=-1).astype(jnp.bfloat16)
    if p_pad != p:
        zt = jnp.pad(zt, ((0, p_pad - p), (0, 0)))

    # softmax bias per (template, head): inf * (mask - 1)
    bias_sh = jnp.repeat(INF * (template_mask.astype(jnp.float32) - 1.0),
                         n_heads).reshape(1, s_h)

    const = lambda i: (0, 0)
    out_flat = pl.pallas_call(
        _tpa_kernel,
        out_shape=jax.ShapeDtypeStruct((p_pad, c_z), jnp.float32),
        grid_spec=pltpu.PrefetchScalarGridSpec(
            num_scalar_prefetch=0,
            grid=(p_pad // tile_p,),
            in_specs=[
                pl.BlockSpec((tile_p, zt.shape[1]), lambda i: (i, 0)),   # fused [z|t]
                pl.BlockSpec((1, s_h), const),                           # softmax bias
                pl.BlockSpec(w_in.shape, const),                         # fused Wq|Wk|Wv
                pl.BlockSpec(g_logit.shape, const),                      # G_logit
                pl.BlockSpec(g_sumt.shape, const),                       # G_sum-templates
                pl.BlockSpec(g_bcast.shape, const),                      # G_bcast
                pl.BlockSpec(wov.shape, const),                          # G_value @ Wo
                pl.BlockSpec(bo2d.shape, const),                         # bo
            ],
            out_specs=pl.BlockSpec((tile_p, c_z), lambda i: (i, 0)),
        ),
        compiler_params=pltpu.CompilerParams(
            dimension_semantics=("parallel",),       # megacore-shards the pair-row axis
            vmem_limit_bytes=32 * 1024 * 1024,       # <= 32 MiB: safe on v7x's 64 MiB VMEM
        ),
    )(zt, bias_sh, w_in, g_logit, g_sumt, g_bcast, wov, bo2d)

    return out_flat[:p].reshape(n_i, n_j, c_z)


def ref_forward(t, z, template_mask, params):
    """Pure-JAX f32 reference mirroring the PyTorch module (for verification)."""
    wq, wk, wv, wo, bo = params
    s, r1, r2, _ = t.shape
    h, ch = NO_HEADS, C_HIDDEN
    bias = INF * (template_mask.astype(jnp.float32) - 1.0)               # [S]
    q = (z @ wq) / math.sqrt(ch)                                         # [r1,r2,H*ch]
    k = jnp.einsum('sijc,cd->sijd', t, wk)
    v = jnp.einsum('sijc,cd->sijd', t, wv)
    q = q.reshape(r1, r2, h, ch)
    k = k.reshape(s, r1, r2, h, ch)
    v = v.reshape(s, r1, r2, h, ch)
    logits = jnp.einsum('ijhd,sijhd->ijhs', q, k) + bias                 # [r1,r2,H,S]
    a = jax.nn.softmax(logits, axis=-1)
    o = jnp.einsum('ijhs,sijhd->ijhd', a, v).reshape(r1, r2, h * ch)
    return o @ wo + bo


if __name__ == "__main__":
    key = jax.random.PRNGKey(0)
    k_t, k_z, k_wq, k_wk, k_wv, k_wo, k_bo = jax.random.split(key, 7)

    hc = NO_HEADS * C_HIDDEN
    # Synthetic parameters (shapes per Attention(c_z, c_t, c_t, c_hidden, no_heads)).
    wq = 0.1 * jax.random.normal(k_wq, (C_Z, hc), dtype=jnp.float32)     # linear_q (no bias)
    wk = 0.1 * jax.random.normal(k_wk, (C_T, hc), dtype=jnp.float32)     # linear_k (no bias)
    wv = 0.1 * jax.random.normal(k_wv, (C_T, hc), dtype=jnp.float32)     # linear_v (no bias)
    wo = 0.1 * jax.random.normal(k_wo, (hc, C_Z), dtype=jnp.float32)     # linear_o weight
    bo = 0.1 * jax.random.normal(k_bo, (C_Z,), dtype=jnp.float32)        # linear_o bias
    params = (wq, wk, wv, wo, bo)

    t = jax.random.normal(k_t, (N_TEMPL, N_RES, N_RES, C_T), dtype=jnp.float32)
    z = jax.random.normal(k_z, (N_RES, N_RES, C_Z), dtype=jnp.float32)
    template_mask = jnp.array([1.0, 1.0, 1.0, 0.0], dtype=jnp.float32)   # one masked template

    prepped = prepare_weights(params, N_TEMPL)      # hoisted: built once, reused per call
    out = template_pointwise_attention(t, z, template_mask, prepped)
    out = jax.block_until_ready(out)

    ref = ref_forward(t, z, template_mask, params)
    err = float(jnp.max(jnp.abs(out - ref)))
    assert out.shape == (N_RES, N_RES, C_Z)
    # bf16 DMA/MXU operands + approx reciprocal vs an all-f32 reference.
    assert err < 5e-2, f"max abs error {err}"

    print("KERNEL_OK")
</pallas_src>

<mosaic_0001>
module attributes {stable_mosaic.version = 11 : i64} {
  func.func @_tpa_kernel(%arg0: i32, %arg1: memref<1152x96xbf16, #tpu.memory_space<vmem>>, %arg2: memref<1x16xf32, #tpu.memory_space<vmem>>, %arg3: memref<96x768xbf16, #tpu.memory_space<vmem>>, %arg4: memref<256x16xbf16, #tpu.memory_space<vmem>>, %arg5: memref<16x16xbf16, #tpu.memory_space<vmem>>, %arg6: memref<16x256xbf16, #tpu.memory_space<vmem>>, %arg7: memref<256x32xbf16, #tpu.memory_space<vmem>>, %arg8: memref<1x32xf32, #tpu.memory_space<vmem>>, %arg9: memref<1152x32xf32, #tpu.memory_space<vmem>>) attributes {dimension_semantics = [#tpu.dimension_semantics<parallel>], iteration_bounds = array<i64: 2>, scalar_prefetch = 0 : i64, scratch_operands = 0 : i64, tpu.core_type = #tpu.core_type<tc>, window_params = [{transform_indices = @transform_0, window_bounds = array<i64: 1152, 96>}, {pipeline_mode = #tpu.pipeline_mode<synchronous>, transform_indices = @transform_1, window_bounds = array<i64: 1, 16>}, {pipeline_mode = #tpu.pipeline_mode<synchronous>, transform_indices = @transform_2, window_bounds = array<i64: 96, 768>}, {pipeline_mode = #tpu.pipeline_mode<synchronous>, transform_indices = @transform_3, window_bounds = array<i64: 256, 16>}, {pipeline_mode = #tpu.pipeline_mode<synchronous>, transform_indices = @transform_4, window_bounds = array<i64: 16, 16>}, {pipeline_mode = #tpu.pipeline_mode<synchronous>, transform_indices = @transform_5, window_bounds = array<i64: 16, 256>}, {pipeline_mode = #tpu.pipeline_mode<synchronous>, transform_indices = @transform_6, window_bounds = array<i64: 256, 32>}, {pipeline_mode = #tpu.pipeline_mode<synchronous>, transform_indices = @transform_7, window_bounds = array<i64: 1, 32>}, {transform_indices = @transform_8, window_bounds = array<i64: 1152, 32>}]} {
    %c0 = arith.constant 0 : index
    %c0_0 = arith.constant 0 : index
    %0 = vector.load %arg1[%c0, %c0_0] : memref<1152x96xbf16, #tpu.memory_space<vmem>>, vector<1152x96xbf16>
    %c0_1 = arith.constant 0 : index
    %c0_2 = arith.constant 0 : index
    %1 = vector.load %arg3[%c0_1, %c0_2] : memref<96x768xbf16, #tpu.memory_space<vmem>>, vector<96x768xbf16>
    %cst = arith.constant dense<0.000000e+00> : vector<1152x768xf32>
    %2 = tpu.matmul %0, %1, %cst {dimension_numbers = #tpu.dot_dimension_numbers<[1], [0], [0], [1], [0, 0, 1, 1], [], []>} : vector<1152x96xbf16>, vector<96x768xbf16>, vector<1152x768xf32> -> vector<1152x768xf32>
    %3 = vector.extract_strided_slice %2 {offsets = [0, 0], sizes = [1152, 256], strides = [1, 1]} : vector<1152x768xf32> to vector<1152x256xf32>
    %4 = vector.extract_strided_slice %2 {offsets = [0, 256], sizes = [1152, 256], strides = [1, 1]} : vector<1152x768xf32> to vector<1152x256xf32>
    %5 = vector.extract_strided_slice %2 {offsets = [0, 512], sizes = [1152, 256], strides = [1, 1]} : vector<1152x768xf32> to vector<1152x256xf32>
    %6 = arith.truncf %5 : vector<1152x256xf32> to vector<1152x256xbf16>
    %7 = arith.mulf %3, %4 : vector<1152x256xf32>
    %8 = arith.truncf %7 : vector<1152x256xf32> to vector<1152x256xbf16>
    %c0_3 = arith.constant 0 : index
    %c0_4 = arith.constant 0 : index
    %9 = vector.load %arg4[%c0_3, %c0_4] : memref<256x16xbf16, #tpu.memory_space<vmem>>, vector<256x16xbf16>
    %cst_5 = arith.constant dense<0.000000e+00> : vector<1152x16xf32>
    %10 = tpu.matmul %8, %9, %cst_5 {dimension_numbers = #tpu.dot_dimension_numbers<[1], [0], [0], [1], [0, 0, 1, 1], [], []>} : vector<1152x256xbf16>, vector<256x16xbf16>, vector<1152x16xf32> -> vector<1152x16xf32>
    %c0_6 = arith.constant 0 : index
    %c0_7 = arith.constant 0 : index
    %11 = vector.load %arg2[%c0_6, %c0_7] : memref<1x16xf32, #tpu.memory_space<vmem>>, vector<1x16xf32>
    %12 = vector.broadcast %11 : vector<1x16xf32> to vector<1152x16xf32>
    %13 = arith.addf %10, %12 : vector<1152x16xf32>
    %cst_8 = arith.constant dense<0xFF800000> : vector<1152xf32>
    %14 = vector.multi_reduction <maximumf>, %13, %cst_8 [1] : vector<1152x16xf32> to vector<1152xf32>
    %15 = vector.shape_cast %14 : vector<1152xf32> to vector<1152x1xf32>
    %16 = vector.broadcast %15 : vector<1152x1xf32> to vector<1152x16xf32>
    %17 = arith.subf %13, %16 : vector<1152x16xf32>
    %18 = math.exp %17 : vector<1152x16xf32>
    %19 = arith.truncf %18 : vector<1152x16xf32> to vector<1152x16xbf16>
    %c0_9 = arith.constant 0 : index
    %c0_10 = arith.constant 0 : index
    %20 = vector.load %arg5[%c0_9, %c0_10] : memref<16x16xbf16, #tpu.memory_space<vmem>>, vector<16x16xbf16>
    %cst_11 = arith.constant dense<0.000000e+00> : vector<1152x16xf32>
    %21 = tpu.matmul %19, %20, %cst_11 {dimension_numbers = #tpu.dot_dimension_numbers<[1], [0], [0], [1], [0, 0, 1, 1], [], []>} : vector<1152x16xbf16>, vector<16x16xbf16>, vector<1152x16xf32> -> vector<1152x16xf32>
    %22 = tpu.reciprocal %21 {approx = true} : vector<1152x16xf32> -> vector<1152x16xf32>
    %23 = arith.mulf %18, %22 : vector<1152x16xf32>
    %24 = arith.truncf %23 : vector<1152x16xf32> to vector<1152x16xbf16>
    %c0_12 = arith.constant 0 : index
    %c0_13 = arith.constant 0 : index
    %25 = vector.load %arg6[%c0_12, %c0_13] : memref<16x256xbf16, #tpu.memory_space<vmem>>, vector<16x256xbf16>
    %cst_14 = arith.constant dense<0.000000e+00> : vector<1152x256xf32>
    %26 = tpu.matmul %24, %25, %cst_14 {dimension_numbers = #tpu.dot_dimension_numbers<[1], [0], [0], [1], [0, 0, 1, 1], [], []>} : vector<1152x16xbf16>, vector<16x256xbf16>, vector<1152x256xf32> -> vector<1152x256xf32>
    %27 = arith.truncf %26 : vector<1152x256xf32> to vector<1152x256xbf16>
    %28 = arith.mulf %27, %6 : vector<1152x256xbf16>
    %c0_15 = arith.constant 0 : index
    %c0_16 = arith.constant 0 : index
    %29 = vector.load %arg7[%c0_15, %c0_16] : memref<256x32xbf16, #tpu.memory_space<vmem>>, vector<256x32xbf16>
    %cst_17 = arith.constant dense<0.000000e+00> : vector<1152x32xf32>
    %30 = tpu.matmul %28, %29, %cst_17 {dimension_numbers = #tpu.dot_dimension_numbers<[1], [0], [0], [1], [0, 0, 1, 1], [], []>} : vector<1152x256xbf16>, vector<256x32xbf16>, vector<1152x32xf32> -> vector<1152x32xf32>
    %c0_18 = arith.constant 0 : index
    %c0_19 = arith.constant 0 : index
    %31 = vector.load %arg8[%c0_18, %c0_19] : memref<1x32xf32, #tpu.memory_space<vmem>>, vector<1x32xf32>
    %32 = vector.broadcast %31 : vector<1x32xf32> to vector<1152x32xf32>
    %33 = arith.addf %30, %32 : vector<1152x32xf32>
    %c0_20 = arith.constant 0 : index
    %c0_21 = arith.constant 0 : index
    %34 = vector.load %arg9[%c0_20, %c0_21] : memref<1152x32xf32, #tpu.memory_space<vmem>>, vector<1152x32xf32>
    tpu.vector_store %arg9[%c0_20, %c0_21], %33 {strides = array<i32>} : memref<1152x32xf32, #tpu.memory_space<vmem>>, vector<1152x32xf32>,
    return
  }
  func.func @transform_0(%arg0: i32) -> (i32, i32) {
    %c0_i32 = arith.constant 0 : i32
    %c0_i32_0 = arith.constant 0 : i32
    return %arg0, %c0_i32 : i32, i32
  }
  func.func @transform_1(%arg0: i32) -> (i32, i32) {
    %c0_i32 = arith.constant 0 : i32
    %c0_i32_0 = arith.constant 0 : i32
    %c0_i32_1 = arith.constant 0 : i32
    return %c0_i32, %c0_i32_0 : i32, i32
  }
  func.func @transform_2(%arg0: i32) -> (i32, i32) {
    %c0_i32 = arith.constant 0 : i32
    %c0_i32_0 = arith.constant 0 : i32
    %c0_i32_1 = arith.constant 0 : i32
    return %c0_i32, %c0_i32_0 : i32, i32
  }
  func.func @transform_3(%arg0: i32) -> (i32, i32) {
    %c0_i32 = arith.constant 0 : i32
    %c0_i32_0 = arith.constant 0 : i32
    %c0_i32_1 = arith.constant 0 : i32
    return %c0_i32, %c0_i32_0 : i32, i32
  }
  func.func @transform_4(%arg0: i32) -> (i32, i32) {
    %c0_i32 = arith.constant 0 : i32
    %c0_i32_0 = arith.constant 0 : i32
    %c0_i32_1 = arith.constant 0 : i32
    return %c0_i32, %c0_i32_0 : i32, i32
  }
  func.func @transform_5(%arg0: i32) -> (i32, i32) {
    %c0_i32 = arith.constant 0 : i32
    %c0_i32_0 = arith.constant 0 : i32
    %c0_i32_1 = arith.constant 0 : i32
    return %c0_i32, %c0_i32_0 : i32, i32
  }
  func.func @transform_6(%arg0: i32) -> (i32, i32) {
    %c0_i32 = arith.constant 0 : i32
    %c0_i32_0 = arith.constant 0 : i32
    %c0_i32_1 = arith.constant 0 : i32
    return %c0_i32, %c0_i32_0 : i32, i32
  }
  func.func @transform_7(%arg0: i32) -> (i32, i32) {
    %c0_i32 = arith.constant 0 : i32
    %c0_i32_0 = arith.constant 0 : i32
    %c0_i32_1 = arith.constant 0 : i32
    return %c0_i32, %c0_i32_0 : i32, i32
  }
  func.func @transform_8(%arg0: i32) -> (i32, i32) {
    %c0_i32 = arith.constant 0 : i32
    %c0_i32_0 = arith.constant 0 : i32
    return %arg0, %c0_i32 : i32, i32
  }
}

</mosaic_0001>

<llo_original>
// kernel: tpu_custom_call.1
$region0: #{tpu_custom_call.1}
  #allocation0 [shape = 'u32[]', space=smem, size = 0x4, offset = 0x4, fixed_abs, tag = 'smem constant byte address 0x4 - core index']
  #allocation1 [shape = 'u32[144,128]{1,0:T(1,128)}', space=vmem, size = 0x12000, scoped, tag = 'internal scratch']
  %s0 = inlined_call_operand.vmem [shape: bf16[2304,96], index: 0, kind: input, shape index: {}]
  %s1 = inlined_call_operand.vmem [shape: f32[1,16], index: 1, kind: input, shape index: {}]
  %s2 = inlined_call_operand.vmem [shape: bf16[96,768], index: 2, kind: input, shape index: {}]
  %s3 = inlined_call_operand.vmem [shape: bf16[256,16], index: 3, kind: input, shape index: {}]
  %s4 = inlined_call_operand.vmem [shape: bf16[16,16], index: 4, kind: input, shape index: {}]
  %s5 = inlined_call_operand.vmem [shape: bf16[16,256], index: 5, kind: input, shape index: {}]
  %s6 = inlined_call_operand.vmem [shape: bf16[256,32], index: 6, kind: input, shape index: {}]
  %s7 = inlined_call_operand.vmem [shape: f32[1,32], index: 7, kind: input, shape index: {}]
  %s8 = inlined_call_operand.vmem [shape: f32[2304,32], index: 8, kind: output, shape index: {}]
  %s9 = sld [smem:[#allocation0]]
  $region65: #{tpu_custom_call.1} parent=0
    _
  %s11 = ssub.s32 1, %s9
  %s12 = scalar_select 0, %s11, %s9
  loop: start=0, step=1, limit=4
  $region2: #{tpu_custom_call.1} parent=0 // loop_pre_header
    _
  $region3: #{tpu_custom_call.1} parent=0 // loop_header
    %s14 = sphi 0, %s18
    %p15 = scmp.ge.s32.totalorder %s14, 4
    %s24 = sphi 0, %s26
    %s27 = sphi 0, %s24
    %s28 = sphi 0, %s27
    %s44 = sphi 0, %s28
    %s48 = sphi 0, %s48
    %s50 = sphi 0, %s48
    %s51 = sphi 0, %s50
    %s65 = sphi 0, %s51
    %s69 = sphi 0, %s69
    %s71 = sphi 0, %s69
    %s72 = sphi 0, %s71
    %s86 = sphi 0, %s72
    %s90 = sphi 0, %s90
    %s92 = sphi 0, %s90
    %s93 = sphi 0, %s92
    %s107 = sphi 0, %s93
    %s111 = sphi 0, %s111
    %s113 = sphi 0, %s111
    %s114 = sphi 0, %s113
    %s128 = sphi 0, %s114
    %s132 = sphi 0, %s132
    %s134 = sphi 0, %s132
    %s135 = sphi 0, %s134
    %s149 = sphi 0, %s135
    %s153 = sphi 0, %s153
    %s155 = sphi 0, %s153
    %s156 = sphi 0, %s155
    %s170 = sphi 0, %s156
    %s174 = sphi 0, %s174
    %s176 = sphi 0, %s174
    %s177 = sphi 0, %s176
    %s191 = sphi 0, %s177
    %s197 = sphi 0, %s199
    %s200 = sphi 0, %s197
    %s201 = sphi 0, %s200
    %s217 = sphi 0, %s201
  $region4: #{tpu_custom_call.1} parent=0 // loop_header_branch
    %17 = sbr.rel (%p15) target = $region8
  $region5: #{tpu_custom_call.1} parent=0 // loop_body
    %s19 = ssub.s32 %s14, 1
    %s20 = ssub.s32 %s14, 2
    %s21 = sadd.s32 %s14, 1
    %s22 = ssub.s32 %s14, %s21
    %p23 = scmp.eq.s32.totalorder %s22, 0
    %s25 = sadd.s32 %s24, 1
    %s26 = scalar_select %p23, %s24, %s25
    %p29 = pneg %p23
    %p30 = scmp.eq.s32.totalorder %s14, 1
    %p31 = por %p29, %p30
    %p32 = scmp.ne.s32.totalorder %s24, %s27
    %p33 = scmp.eq.s32.totalorder %s14, 0
    %p34 = por %p32, %p33
    %p35 = scmp.ne.s32.totalorder %s24, %s27
    %p36 = scmp.eq.s32.totalorder %s19, 1
    %p37 = por %p35, %p36
    %p38 = scmp.ne.s32.totalorder %s27, %s28
    %p39 = scmp.eq.s32.totalorder %s19, 0
    %p40 = por %p38, %p39
    %p41 = scmp.ne.s32.totalorder %s27, %s28
    %p42 = scmp.eq.s32.totalorder %s20, 1
    %p43 = por %p41, %p42
    %p45 = scmp.ne.s32.totalorder %s28, %s44
    %p46 = scmp.eq.s32.totalorder %s20, 0
    %p47 = por %p45, %p46
    %s49 = sadd.s32 %s48, 1
    %p52 = scmp.eq.s32.totalorder %s14, 1
    %p53 = scmp.ne.s32.totalorder %s48, %s50
    %p54 = scmp.eq.s32.totalorder %s14, 0
    %p55 = por %p53, %p54
    %p56 = scmp.ne.s32.totalorder %s48, %s50
    %p57 = scmp.eq.s32.totalorder %s19, 1
    %p58 = por %p56, %p57
    %p59 = scmp.ne.s32.totalorder %s50, %s51
    %p60 = scmp.eq.s32.totalorder %s19, 0
    %p61 = por %p59, %p60
    %p62 = scmp.ne.s32.totalorder %s50, %s51
    %p63 = scmp.eq.s32.totalorder %s20, 1
    %p64 = por %p62, %p63
    %p66 = scmp.ne.s32.totalorder %s51, %s65
    %p67 = scmp.eq.s32.totalorder %s20, 0
    %p68 = por %p66, %p67
    %s70 = sadd.s32 %s69, 1
    %p73 = scmp.eq.s32.totalorder %s14, 1
    %p74 = scmp.ne.s32.totalorder %s69, %s71
    %p75 = scmp.eq.s32.totalorder %s14, 0
    %p76 = por %p74, %p75
    %p77 = scmp.ne.s32.totalorder %s69, %s71
    %p78 = scmp.eq.s32.totalorder %s19, 1
    %p79 = por %p77, %p78
    %p80 = scmp.ne.s32.totalorder %s71, %s72
    %p81 = scmp.eq.s32.totalorder %s19, 0
    %p82 = por %p80, %p81
    %p83 = scmp.ne.s32.totalorder %s71, %s72
    %p84 = scmp.eq.s32.totalorder %s20, 1
    %p85 = por %p83, %p84
    %p87 = scmp.ne.s32.totalorder %s72, %s86
    %p88 = scmp.eq.s32.totalorder %s20, 0
    %p89 = por %p87, %p88
    %s91 = sadd.s32 %s90, 1
    %p94 = scmp.eq.s32.totalorder %s14, 1
    %p95 = scmp.ne.s32.totalorder %s90, %s92
    %p96 = scmp.eq.s32.totalorder %s14, 0
    %p97 = por %p95, %p96
    %p98 = scmp.ne.s32.totalorder %s90, %s92
    %p99 = scmp.eq.s32.totalorder %s19, 1
    %p100 = por %p98, %p99
    %p101 = scmp.ne.s32.totalorder %s92, %s93
    %p102 = scmp.eq.s32.totalorder %s19, 0
    %p103 = por %p101, %p102
    %p104 = scmp.ne.s32.totalorder %s92, %s93
    %p105 = scmp.eq.s32.totalorder %s20, 1
    %p106 = por %p104, %p105
    %p108 = scmp.ne.s32.totalorder %s93, %s107
    %p109 = scmp.eq.s32.totalorder %s20, 0
    %p110 = por %p108, %p109
    %s112 = sadd.s32 %s111, 1
    %p115 = scmp.eq.s32.totalorder %s14, 1
    %p116 = scmp.ne.s32.totalorder %s111, %s113
    %p117 = scmp.eq.s32.totalorder %s14, 0
    %p118 = por %p116, %p117
    %p119 = scmp.ne.s32.totalorder %s111, %s113
    %p120 = scmp.eq.s32.totalorder %s19, 1
    %p121 = por %p119, %p120
    %p122 = scmp.ne.s32.totalorder %s113, %s114
    %p123 = scmp.eq.s32.totalorder %s19, 0
    %p124 = por %p122, %p123
    %p125 = scmp.ne.s32.totalorder %s113, %s114
    %p126 = scmp.eq.s32.totalorder %s20, 1
    %p127 = por %p125, %p126
    %p129 = scmp.ne.s32.totalorder %s114, %s128
    %p130 = scmp.eq.s32.totalorder %s20, 0
    %p131 = por %p129, %p130
    %s133 = sadd.s32 %s132, 1
    %p136 = scmp.eq.s32.totalorder %s14, 1
    %p137 = scmp.ne.s32.totalorder %s132, %s134
    %p138 = scmp.eq.s32.totalorder %s14, 0
    %p139 = por %p137, %p138
    %p140 = scmp.ne.s32.totalorder %s132, %s134
    %p141 = scmp.eq.s32.totalorder %s19, 1
    %p142 = por %p140, %p141
    %p143 = scmp.ne.s32.totalorder %s134, %s135
    %p144 = scmp.eq.s32.totalorder %s19, 0
    %p145 = por %p143, %p144
    %p146 = scmp.ne.s32.totalorder %s134, %s135
    %p147 = scmp.eq.s32.totalorder %s20, 1
    %p148 = por %p146, %p147
    %p150 = scmp.ne.s32.totalorder %s135, %s149
    %p151 = scmp.eq.s32.totalorder %s20, 0
    %p152 = por %p150, %p151
    %s154 = sadd.s32 %s153, 1
    %p157 = scmp.eq.s32.totalorder %s14, 1
    %p158 = scmp.ne.s32.totalorder %s153, %s155
    %p159 = scmp.eq.s32.totalorder %s14, 0
    %p160 = por %p158, %p159
    %p161 = scmp.ne.s32.totalorder %s153, %s155
    %p162 = scmp.eq.s32.totalorder %s19, 1
    %p163 = por %p161, %p162
    %p164 = scmp.ne.s32.totalorder %s155, %s156
    %p165 = scmp.eq.s32.totalorder %s19, 0
    %p166 = por %p164, %p165
    %p167 = scmp.ne.s32.totalorder %s155, %s156
    %p168 = scmp.eq.s32.totalorder %s20, 1
    %p169 = por %p167, %p168
    %p171 = scmp.ne.s32.totalorder %s156, %s170
    %p172 = scmp.eq.s32.totalorder %s20, 0
    %p173 = por %p171, %p172
    %s175 = sadd.s32 %s174, 1
    %p178 = scmp.eq.s32.totalorder %s14, 1
    %p179 = scmp.ne.s32.totalorder %s174, %s176
    %p180 = scmp.eq.s32.totalorder %s14, 0
    %p181 = por %p179, %p180
    %p182 = scmp.ne.s32.totalorder %s174, %s176
    %p183 = scmp.eq.s32.totalorder %s19, 1
    %p184 = por %p182, %p183
    %p185 = scmp.ne.s32.totalorder %s176, %s177
    %p186 = scmp.eq.s32.totalorder %s19, 0
    %p187 = por %p185, %p186
    %p188 = scmp.ne.s32.totalorder %s176, %s177
    %p189 = scmp.eq.s32.totalorder %s20, 1
    %p190 = por %p188, %p189
    %p192 = scmp.ne.s32.totalorder %s177, %s191
    %p193 = scmp.eq.s32.totalorder %s20, 0
    %p194 = por %p192, %p193
    %s195 = ssub.s32 %s14, %s21
    %p196 = scmp.eq.s32.totalorder %s195, 0
    %s198 = sadd.s32 %s197, 1
    %s199 = scalar_select %p196, %s197, %s198
    %p202 = pneg %p196
    %p203 = scmp.eq.s32.totalorder %s14, 1
    %p204 = por %p202, %p203
    %p205 = scmp.ne.s32.totalorder %s197, %s200
    %p206 = scmp.eq.s32.totalorder %s14, 0
    %p207 = por %p205, %p206
    %p208 = scmp.ne.s32.totalorder %s197, %s200
    %p209 = scmp.eq.s32.totalorder %s19, 1
    %p210 = por %p208, %p209
    %p211 = scmp.ne.s32.totalorder %s200, %s201
    %p212 = scmp.eq.s32.totalorder %s19, 0
    %p213 = por %p211, %p212
    %p214 = scmp.ne.s32.totalorder %s200, %s201
    %p215 = scmp.eq.s32.totalorder %s20, 1
    %p216 = por %p214, %p215
    %p218 = scmp.ne.s32.totalorder %s201, %s217
    %p219 = scmp.eq.s32.totalorder %s20, 0
    %p220 = por %p218, %p219
    %p221 = scmp.le.s32.totalorder 1, %s14
    %p222 = scmp.lt.s32.totalorder %s14, 3
    %p223 = pnand %p221, %p222
    %p224 = pneg %p223
    // Predicated region
    $region9: #{tpu_custom_call.1} parent=5 // pred_check
      _
    $region10: #{tpu_custom_call.1} parent=5 // pred_check_branch
      %226 = sbr.rel (%p223) target = $region12
    $region11: #{tpu_custom_call.1} parent=5 // pred_region
      %s227 = ssub.s32 %s14, 1
      // Predicated region
      $region13: #{tpu_custom_call.1} parent=11 // pred_check
        %p228 = pneg %p61
      $region14: #{tpu_custom_call.1} parent=11 // pred_check_branch
        %230 = sbr.rel (%p228) target = $region16
      $region15: #{tpu_custom_call.1} parent=11 // pred_region
        _
      $region16: #{tpu_custom_call.1} parent=11 // pred_fallthru
        _
      // Predicated region
      $region17: #{tpu_custom_call.1} parent=11 // pred_check
        %p231 = pneg %p82
      $region18: #{tpu_custom_call.1} parent=11 // pred_check_branch
        %233 = sbr.rel (%p231) target = $region20
      $region19: #{tpu_custom_call.1} parent=11 // pred_region
        _
      $region20: #{tpu_custom_call.1} parent=11 // pred_fallthru
        _
      // Predicated region
      $region21: #{tpu_custom_call.1} parent=11 // pred_check
        %p234 = pneg %p103
      $region22: #{tpu_custom_call.1} parent=11 // pred_check_branch
        %236 = sbr.rel (%p234) target = $region24
      $region23: #{tpu_custom_call.1} parent=11 // pred_region
        _
      $region24: #{tpu_custom_call.1} parent=11 // pred_fallthru
        _
      // Predicated region
      $region25: #{tpu_custom_call.1} parent=11 // pred_check
        %p237 = pneg %p124
      $region26: #{tpu_custom_call.1} parent=11 // pred_check_branch
        %239 = sbr.rel (%p237) target = $region28
      $region27: #{tpu_custom_call.1} parent=11 // pred_region
        _
      $region28: #{tpu_custom_call.1} parent=11 // pred_fallthru
        _
      // Predicated region
      $region29: #{tpu_custom_call.1} parent=11 // pred_check
        %p240 = pneg %p145
      $region30: #{tpu_custom_call.1} parent=11 // pred_check_branch
        %242 = sbr.rel (%p240) target = $region32
      $region31: #{tpu_custom_call.1} parent=11 // pred_region
        _
      $region32: #{tpu_custom_call.1} parent=11 // pred_fallthru
        _
      // Predicated region
      $region33: #{tpu_custom_call.1} parent=11 // pred_check
        %p243 = pneg %p166
      $region34: #{tpu_custom_call.1} parent=11 // pred_check_branch
        %245 = sbr.rel (%p243) target = $region36
      $region35: #{tpu_custom_call.1} parent=11 // pred_region
        _
      $region36: #{tpu_custom_call.1} parent=11 // pred_fallthru
        _
      // Predicated region
      $region37: #{tpu_custom_call.1} parent=11 // pred_check
        %p246 = pneg %p187
      $region38: #{tpu_custom_call.1} parent=11 // pred_check_branch
        %248 = sbr.rel (%p246) target = $region40
      $region39: #{tpu_custom_call.1} parent=11 // pred_region
        _
      $region40: #{tpu_custom_call.1} parent=11 // pred_fallthru
        _
    $region12: #{tpu_custom_call.1} parent=5 // pred_fallthru
      _
    %p249 = scmp.lt.s32.totalorder %s14, 2
    // Predicated region
    $region41: #{tpu_custom_call.1} parent=5 // pred_check
      %p250 = pneg %p249
    $region42: #{tpu_custom_call.1} parent=5 // pred_check_branch
      %252 = sbr.rel (%p250) target = $region44
    $region43: #{tpu_custom_call.1} parent=5 // pred_region
      // Predicated region
      $region45: #{tpu_custom_call.1} parent=43 // pred_check
        %p253 = pneg %p34
      $region46: #{tpu_custom_call.1} parent=43 // pred_check_branch
        %255 = sbr.rel (%p253) target = $region48
      $region47: #{tpu_custom_call.1} parent=43 // pred_region
        %s256 = smul.u32 144, %s14
        %p257 = scmp.lt.s32.totalorder %s256, 287
        %s258 = scalar_select %p257, %s256, 287
        %s259 = smul.addr %s258, 4
        %s260 = scalar_lea.vmem %s0, %s259
        %s261 = smul.u32 144, %s14
      $region48: #{tpu_custom_call.1} parent=43 // pred_fallthru
        _
    $region44: #{tpu_custom_call.1} parent=5 // pred_fallthru
      _
    %p262 = scmp.le.s32.totalorder 1, %s14
    %p263 = scmp.lt.s32.totalorder %s14, 3
    %p264 = pnand %p262, %p263
    %p265 = pneg %p264
    // Predicated region
    $region49: #{tpu_custom_call.1} parent=5 // pred_check
      _
    $region50: #{tpu_custom_call.1} parent=5 // pred_check_branch
      %267 = sbr.rel (%p264) target = $region52
    $region51: #{tpu_custom_call.1} parent=5 // pred_region
      %s268 = ssub.s32 %s14, 1
      %s269 = smul.u32 144, %s19
      %p270 = scmp.lt.s32.totalorder %s269, 287
      %s271 = scalar_select %p270, %s269, 287
      %s272 = smul.addr %s271, 4
      %s273 = scalar_lea.vmem %s0, %s272
      %p274 = pneg %p40
      %p275 = pneg %p37
      %p276 = pneg %p61
      %p277 = pneg %p58
      %p278 = pneg %p82
      %p279 = pneg %p79
      %p280 = pneg %p103
      %p281 = pneg %p100
      %p282 = pneg %p124
      %p283 = pneg %p121
      %p284 = pneg %p145
      %p285 = pneg %p142
      %p286 = pneg %p166
      %p287 = pneg %p163
      %p288 = pneg %p187
      %p289 = pneg %p184
      %p290 = pneg %p213
      %p291 = pneg %p210
      %s292 = smul.u32 144, %s19
      %p293 = scmp.lt.s32.totalorder %s292, 287
      %s294 = scalar_select %p293, %s292, 287
      %s295 = smul.addr %s294, 8
      %s296 = scalar_lea.vmem %s8, %s295
      %s297 = smul.u32 144, %s19
      %p298 = scmp.lt.s32.totalorder %s297, 287
      %s299 = scalar_select %p298, %s297, 287
      %s300 = smul.addr %s299, 4
      %s301 = scalar_lea.vmem %s0, %s300
      %s302 = smul.u32 144, %s19
      %s303 = smul.u32 144, %s19
      %p304 = scmp.lt.s32.totalorder %s303, 287
      %s305 = scalar_select %p304, %s303, 287
      %s306 = smul.addr %s305, 8
      %s307 = scalar_lea.vmem %s8, %s306
      %s308 = smul.u32 144, %s19
      %v310 = vld [vmem:[%s301] sm:$0xf]
      %v311 = vld [vmem:[%s301 + $0x4] sm:$0xf]
      %v312 = vld [vmem:[%s301 + $0x8] sm:$0xf]
      %v313 = vld [vmem:[%s301 + $0xc] sm:$0xf]
      %v314 = vld [vmem:[%s301 + $0x10] sm:$0xf]
      %v315 = vld [vmem:[%s301 + $0x14] sm:$0xf]
      %v316 = vld [vmem:[%s301 + $0x18] sm:$0xf]
      %v317 = vld [vmem:[%s301 + $0x1c] sm:$0xf]
      %v318 = vld [vmem:[%s301 + $0x20] sm:$0xf]
      %v319 = vld [vmem:[%s301 + $0x24] sm:$0xf]
      %v320 = vld [vmem:[%s301 + $0x28] sm:$0xf]
      %v321 = vld [vmem:[%s301 + $0x2c] sm:$0xf]
      %v322 = vld [vmem:[%s301 + $0x30] sm:$0xf]
      %v323 = vld [vmem:[%s301 + $0x34] sm:$0xf]
      %v324 = vld [vmem:[%s301 + $0x38] sm:$0xf]
      %v325 = vld [vmem:[%s301 + $0x3c] sm:$0xf]
      %v326 = vld [vmem:[%s301 + $0x40] sm:$0xf]
      %v327 = vld [vmem:[%s301 + $0x44] sm:$0xf]
      %v328 = vld [vmem:[%s301 + $0x48] sm:$0xf]
      %v329 = vld [vmem:[%s301 + $0x4c] sm:$0xf]
      %v330 = vld [vmem:[%s301 + $0x50] sm:$0xf]
      %v331 = vld [vmem:[%s301 + $0x54] sm:$0xf]
      %v332 = vld [vmem:[%s301 + $0x58] sm:$0xf]
      %v333 = vld [vmem:[%s301 + $0x5c] sm:$0xf]
      %v334 = vld [vmem:[%s301 + $0x60] sm:$0xf]
      %v335 = vld [vmem:[%s301 + $0x64] sm:$0xf]
      %v336 = vld [vmem:[%s301 + $0x68] sm:$0xf]
      %v337 = vld [vmem:[%s301 + $0x6c] sm:$0xf]
      %v338 = vld [vmem:[%s301 + $0x70] sm:$0xf]
      %v339 = vld [vmem:[%s301 + $0x74] sm:$0xf]
      %v340 = vld [vmem:[%s301 + $0x78] sm:$0xf]
      %v341 = vld [vmem:[%s301 + $0x7c] sm:$0xf]
      %v342 = vld [vmem:[%s301 + $0x80] sm:$0xf]
      %v343 = vld [vmem:[%s301 + $0x84] sm:$0xf]
      %v344 = vld [vmem:[%s301 + $0x88] sm:$0xf]
      %v345 = vld [vmem:[%s301 + $0x8c] sm:$0xf]
      %v346 = vld [vmem:[%s301 + $0x90] sm:$0xf]
      %v347 = vld [vmem:[%s301 + $0x94] sm:$0xf]
      %v348 = vld [vmem:[%s301 + $0x98] sm:$0xf]
      %v349 = vld [vmem:[%s301 + $0x9c] sm:$0xf]
      %v350 = vld [vmem:[%s301 + $0xa0] sm:$0xf]
      %v351 = vld [vmem:[%s301 + $0xa4] sm:$0xf]
      %v352 = vld [vmem:[%s301 + $0xa8] sm:$0xf]
      %v353 = vld [vmem:[%s301 + $0xac] sm:$0xf]
      %v354 = vld [vmem:[%s301 + $0xb0] sm:$0xf]
      %v355 = vld [vmem:[%s301 + $0xb4] sm:$0xf]
      %v356 = vld [vmem:[%s301 + $0xb8] sm:$0xf]
      %v357 = vld [vmem:[%s301 + $0xbc] sm:$0xf]
      %v358 = vld [vmem:[%s301 + $0xc0] sm:$0xf]
      %v359 = vld [vmem:[%s301 + $0xc4] sm:$0xf]
      %v360 = vld [vmem:[%s301 + $0xc8] sm:$0xf]
      %v361 = vld [vmem:[%s301 + $0xcc] sm:$0xf]
      %v362 = vld [vmem:[%s301 + $0xd0] sm:$0xf]
      %v363 = vld [vmem:[%s301 + $0xd4] sm:$0xf]
      %v364 = vld [vmem:[%s301 + $0xd8] sm:$0xf]
      %v365 = vld [vmem:[%s301 + $0xdc] sm:$0xf]
      %v366 = vld [vmem:[%s301 + $0xe0] sm:$0xf]
      %v367 = vld [vmem:[%s301 + $0xe4] sm:$0xf]
      %v368 = vld [vmem:[%s301 + $0xe8] sm:$0xf]
      %v369 = vld [vmem:[%s301 + $0xec] sm:$0xf]
      %v370 = vld [vmem:[%s301 + $0xf0] sm:$0xf]
      %v371 = vld [vmem:[%s301 + $0xf4] sm:$0xf]
      %v372 = vld [vmem:[%s301 + $0xf8] sm:$0xf]
      %v373 = vld [vmem:[%s301 + $0xfc] sm:$0xf]
      %v374 = vld [vmem:[%s301 + $0x100] sm:$0xf]
      %v375 = vld [vmem:[%s301 + $0x104] sm:$0xf]
      %v376 = vld [vmem:[%s301 + $0x108] sm:$0xf]
      %v377 = vld [vmem:[%s301 + $0x10c] sm:$0xf]
      %v378 = vld [vmem:[%s301 + $0x110] sm:$0xf]
      %v379 = vld [vmem:[%s301 + $0x114] sm:$0xf]
      %v380 = vld [vmem:[%s301 + $0x118] sm:$0xf]
      %v381 = vld [vmem:[%s301 + $0x11c] sm:$0xf]
      %v382 = vld [vmem:[%s301 + $0x120] sm:$0xf]
      %v383 = vld [vmem:[%s301 + $0x124] sm:$0xf]
      %v384 = vld [vmem:[%s301 + $0x128] sm:$0xf]
      %v385 = vld [vmem:[%s301 + $0x12c] sm:$0xf]
      %v386 = vld [vmem:[%s301 + $0x130] sm:$0xf]
      %v387 = vld [vmem:[%s301 + $0x134] sm:$0xf]
      %v388 = vld [vmem:[%s301 + $0x138] sm:$0xf]
      %v389 = vld [vmem:[%s301 + $0x13c] sm:$0xf]
      %v390 = vld [vmem:[%s301 + $0x140] sm:$0xf]
      %v391 = vld [vmem:[%s301 + $0x144] sm:$0xf]
      %v392 = vld [vmem:[%s301 + $0x148] sm:$0xf]
      %v393 = vld [vmem:[%s301 + $0x14c] sm:$0xf]
      %v394 = vld [vmem:[%s301 + $0x150] sm:$0xf]
      %v395 = vld [vmem:[%s301 + $0x154] sm:$0xf]
      %v396 = vld [vmem:[%s301 + $0x158] sm:$0xf]
      %v397 = vld [vmem:[%s301 + $0x15c] sm:$0xf]
      %v398 = vld [vmem:[%s301 + $0x160] sm:$0xf]
      %v399 = vld [vmem:[%s301 + $0x164] sm:$0xf]
      %v400 = vld [vmem:[%s301 + $0x168] sm:$0xf]
      %v401 = vld [vmem:[%s301 + $0x16c] sm:$0xf]
      %v402 = vld [vmem:[%s301 + $0x170] sm:$0xf]
      %v403 = vld [vmem:[%s301 + $0x174] sm:$0xf]
      %v404 = vld [vmem:[%s301 + $0x178] sm:$0xf]
      %v405 = vld [vmem:[%s301 + $0x17c] sm:$0xf]
      %v406 = vld [vmem:[%s301 + $0x180] sm:$0xf]
      %v407 = vld [vmem:[%s301 + $0x184] sm:$0xf]
      %v408 = vld [vmem:[%s301 + $0x188] sm:$0xf]
      %v409 = vld [vmem:[%s301 + $0x18c] sm:$0xf]
      %v410 = vld [vmem:[%s301 + $0x190] sm:$0xf]
      %v411 = vld [vmem:[%s301 + $0x194] sm:$0xf]
      %v412 = vld [vmem:[%s301 + $0x198] sm:$0xf]
      %v413 = vld [vmem:[%s301 + $0x19c] sm:$0xf]
      %v414 = vld [vmem:[%s301 + $0x1a0] sm:$0xf]
      %v415 = vld [vmem:[%s301 + $0x1a4] sm:$0xf]
      %v416 = vld [vmem:[%s301 + $0x1a8] sm:$0xf]
      %v417 = vld [vmem:[%s301 + $0x1ac] sm:$0xf]
      %v418 = vld [vmem:[%s301 + $0x1b0] sm:$0xf]
      %v419 = vld [vmem:[%s301 + $0x1b4] sm:$0xf]
      %v420 = vld [vmem:[%s301 + $0x1b8] sm:$0xf]
      %v421 = vld [vmem:[%s301 + $0x1bc] sm:$0xf]
      %v422 = vld [vmem:[%s301 + $0x1c0] sm:$0xf]
      %v423 = vld [vmem:[%s301 + $0x1c4] sm:$0xf]
      %v424 = vld [vmem:[%s301 + $0x1c8] sm:$0xf]
      %v425 = vld [vmem:[%s301 + $0x1cc] sm:$0xf]
      %v426 = vld [vmem:[%s301 + $0x1d0] sm:$0xf]
      %v427 = vld [vmem:[%s301 + $0x1d4] sm:$0xf]
      %v428 = vld [vmem:[%s301 + $0x1d8] sm:$0xf]
      %v429 = vld [vmem:[%s301 + $0x1dc] sm:$0xf]
      %v430 = vld [vmem:[%s301 + $0x1e0] sm:$0xf]
      %v431 = vld [vmem:[%s301 + $0x1e4] sm:$0xf]
      %v432 = vld [vmem:[%s301 + $0x1e8] sm:$0xf]
      %v433 = vld [vmem:[%s301 + $0x1ec] sm:$0xf]
      %v434 = vld [vmem:[%s301 + $0x1f0] sm:$0xf]
      %v435 = vld [vmem:[%s301 + $0x1f4] sm:$0xf]
      %v436 = vld [vmem:[%s301 + $0x1f8] sm:$0xf]
      %v437 = vld [vmem:[%s301 + $0x1fc] sm:$0xf]
      %v438 = vld [vmem:[%s301 + $0x200] sm:$0xf]
      %v439 = vld [vmem:[%s301 + $0x204] sm:$0xf]
      %v440 = vld [vmem:[%s301 + $0x208] sm:$0xf]
      %v441 = vld [vmem:[%s301 + $0x20c] sm:$0xf]
      %v442 = vld [vmem:[%s301 + $0x210] sm:$0xf]
      %v443 = vld [vmem:[%s301 + $0x214] sm:$0xf]
      %v444 = vld [vmem:[%s301 + $0x218] sm:$0xf]
      %v445 = vld [vmem:[%s301 + $0x21c] sm:$0xf]
      %v446 = vld [vmem:[%s301 + $0x220] sm:$0xf]
      %v447 = vld [vmem:[%s301 + $0x224] sm:$0xf]
      %v448 = vld [vmem:[%s301 + $0x228] sm:$0xf]
      %v449 = vld [vmem:[%s301 + $0x22c] sm:$0xf]
      %v450 = vld [vmem:[%s301 + $0x230] sm:$0xf]
      %v451 = vld [vmem:[%s301 + $0x234] sm:$0xf]
      %v452 = vld [vmem:[%s301 + $0x238] sm:$0xf]
      %v453 = vld [vmem:[%s301 + $0x23c] sm:$0xf]
      %v454 = vld [vmem:[%s2] sm:$0xff]
      %v455 = vld [vmem:[%s2 + $0x8] sm:$0xff]
      %v456 = vld [vmem:[%s2 + $0x10] sm:$0xff]
      %v457 = vld [vmem:[%s2 + $0x18] sm:$0xff]
      %v458 = vld [vmem:[%s2 + $0x20] sm:$0xff]
      %v459 = vld [vmem:[%s2 + $0x28] sm:$0xff]
      %v460 = vld [vmem:[%s2 + $0x30] sm:$0xff]
      %v461 = vld [vmem:[%s2 + $0x38] sm:$0xff]
      %v462 = vld [vmem:[%s2 + $0x40] sm:$0xff]
      %v463 = vld [vmem:[%s2 + $0x48] sm:$0xff]
      %v464 = vld [vmem:[%s2 + $0x50] sm:$0xff]
      %v465 = vld [vmem:[%s2 + $0x58] sm:$0xff]
      %v466 = vld [vmem:[%s2 + $0x60] sm:$0xff]
      %v467 = vld [vmem:[%s2 + $0x68] sm:$0xff]
      %v468 = vld [vmem:[%s2 + $0x70] sm:$0xff]
      %v469 = vld [vmem:[%s2 + $0x78] sm:$0xff]
      %v470 = vld [vmem:[%s2 + $0x80] sm:$0xff]
      %v471 = vld [vmem:[%s2 + $0x88] sm:$0xff]
      %v472 = vld [vmem:[%s2 + $0x90] sm:$0xff]
      %v473 = vld [vmem:[%s2 + $0x98] sm:$0xff]
      %v474 = vld [vmem:[%s2 + $0xa0] sm:$0xff]
      %v475 = vld [vmem:[%s2 + $0xa8] sm:$0xff]
      %v476 = vld [vmem:[%s2 + $0xb0] sm:$0xff]
      %v477 = vld [vmem:[%s2 + $0xb8] sm:$0xff]
      %v478 = vld [vmem:[%s2 + $0xc0] sm:$0xff]
      %v479 = vld [vmem:[%s2 + $0xc8] sm:$0xff]
      %v480 = vld [vmem:[%s2 + $0xd0] sm:$0xff]
      %v481 = vld [vmem:[%s2 + $0xd8] sm:$0xff]
      %v482 = vld [vmem:[%s2 + $0xe0] sm:$0xff]
      %v483 = vld [vmem:[%s2 + $0xe8] sm:$0xff]
      %v484 = vld [vmem:[%s2 + $0xf0] sm:$0xff]
      %v485 = vld [vmem:[%s2 + $0xf8] sm:$0xff]
      %v486 = vld [vmem:[%s2 + $0x100] sm:$0xff]
      %v487 = vld [vmem:[%s2 + $0x108] sm:$0xff]
      %v488 = vld [vmem:[%s2 + $0x110] sm:$0xff]
      %v489 = vld [vmem:[%s2 + $0x118] sm:$0xff]
      %v634 = vunpack.c.l.b16 %v310
      %v635 = vunpack.c.l.b16 %v311
      %v636 = vunpack.c.l.b16 %v312
      %v637 = vunpack.c.l.b16 %v313
      %v638 = vunpack.c.l.b16 %v314
      %v639 = vunpack.c.l.b16 %v315
      %v640 = vunpack.c.l.b16 %v316
      %v641 = vunpack.c.l.b16 %v317
      %v642 = vunpack.c.l.b16 %v318
      %v643 = vunpack.c.l.b16 %v319
      %v644 = vunpack.c.l.b16 %v320
      %v645 = vunpack.c.l.b16 %v321
      %v646 = vunpack.c.l.b16 %v322
      %v647 = vunpack.c.l.b16 %v323
      %v648 = vunpack.c.l.b16 %v324
      %v649 = vunpack.c.l.b16 %v325
      %v650 = vunpack.c.l.b16 %v326
      %v651 = vunpack.c.l.b16 %v327
      %v652 = vunpack.c.l.b16 %v328
      %v653 = vunpack.c.l.b16 %v329
      %v654 = vunpack.c.l.b16 %v330
      %v655 = vunpack.c.l.b16 %v331
      %v656 = vunpack.c.l.b16 %v332
      %v657 = vunpack.c.l.b16 %v333
      %v658 = vunpack.c.l.b16 %v334
      %v659 = vunpack.c.l.b16 %v335
      %v660 = vunpack.c.l.b16 %v336
      %v661 = vunpack.c.l.b16 %v337
      %v662 = vunpack.c.l.b16 %v338
      %v663 = vunpack.c.l.b16 %v339
      %v664 = vunpack.c.l.b16 %v340
      %v665 = vunpack.c.l.b16 %v341
      %v666 = vunpack.c.l.b16 %v342
      %v667 = vunpack.c.l.b16 %v343
      %v668 = vunpack.c.l.b16 %v344
      %v669 = vunpack.c.l.b16 %v345
      %v670 = vunpack.c.l.b16 %v346
      %v671 = vunpack.c.l.b16 %v347
      %v672 = vunpack.c.l.b16 %v348
      %v673 = vunpack.c.l.b16 %v349
      %v674 = vunpack.c.l.b16 %v350
      %v675 = vunpack.c.l.b16 %v351
      %v676 = vunpack.c.l.b16 %v352
      %v677 = vunpack.c.l.b16 %v353
      %v678 = vunpack.c.l.b16 %v354
      %v679 = vunpack.c.l.b16 %v355
      %v680 = vunpack.c.l.b16 %v356
      %v681 = vunpack.c.l.b16 %v357
      %v682 = vunpack.c.l.b16 %v358
      %v683 = vunpack.c.l.b16 %v359
      %v684 = vunpack.c.l.b16 %v360
      %v685 = vunpack.c.l.b16 %v361
      %v686 = vunpack.c.l.b16 %v362
      %v687 = vunpack.c.l.b16 %v363
      %v688 = vunpack.c.l.b16 %v364
      %v689 = vunpack.c.l.b16 %v365
      %v690 = vunpack.c.l.b16 %v366
      %v691 = vunpack.c.l.b16 %v367
      %v692 = vunpack.c.l.b16 %v368
      %v693 = vunpack.c.l.b16 %v369
      %v694 = vunpack.c.l.b16 %v370
      %v695 = vunpack.c.l.b16 %v371
      %v696 = vunpack.c.l.b16 %v372
      %v697 = vunpack.c.l.b16 %v373
      %v698 = vunpack.c.l.b16 %v374
      %v699 = vunpack.c.l.b16 %v375
      %v700 = vunpack.c.l.b16 %v376
      %v701 = vunpack.c.l.b16 %v377
      %v702 = vunpack.c.l.b16 %v378
      %v703 = vunpack.c.l.b16 %v379
      %v704 = vunpack.c.l.b16 %v380
      %v705 = vunpack.c.l.b16 %v381
      %v706 = vunpack.c.l.b16 %v382
      %v707 = vunpack.c.l.b16 %v383
      %v708 = vunpack.c.l.b16 %v384
      %v709 = vunpack.c.l.b16 %v385
      %v710 = vunpack.c.l.b16 %v386
      %v711 = vunpack.c.l.b16 %v387
      %v712 = vunpack.c.l.b16 %v388
      %v713 = vunpack.c.l.b16 %v389
      %v714 = vunpack.c.l.b16 %v390
      %v715 = vunpack.c.l.b16 %v391
      %v716 = vunpack.c.l.b16 %v392
      %v717 = vunpack.c.l.b16 %v393
      %v718 = vunpack.c.l.b16 %v394
      %v719 = vunpack.c.l.b16 %v395
      %v720 = vunpack.c.l.b16 %v396
      %v721 = vunpack.c.l.b16 %v397
      %v722 = vunpack.c.l.b16 %v398
      %v723 = vunpack.c.l.b16 %v399
      %v724 = vunpack.c.l.b16 %v400
      %v725 = vunpack.c.l.b16 %v401
      %v726 = vunpack.c.l.b16 %v402
      %v727 = vunpack.c.l.b16 %v403
      %v728 = vunpack.c.l.b16 %v404
      %v729 = vunpack.c.l.b16 %v405
      %v730 = vunpack.c.l.b16 %v406
      %v731 = vunpack.c.l.b16 %v407
      %v732 = vunpack.c.l.b16 %v408
      %v733 = vunpack.c.l.b16 %v409
      %v734 = vunpack.c.l.b16 %v410
      %v735 = vunpack.c.l.b16 %v411
      %v736 = vunpack.c.l.b16 %v412
      %v737 = vunpack.c.l.b16 %v413
      %v738 = vunpack.c.l.b16 %v414
      %v739 = vunpack.c.l.b16 %v415
      %v740 = vunpack.c.l.b16 %v416
      %v741 = vunpack.c.l.b16 %v417
      %v742 = vunpack.c.l.b16 %v418
      %v743 = vunpack.c.l.b16 %v419
      %v744 = vunpack.c.l.b16 %v420
      %v745 = vunpack.c.l.b16 %v421
      %v746 = vunpack.c.l.b16 %v422
      %v747 = vunpack.c.l.b16 %v423
      %v748 = vunpack.c.l.b16 %v424
      %v749 = vunpack.c.l.b16 %v425
      %v750 = vunpack.c.l.b16 %v426
      %v751 = vunpack.c.l.b16 %v427
      %v752 = vunpack.c.l.b16 %v428
      %v753 = vunpack.c.l.b16 %v429
      %v754 = vunpack.c.l.b16 %v430
      %v755 = vunpack.c.l.b16 %v431
      %v756 = vunpack.c.l.b16 %v432
      %v757 = vunpack.c.l.b16 %v433
      %v758 = vunpack.c.l.b16 %v434
      %v759 = vunpack.c.l.b16 %v435
      %v760 = vunpack.c.l.b16 %v436
      %v761 = vunpack.c.l.b16 %v437
      %v762 = vunpack.c.l.b16 %v438
      %v763 = vunpack.c.l.b16 %v439
      %v764 = vunpack.c.l.b16 %v440
      %v765 = vunpack.c.l.b16 %v441
      %v766 = vunpack.c.l.b16 %v442
      %v767 = vunpack.c.l.b16 %v443
      %v768 = vunpack.c.l.b16 %v444
      %v769 = vunpack.c.l.b16 %v445
      %v770 = vunpack.c.l.b16 %v446
      %v771 = vunpack.c.l.b16 %v447
      %v772 = vunpack.c.l.b16 %v448
      %v773 = vunpack.c.l.b16 %v449
      %v774 = vunpack.c.l.b16 %v450
      %v775 = vunpack.c.l.b16 %v451
      %v776 = vunpack.c.l.b16 %v452
      %v777 = vunpack.c.l.b16 %v453
      %v778 = vpack.c.b16 %v635, %v634
      %v779 = vpack.c.b16 %v637, %v636
      %v780 = vpack.c.b16 %v639, %v638
      %v781 = vpack.c.b16 %v641, %v640
      %v782 = vpack.c.b16 %v643, %v642
      %v783 = vpack.c.b16 %v645, %v644
      %v784 = vpack.c.b16 %v647, %v646
      %v785 = vpack.c.b16 %v649, %v648
      %v786 = vpack.c.b16 %v651, %v650
      %v787 = vpack.c.b16 %v653, %v652
      %v788 = vpack.c.b16 %v655, %v654
      %v789 = vpack.c.b16 %v657, %v656
      %v790 = vpack.c.b16 %v659, %v658
      %v791 = vpack.c.b16 %v661, %v660
      %v792 = vpack.c.b16 %v663, %v662
      %v793 = vpack.c.b16 %v665, %v664
      %v794 = vpack.c.b16 %v667, %v666
      %v795 = vpack.c.b16 %v669, %v668
      %v796 = vpack.c.b16 %v671, %v670
      %v797 = vpack.c.b16 %v673, %v672
      %v798 = vpack.c.b16 %v675, %v674
      %v799 = vpack.c.b16 %v677, %v676
      %v800 = vpack.c.b16 %v679, %v678
      %v801 = vpack.c.b16 %v681, %v680
      %v802 = vpack.c.b16 %v683, %v682
      %v803 = vpack.c.b16 %v685, %v684
      %v804 = vpack.c.b16 %v687, %v686
      %v805 = vpack.c.b16 %v689, %v688
      %v806 = vpack.c.b16 %v691, %v690
      %v807 = vpack.c.b16 %v693, %v692
      %v808 = vpack.c.b16 %v695, %v694
      %v809 = vpack.c.b16 %v697, %v696
      %v810 = vpack.c.b16 %v699, %v698
      %v811 = vpack.c.b16 %v701, %v700
      %v812 = vpack.c.b16 %v703, %v702
      %v813 = vpack.c.b16 %v705, %v704
      %v814 = vpack.c.b16 %v707, %v706
      %v815 = vpack.c.b16 %v709, %v708
      %v816 = vpack.c.b16 %v711, %v710
      %v817 = vpack.c.b16 %v713, %v712
      %v818 = vpack.c.b16 %v715, %v714
      %v819 = vpack.c.b16 %v717, %v716
      %v820 = vpack.c.b16 %v719, %v718
      %v821 = vpack.c.b16 %v721, %v720
      %v822 = vpack.c.b16 %v723, %v722
      %v823 = vpack.c.b16 %v725, %v724
      %v824 = vpack.c.b16 %v727, %v726
      %v825 = vpack.c.b16 %v729, %v728
      %v826 = vpack.c.b16 %v731, %v730
      %v827 = vpack.c.b16 %v733, %v732
      %v828 = vpack.c.b16 %v735, %v734
      %v829 = vpack.c.b16 %v737, %v736
      %v830 = vpack.c.b16 %v739, %v738
      %v831 = vpack.c.b16 %v741, %v740
      %v832 = vpack.c.b16 %v743, %v742
      %v833 = vpack.c.b16 %v745, %v744
      %v834 = vpack.c.b16 %v747, %v746
      %v835 = vpack.c.b16 %v749, %v748
      %v836 = vpack.c.b16 %v751, %v750
      %v837 = vpack.c.b16 %v753, %v752
      %v838 = vpack.c.b16 %v755, %v754
      %v839 = vpack.c.b16 %v757, %v756
      %v840 = vpack.c.b16 %v759, %v758
      %v841 = vpack.c.b16 %v761, %v760
      %v842 = vpack.c.b16 %v763, %v762
      %v843 = vpack.c.b16 %v765, %v764
      %v844 = vpack.c.b16 %v767, %v766
      %v845 = vpack.c.b16 %v769, %v768
      %v846 = vpack.c.b16 %v771, %v770
      %v847 = vpack.c.b16 %v773, %v772
      %v848 = vpack.c.b16 %v775, %v774
      %v849 = vpack.c.b16 %v777, %v776
      %v886 = vunpack.c.l.b16 %v454
      %v887 = vunpack.c.h.b16 %v454
      %v888 = vunpack.c.l.b16 %v455
      %v889 = vunpack.c.h.b16 %v455
      %v890 = vunpack.c.l.b16 %v456
      %v891 = vunpack.c.h.b16 %v456
      %v892 = vunpack.c.l.b16 %v457
      %v893 = vunpack.c.h.b16 %v457
      %v894 = vunpack.c.l.b16 %v458
      %v895 = vunpack.c.h.b16 %v458
      %v896 = vunpack.c.l.b16 %v459
      %v897 = vunpack.c.h.b16 %v459
      %v898 = vunpack.c.l.b16 %v460
      %v899 = vunpack.c.h.b16 %v460
      %v900 = vunpack.c.l.b16 %v461
      %v901 = vunpack.c.h.b16 %v461
      %v902 = vunpack.c.l.b16 %v462
      %v903 = vunpack.c.h.b16 %v462
      %v904 = vunpack.c.l.b16 %v463
      %v905 = vunpack.c.h.b16 %v463
      %v906 = vunpack.c.l.b16 %v464
      %v907 = vunpack.c.h.b16 %v464
      %v908 = vunpack.c.l.b16 %v465
      %v909 = vunpack.c.h.b16 %v465
      %v910 = vunpack.c.l.b16 %v466
      %v911 = vunpack.c.h.b16 %v466
      %v912 = vunpack.c.l.b16 %v467
      %v913 = vunpack.c.h.b16 %v467
      %v914 = vunpack.c.l.b16 %v468
      %v915 = vunpack.c.h.b16 %v468
      %v916 = vunpack.c.l.b16 %v469
      %v917 = vunpack.c.h.b16 %v469
      %v918 = vunpack.c.l.b16 %v470
      %v919 = vunpack.c.h.b16 %v470
      %v920 = vunpack.c.l.b16 %v471
      %v921 = vunpack.c.h.b16 %v471
      %v922 = vunpack.c.l.b16 %v472
      %v923 = vunpack.c.h.b16 %v472
      %v924 = vunpack.c.l.b16 %v473
      %v925 = vunpack.c.h.b16 %v473
      %v926 = vunpack.c.l.b16 %v474
      %v927 = vunpack.c.h.b16 %v474
      %v928 = vunpack.c.l.b16 %v475
      %v929 = vunpack.c.h.b16 %v475
      %v930 = vunpack.c.l.b16 %v476
      %v931 = vunpack.c.h.b16 %v476
      %v932 = vunpack.c.l.b16 %v477
      %v933 = vunpack.c.h.b16 %v477
      %v934 = vunpack.c.l.b16 %v478
      %v935 = vunpack.c.h.b16 %v478
      %v936 = vunpack.c.l.b16 %v479
      %v937 = vunpack.c.h.b16 %v479
      %v938 = vunpack.c.l.b16 %v480
      %v939 = vunpack.c.h.b16 %v480
      %v940 = vunpack.c.l.b16 %v481
      %v941 = vunpack.c.h.b16 %v481
      %v942 = vunpack.c.l.b16 %v482
      %v943 = vunpack.c.h.b16 %v482
      %v944 = vunpack.c.l.b16 %v483
      %v945 = vunpack.c.h.b16 %v483
      %v946 = vunpack.c.l.b16 %v484
      %v947 = vunpack.c.h.b16 %v484
      %v948 = vunpack.c.l.b16 %v485
      %v949 = vunpack.c.h.b16 %v485
      %v950 = vunpack.c.l.b16 %v486
      %v951 = vunpack.c.h.b16 %v486
      %v952 = vunpack.c.l.b16 %v487
      %v953 = vunpack.c.h.b16 %v487
      %v954 = vunpack.c.l.b16 %v488
      %v955 = vunpack.c.h.b16 %v488
      %v956 = vunpack.c.l.b16 %v489
      %v957 = vunpack.c.h.b16 %v489
      %v958 = vpack.c.b16 %v892, %v886
      %v959 = vpack.c.b16 %v893, %v887
      %v960 = vpack.c.b16 %v894, %v888
      %v961 = vpack.c.b16 %v895, %v889
      %v962 = vpack.c.b16 %v896, %v890
      %v963 = vpack.c.b16 %v897, %v891
      %v964 = vpack.c.b16 %v904, %v898
      %v965 = vpack.c.b16 %v905, %v899
      %v966 = vpack.c.b16 %v906, %v900
      %v967 = vpack.c.b16 %v907, %v901
      %v968 = vpack.c.b16 %v908, %v902
      %v969 = vpack.c.b16 %v909, %v903
      %v970 = vpack.c.b16 %v916, %v910
      %v971 = vpack.c.b16 %v917, %v911
      %v972 = vpack.c.b16 %v918, %v912
      %v973 = vpack.c.b16 %v919, %v913
      %v974 = vpack.c.b16 %v920, %v914
      %v975 = vpack.c.b16 %v921, %v915
      %v976 = vpack.c.b16 %v928, %v922
      %v977 = vpack.c.b16 %v929, %v923
      %v978 = vpack.c.b16 %v930, %v924
      %v979 = vpack.c.b16 %v931, %v925
      %v980 = vpack.c.b16 %v932, %v926
      %v981 = vpack.c.b16 %v933, %v927
      %v982 = vpack.c.b16 %v940, %v934
      %v983 = vpack.c.b16 %v941, %v935
      %v984 = vpack.c.b16 %v942, %v936
      %v985 = vpack.c.b16 %v943, %v937
      %v986 = vpack.c.b16 %v944, %v938
      %v987 = vpack.c.b16 %v945, %v939
      %v988 = vpack.c.b16 %v952, %v946
      %v989 = vpack.c.b16 %v953, %v947
      %v990 = vpack.c.b16 %v954, %v948
      %v991 = vpack.c.b16 %v955, %v949
      %v992 = vpack.c.b16 %v956, %v950
      %v993 = vpack.c.b16 %v957, %v951
      %vm1030 = vcmask 785408
      %v1032 = vsel %vm1030, %v778, 0
      %v1035 = vsel %vm1030, %v779, 0
      %v1038 = vsel %vm1030, %v780, 0
      %v1041 = vsel %vm1030, %v781, 0
      %v1044 = vsel %vm1030, %v782, 0
      %v1047 = vsel %vm1030, %v783, 0
      %v1050 = vsel %vm1030, %v784, 0
      %v1053 = vsel %vm1030, %v785, 0
      %v1056 = vsel %vm1030, %v786, 0
      %v1059 = vsel %vm1030, %v787, 0
      %v1062 = vsel %vm1030, %v788, 0
      %v1065 = vsel %vm1030, %v789, 0
      %v1068 = vsel %vm1030, %v790, 0
      %v1071 = vsel %vm1030, %v791, 0
      %v1074 = vsel %vm1030, %v792, 0
      %v1077 = vsel %vm1030, %v793, 0
      %v1080 = vsel %vm1030, %v794, 0
      %v1083 = vsel %vm1030, %v795, 0
      %v1086 = vsel %vm1030, %v796, 0
      %v1089 = vsel %vm1030, %v797, 0
      %v1092 = vsel %vm1030, %v798, 0
      %v1095 = vsel %vm1030, %v799, 0
      %v1098 = vsel %vm1030, %v800, 0
      %v1101 = vsel %vm1030, %v801, 0
      %v1104 = vsel %vm1030, %v802, 0
      %v1107 = vsel %vm1030, %v803, 0
      %v1110 = vsel %vm1030, %v804, 0
      %v1113 = vsel %vm1030, %v805, 0
      %v1116 = vsel %vm1030, %v806, 0
      %v1119 = vsel %vm1030, %v807, 0
      %v1122 = vsel %vm1030, %v808, 0
      %v1125 = vsel %vm1030, %v809, 0
      %v1128 = vsel %vm1030, %v810, 0
      %v1131 = vsel %vm1030, %v811, 0
      %v1134 = vsel %vm1030, %v812, 0
      %v1137 = vsel %vm1030, %v813, 0
      %v1140 = vsel %vm1030, %v814, 0
      %v1143 = vsel %vm1030, %v815, 0
      %v1146 = vsel %vm1030, %v816, 0
      %v1149 = vsel %vm1030, %v817, 0
      %v1152 = vsel %vm1030, %v818, 0
      %v1155 = vsel %vm1030, %v819, 0
      %v1158 = vsel %vm1030, %v820, 0
      %v1161 = vsel %vm1030, %v821, 0
      %v1164 = vsel %vm1030, %v822, 0
      %v1167 = vsel %vm1030, %v823, 0
      %v1170 = vsel %vm1030, %v824, 0
      %v1173 = vsel %vm1030, %v825, 0
      %v1176 = vsel %vm1030, %v826, 0
      %v1179 = vsel %vm1030, %v827, 0
      %v1182 = vsel %vm1030, %v828, 0
      %v1185 = vsel %vm1030, %v829, 0
      %v1188 = vsel %vm1030, %v830, 0
      %v1191 = vsel %vm1030, %v831, 0
      %v1194 = vsel %vm1030, %v832, 0
      %v1197 = vsel %vm1030, %v833, 0
      %v1200 = vsel %vm1030, %v834, 0
      %v1203 = vsel %vm1030, %v835, 0
      %v1206 = vsel %vm1030, %v836, 0
      %v1209 = vsel %vm1030, %v837, 0
      %v1212 = vsel %vm1030, %v838, 0
      %v1215 = vsel %vm1030, %v839, 0
      %v1218 = vsel %vm1030, %v840, 0
      %v1221 = vsel %vm1030, %v841, 0
      %v1224 = vsel %vm1030, %v842, 0
      %v1227 = vsel %vm1030, %v843, 0
      %v1230 = vsel %vm1030, %v844, 0
      %v1233 = vsel %vm1030, %v845, 0
      %v1236 = vsel %vm1030, %v846, 0
      %v1239 = vsel %vm1030, %v847, 0
      %v1242 = vsel %vm1030, %v848, 0
      %v1245 = vsel %vm1030, %v849, 0
      %1247 = vmatprep.subr.bf16.mxu0 %v959
      %1248 = vmatpush1.bf16.msra.mxu0 %v958
      %1249 = vmatprep.subr.bf16.mxu0 %v965
      %1250 = vmatpush1.bf16.msra.mxu0 %v964
      %1251 = vmatprep.subr.bf16.mxu0 %v971
      %1252 = vmatpush1.bf16.msra.mxu0 %v970
      %1253 = vmatprep.subr.bf16.mxu0 %v977
      %1254 = vmatpush1.bf16.msra.mxu0 %v976
      %1255 = vmatprep.subr.bf16.mxu0 %v983
      %1256 = vmatpush1.bf16.msra.mxu0 %v982
      %1257 = vmatprep.subr.bf16.mxu0 %v989
      %1258 = vmatpush1.bf16.msra.mxu0 %v988
      %1259 = vmatprep.subr.bf16.mxu0 0
      %1260 = vmatpush1.bf16.msra.mxu0 0
      %1261 = vmatprep.subr.bf16.mxu0 0
      %1262 = vmatpush1.bf16.msra.mxu0 0
      %1263 = vmatprep.subr.bf16.mxu0 0
      %1264 = vmatpush1.bf16.msra.mxu0 0
      %1265 = vmatprep.subr.bf16.mxu0 0
      %1266 = vmatpush1.bf16.msra.mxu0 0
      %1267 = vmatprep.subr.bf16.mxu0 0
      %1268 = vmatpush1.bf16.msra.mxu0 0
      %1269 = vmatprep.subr.bf16.mxu0 0
      %1270 = vmatpush1.bf16.msra.mxu0 0
      %1271 = vmatprep.subr.bf16.mxu0 0
      %1272 = vmatpush1.bf16.msra.mxu0 0
      %1273 = vmatprep.subr.bf16.mxu0 0
      %1274 = vmatpush1.bf16.msra.mxu0 0
      %1275 = vmatprep.subr.bf16.mxu0 0
      %1276 = vmatpush1.bf16.msra.mxu0 0
      %1277 = vmatprep.subr.bf16.mxu0 0
      %1278 = vmatpush1.bf16.msra.mxu0 0
      %1279 = vmatprep.mubr.bf16.mxu0 0
      %1280 = vmatmul.mubr.bf16.gmra.mrb[0].mxu0 %v1032
      %v1281 = vpop.f32.mrb[0].mxu0
      %v1282 = vadd.f32 0.0, %v1281
      %v1283 = vpop.f32.mrb[0].mxu0
      %v1284 = vadd.f32 0.0, %v1283
      %v1285 = vpop.f32.mrb[0].mxu0
      %v1286 = vadd.f32 0.0, %v1285
      %v1287 = vpop.f32.mrb[0].mxu0
      %v1288 = vadd.f32 0.0, %v1287
      %1289 = vmatprep.mubr.bf16.mxu0 0
      %1290 = vmatmul.mubr.bf16.gmra.mrb[0].mxu0 %v1035
      %v1291 = vpop.f32.mrb[0].mxu0
      %v1292 = vadd.f32 0.0, %v1291
      %v1293 = vpop.f32.mrb[0].mxu0
      %v1294 = vadd.f32 0.0, %v1293
      %v1295 = vpop.f32.mrb[0].mxu0
      %v1296 = vadd.f32 0.0, %v1295
      %v1297 = vpop.f32.mrb[0].mxu0
      %v1298 = vadd.f32 0.0, %v1297
      %1299 = vmatprep.mubr.bf16.mxu0 0
      %1300 = vmatmul.mubr.bf16.gmra.mrb[0].mxu0 %v1038
      %v1301 = vpop.f32.mrb[0].mxu0
      %v1302 = vadd.f32 0.0, %v1301
      %v1303 = vpop.f32.mrb[0].mxu0
      %v1304 = vadd.f32 0.0, %v1303
      %v1305 = vpop.f32.mrb[0].mxu0
      %v1306 = vadd.f32 0.0, %v1305
      %v1307 = vpop.f32.mrb[0].mxu0
      %v1308 = vadd.f32 0.0, %v1307
      %1309 = vmatprep.mubr.bf16.mxu0 0
      %1310 = vmatmul.mubr.bf16.gmra.mrb[0].mxu0 %v1041
      %v1311 = vpop.f32.mrb[0].mxu0
      %v1312 = vadd.f32 0.0, %v1311
      %v1313 = vpop.f32.mrb[0].mxu0
      %v1314 = vadd.f32 0.0, %v1313
      %v1315 = vpop.f32.mrb[0].mxu0
      %v1316 = vadd.f32 0.0, %v1315
      %v1317 = vpop.f32.mrb[0].mxu0
      %v1318 = vadd.f32 0.0, %v1317
      %1319 = vmatprep.mubr.bf16.mxu0 0
      %1320 = vmatmul.mubr.bf16.gmra.mrb[0].mxu0 %v1044
      %v1321 = vpop.f32.mrb[0].mxu0
      %v1322 = vadd.f32 0.0, %v1321
      %v1323 = vpop.f32.mrb[0].mxu0
      %v1324 = vadd.f32 0.0, %v1323
      %v1325 = vpop.f32.mrb[0].mxu0
      %v1326 = vadd.f32 0.0, %v1325
      %v1327 = vpop.f32.mrb[0].mxu0
      %v1328 = vadd.f32 0.0, %v1327
      %1329 = vmatprep.mubr.bf16.mxu0 0
      %1330 = vmatmul.mubr.bf16.gmra.mrb[0].mxu0 %v1047
      %v1331 = vpop.f32.mrb[0].mxu0
      %v1332 = vadd.f32 0.0, %v1331
      %v1333 = vpop.f32.mrb[0].mxu0
      %v1334 = vadd.f32 0.0, %v1333
      %v1335 = vpop.f32.mrb[0].mxu0
      %v1336 = vadd.f32 0.0, %v1335
      %v1337 = vpop.f32.mrb[0].mxu0
      %v1338 = vadd.f32 0.0, %v1337
      %1339 = vmatprep.mubr.bf16.mxu0 0
      %1340 = vmatmul.mubr.bf16.gmra.mrb[0].mxu0 %v1050
      %v1341 = vpop.f32.mrb[0].mxu0
      %v1342 = vadd.f32 0.0, %v1341
      %v1343 = vpop.f32.mrb[0].mxu0
      %v1344 = vadd.f32 0.0, %v1343
      %v1345 = vpop.f32.mrb[0].mxu0
      %v1346 = vadd.f32 0.0, %v1345
      %v1347 = vpop.f32.mrb[0].mxu0
      %v1348 = vadd.f32 0.0, %v1347
      %1349 = vmatprep.mubr.bf16.mxu0 0
      %1350 = vmatmul.mubr.bf16.gmra.mrb[0].mxu0 %v1053
      %v1351 = vpop.f32.mrb[0].mxu0
      %v1352 = vadd.f32 0.0, %v1351
      %v1353 = vpop.f32.mrb[0].mxu0
      %v1354 = vadd.f32 0.0, %v1353
      %v1355 = vpop.f32.mrb[0].mxu0
      %v1356 = vadd.f32 0.0, %v1355
      %v1357 = vpop.f32.mrb[0].mxu0
      %v1358 = vadd.f32 0.0, %v1357
      %1359 = vmatprep.mubr.bf16.mxu0 0
      %1360 = vmatmul.mubr.bf16.gmra.mrb[0].mxu0 %v1056
      %v1361 = vpop.f32.mrb[0].mxu0
      %v1362 = vadd.f32 0.0, %v1361
      %v1363 = vpop.f32.mrb[0].mxu0
      %v1364 = vadd.f32 0.0, %v1363
      %v1365 = vpop.f32.mrb[0].mxu0
      %v1366 = vadd.f32 0.0, %v1365
      %v1367 = vpop.f32.mrb[0].mxu0
      %v1368 = vadd.f32 0.0, %v1367
      %1369 = vmatprep.mubr.bf16.mxu0 0
      %1370 = vmatmul.mubr.bf16.gmra.mrb[0].mxu0 %v1059
      %v1371 = vpop.f32.mrb[0].mxu0
      %v1372 = vadd.f32 0.0, %v1371
      %v1373 = vpop.f32.mrb[0].mxu0
      %v1374 = vadd.f32 0.0, %v1373
      %v1375 = vpop.f32.mrb[0].mxu0
      %v1376 = vadd.f32 0.0, %v1375
      %v1377 = vpop.f32.mrb[0].mxu0
      %v1378 = vadd.f32 0.0, %v1377
      %1379 = vmatprep.mubr.bf16.mxu0 0
      %1380 = vmatmul.mubr.bf16.gmra.mrb[0].mxu0 %v1062
      %v1381 = vpop.f32.mrb[0].mxu0
      %v1382 = vadd.f32 0.0, %v1381
      %v1383 = vpop.f32.mrb[0].mxu0
      %v1384 = vadd.f32 0.0, %v1383
      %v1385 = vpop.f32.mrb[0].mxu0
      %v1386 = vadd.f32 0.0, %v1385
      %v1387 = vpop.f32.mrb[0].mxu0
      %v1388 = vadd.f32 0.0, %v1387
      %1389 = vmatprep.mubr.bf16.mxu0 0
      %1390 = vmatmul.mubr.bf16.gmra.mrb[0].mxu0 %v1065
      %v1391 = vpop.f32.mrb[0].mxu0
      %v1392 = vadd.f32 0.0, %v1391
      %v1393 = vpop.f32.mrb[0].mxu0
      %v1394 = vadd.f32 0.0, %v1393
      %v1395 = vpop.f32.mrb[0].mxu0
      %v1396 = vadd.f32 0.0, %v1395
      %v1397 = vpop.f32.mrb[0].mxu0
      %v1398 = vadd.f32 0.0, %v1397
      %1399 = vmatprep.mubr.bf16.mxu0 0
      %1400 = vmatmul.mubr.bf16.gmra.mrb[0].mxu0 %v1068
      %v1401 = vpop.f32.mrb[0].mxu0
      %v1402 = vadd.f32 0.0, %v1401
      %v1403 = vpop.f32.mrb[0].mxu0
      %v1404 = vadd.f32 0.0, %v1403
      %v1405 = vpop.f32.mrb[0].mxu0
      %v1406 = vadd.f32 0.0, %v1405
      %v1407 = vpop.f32.mrb[0].mxu0
      %v1408 = vadd.f32 0.0, %v1407
      %1409 = vmatprep.mubr.bf16.mxu0 0
      %1410 = vmatmul.mubr.bf16.gmra.mrb[0].mxu0 %v1071
      %v1411 = vpop.f32.mrb[0].mxu0
      %v1412 = vadd.f32 0.0, %v1411
      %v1413 = vpop.f32.mrb[0].mxu0
      %v1414 = vadd.f32 0.0, %v1413
      %v1415 = vpop.f32.mrb[0].mxu0
      %v1416 = vadd.f32 0.0, %v1415
      %v1417 = vpop.f32.mrb[0].mxu0
      %v1418 = vadd.f32 0.0, %v1417
      %1419 = vmatprep.mubr.bf16.mxu0 0
      %1420 = vmatmul.mubr.bf16.gmra.mrb[0].mxu0 %v1074
      %v1421 = vpop.f32.mrb[0].mxu0
      %v1422 = vadd.f32 0.0, %v1421
      %v1423 = vpop.f32.mrb[0].mxu0
      %v1424 = vadd.f32 0.0, %v1423
      %v1425 = vpop.f32.mrb[0].mxu0
      %v1426 = vadd.f32 0.0, %v1425
      %v1427 = vpop.f32.mrb[0].mxu0
      %v1428 = vadd.f32 0.0, %v1427
      %1429 = vmatprep.mubr.bf16.mxu0 0
      %1430 = vmatmul.mubr.bf16.gmra.mrb[0].mxu0 %v1077
      %v1431 = vpop.f32.mrb[0].mxu0
      %v1432 = vadd.f32 0.0, %v1431
      %v1433 = vpop.f32.mrb[0].mxu0
      %v1434 = vadd.f32 0.0, %v1433
      %v1435 = vpop.f32.mrb[0].mxu0
      %v1436 = vadd.f32 0.0, %v1435
      %v1437 = vpop.f32.mrb[0].mxu0
      %v1438 = vadd.f32 0.0, %v1437
      %1439 = vmatprep.mubr.bf16.mxu0 0
      %1440 = vmatmul.mubr.bf16.gmra.mrb[0].mxu0 %v1080
      %v1441 = vpop.f32.mrb[0].mxu0
      %v1442 = vadd.f32 0.0, %v1441
      %v1443 = vpop.f32.mrb[0].mxu0
      %v1444 = vadd.f32 0.0, %v1443
      %v1445 = vpop.f32.mrb[0].mxu0
      %v1446 = vadd.f32 0.0, %v1445
      %v1447 = vpop.f32.mrb[0].mxu0
      %v1448 = vadd.f32 0.0, %v1447
      %1449 = vmatprep.mubr.bf16.mxu0 0
      %1450 = vmatmul.mubr.bf16.gmra.mrb[0].mxu0 %v1083
      %v1451 = vpop.f32.mrb[0].mxu0
      %v1452 = vadd.f32 0.0, %v1451
      %v1453 = vpop.f32.mrb[0].mxu0
      %v1454 = vadd.f32 0.0, %v1453
      %v1455 = vpop.f32.mrb[0].mxu0
      %v1456 = vadd.f32 0.0, %v1455
      %v1457 = vpop.f32.mrb[0].mxu0
      %v1458 = vadd.f32 0.0, %v1457
      %1459 = vmatprep.mubr.bf16.mxu0 0
      %1460 = vmatmul.mubr.bf16.gmra.mrb[0].mxu0 %v1086
      %v1461 = vpop.f32.mrb[0].mxu0
      %v1462 = vadd.f32 0.0, %v1461
      %v1463 = vpop.f32.mrb[0].mxu0
      %v1464 = vadd.f32 0.0, %v1463
      %v1465 = vpop.f32.mrb[0].mxu0
      %v1466 = vadd.f32 0.0, %v1465
      %v1467 = vpop.f32.mrb[0].mxu0
      %v1468 = vadd.f32 0.0, %v1467
      %1469 = vmatprep.mubr.bf16.mxu0 0
      %1470 = vmatmul.mubr.bf16.gmra.mrb[0].mxu0 %v1089
      %v1471 = vpop.f32.mrb[0].mxu0
      %v1472 = vadd.f32 0.0, %v1471
      %v1473 = vpop.f32.mrb[0].mxu0
      %v1474 = vadd.f32 0.0, %v1473
      %v1475 = vpop.f32.mrb[0].mxu0
      %v1476 = vadd.f32 0.0, %v1475
      %v1477 = vpop.f32.mrb[0].mxu0
      %v1478 = vadd.f32 0.0, %v1477
      %1479 = vmatprep.mubr.bf16.mxu0 0
      %1480 = vmatmul.mubr.bf16.gmra.mrb[0].mxu0 %v1092
      %v1481 = vpop.f32.mrb[0].mxu0
      %v1482 = vadd.f32 0.0, %v1481
      %v1483 = vpop.f32.mrb[0].mxu0
      %v1484 = vadd.f32 0.0, %v1483
      %v1485 = vpop.f32.mrb[0].mxu0
      %v1486 = vadd.f32 0.0, %v1485
      %v1487 = vpop.f32.mrb[0].mxu0
      %v1488 = vadd.f32 0.0, %v1487
      %1489 = vmatprep.mubr.bf16.mxu0 0
      %1490 = vmatmul.mubr.bf16.gmra.mrb[0].mxu0 %v1095
      %v1491 = vpop.f32.mrb[0].mxu0
      %v1492 = vadd.f32 0.0, %v1491
      %v1493 = vpop.f32.mrb[0].mxu0
      %v1494 = vadd.f32 0.0, %v1493
      %v1495 = vpop.f32.mrb[0].mxu0
      %v1496 = vadd.f32 0.0, %v1495
      %v1497 = vpop.f32.mrb[0].mxu0
      %v1498 = vadd.f32 0.0, %v1497
      %1499 = vmatprep.mubr.bf16.mxu0 0
      %1500 = vmatmul.mubr.bf16.gmra.mrb[0].mxu0 %v1098
      %v1501 = vpop.f32.mrb[0].mxu0
      %v1502 = vadd.f32 0.0, %v1501
      %v1503 = vpop.f32.mrb[0].mxu0
      %v1504 = vadd.f32 0.0, %v1503
      %v1505 = vpop.f32.mrb[0].mxu0
      %v1506 = vadd.f32 0.0, %v1505
      %v1507 = vpop.f32.mrb[0].mxu0
      %v1508 = vadd.f32 0.0, %v1507
      %1509 = vmatprep.mubr.bf16.mxu0 0
      %1510 = vmatmul.mubr.bf16.gmra.mrb[0].mxu0 %v1101
      %v1511 = vpop.f32.mrb[0].mxu0
      %v1512 = vadd.f32 0.0, %v1511
      %v1513 = vpop.f32.mrb[0].mxu0
      %v1514 = vadd.f32 0.0, %v1513
      %v1515 = vpop.f32.mrb[0].mxu0
      %v1516 = vadd.f32 0.0, %v1515
      %v1517 = vpop.f32.mrb[0].mxu0
      %v1518 = vadd.f32 0.0, %v1517
      %1519 = vmatprep.mubr.bf16.mxu0 0
      %1520 = vmatmul.mubr.bf16.gmra.mrb[0].mxu0 %v1104
      %v1521 = vpop.f32.mrb[0].mxu0
      %v1522 = vadd.f32 0.0, %v1521
      %v1523 = vpop.f32.mrb[0].mxu0
      %v1524 = vadd.f32 0.0, %v1523
      %v1525 = vpop.f32.mrb[0].mxu0
      %v1526 = vadd.f32 0.0, %v1525
      %v1527 = vpop.f32.mrb[0].mxu0
      %v1528 = vadd.f32 0.0, %v1527
      %1529 = vmatprep.mubr.bf16.mxu0 0
      %1530 = vmatmul.mubr.bf16.gmra.mrb[0].mxu0 %v1107
      %v1531 = vpop.f32.mrb[0].mxu0
      %v1532 = vadd.f32 0.0, %v1531
      %v1533 = vpop.f32.mrb[0].mxu0
      %v1534 = vadd.f32 0.0, %v1533
      %v1535 = vpop.f32.mrb[0].mxu0
      %v1536 = vadd.f32 0.0, %v1535
      %v1537 = vpop.f32.mrb[0].mxu0
      %v1538 = vadd.f32 0.0, %v1537
      %1539 = vmatprep.mubr.bf16.mxu0 0
      %1540 = vmatmul.mubr.bf16.gmra.mrb[0].mxu0 %v1110
      %v1541 = vpop.f32.mrb[0].mxu0
      %v1542 = vadd.f32 0.0, %v1541
      %v1543 = vpop.f32.mrb[0].mxu0
      %v1544 = vadd.f32 0.0, %v1543
      %v1545 = vpop.f32.mrb[0].mxu0
      %v1546 = vadd.f32 0.0, %v1545
      %v1547 = vpop.f32.mrb[0].mxu0
      %v1548 = vadd.f32 0.0, %v1547
      %1549 = vmatprep.mubr.bf16.mxu0 0
      %1550 = vmatmul.mubr.bf16.gmra.mrb[0].mxu0 %v1113
      %v1551 = vpop.f32.mrb[0].mxu0
      %v1552 = vadd.f32 0.0, %v1551
      %v1553 = vpop.f32.mrb[0].mxu0
      %v1554 = vadd.f32 0.0, %v1553
      %v1555 = vpop.f32.mrb[0].mxu0
      %v1556 = vadd.f32 0.0, %v1555
      %v1557 = vpop.f32.mrb[0].mxu0
      %v1558 = vadd.f32 0.0, %v1557
      %1559 = vmatprep.mubr.bf16.mxu0 0
      %1560 = vmatmul.mubr.bf16.gmra.mrb[0].mxu0 %v1116
      %v1561 = vpop.f32.mrb[0].mxu0
      %v1562 = vadd.f32 0.0, %v1561
      %v1563 = vpop.f32.mrb[0].mxu0
      %v1564 = vadd.f32 0.0, %v1563
      %v1565 = vpop.f32.mrb[0].mxu0
      %v1566 = vadd.f32 0.0, %v1565
      %v1567 = vpop.f32.mrb[0].mxu0
      %v1568 = vadd.f32 0.0, %v1567
      %1569 = vmatprep.mubr.bf16.mxu0 0
      %1570 = vmatmul.mubr.bf16.gmra.mrb[0].mxu0 %v1119
      %v1571 = vpop.f32.mrb[0].mxu0
      %v1572 = vadd.f32 0.0, %v1571
      %v1573 = vpop.f32.mrb[0].mxu0
      %v1574 = vadd.f32 0.0, %v1573
      %v1575 = vpop.f32.mrb[0].mxu0
      %v1576 = vadd.f32 0.0, %v1575
      %v1577 = vpop.f32.mrb[0].mxu0
      %v1578 = vadd.f32 0.0, %v1577
      %1579 = vmatprep.mubr.bf16.mxu0 0
      %1580 = vmatmul.mubr.bf16.gmra.mrb[0].mxu0 %v1122
      %v1581 = vpop.f32.mrb[0].mxu0
      %v1582 = vadd.f32 0.0, %v1581
      %v1583 = vpop.f32.mrb[0].mxu0
      %v1584 = vadd.f32 0.0, %v1583
      %v1585 = vpop.f32.mrb[0].mxu0
      %v1586 = vadd.f32 0.0, %v1585
      %v1587 = vpop.f32.mrb[0].mxu0
      %v1588 = vadd.f32 0.0, %v1587
      %1589 = vmatprep.mubr.bf16.mxu0 0
      %1590 = vmatmul.mubr.bf16.gmra.mrb[0].mxu0 %v1125
      %v1591 = vpop.f32.mrb[0].mxu0
      %v1592 = vadd.f32 0.0, %v1591
      %v1593 = vpop.f32.mrb[0].mxu0
      %v1594 = vadd.f32 0.0, %v1593
      %v1595 = vpop.f32.mrb[0].mxu0
      %v1596 = vadd.f32 0.0, %v1595
      %v1597 = vpop.f32.mrb[0].mxu0
      %v1598 = vadd.f32 0.0, %v1597
      %1599 = vmatprep.mubr.bf16.mxu0 0
      %1600 = vmatmul.mubr.bf16.gmra.mrb[0].mxu0 %v1128
      %v1601 = vpop.f32.mrb[0].mxu0
      %v1602 = vadd.f32 0.0, %v1601
      %v1603 = vpop.f32.mrb[0].mxu0
      %v1604 = vadd.f32 0.0, %v1603
      %v1605 = vpop.f32.mrb[0].mxu0
      %v1606 = vadd.f32 0.0, %v1605
      %v1607 = vpop.f32.mrb[0].mxu0
      %v1608 = vadd.f32 0.0, %v1607
      %1609 = vmatprep.mubr.bf16.mxu0 0
      %1610 = vmatmul.mubr.bf16.gmra.mrb[0].mxu0 %v1131
      %v1611 = vpop.f32.mrb[0].mxu0
      %v1612 = vadd.f32 0.0, %v1611
      %v1613 = vpop.f32.mrb[0].mxu0
      %v1614 = vadd.f32 0.0, %v1613
      %v1615 = vpop.f32.mrb[0].mxu0
      %v1616 = vadd.f32 0.0, %v1615
      %v1617 = vpop.f32.mrb[0].mxu0
      %v1618 = vadd.f32 0.0, %v1617
      %1619 = vmatprep.mubr.bf16.mxu0 0
      %1620 = vmatmul.mubr.bf16.gmra.mrb[0].mxu0 %v1134
      %v1621 = vpop.f32.mrb[0].mxu0
      %v1622 = vadd.f32 0.0, %v1621
      %v1623 = vpop.f32.mrb[0].mxu0
      %v1624 = vadd.f32 0.0, %v1623
      %v1625 = vpop.f32.mrb[0].mxu0
      %v1626 = vadd.f32 0.0, %v1625
      %v1627 = vpop.f32.mrb[0].mxu0
      %v1628 = vadd.f32 0.0, %v1627
      %1629 = vmatprep.mubr.bf16.mxu0 0
      %1630 = vmatmul.mubr.bf16.gmra.mrb[0].mxu0 %v1137
      %v1631 = vpop.f32.mrb[0].mxu0
      %v1632 = vadd.f32 0.0, %v1631
      %v1633 = vpop.f32.mrb[0].mxu0
      %v1634 = vadd.f32 0.0, %v1633
      %v1635 = vpop.f32.mrb[0].mxu0
      %v1636 = vadd.f32 0.0, %v1635
      %v1637 = vpop.f32.mrb[0].mxu0
      %v1638 = vadd.f32 0.0, %v1637
      %1639 = vmatprep.mubr.bf16.mxu0 0
      %1640 = vmatmul.mubr.bf16.gmra.mrb[0].mxu0 %v1140
      %v1641 = vpop.f32.mrb[0].mxu0
      %v1642 = vadd.f32 0.0, %v1641
      %v1643 = vpop.f32.mrb[0].mxu0
      %v1644 = vadd.f32 0.0, %v1643
      %v1645 = vpop.f32.mrb[0].mxu0
      %v1646 = vadd.f32 0.0, %v1645
      %v1647 = vpop.f32.mrb[0].mxu0
      %v1648 = vadd.f32 0.0, %v1647
      %1649 = vmatprep.mubr.bf16.mxu0 0
      %1650 = vmatmul.mubr.bf16.gmra.mrb[0].mxu0 %v1143
      %v1651 = vpop.f32.mrb[0].mxu0
      %v1652 = vadd.f32 0.0, %v1651
      %v1653 = vpop.f32.mrb[0].mxu0
      %v1654 = vadd.f32 0.0, %v1653
      %v1655 = vpop.f32.mrb[0].mxu0
      %v1656 = vadd.f32 0.0, %v1655
      %v1657 = vpop.f32.mrb[0].mxu0
      %v1658 = vadd.f32 0.0, %v1657
      %1659 = vmatprep.mubr.bf16.mxu0 0
      %1660 = vmatmul.mubr.bf16.gmra.mrb[0].mxu0 %v1146
      %v1661 = vpop.f32.mrb[0].mxu0
      %v1662 = vadd.f32 0.0, %v1661
      %v1663 = vpop.f32.mrb[0].mxu0
      %v1664 = vadd.f32 0.0, %v1663
      %v1665 = vpop.f32.mrb[0].mxu0
      %v1666 = vadd.f32 0.0, %v1665
      %v1667 = vpop.f32.mrb[0].mxu0
      %v1668 = vadd.f32 0.0, %v1667
      %1669 = vmatprep.mubr.bf16.mxu0 0
      %1670 = vmatmul.mubr.bf16.gmra.mrb[0].mxu0 %v1149
      %v1671 = vpop.f32.mrb[0].mxu0
      %v1672 = vadd.f32 0.0, %v1671
      %v1673 = vpop.f32.mrb[0].mxu0
      %v1674 = vadd.f32 0.0, %v1673
      %v1675 = vpop.f32.mrb[0].mxu0
      %v1676 = vadd.f32 0.0, %v1675
      %v1677 = vpop.f32.mrb[0].mxu0
      %v1678 = vadd.f32 0.0, %v1677
      %1679 = vmatprep.mubr.bf16.mxu0 0
      %1680 = vmatmul.mubr.bf16.gmra.mrb[0].mxu0 %v1152
      %v1681 = vpop.f32.mrb[0].mxu0
      %v1682 = vadd.f32 0.0, %v1681
      %v1683 = vpop.f32.mrb[0].mxu0
      %v1684 = vadd.f32 0.0, %v1683
      %v1685 = vpop.f32.mrb[0].mxu0
      %v1686 = vadd.f32 0.0, %v1685
      %v1687 = vpop.f32.mrb[0].mxu0
      %v1688 = vadd.f32 0.0, %v1687
      %1689 = vmatprep.mubr.bf16.mxu0 0
      %1690 = vmatmul.mubr.bf16.gmra.mrb[0].mxu0 %v1155
      %v1691 = vpop.f32.mrb[0].mxu0
      %v1692 = vadd.f32 0.0, %v1691
      %v1693 = vpop.f32.mrb[0].mxu0
      %v1694 = vadd.f32 0.0, %v1693
      %v1695 = vpop.f32.mrb[0].mxu0
      %v1696 = vadd.f32 0.0, %v1695
      %v1697 = vpop.f32.mrb[0].mxu0
      %v1698 = vadd.f32 0.0, %v1697
      %1699 = vmatprep.mubr.bf16.mxu0 0
      %1700 = vmatmul.mubr.bf16.gmra.mrb[0].mxu0 %v1158
      %v1701 = vpop.f32.mrb[0].mxu0
      %v1702 = vadd.f32 0.0, %v1701
      %v1703 = vpop.f32.mrb[0].mxu0
      %v1704 = vadd.f32 0.0, %v1703
      %v1705 = vpop.f32.mrb[0].mxu0
      %v1706 = vadd.f32 0.0, %v1705
      %v1707 = vpop.f32.mrb[0].mxu0
      %v1708 = vadd.f32 0.0, %v1707
      %1709 = vmatprep.mubr.bf16.mxu0 0
      %1710 = vmatmul.mubr.bf16.gmra.mrb[0].mxu0 %v1161
      %v1711 = vpop.f32.mrb[0].mxu0
      %v1712 = vadd.f32 0.0, %v1711
      %v1713 = vpop.f32.mrb[0].mxu0
      %v1714 = vadd.f32 0.0, %v1713
      %v1715 = vpop.f32.mrb[0].mxu0
      %v1716 = vadd.f32 0.0, %v1715
      %v1717 = vpop.f32.mrb[0].mxu0
      %v1718 = vadd.f32 0.0, %v1717
      %1719 = vmatprep.mubr.bf16.mxu0 0
      %1720 = vmatmul.mubr.bf16.gmra.mrb[0].mxu0 %v1164
      %v1721 = vpop.f32.mrb[0].mxu0
      %v1722 = vadd.f32 0.0, %v1721
      %v1723 = vpop.f32.mrb[0].mxu0
      %v1724 = vadd.f32 0.0, %v1723
      %v1725 = vpop.f32.mrb[0].mxu0
      %v1726 = vadd.f32 0.0, %v1725
      %v1727 = vpop.f32.mrb[0].mxu0
      %v1728 = vadd.f32 0.0, %v1727
      %1729 = vmatprep.mubr.bf16.mxu0 0
      %1730 = vmatmul.mubr.bf16.gmra.mrb[0].mxu0 %v1167
      %v1731 = vpop.f32.mrb[0].mxu0
      %v1732 = vadd.f32 0.0, %v1731
      %v1733 = vpop.f32.mrb[0].mxu0
      %v1734 = vadd.f32 0.0, %v1733
      %v1735 = vpop.f32.mrb[0].mxu0
      %v1736 = vadd.f32 0.0, %v1735
      %v1737 = vpop.f32.mrb[0].mxu0
      %v1738 = vadd.f32 0.0, %v1737
      %1739 = vmatprep.mubr.bf16.mxu0 0
      %1740 = vmatmul.mubr.bf16.gmra.mrb[0].mxu0 %v1170
      %v1741 = vpop.f32.mrb[0].mxu0
      %v1742 = vadd.f32 0.0, %v1741
      %v1743 = vpop.f32.mrb[0].mxu0
      %v1744 = vadd.f32 0.0, %v1743
      %v1745 = vpop.f32.mrb[0].mxu0
      %v1746 = vadd.f32 0.0, %v1745
      %v1747 = vpop.f32.mrb[0].mxu0
      %v1748 = vadd.f32 0.0, %v1747
      %1749 = vmatprep.mubr.bf16.mxu0 0
      %1750 = vmatmul.mubr.bf16.gmra.mrb[0].mxu0 %v1173
      %v1751 = vpop.f32.mrb[0].mxu0
      %v1752 = vadd.f32 0.0, %v1751
      %v1753 = vpop.f32.mrb[0].mxu0
      %v1754 = vadd.f32 0.0, %v1753
      %v1755 = vpop.f32.mrb[0].mxu0
      %v1756 = vadd.f32 0.0, %v1755
      %v1757 = vpop.f32.mrb[0].mxu0
      %v1758 = vadd.f32 0.0, %v1757
      %1759 = vmatprep.mubr.bf16.mxu0 0
      %1760 = vmatmul.mubr.bf16.gmra.mrb[0].mxu0 %v1176
      %v1761 = vpop.f32.mrb[0].mxu0
      %v1762 = vadd.f32 0.0, %v1761
      %v1763 = vpop.f32.mrb[0].mxu0
      %v1764 = vadd.f32 0.0, %v1763
      %v1765 = vpop.f32.mrb[0].mxu0
      %v1766 = vadd.f32 0.0, %v1765
      %v1767 = vpop.f32.mrb[0].mxu0
      %v1768 = vadd.f32 0.0, %v1767
      %1769 = vmatprep.mubr.bf16.mxu0 0
      %1770 = vmatmul.mubr.bf16.gmra.mrb[0].mxu0 %v1179
      %v1771 = vpop.f32.mrb[0].mxu0
      %v1772 = vadd.f32 0.0, %v1771
      %v1773 = vpop.f32.mrb[0].mxu0
      %v1774 = vadd.f32 0.0, %v1773
      %v1775 = vpop.f32.mrb[0].mxu0
      %v1776 = vadd.f32 0.0, %v1775
      %v1777 = vpop.f32.mrb[0].mxu0
      %v1778 = vadd.f32 0.0, %v1777
      %1779 = vmatprep.mubr.bf16.mxu0 0
      %1780 = vmatmul.mubr.bf16.gmra.mrb[0].mxu0 %v1182
      %v1781 = vpop.f32.mrb[0].mxu0
      %v1782 = vadd.f32 0.0, %v1781
      %v1783 = vpop.f32.mrb[0].mxu0
      %v1784 = vadd.f32 0.0, %v1783
      %v1785 = vpop.f32.mrb[0].mxu0
      %v1786 = vadd.f32 0.0, %v1785
      %v1787 = vpop.f32.mrb[0].mxu0
      %v1788 = vadd.f32 0.0, %v1787
      %1789 = vmatprep.mubr.bf16.mxu0 0
      %1790 = vmatmul.mubr.bf16.gmra.mrb[0].mxu0 %v1185
      %v1791 = vpop.f32.mrb[0].mxu0
      %v1792 = vadd.f32 0.0, %v1791
      %v1793 = vpop.f32.mrb[0].mxu0
      %v1794 = vadd.f32 0.0, %v1793
      %v1795 = vpop.f32.mrb[0].mxu0
      %v1796 = vadd.f32 0.0, %v1795
      %v1797 = vpop.f32.mrb[0].mxu0
      %v1798 = vadd.f32 0.0, %v1797
      %1799 = vmatprep.mubr.bf16.mxu0 0
      %1800 = vmatmul.mubr.bf16.gmra.mrb[0].mxu0 %v1188
      %v1801 = vpop.f32.mrb[0].mxu0
      %v1802 = vadd.f32 0.0, %v1801
      %v1803 = vpop.f32.mrb[0].mxu0
      %v1804 = vadd.f32 0.0, %v1803
      %v1805 = vpop.f32.mrb[0].mxu0
      %v1806 = vadd.f32 0.0, %v1805
      %v1807 = vpop.f32.mrb[0].mxu0
      %v1808 = vadd.f32 0.0, %v1807
      %1809 = vmatprep.mubr.bf16.mxu0 0
      %1810 = vmatmul.mubr.bf16.gmra.mrb[0].mxu0 %v1191
      %v1811 = vpop.f32.mrb[0].mxu0
      %v1812 = vadd.f32 0.0, %v1811
      %v1813 = vpop.f32.mrb[0].mxu0
      %v1814 = vadd.f32 0.0, %v1813
      %v1815 = vpop.f32.mrb[0].mxu0
      %v1816 = vadd.f32 0.0, %v1815
      %v1817 = vpop.f32.mrb[0].mxu0
      %v1818 = vadd.f32 0.0, %v1817
      %1819 = vmatprep.mubr.bf16.mxu0 0
      %1820 = vmatmul.mubr.bf16.gmra.mrb[0].mxu0 %v1194
      %v1821 = vpop.f32.mrb[0].mxu0
      %v1822 = vadd.f32 0.0, %v1821
      %v1823 = vpop.f32.mrb[0].mxu0
      %v1824 = vadd.f32 0.0, %v1823
      %v1825 = vpop.f32.mrb[0].mxu0
      %v1826 = vadd.f32 0.0, %v1825
      %v1827 = vpop.f32.mrb[0].mxu0
      %v1828 = vadd.f32 0.0, %v1827
      %1829 = vmatprep.mubr.bf16.mxu0 0
      %1830 = vmatmul.mubr.bf16.gmra.mrb[0].mxu0 %v1197
      %v1831 = vpop.f32.mrb[0].mxu0
      %v1832 = vadd.f32 0.0, %v1831
      %v1833 = vpop.f32.mrb[0].mxu0
      %v1834 = vadd.f32 0.0, %v1833
      %v1835 = vpop.f32.mrb[0].mxu0
      %v1836 = vadd.f32 0.0, %v1835
      %v1837 = vpop.f32.mrb[0].mxu0
      %v1838 = vadd.f32 0.0, %v1837
      %1839 = vmatprep.mubr.bf16.mxu0 0
      %1840 = vmatmul.mubr.bf16.gmra.mrb[0].mxu0 %v1200
      %v1841 = vpop.f32.mrb[0].mxu0
      %v1842 = vadd.f32 0.0, %v1841
      %v1843 = vpop.f32.mrb[0].mxu0
      %v1844 = vadd.f32 0.0, %v1843
      %v1845 = vpop.f32.mrb[0].mxu0
      %v1846 = vadd.f32 0.0, %v1845
      %v1847 = vpop.f32.mrb[0].mxu0
      %v1848 = vadd.f32 0.0, %v1847
      %1849 = vmatprep.mubr.bf16.mxu0 0
      %1850 = vmatmul.mubr.bf16.gmra.mrb[0].mxu0 %v1203
      %v1851 = vpop.f32.mrb[0].mxu0
      %v1852 = vadd.f32 0.0, %v1851
      %v1853 = vpop.f32.mrb[0].mxu0
      %v1854 = vadd.f32 0.0, %v1853
      %v1855 = vpop.f32.mrb[0].mxu0
      %v1856 = vadd.f32 0.0, %v1855
      %v1857 = vpop.f32.mrb[0].mxu0
      %v1858 = vadd.f32 0.0, %v1857
      %1859 = vmatprep.mubr.bf16.mxu0 0
      %1860 = vmatmul.mubr.bf16.gmra.mrb[0].mxu0 %v1206
      %v1861 = vpop.f32.mrb[0].mxu0
      %v1862 = vadd.f32 0.0, %v1861
      %v1863 = vpop.f32.mrb[0].mxu0
      %v1864 = vadd.f32 0.0, %v1863
      %v1865 = vpop.f32.mrb[0].mxu0
      %v1866 = vadd.f32 0.0, %v1865
      %v1867 = vpop.f32.mrb[0].mxu0
      %v1868 = vadd.f32 0.0, %v1867
      %1869 = vmatprep.mubr.bf16.mxu0 0
      %1870 = vmatmul.mubr.bf16.gmra.mrb[0].mxu0 %v1209
      %v1871 = vpop.f32.mrb[0].mxu0
      %v1872 = vadd.f32 0.0, %v1871
      %v1873 = vpop.f32.mrb[0].mxu0
      %v1874 = vadd.f32 0.0, %v1873
      %v1875 = vpop.f32.mrb[0].mxu0
      %v1876 = vadd.f32 0.0, %v1875
      %v1877 = vpop.f32.mrb[0].mxu0
      %v1878 = vadd.f32 0.0, %v1877
      %1879 = vmatprep.mubr.bf16.mxu0 0
      %1880 = vmatmul.mubr.bf16.gmra.mrb[0].mxu0 %v1212
      %v1881 = vpop.f32.mrb[0].mxu0
      %v1882 = vadd.f32 0.0, %v1881
      %v1883 = vpop.f32.mrb[0].mxu0
      %v1884 = vadd.f32 0.0, %v1883
      %v1885 = vpop.f32.mrb[0].mxu0
      %v1886 = vadd.f32 0.0, %v1885
      %v1887 = vpop.f32.mrb[0].mxu0
      %v1888 = vadd.f32 0.0, %v1887
      %1889 = vmatprep.mubr.bf16.mxu0 0
      %1890 = vmatmul.mubr.bf16.gmra.mrb[0].mxu0 %v1215
      %v1891 = vpop.f32.mrb[0].mxu0
      %v1892 = vadd.f32 0.0, %v1891
      %v1893 = vpop.f32.mrb[0].mxu0
      %v1894 = vadd.f32 0.0, %v1893
      %v1895 = vpop.f32.mrb[0].mxu0
      %v1896 = vadd.f32 0.0, %v1895
      %v1897 = vpop.f32.mrb[0].mxu0
      %v1898 = vadd.f32 0.0, %v1897
      %1899 = vmatprep.mubr.bf16.mxu0 0
      %1900 = vmatmul.mubr.bf16.gmra.mrb[0].mxu0 %v1218
      %v1901 = vpop.f32.mrb[0].mxu0
      %v1902 = vadd.f32 0.0, %v1901
      %v1903 = vpop.f32.mrb[0].mxu0
      %v1904 = vadd.f32 0.0, %v1903
      %v1905 = vpop.f32.mrb[0].mxu0
      %v1906 = vadd.f32 0.0, %v1905
      %v1907 = vpop.f32.mrb[0].mxu0
      %v1908 = vadd.f32 0.0, %v1907
      %1909 = vmatprep.mubr.bf16.mxu0 0
      %1910 = vmatmul.mubr.bf16.gmra.mrb[0].mxu0 %v1221
      %v1911 = vpop.f32.mrb[0].mxu0
      %v1912 = vadd.f32 0.0, %v1911
      %v1913 = vpop.f32.mrb[0].mxu0
      %v1914 = vadd.f32 0.0, %v1913
      %v1915 = vpop.f32.mrb[0].mxu0
      %v1916 = vadd.f32 0.0, %v1915
      %v1917 = vpop.f32.mrb[0].mxu0
      %v1918 = vadd.f32 0.0, %v1917
      %1919 = vmatprep.mubr.bf16.mxu0 0
      %1920 = vmatmul.mubr.bf16.gmra.mrb[0].mxu0 %v1224
      %v1921 = vpop.f32.mrb[0].mxu0
      %v1922 = vadd.f32 0.0, %v1921
      %v1923 = vpop.f32.mrb[0].mxu0
      %v1924 = vadd.f32 0.0, %v1923
      %v1925 = vpop.f32.mrb[0].mxu0
      %v1926 = vadd.f32 0.0, %v1925
      %v1927 = vpop.f32.mrb[0].mxu0
      %v1928 = vadd.f32 0.0, %v1927
      %1929 = vmatprep.mubr.bf16.mxu0 0
      %1930 = vmatmul.mubr.bf16.gmra.mrb[0].mxu0 %v1227
      %v1931 = vpop.f32.mrb[0].mxu0
      %v1932 = vadd.f32 0.0, %v1931
      %v1933 = vpop.f32.mrb[0].mxu0
      %v1934 = vadd.f32 0.0, %v1933
      %v1935 = vpop.f32.mrb[0].mxu0
      %v1936 = vadd.f32 0.0, %v1935
      %v1937 = vpop.f32.mrb[0].mxu0
      %v1938 = vadd.f32 0.0, %v1937
      %1939 = vmatprep.mubr.bf16.mxu0 0
      %1940 = vmatmul.mubr.bf16.gmra.mrb[0].mxu0 %v1230
      %v1941 = vpop.f32.mrb[0].mxu0
      %v1942 = vadd.f32 0.0, %v1941
      %v1943 = vpop.f32.mrb[0].mxu0
      %v1944 = vadd.f32 0.0, %v1943
      %v1945 = vpop.f32.mrb[0].mxu0
      %v1946 = vadd.f32 0.0, %v1945
      %v1947 = vpop.f32.mrb[0].mxu0
      %v1948 = vadd.f32 0.0, %v1947
      %1949 = vmatprep.mubr.bf16.mxu0 0
      %1950 = vmatmul.mubr.bf16.gmra.mrb[0].mxu0 %v1233
      %v1951 = vpop.f32.mrb[0].mxu0
      %v1952 = vadd.f32 0.0, %v1951
      %v1953 = vpop.f32.mrb[0].mxu0
      %v1954 = vadd.f32 0.0, %v1953
      %v1955 = vpop.f32.mrb[0].mxu0
      %v1956 = vadd.f32 0.0, %v1955
      %v1957 = vpop.f32.mrb[0].mxu0
      %v1958 = vadd.f32 0.0, %v1957
      %1959 = vmatprep.mubr.bf16.mxu0 0
      %1960 = vmatmul.mubr.bf16.gmra.mrb[0].mxu0 %v1236
      %v1961 = vpop.f32.mrb[0].mxu0
      %v1962 = vadd.f32 0.0, %v1961
      %v1963 = vpop.f32.mrb[0].mxu0
      %v1964 = vadd.f32 0.0, %v1963
      %v1965 = vpop.f32.mrb[0].mxu0
      %v1966 = vadd.f32 0.0, %v1965
      %v1967 = vpop.f32.mrb[0].mxu0
      %v1968 = vadd.f32 0.0, %v1967
      %1969 = vmatprep.mubr.bf16.mxu0 0
      %1970 = vmatmul.mubr.bf16.gmra.mrb[0].mxu0 %v1239
      %v1971 = vpop.f32.mrb[0].mxu0
      %v1972 = vadd.f32 0.0, %v1971
      %v1973 = vpop.f32.mrb[0].mxu0
      %v1974 = vadd.f32 0.0, %v1973
      %v1975 = vpop.f32.mrb[0].mxu0
      %v1976 = vadd.f32 0.0, %v1975
      %v1977 = vpop.f32.mrb[0].mxu0
      %v1978 = vadd.f32 0.0, %v1977
      %1979 = vmatprep.mubr.bf16.mxu0 0
      %1980 = vmatmul.mubr.bf16.gmra.mrb[0].mxu0 %v1242
      %v1981 = vpop.f32.mrb[0].mxu0
      %v1982 = vadd.f32 0.0, %v1981
      %v1983 = vpop.f32.mrb[0].mxu0
      %v1984 = vadd.f32 0.0, %v1983
      %v1985 = vpop.f32.mrb[0].mxu0
      %v1986 = vadd.f32 0.0, %v1985
      %v1987 = vpop.f32.mrb[0].mxu0
      %v1988 = vadd.f32 0.0, %v1987
      %1989 = vmatprep.mubr.bf16.mxu0 0
      %1990 = vmatmul.mubr.bf16.gmra.mrb[0].mxu0 %v1245
      %v1991 = vpop.f32.mrb[0].mxu0
      %v1992 = vadd.f32 0.0, %v1991
      %v1993 = vpop.f32.mrb[0].mxu0
      %v1994 = vadd.f32 0.0, %v1993
      %v1995 = vpop.f32.mrb[0].mxu0
      %v1996 = vadd.f32 0.0, %v1995
      %v1997 = vpop.f32.mrb[0].mxu0
      %v1998 = vadd.f32 0.0, %v1997
      %1999 = vdwg.mxu0
      %2000 = vmatprep.subr.bf16.mxu0 %v961
      %2001 = vmatpush1.bf16.msra.mxu0 %v960
      %2002 = vmatprep.subr.bf16.mxu0 %v967
      %2003 = vmatpush1.bf16.msra.mxu0 %v966
      %2004 = vmatprep.subr.bf16.mxu0 %v973
      %2005 = vmatpush1.bf16.msra.mxu0 %v972
      %2006 = vmatprep.subr.bf16.mxu0 %v979
      %2007 = vmatpush1.bf16.msra.mxu0 %v978
      %2008 = vmatprep.subr.bf16.mxu0 %v985
      %2009 = vmatpush1.bf16.msra.mxu0 %v984
      %2010 = vmatprep.subr.bf16.mxu0 %v991
      %2011 = vmatpush1.bf16.msra.mxu0 %v990
      %2012 = vmatprep.subr.bf16.mxu0 0
      %2013 = vmatpush1.bf16.msra.mxu0 0
      %2014 = vmatprep.subr.bf16.mxu0 0
      %2015 = vmatpush1.bf16.msra.mxu0 0
      %2016 = vmatprep.subr.bf16.mxu0 0
      %2017 = vmatpush1.bf16.msra.mxu0 0
      %2018 = vmatprep.subr.bf16.mxu0 0
      %2019 = vmatpush1.bf16.msra.mxu0 0
      %2020 = vmatprep.subr.bf16.mxu0 0
      %2021 = vmatpush1.bf16.msra.mxu0 0
      %2022 = vmatprep.subr.bf16.mxu0 0
      %2023 = vmatpush1.bf16.msra.mxu0 0
      %2024 = vmatprep.subr.bf16.mxu0 0
      %2025 = vmatpush1.bf16.msra.mxu0 0
      %2026 = vmatprep.subr.bf16.mxu0 0
      %2027 = vmatpush1.bf16.msra.mxu0 0
      %2028 = vmatprep.subr.bf16.mxu0 0
      %2029 = vmatpush1.bf16.msra.mxu0 0
      %2030 = vmatprep.subr.bf16.mxu0 0
      %2031 = vmatpush1.bf16.msra.mxu0 0
      %2032 = vmatprep.mubr.bf16.mxu0 0
      %2033 = vmatmul.mubr.bf16.gmra.mrb[0].mxu0 %v1032
      %v2034 = vpop.f32.mrb[0].mxu0
      %v2035 = vadd.f32 0.0, %v2034
      %v2036 = vpop.f32.mrb[0].mxu0
      %v2037 = vadd.f32 0.0, %v2036
      %v2038 = vpop.f32.mrb[0].mxu0
      %v2039 = vadd.f32 0.0, %v2038
      %v2040 = vpop.f32.mrb[0].mxu0
      %v2041 = vadd.f32 0.0, %v2040
      %2042 = vmatprep.mubr.bf16.mxu0 0
      %2043 = vmatmul.mubr.bf16.gmra.mrb[0].mxu0 %v1035
      %v2044 = vpop.f32.mrb[0].mxu0
      %v2045 = vadd.f32 0.0, %v2044
      %v2046 = vpop.f32.mrb[0].mxu0
      %v2047 = vadd.f32 0.0, %v2046
      %v2048 = vpop.f32.mrb[0].mxu0
      %v2049 = vadd.f32 0.0, %v2048
      %v2050 = vpop.f32.mrb[0].mxu0
      %v2051 = vadd.f32 0.0, %v2050
      %2052 = vmatprep.mubr.bf16.mxu0 0
      %2053 = vmatmul.mubr.bf16.gmra.mrb[0].mxu0 %v1038
      %v2054 = vpop.f32.mrb[0].mxu0
      %v2055 = vadd.f32 0.0, %v2054
      %v2056 = vpop.f32.mrb[0].mxu0
      %v2057 = vadd.f32 0.0, %v2056
      %v2058 = vpop.f32.mrb[0].mxu0
      %v2059 = vadd.f32 0.0, %v2058
      %v2060 = vpop.f32.mrb[0].mxu0
      %v2061 = vadd.f32 0.0, %v2060
      %2062 = vmatprep.mubr.bf16.mxu0 0
      %2063 = vmatmul.mubr.bf16.gmra.mrb[0].mxu0 %v1041
      %v2064 = vpop.f32.mrb[0].mxu0
      %v2065 = vadd.f32 0.0, %v2064
      %v2066 = vpop.f32.mrb[0].mxu0
      %v2067 = vadd.f32 0.0, %v2066
      %v2068 = vpop.f32.mrb[0].mxu0
      %v2069 = vadd.f32 0.0, %v2068
      %v2070 = vpop.f32.mrb[0].mxu0
      %v2071 = vadd.f32 0.0, %v2070
      %2072 = vmatprep.mubr.bf16.mxu0 0
      %2073 = vmatmul.mubr.bf16.gmra.mrb[0].mxu0 %v1044
      %v2074 = vpop.f32.mrb[0].mxu0
      %v2075 = vadd.f32 0.0, %v2074
      %v2076 = vpop.f32.mrb[0].mxu0
      %v2077 = vadd.f32 0.0, %v2076
      %v2078 = vpop.f32.mrb[0].mxu0
      %v2079 = vadd.f32 0.0, %v2078
      %v2080 = vpop.f32.mrb[0].mxu0
      %v2081 = vadd.f32 0.0, %v2080
      %2082 = vmatprep.mubr.bf16.mxu0 0
      %2083 = vmatmul.mubr.bf16.gmra.mrb[0].mxu0 %v1047
      %v2084 = vpop.f32.mrb[0].mxu0
      %v2085 = vadd.f32 0.0, %v2084
      %v2086 = vpop.f32.mrb[0].mxu0
      %v2087 = vadd.f32 0.0, %v2086
      %v2088 = vpop.f32.mrb[0].mxu0
      %v2089 = vadd.f32 0.0, %v2088
      %v2090 = vpop.f32.mrb[0].mxu0
      %v2091 = vadd.f32 0.0, %v2090
      %2092 = vmatprep.mubr.bf16.mxu0 0
      %2093 = vmatmul.mubr.bf16.gmra.mrb[0].mxu0 %v1050
      %v2094 = vpop.f32.mrb[0].mxu0
      %v2095 = vadd.f32 0.0, %v2094
      %v2096 = vpop.f32.mrb[0].mxu0
      %v2097 = vadd.f32 0.0, %v2096
      %v2098 = vpop.f32.mrb[0].mxu0
      %v2099 = vadd.f32 0.0, %v2098
      %v2100 = vpop.f32.mrb[0].mxu0
      %v2101 = vadd.f32 0.0, %v2100
      %2102 = vmatprep.mubr.bf16.mxu0 0
      %2103 = vmatmul.mubr.bf16.gmra.mrb[0].mxu0 %v1053
      %v2104 = vpop.f32.mrb[0].mxu0
      %v2105 = vadd.f32 0.0, %v2104
      %v2106 = vpop.f32.mrb[0].mxu0
      %v2107 = vadd.f32 0.0, %v2106
      %v2108 = vpop.f32.mrb[0].mxu0
      %v2109 = vadd.f32 0.0, %v2108
      %v2110 = vpop.f32.mrb[0].mxu0
      %v2111 = vadd.f32 0.0, %v2110
      %2112 = vmatprep.mubr.bf16.mxu0 0
      %2113 = vmatmul.mubr.bf16.gmra.mrb[0].mxu0 %v1056
      %v2114 = vpop.f32.mrb[0].mxu0
      %v2115 = vadd.f32 0.0, %v2114
      %v2116 = vpop.f32.mrb[0].mxu0
      %v2117 = vadd.f32 0.0, %v2116
      %v2118 = vpop.f32.mrb[0].mxu0
      %v2119 = vadd.f32 0.0, %v2118
      %v2120 = vpop.f32.mrb[0].mxu0
      %v2121 = vadd.f32 0.0, %v2120
      %2122 = vmatprep.mubr.bf16.mxu0 0
      %2123 = vmatmul.mubr.bf16.gmra.mrb[0].mxu0 %v1059
      %v2124 = vpop.f32.mrb[0].mxu0
      %v2125 = vadd.f32 0.0, %v2124
      %v2126 = vpop.f32.mrb[0].mxu0
      %v2127 = vadd.f32 0.0, %v2126
      %v2128 = vpop.f32.mrb[0].mxu0
      %v2129 = vadd.f32 0.0, %v2128
      %v2130 = vpop.f32.mrb[0].mxu0
      %v2131 = vadd.f32 0.0, %v2130
      %2132 = vmatprep.mubr.bf16.mxu0 0
      %2133 = vmatmul.mubr.bf16.gmra.mrb[0].mxu0 %v1062
      %v2134 = vpop.f32.mrb[0].mxu0
      %v2135 = vadd.f32 0.0, %v2134
      %v2136 = vpop.f32.mrb[0].mxu0
      %v2137 = vadd.f32 0.0, %v2136
      %v2138 = vpop.f32.mrb[0].mxu0
      %v2139 = vadd.f32 0.0, %v2138
      %v2140 = vpop.f32.mrb[0].mxu0
      %v2141 = vadd.f32 0.0, %v2140
      %2142 = vmatprep.mubr.bf16.mxu0 0
      %2143 = vmatmul.mubr.bf16.gmra.mrb[0].mxu0 %v1065
      %v2144 = vpop.f32.mrb[0].mxu0
      %v2145 = vadd.f32 0.0, %v2144
      %v2146 = vpop.f32.mrb[0].mxu0
      %v2147 = vadd.f32 0.0, %v2146
      %v2148 = vpop.f32.mrb[0].mxu0
      %v2149 = vadd.f32 0.0, %v2148
      %v2150 = vpop.f32.mrb[0].mxu0
      %v2151 = vadd.f32 0.0, %v2150
      %2152 = vmatprep.mubr.bf16.mxu0 0
      %2153 = vmatmul.mubr.bf16.gmra.mrb[0].mxu0 %v1068
      %v2154 = vpop.f32.mrb[0].mxu0
      %v2155 = vadd.f32 0.0, %v2154
      %v2156 = vpop.f32.mrb[0].mxu0
      %v2157 = vadd.f32 0.0, %v2156
      %v2158 = vpop.f32.mrb[0].mxu0
      %v2159 = vadd.f32 0.0, %v2158
      %v2160 = vpop.f32.mrb[0].mxu0
      %v2161 = vadd.f32 0.0, %v2160
      %2162 = vmatprep.mubr.bf16.mxu0 0
      %2163 = vmatmul.mubr.bf16.gmra.mrb[0].mxu0 %v1071
      %v2164 = vpop.f32.mrb[0].mxu0
      %v2165 = vadd.f32 0.0, %v2164
      %v2166 = vpop.f32.mrb[0].mxu0
      %v2167 = vadd.f32 0.0, %v2166
      %v2168 = vpop.f32.mrb[0].mxu0
      %v2169 = vadd.f32 0.0, %v2168
      %v2170 = vpop.f32.mrb[0].mxu0
      %v2171 = vadd.f32 0.0, %v2170
      %2172 = vmatprep.mubr.bf16.mxu0 0
      %2173 = vmatmul.mubr.bf16.gmra.mrb[0].mxu0 %v1074
      %v2174 = vpop.f32.mrb[0].mxu0
      %v2175 = vadd.f32 0.0, %v2174
      %v2176 = vpop.f32.mrb[0].mxu0
      %v2177 = vadd.f32 0.0, %v2176
      %v2178 = vpop.f32.mrb[0].mxu0
      %v2179 = vadd.f32 0.0, %v2178
      %v2180 = vpop.f32.mrb[0].mxu0
      %v2181 = vadd.f32 0.0, %v2180
      %2182 = vmatprep.mubr.bf16.mxu0 0
      %2183 = vmatmul.mubr.bf16.gmra.mrb[0].mxu0 %v1077
      %v2184 = vpop.f32.mrb[0].mxu0
      %v2185 = vadd.f32 0.0, %v2184
      %v2186 = vpop.f32.mrb[0].mxu0
      %v2187 = vadd.f32 0.0, %v2186
      %v2188 = vpop.f32.mrb[0].mxu0
      %v2189 = vadd.f32 0.0, %v2188
      %v2190 = vpop.f32.mrb[0].mxu0
      %v2191 = vadd.f32 0.0, %v2190
      %2192 = vmatprep.mubr.bf16.mxu0 0
      %2193 = vmatmul.mubr.bf16.gmra.mrb[0].mxu0 %v1080
      %v2194 = vpop.f32.mrb[0].mxu0
      %v2195 = vadd.f32 0.0, %v2194
      %v2196 = vpop.f32.mrb[0].mxu0
      %v2197 = vadd.f32 0.0, %v2196
      %v2198 = vpop.f32.mrb[0].mxu0
      %v2199 = vadd.f32 0.0, %v2198
      %v2200 = vpop.f32.mrb[0].mxu0
      %v2201 = vadd.f32 0.0, %v2200
      %2202 = vmatprep.mubr.bf16.mxu0 0
      %2203 = vmatmul.mubr.bf16.gmra.mrb[0].mxu0 %v1083
      %v2204 = vpop.f32.mrb[0].mxu0
      %v2205 = vadd.f32 0.0, %v2204
      %v2206 = vpop.f32.mrb[0].mxu0
      %v2207 = vadd.f32 0.0, %v2206
      %v2208 = vpop.f32.mrb[0].mxu0
      %v2209 = vadd.f32 0.0, %v2208
      %v2210 = vpop.f32.mrb[0].mxu0
      %v2211 = vadd.f32 0.0, %v2210
      %2212 = vmatprep.mubr.bf16.mxu0 0
      %2213 = vmatmul.mubr.bf16.gmra.mrb[0].mxu0 %v1086
      %v2214 = vpop.f32.mrb[0].mxu0
      %v2215 = vadd.f32 0.0, %v2214
      %v2216 = vpop.f32.mrb[0].mxu0
      %v2217 = vadd.f32 0.0, %v2216
      %v2218 = vpop.f32.mrb[0].mxu0
      %v2219 = vadd.f32 0.0, %v2218
      %v2220 = vpop.f32.mrb[0].mxu0
      %v2221 = vadd.f32 0.0, %v2220
      %2222 = vmatprep.mubr.bf16.mxu0 0
      %2223 = vmatmul.mubr.bf16.gmra.mrb[0].mxu0 %v1089
      %v2224 = vpop.f32.mrb[0].mxu0
      %v2225 = vadd.f32 0.0, %v2224
      %v2226 = vpop.f32.mrb[0].mxu0
      %v2227 = vadd.f32 0.0, %v2226
      %v2228 = vpop.f32.mrb[0].mxu0
      %v2229 = vadd.f32 0.0, %v2228
      %v2230 = vpop.f32.mrb[0].mxu0
      %v2231 = vadd.f32 0.0, %v2230
      %2232 = vmatprep.mubr.bf16.mxu0 0
      %2233 = vmatmul.mubr.bf16.gmra.mrb[0].mxu0 %v1092
      %v2234 = vpop.f32.mrb[0].mxu0
      %v2235 = vadd.f32 0.0, %v2234
      %v2236 = vpop.f32.mrb[0].mxu0
      %v2237 = vadd.f32 0.0, %v2236
      %v2238 = vpop.f32.mrb[0].mxu0
      %v2239 = vadd.f32 0.0, %v2238
      %v2240 = vpop.f32.mrb[0].mxu0
      %v2241 = vadd.f32 0.0, %v2240
      %2242 = vmatprep.mubr.bf16.mxu0 0
      %2243 = vmatmul.mubr.bf16.gmra.mrb[0].mxu0 %v1095
      %v2244 = vpop.f32.mrb[0].mxu0
      %v2245 = vadd.f32 0.0, %v2244
      %v2246 = vpop.f32.mrb[0].mxu0
      %v2247 = vadd.f32 0.0, %v2246
      %v2248 = vpop.f32.mrb[0].mxu0
      %v2249 = vadd.f32 0.0, %v2248
      %v2250 = vpop.f32.mrb[0].mxu0
      %v2251 = vadd.f32 0.0, %v2250
      %2252 = vmatprep.mubr.bf16.mxu0 0
      %2253 = vmatmul.mubr.bf16.gmra.mrb[0].mxu0 %v1098
      %v2254 = vpop.f32.mrb[0].mxu0
      %v2255 = vadd.f32 0.0, %v2254
      %v2256 = vpop.f32.mrb[0].mxu0
      %v2257 = vadd.f32 0.0, %v2256
      %v2258 = vpop.f32.mrb[0].mxu0
      %v2259 = vadd.f32 0.0, %v2258
      %v2260 = vpop.f32.mrb[0].mxu0
      %v2261 = vadd.f32 0.0, %v2260
      %2262 = vmatprep.mubr.bf16.mxu0 0
      %2263 = vmatmul.mubr.bf16.gmra.mrb[0].mxu0 %v1101
      %v2264 = vpop.f32.mrb[0].mxu0
      %v2265 = vadd.f32 0.0, %v2264
      %v2266 = vpop.f32.mrb[0].mxu0
      %v2267 = vadd.f32 0.0, %v2266
      %v2268 = vpop.f32.mrb[0].mxu0
      %v2269 = vadd.f32 0.0, %v2268
      %v2270 = vpop.f32.mrb[0].mxu0
      %v2271 = vadd.f32 0.0, %v2270
      %2272 = vmatprep.mubr.bf16.mxu0 0
      %2273 = vmatmul.mubr.bf16.gmra.mrb[0].mxu0 %v1104
      %v2274 = vpop.f32.mrb[0].mxu0
      %v2275 = vadd.f32 0.0, %v2274
      %v2276 = vpop.f32.mrb[0].mxu0
      %v2277 = vadd.f32 0.0, %v2276
      %v2278 = vpop.f32.mrb[0].mxu0
      %v2279 = vadd.f32 0.0, %v2278
      %v2280 = vpop.f32.mrb[0].mxu0
      %v2281 = vadd.f32 0.0, %v2280
      %2282 = vmatprep.mubr.bf16.mxu0 0
      %2283 = vmatmul.mubr.bf16.gmra.mrb[0].mxu0 %v1107
      %v2284 = vpop.f32.mrb[0].mxu0
      %v2285 = vadd.f32 0.0, %v2284
      %v2286 = vpop.f32.mrb[0].mxu0
      %v2287 = vadd.f32 0.0, %v2286
      %v2288 = vpop.f32.mrb[0].mxu0
      %v2289 = vadd.f32 0.0, %v2288
      %v2290 = vpop.f32.mrb[0].mxu0
      %v2291 = vadd.f32 0.0, %v2290
      %2292 = vmatprep.mubr.bf16.mxu0 0
      %2293 = vmatmul.mubr.bf16.gmra.mrb[0].mxu0 %v1110
      %v2294 = vpop.f32.mrb[0].mxu0
      %v2295 = vadd.f32 0.0, %v2294
      %v2296 = vpop.f32.mrb[0].mxu0
      %v2297 = vadd.f32 0.0, %v2296
      %v2298 = vpop.f32.mrb[0].mxu0
      %v2299 = vadd.f32 0.0, %v2298
      %v2300 = vpop.f32.mrb[0].mxu0
      %v2301 = vadd.f32 0.0, %v2300
      %2302 = vmatprep.mubr.bf16.mxu0 0
      %2303 = vmatmul.mubr.bf16.gmra.mrb[0].mxu0 %v1113
      %v2304 = vpop.f32.mrb[0].mxu0
      %v2305 = vadd.f32 0.0, %v2304
      %v2306 = vpop.f32.mrb[0].mxu0
      %v2307 = vadd.f32 0.0, %v2306
      %v2308 = vpop.f32.mrb[0].mxu0
      %v2309 = vadd.f32 0.0, %v2308
      %v2310 = vpop.f32.mrb[0].mxu0
      %v2311 = vadd.f32 0.0, %v2310
      %2312 = vmatprep.mubr.bf16.mxu0 0
      %2313 = vmatmul.mubr.bf16.gmra.mrb[0].mxu0 %v1116
      %v2314 = vpop.f32.mrb[0].mxu0
      %v2315 = vadd.f32 0.0, %v2314
      %v2316 = vpop.f32.mrb[0].mxu0
      %v2317 = vadd.f32 0.0, %v2316
      %v2318 = vpop.f32.mrb[0].mxu0
      %v2319 = vadd.f32 0.0, %v2318
      %v2320 = vpop.f32.mrb[0].mxu0
      %v2321 = vadd.f32 0.0, %v2320
      %2322 = vmatprep.mubr.bf16.mxu0 0
      %2323 = vmatmul.mubr.bf16.gmra.mrb[0].mxu0 %v1119
      %v2324 = vpop.f32.mrb[0].mxu0
      %v2325 = vadd.f32 0.0, %v2324
      %v2326 = vpop.f32.mrb[0].mxu0
      %v2327 = vadd.f32 0.0, %v2326
      %v2328 = vpop.f32.mrb[0].mxu0
      %v2329 = vadd.f32 0.0, %v2328
      %v2330 = vpop.f32.mrb[0].mxu0
      %v2331 = vadd.f32 0.0, %v2330
      %2332 = vmatprep.mubr.bf16.mxu0 0
      %2333 = vmatmul.mubr.bf16.gmra.mrb[0].mxu0 %v1122
      %v2334 = vpop.f32.mrb[0].mxu0
      %v2335 = vadd.f32 0.0, %v2334
      %v2336 = vpop.f32.mrb[0].mxu0
      %v2337 = vadd.f32 0.0, %v2336
      %v2338 = vpop.f32.mrb[0].mxu0
      %v2339 = vadd.f32 0.0, %v2338
      %v2340 = vpop.f32.mrb[0].mxu0
      %v2341 = vadd.f32 0.0, %v2340
      %2342 = vmatprep.mubr.bf16.mxu0 0
      %2343 = vmatmul.mubr.bf16.gmra.mrb[0].mxu0 %v1125
      %v2344 = vpop.f32.mrb[0].mxu0
      %v2345 = vadd.f32 0.0, %v2344
      %v2346 = vpop.f32.mrb[0].mxu0
      %v2347 = vadd.f32 0.0, %v2346
      %v2348 = vpop.f32.mrb[0].mxu0
      %v2349 = vadd.f32 0.0, %v2348
      %v2350 = vpop.f32.mrb[0].mxu0
      %v2351 = vadd.f32 0.0, %v2350
      %2352 = vmatprep.mubr.bf16.mxu0 0
      %2353 = vmatmul.mubr.bf16.gmra.mrb[0].mxu0 %v1128
      %v2354 = vpop.f32.mrb[0].mxu0
      %v2355 = vadd.f32 0.0, %v2354
      %v2356 = vpop.f32.mrb[0].mxu0
      %v2357 = vadd.f32 0.0, %v2356
      %v2358 = vpop.f32.mrb[0].mxu0
      %v2359 = vadd.f32 0.0, %v2358
      %v2360 = vpop.f32.mrb[0].mxu0
      %v2361 = vadd.f32 0.0, %v2360
      %2362 = vmatprep.mubr.bf16.mxu0 0
      %2363 = vmatmul.mubr.bf16.gmra.mrb[0].mxu0 %v1131
      %v2364 = vpop.f32.mrb[0].mxu0
      %v2365 = vadd.f32 0.0, %v2364
      %v2366 = vpop.f32.mrb[0].mxu0
      %v2367 = vadd.f32 0.0, %v2366
      %v2368 = vpop.f32.mrb[0].mxu0
      %v2369 = vadd.f32 0.0, %v2368
      %v2370 = vpop.f32.mrb[0].mxu0
      %v2371 = vadd.f32 0.0, %v2370
      %2372 = vmatprep.mubr.bf16.mxu0 0
      %2373 = vmatmul.mubr.bf16.gmra.mrb[0].mxu0 %v1134
      %v2374 = vpop.f32.mrb[0].mxu0
      %v2375 = vadd.f32 0.0, %v2374
      %v2376 = vpop.f32.mrb[0].mxu0
      %v2377 = vadd.f32 0.0, %v2376
      %v2378 = vpop.f32.mrb[0].mxu0
      %v2379 = vadd.f32 0.0, %v2378
      %v2380 = vpop.f32.mrb[0].mxu0
      %v2381 = vadd.f32 0.0, %v2380
      %2382 = vmatprep.mubr.bf16.mxu0 0
      %2383 = vmatmul.mubr.bf16.gmra.mrb[0].mxu0 %v1137
      %v2384 = vpop.f32.mrb[0].mxu0
      %v2385 = vadd.f32 0.0, %v2384
      %v2386 = vpop.f32.mrb[0].mxu0
      %v2387 = vadd.f32 0.0, %v2386
      %v2388 = vpop.f32.mrb[0].mxu0
      %v2389 = vadd.f32 0.0, %v2388
      %v2390 = vpop.f32.mrb[0].mxu0
      %v2391 = vadd.f32 0.0, %v2390
      %2392 = vmatprep.mubr.bf16.mxu0 0
      %2393 = vmatmul.mubr.bf16.gmra.mrb[0].mxu0 %v1140
      %v2394 = vpop.f32.mrb[0].mxu0
      %v2395 = vadd.f32 0.0, %v2394
      %v2396 = vpop.f32.mrb[0].mxu0
      %v2397 = vadd.f32 0.0, %v2396
      %v2398 = vpop.f32.mrb[0].mxu0
      %v2399 = vadd.f32 0.0, %v2398
      %v2400 = vpop.f32.mrb[0].mxu0
      %v2401 = vadd.f32 0.0, %v2400
      %2402 = vmatprep.mubr.bf16.mxu0 0
      %2403 = vmatmul.mubr.bf16.gmra.mrb[0].mxu0 %v1143
      %v2404 = vpop.f32.mrb[0].mxu0
      %v2405 = vadd.f32 0.0, %v2404
      %v2406 = vpop.f32.mrb[0].mxu0
      %v2407 = vadd.f32 0.0, %v2406
      %v2408 = vpop.f32.mrb[0].mxu0
      %v2409 = vadd.f32 0.0, %v2408
      %v2410 = vpop.f32.mrb[0].mxu0
      %v2411 = vadd.f32 0.0, %v2410
      %2412 = vmatprep.mubr.bf16.mxu0 0
      %2413 = vmatmul.mubr.bf16.gmra.mrb[0].mxu0 %v1146
      %v2414 = vpop.f32.mrb[0].mxu0
      %v2415 = vadd.f32 0.0, %v2414
      %v2416 = vpop.f32.mrb[0].mxu0
      %v2417 = vadd.f32 0.0, %v2416
      %v2418 = vpop.f32.mrb[0].mxu0
      %v2419 = vadd.f32 0.0, %v2418
      %v2420 = vpop.f32.mrb[0].mxu0
      %v2421 = vadd.f32 0.0, %v2420
      %2422 = vmatprep.mubr.bf16.mxu0 0
      %2423 = vmatmul.mubr.bf16.gmra.mrb[0].mxu0 %v1149
      %v2424 = vpop.f32.mrb[0].mxu0
      %v2425 = vadd.f32 0.0, %v2424
      %v2426 = vpop.f32.mrb[0].mxu0
      %v2427 = vadd.f32 0.0, %v2426
      %v2428 = vpop.f32.mrb[0].mxu0
      %v2429 = vadd.f32 0.0, %v2428
      %v2430 = vpop.f32.mrb[0].mxu0
      %v2431 = vadd.f32 0.0, %v2430
      %2432 = vmatprep.mubr.bf16.mxu0 0
      %2433 = vmatmul.mubr.bf16.gmra.mrb[0].mxu0 %v1152
      %v2434 = vpop.f32.mrb[0].mxu0
      %v2435 = vadd.f32 0.0, %v2434
      %v2436 = vpop.f32.mrb[0].mxu0
      %v2437 = vadd.f32 0.0, %v2436
      %v2438 = vpop.f32.mrb[0].mxu0
      %v2439 = vadd.f32 0.0, %v2438
      %v2440 = vpop.f32.mrb[0].mxu0
      %v2441 = vadd.f32 0.0, %v2440
      %2442 = vmatprep.mubr.bf16.mxu0 0
      %2443 = vmatmul.mubr.bf16.gmra.mrb[0].mxu0 %v1155
      %v2444 = vpop.f32.mrb[0].mxu0
      %v2445 = vadd.f32 0.0, %v2444
      %v2446 = vpop.f32.mrb[0].mxu0
      %v2447 = vadd.f32 0.0, %v2446
      %v2448 = vpop.f32.mrb[0].mxu0
      %v2449 = vadd.f32 0.0, %v2448
      %v2450 = vpop.f32.mrb[0].mxu0
      %v2451 = vadd.f32 0.0, %v2450
      %2452 = vmatprep.mubr.bf16.mxu0 0
      %2453 = vmatmul.mubr.bf16.gmra.mrb[0].mxu0 %v1158
      %v2454 = vpop.f32.mrb[0].mxu0
      %v2455 = vadd.f32 0.0, %v2454
      %v2456 = vpop.f32.mrb[0].mxu0
      %v2457 = vadd.f32 0.0, %v2456
      %v2458 = vpop.f32.mrb[0].mxu0
      %v2459 = vadd.f32 0.0, %v2458
      %v2460 = vpop.f32.mrb[0].mxu0
      %v2461 = vadd.f32 0.0, %v2460
      %2462 = vmatprep.mubr.bf16.mxu0 0
      %2463 = vmatmul.mubr.bf16.gmra.mrb[0].mxu0 %v1161
      %v2464 = vpop.f32.mrb[0].mxu0
      %v2465 = vadd.f32 0.0, %v2464
      %v2466 = vpop.f32.mrb[0].mxu0
      %v2467 = vadd.f32 0.0, %v2466
      %v2468 = vpop.f32.mrb[0].mxu0
      %v2469 = vadd.f32 0.0, %v2468
      %v2470 = vpop.f32.mrb[0].mxu0
      %v2471 = vadd.f32 0.0, %v2470
      %2472 = vmatprep.mubr.bf16.mxu0 0
      %2473 = vmatmul.mubr.bf16.gmra.mrb[0].mxu0 %v1164
      %v2474 = vpop.f32.mrb[0].mxu0
      %v2475 = vadd.f32 0.0, %v2474
      %v2476 = vpop.f32.mrb[0].mxu0
      %v2477 = vadd.f32 0.0, %v2476
      %v2478 = vpop.f32.mrb[0].mxu0
      %v2479 = vadd.f32 0.0, %v2478
      %v2480 = vpop.f32.mrb[0].mxu0
      %v2481 = vadd.f32 0.0, %v2480
      %2482 = vmatprep.mubr.bf16.mxu0 0
      %2483 = vmatmul.mubr.bf16.gmra.mrb[0].mxu0 %v1167
      %v2484 = vpop.f32.mrb[0].mxu0
      %v2485 = vadd.f32 0.0, %v2484
      %v2486 = vpop.f32.mrb[0].mxu0
      %v2487 = vadd.f32 0.0, %v2486
      %v2488 = vpop.f32.mrb[0].mxu0
      %v2489 = vadd.f32 0.0, %v2488
      %v2490 = vpop.f32.mrb[0].mxu0
      %v2491 = vadd.f32 0.0, %v2490
      %2492 = vmatprep.mubr.bf16.mxu0 0
      %2493 = vmatmul.mubr.bf16.gmra.mrb[0].mxu0 %v1170
      %v2494 = vpop.f32.mrb[0].mxu0
      %v2495 = vadd.f32 0.0, %v2494
      %v2496 = vpop.f32.mrb[0].mxu0
      %v2497 = vadd.f32 0.0, %v2496
      %v2498 = vpop.f32.mrb[0].mxu0
      %v2499 = vadd.f32 0.0, %v2498
      %v2500 = vpop.f32.mrb[0].mxu0
      %v2501 = vadd.f32 0.0, %v2500
      %2502 = vmatprep.mubr.bf16.mxu0 0
      %2503 = vmatmul.mubr.bf16.gmra.mrb[0].mxu0 %v1173
      %v2504 = vpop.f32.mrb[0].mxu0
      %v2505 = vadd.f32 0.0, %v2504
      %v2506 = vpop.f32.mrb[0].mxu0
      %v2507 = vadd.f32 0.0, %v2506
      %v2508 = vpop.f32.mrb[0].mxu0
      %v2509 = vadd.f32 0.0, %v2508
      %v2510 = vpop.f32.mrb[0].mxu0
      %v2511 = vadd.f32 0.0, %v2510
      %2512 = vmatprep.mubr.bf16.mxu0 0
      %2513 = vmatmul.mubr.bf16.gmra.mrb[0].mxu0 %v1176
      %v2514 = vpop.f32.mrb[0].mxu0
      %v2515 = vadd.f32 0.0, %v2514
      %v2516 = vpop.f32.mrb[0].mxu0
      %v2517 = vadd.f32 0.0, %v2516
      %v2518 = vpop.f32.mrb[0].mxu0
      %v2519 = vadd.f32 0.0, %v2518
      %v2520 = vpop.f32.mrb[0].mxu0
      %v2521 = vadd.f32 0.0, %v2520
      %2522 = vmatprep.mubr.bf16.mxu0 0
      %2523 = vmatmul.mubr.bf16.gmra.mrb[0].mxu0 %v1179
      %v2524 = vpop.f32.mrb[0].mxu0
      %v2525 = vadd.f32 0.0, %v2524
      %v2526 = vpop.f32.mrb[0].mxu0
      %v2527 = vadd.f32 0.0, %v2526
      %v2528 = vpop.f32.mrb[0].mxu0
      %v2529 = vadd.f32 0.0, %v2528
      %v2530 = vpop.f32.mrb[0].mxu0
      %v2531 = vadd.f32 0.0, %v2530
      %2532 = vmatprep.mubr.bf16.mxu0 0
      %2533 = vmatmul.mubr.bf16.gmra.mrb[0].mxu0 %v1182
      %v2534 = vpop.f32.mrb[0].mxu0
      %v2535 = vadd.f32 0.0, %v2534
      %v2536 = vpop.f32.mrb[0].mxu0
      %v2537 = vadd.f32 0.0, %v2536
      %v2538 = vpop.f32.mrb[0].mxu0
      %v2539 = vadd.f32 0.0, %v2538
      %v2540 = vpop.f32.mrb[0].mxu0
      %v2541 = vadd.f32 0.0, %v2540
      %2542 = vmatprep.mubr.bf16.mxu0 0
      %2543 = vmatmul.mubr.bf16.gmra.mrb[0].mxu0 %v1185
      %v2544 = vpop.f32.mrb[0].mxu0
      %v2545 = vadd.f32 0.0, %v2544
      %v2546 = vpop.f32.mrb[0].mxu0
      %v2547 = vadd.f32 0.0, %v2546
      %v2548 = vpop.f32.mrb[0].mxu0
      %v2549 = vadd.f32 0.0, %v2548
      %v2550 = vpop.f32.mrb[0].mxu0
      %v2551 = vadd.f32 0.0, %v2550
      %2552 = vmatprep.mubr.bf16.mxu0 0
      %2553 = vmatmul.mubr.bf16.gmra.mrb[0].mxu0 %v1188
      %v2554 = vpop.f32.mrb[0].mxu0
      %v2555 = vadd.f32 0.0, %v2554
      %v2556 = vpop.f32.mrb[0].mxu0
      %v2557 = vadd.f32 0.0, %v2556
      %v2558 = vpop.f32.mrb[0].mxu0
      %v2559 = vadd.f32 0.0, %v2558
      %v2560 = vpop.f32.mrb[0].mxu0
      %v2561 = vadd.f32 0.0, %v2560
      %2562 = vmatprep.mubr.bf16.mxu0 0
      %2563 = vmatmul.mubr.bf16.gmra.mrb[0].mxu0 %v1191
      %v2564 = vpop.f32.mrb[0].mxu0
      %v2565 = vadd.f32 0.0, %v2564
      %v2566 = vpop.f32.mrb[0].mxu0
      %v2567 = vadd.f32 0.0, %v2566
      %v2568 = vpop.f32.mrb[0].mxu0
      %v2569 = vadd.f32 0.0, %v2568
      %v2570 = vpop.f32.mrb[0].mxu0
      %v2571 = vadd.f32 0.0, %v2570
      %2572 = vmatprep.mubr.bf16.mxu0 0
      %2573 = vmatmul.mubr.bf16.gmra.mrb[0].mxu0 %v1194
      %v2574 = vpop.f32.mrb[0].mxu0
      %v2575 = vadd.f32 0.0, %v2574
      %v2576 = vpop.f32.mrb[0].mxu0
      %v2577 = vadd.f32 0.0, %v2576
      %v2578 = vpop.f32.mrb[0].mxu0
      %v2579 = vadd.f32 0.0, %v2578
      %v2580 = vpop.f32.mrb[0].mxu0
      %v2581 = vadd.f32 0.0, %v2580
      %2582 = vmatprep.mubr.bf16.mxu0 0
      %2583 = vmatmul.mubr.bf16.gmra.mrb[0].mxu0 %v1197
      %v2584 = vpop.f32.mrb[0].mxu0
      %v2585 = vadd.f32 0.0, %v2584
      %v2586 = vpop.f32.mrb[0].mxu0
      %v2587 = vadd.f32 0.0, %v2586
      %v2588 = vpop.f32.mrb[0].mxu0
      %v2589 = vadd.f32 0.0, %v2588
      %v2590 = vpop.f32.mrb[0].mxu0
      %v2591 = vadd.f32 0.0, %v2590
      %2592 = vmatprep.mubr.bf16.mxu0 0
      %2593 = vmatmul.mubr.bf16.gmra.mrb[0].mxu0 %v1200
      %v2594 = vpop.f32.mrb[0].mxu0
      %v2595 = vadd.f32 0.0, %v2594
      %v2596 = vpop.f32.mrb[0].mxu0
      %v2597 = vadd.f32 0.0, %v2596
      %v2598 = vpop.f32.mrb[0].mxu0
      %v2599 = vadd.f32 0.0, %v2598
      %v2600 = vpop.f32.mrb[0].mxu0
      %v2601 = vadd.f32 0.0, %v2600
      %2602 = vmatprep.mubr.bf16.mxu0 0
      %2603 = vmatmul.mubr.bf16.gmra.mrb[0].mxu0 %v1203
      %v2604 = vpop.f32.mrb[0].mxu0
      %v2605 = vadd.f32 0.0, %v2604
      %v2606 = vpop.f32.mrb[0].mxu0
      %v2607 = vadd.f32 0.0, %v2606
      %v2608 = vpop.f32.mrb[0].mxu0
      %v2609 = vadd.f32 0.0, %v2608
      %v2610 = vpop.f32.mrb[0].mxu0
      %v2611 = vadd.f32 0.0, %v2610
      %2612 = vmatprep.mubr.bf16.mxu0 0
      %2613 = vmatmul.mubr.bf16.gmra.mrb[0].mxu0 %v1206
      %v2614 = vpop.f32.mrb[0].mxu0
      %v2615 = vadd.f32 0.0, %v2614
      %v2616 = vpop.f32.mrb[0].mxu0
      %v2617 = vadd.f32 0.0, %v2616
      %v2618 = vpop.f32.mrb[0].mxu0
      %v2619 = vadd.f32 0.0, %v2618
      %v2620 = vpop.f32.mrb[0].mxu0
      %v2621 = vadd.f32 0.0, %v2620
      %2622 = vmatprep.mubr.bf16.mxu0 0
      %2623 = vmatmul.mubr.bf16.gmra.mrb[0].mxu0 %v1209
      %v2624 = vpop.f32.mrb[0].mxu0
      %v2625 = vadd.f32 0.0, %v2624
      %v2626 = vpop.f32.mrb[0].mxu0
      %v2627 = vadd.f32 0.0, %v2626
      %v2628 = vpop.f32.mrb[0].mxu0
      %v2629 = vadd.f32 0.0, %v2628
      %v2630 = vpop.f32.mrb[0].mxu0
      %v2631 = vadd.f32 0.0, %v2630
      %2632 = vmatprep.mubr.bf16.mxu0 0
      %2633 = vmatmul.mubr.bf16.gmra.mrb[0].mxu0 %v1212
      %v2634 = vpop.f32.mrb[0].mxu0
      %v2635 = vadd.f32 0.0, %v2634
      %v2636 = vpop.f32.mrb[0].mxu0
      %v2637 = vadd.f32 0.0, %v2636
      %v2638 = vpop.f32.mrb[0].mxu0
      %v2639 = vadd.f32 0.0, %v2638
      %v2640 = vpop.f32.mrb[0].mxu0
      %v2641 = vadd.f32 0.0, %v2640
      %2642 = vmatprep.mubr.bf16.mxu0 0
      %2643 = vmatmul.mubr.bf16.gmra.mrb[0].mxu0 %v1215
      %v2644 = vpop.f32.mrb[0].mxu0
      %v2645 = vadd.f32 0.0, %v2644
      %v2646 = vpop.f32.mrb[0].mxu0
      %v2647 = vadd.f32 0.0, %v2646
      %v2648 = vpop.f32.mrb[0].mxu0
      %v2649 = vadd.f32 0.0, %v2648
      %v2650 = vpop.f32.mrb[0].mxu0
      %v2651 = vadd.f32 0.0, %v2650
      %2652 = vmatprep.mubr.bf16.mxu0 0
      %2653 = vmatmul.mubr.bf16.gmra.mrb[0].mxu0 %v1218
      %v2654 = vpop.f32.mrb[0].mxu0
      %v2655 = vadd.f32 0.0, %v2654
      %v2656 = vpop.f32.mrb[0].mxu0
      %v2657 = vadd.f32 0.0, %v2656
      %v2658 = vpop.f32.mrb[0].mxu0
      %v2659 = vadd.f32 0.0, %v2658
      %v2660 = vpop.f32.mrb[0].mxu0
      %v2661 = vadd.f32 0.0, %v2660
      %2662 = vmatprep.mubr.bf16.mxu0 0
      %2663 = vmatmul.mubr.bf16.gmra.mrb[0].mxu0 %v1221
      %v2664 = vpop.f32.mrb[0].mxu0
      %v2665 = vadd.f32 0.0, %v2664
      %v2666 = vpop.f32.mrb[0].mxu0
      %v2667 = vadd.f32 0.0, %v2666
      %v2668 = vpop.f32.mrb[0].mxu0
      %v2669 = vadd.f32 0.0, %v2668
      %v2670 = vpop.f32.mrb[0].mxu0
      %v2671 = vadd.f32 0.0, %v2670
      %2672 = vmatprep.mubr.bf16.mxu0 0
      %2673 = vmatmul.mubr.bf16.gmra.mrb[0].mxu0 %v1224
      %v2674 = vpop.f32.mrb[0].mxu0
      %v2675 = vadd.f32 0.0, %v2674
      %v2676 = vpop.f32.mrb[0].mxu0
      %v2677 = vadd.f32 0.0, %v2676
      %v2678 = vpop.f32.mrb[0].mxu0
      %v2679 = vadd.f32 0.0, %v2678
      %v2680 = vpop.f32.mrb[0].mxu0
      %v2681 = vadd.f32 0.0, %v2680
      %2682 = vmatprep.mubr.bf16.mxu0 0
      %2683 = vmatmul.mubr.bf16.gmra.mrb[0].mxu0 %v1227
      %v2684 = vpop.f32.mrb[0].mxu0
      %v2685 = vadd.f32 0.0, %v2684
      %v2686 = vpop.f32.mrb[0].mxu0
      %v2687 = vadd.f32 0.0, %v2686
      %v2688 = vpop.f32.mrb[0].mxu0
      %v2689 = vadd.f32 0.0, %v2688
      %v2690 = vpop.f32.mrb[0].mxu0
      %v2691 = vadd.f32 0.0, %v2690
      %2692 = vmatprep.mubr.bf16.mxu0 0
      %2693 = vmatmul.mubr.bf16.gmra.mrb[0].mxu0 %v1230
      %v2694 = vpop.f32.mrb[0].mxu0
      %v2695 = vadd.f32 0.0, %v2694
      %v2696 = vpop.f32.mrb[0].mxu0
      %v2697 = vadd.f32 0.0, %v2696
      %v2698 = vpop.f32.mrb[0].mxu0
      %v2699 = vadd.f32 0.0, %v2698
      %v2700 = vpop.f32.mrb[0].mxu0
      %v2701 = vadd.f32 0.0, %v2700
      %2702 = vmatprep.mubr.bf16.mxu0 0
      %2703 = vmatmul.mubr.bf16.gmra.mrb[0].mxu0 %v1233
      %v2704 = vpop.f32.mrb[0].mxu0
      %v2705 = vadd.f32 0.0, %v2704
      %v2706 = vpop.f32.mrb[0].mxu0
      %v2707 = vadd.f32 0.0, %v2706
      %v2708 = vpop.f32.mrb[0].mxu0
      %v2709 = vadd.f32 0.0, %v2708
      %v2710 = vpop.f32.mrb[0].mxu0
      %v2711 = vadd.f32 0.0, %v2710
      %2712 = vmatprep.mubr.bf16.mxu0 0
      %2713 = vmatmul.mubr.bf16.gmra.mrb[0].mxu0 %v1236
      %v2714 = vpop.f32.mrb[0].mxu0
      %v2715 = vadd.f32 0.0, %v2714
      %v2716 = vpop.f32.mrb[0].mxu0
      %v2717 = vadd.f32 0.0, %v2716
      %v2718 = vpop.f32.mrb[0].mxu0
      %v2719 = vadd.f32 0.0, %v2718
      %v2720 = vpop.f32.mrb[0].mxu0
      %v2721 = vadd.f32 0.0, %v2720
      %2722 = vmatprep.mubr.bf16.mxu0 0
      %2723 = vmatmul.mubr.bf16.gmra.mrb[0].mxu0 %v1239
      %v2724 = vpop.f32.mrb[0].mxu0
      %v2725 = vadd.f32 0.0, %v2724
      %v2726 = vpop.f32.mrb[0].mxu0
      %v2727 = vadd.f32 0.0, %v2726
      %v2728 = vpop.f32.mrb[0].mxu0
      %v2729 = vadd.f32 0.0, %v2728
      %v2730 = vpop.f32.mrb[0].mxu0
      %v2731 = vadd.f32 0.0, %v2730
      %2732 = vmatprep.mubr.bf16.mxu0 0
      %2733 = vmatmul.mubr.bf16.gmra.mrb[0].mxu0 %v1242
      %v2734 = vpop.f32.mrb[0].mxu0
      %v2735 = vadd.f32 0.0, %v2734
      %v2736 = vpop.f32.mrb[0].mxu0
      %v2737 = vadd.f32 0.0, %v2736
      %v2738 = vpop.f32.mrb[0].mxu0
      %v2739 = vadd.f32 0.0, %v2738
      %v2740 = vpop.f32.mrb[0].mxu0
      %v2741 = vadd.f32 0.0, %v2740
      %2742 = vmatprep.mubr.bf16.mxu0 0
      %2743 = vmatmul.mubr.bf16.gmra.mrb[0].mxu0 %v1245
      %v2744 = vpop.f32.mrb[0].mxu0
      %v2745 = vadd.f32 0.0, %v2744
      %v2746 = vpop.f32.mrb[0].mxu0
      %v2747 = vadd.f32 0.0, %v2746
      %v2748 = vpop.f32.mrb[0].mxu0
      %v2749 = vadd.f32 0.0, %v2748
      %v2750 = vpop.f32.mrb[0].mxu0
      %v2751 = vadd.f32 0.0, %v2750
      %2752 = vdwg.mxu0
      %2753 = vmatprep.subr.bf16.mxu0 %v963
      %2754 = vmatpush1.bf16.msra.mxu0 %v962
      %2755 = vmatprep.subr.bf16.mxu0 %v969
      %2756 = vmatpush1.bf16.msra.mxu0 %v968
      %2757 = vmatprep.subr.bf16.mxu0 %v975
      %2758 = vmatpush1.bf16.msra.mxu0 %v974
      %2759 = vmatprep.subr.bf16.mxu0 %v981
      %2760 = vmatpush1.bf16.msra.mxu0 %v980
      %2761 = vmatprep.subr.bf16.mxu0 %v987
      %2762 = vmatpush1.bf16.msra.mxu0 %v986
      %2763 = vmatprep.subr.bf16.mxu0 %v993
      %2764 = vmatpush1.bf16.msra.mxu0 %v992
      %2765 = vmatprep.subr.bf16.mxu0 0
      %2766 = vmatpush1.bf16.msra.mxu0 0
      %2767 = vmatprep.subr.bf16.mxu0 0
      %2768 = vmatpush1.bf16.msra.mxu0 0
      %2769 = vmatprep.subr.bf16.mxu0 0
      %2770 = vmatpush1.bf16.msra.mxu0 0
      %2771 = vmatprep.subr.bf16.mxu0 0
      %2772 = vmatpush1.bf16.msra.mxu0 0
      %2773 = vmatprep.subr.bf16.mxu0 0
      %2774 = vmatpush1.bf16.msra.mxu0 0
      %2775 = vmatprep.subr.bf16.mxu0 0
      %2776 = vmatpush1.bf16.msra.mxu0 0
      %2777 = vmatprep.subr.bf16.mxu0 0
      %2778 = vmatpush1.bf16.msra.mxu0 0
      %2779 = vmatprep.subr.bf16.mxu0 0
      %2780 = vmatpush1.bf16.msra.mxu0 0
      %2781 = vmatprep.subr.bf16.mxu0 0
      %2782 = vmatpush1.bf16.msra.mxu0 0
      %2783 = vmatprep.subr.bf16.mxu0 0
      %2784 = vmatpush1.bf16.msra.mxu0 0
      %2785 = vmatprep.mubr.bf16.mxu0 0
      %2786 = vmatmul.mubr.bf16.gmra.mrb[0].mxu0 %v1032
      %v2787 = vpop.f32.mrb[0].mxu0
      %v2788 = vadd.f32 0.0, %v2787
      %v2789 = vpop.f32.mrb[0].mxu0
      %v2790 = vadd.f32 0.0, %v2789
      %v2791 = vpop.f32.mrb[0].mxu0
      %v2792 = vadd.f32 0.0, %v2791
      %v2793 = vpop.f32.mrb[0].mxu0
      %v2794 = vadd.f32 0.0, %v2793
      %2795 = vmatprep.mubr.bf16.mxu0 0
      %2796 = vmatmul.mubr.bf16.gmra.mrb[0].mxu0 %v1035
      %v2797 = vpop.f32.mrb[0].mxu0
      %v2798 = vadd.f32 0.0, %v2797
      %v2799 = vpop.f32.mrb[0].mxu0
      %v2800 = vadd.f32 0.0, %v2799
      %v2801 = vpop.f32.mrb[0].mxu0
      %v2802 = vadd.f32 0.0, %v2801
      %v2803 = vpop.f32.mrb[0].mxu0
      %v2804 = vadd.f32 0.0, %v2803
      %2805 = vmatprep.mubr.bf16.mxu0 0
      %2806 = vmatmul.mubr.bf16.gmra.mrb[0].mxu0 %v1038
      %v2807 = vpop.f32.mrb[0].mxu0
      %v2808 = vadd.f32 0.0, %v2807
      %v2809 = vpop.f32.mrb[0].mxu0
      %v2810 = vadd.f32 0.0, %v2809
      %v2811 = vpop.f32.mrb[0].mxu0
      %v2812 = vadd.f32 0.0, %v2811
      %v2813 = vpop.f32.mrb[0].mxu0
      %v2814 = vadd.f32 0.0, %v2813
      %2815 = vmatprep.mubr.bf16.mxu0 0
      %2816 = vmatmul.mubr.bf16.gmra.mrb[0].mxu0 %v1041
      %v2817 = vpop.f32.mrb[0].mxu0
      %v2818 = vadd.f32 0.0, %v2817
      %v2819 = vpop.f32.mrb[0].mxu0
      %v2820 = vadd.f32 0.0, %v2819
      %v2821 = vpop.f32.mrb[0].mxu0
      %v2822 = vadd.f32 0.0, %v2821
      %v2823 = vpop.f32.mrb[0].mxu0
      %v2824 = vadd.f32 0.0, %v2823
      %2825 = vmatprep.mubr.bf16.mxu0 0
      %2826 = vmatmul.mubr.bf16.gmra.mrb[0].mxu0 %v1044
      %v2827 = vpop.f32.mrb[0].mxu0
      %v2828 = vadd.f32 0.0, %v2827
      %v2829 = vpop.f32.mrb[0].mxu0
      %v2830 = vadd.f32 0.0, %v2829
      %v2831 = vpop.f32.mrb[0].mxu0
      %v2832 = vadd.f32 0.0, %v2831
      %v2833 = vpop.f32.mrb[0].mxu0
      %v2834 = vadd.f32 0.0, %v2833
      %2835 = vmatprep.mubr.bf16.mxu0 0
      %2836 = vmatmul.mubr.bf16.gmra.mrb[0].mxu0 %v1047
      %v2837 = vpop.f32.mrb[0].mxu0
      %v2838 = vadd.f32 0.0, %v2837
      %v2839 = vpop.f32.mrb[0].mxu0
      %v2840 = vadd.f32 0.0, %v2839
      %v2841 = vpop.f32.mrb[0].mxu0
      %v2842 = vadd.f32 0.0, %v2841
      %v2843 = vpop.f32.mrb[0].mxu0
      %v2844 = vadd.f32 0.0, %v2843
      %2845 = vmatprep.mubr.bf16.mxu0 0
      %2846 = vmatmul.mubr.bf16.gmra.mrb[0].mxu0 %v1050
      %v2847 = vpop.f32.mrb[0].mxu0
      %v2848 = vadd.f32 0.0, %v2847
      %v2849 = vpop.f32.mrb[0].mxu0
      %v2850 = vadd.f32 0.0, %v2849
      %v2851 = vpop.f32.mrb[0].mxu0
      %v2852 = vadd.f32 0.0, %v2851
      %v2853 = vpop.f32.mrb[0].mxu0
      %v2854 = vadd.f32 0.0, %v2853
      %2855 = vmatprep.mubr.bf16.mxu0 0
      %2856 = vmatmul.mubr.bf16.gmra.mrb[0].mxu0 %v1053
      %v2857 = vpop.f32.mrb[0].mxu0
      %v2858 = vadd.f32 0.0, %v2857
      %v2859 = vpop.f32.mrb[0].mxu0
      %v2860 = vadd.f32 0.0, %v2859
      %v2861 = vpop.f32.mrb[0].mxu0
      %v2862 = vadd.f32 0.0, %v2861
      %v2863 = vpop.f32.mrb[0].mxu0
      %v2864 = vadd.f32 0.0, %v2863
      %2865 = vmatprep.mubr.bf16.mxu0 0
      %2866 = vmatmul.mubr.bf16.gmra.mrb[0].mxu0 %v1056
      %v2867 = vpop.f32.mrb[0].mxu0
      %v2868 = vadd.f32 0.0, %v2867
      %v2869 = vpop.f32.mrb[0].mxu0
      %v2870 = vadd.f32 0.0, %v2869
      %v2871 = vpop.f32.mrb[0].mxu0
      %v2872 = vadd.f32 0.0, %v2871
      %v2873 = vpop.f32.mrb[0].mxu0
      %v2874 = vadd.f32 0.0, %v2873
      %2875 = vmatprep.mubr.bf16.mxu0 0
      %2876 = vmatmul.mubr.bf16.gmra.mrb[0].mxu0 %v1059
      %v2877 = vpop.f32.mrb[0].mxu0
      %v2878 = vadd.f32 0.0, %v2877
      %v2879 = vpop.f32.mrb[0].mxu0
      %v2880 = vadd.f32 0.0, %v2879
      %v2881 = vpop.f32.mrb[0].mxu0
      %v2882 = vadd.f32 0.0, %v2881
      %v2883 = vpop.f32.mrb[0].mxu0
      %v2884 = vadd.f32 0.0, %v2883
      %2885 = vmatprep.mubr.bf16.mxu0 0
      %2886 = vmatmul.mubr.bf16.gmra.mrb[0].mxu0 %v1062
      %v2887 = vpop.f32.mrb[0].mxu0
      %v2888 = vadd.f32 0.0, %v2887
      %v2889 = vpop.f32.mrb[0].mxu0
      %v2890 = vadd.f32 0.0, %v2889
      %v2891 = vpop.f32.mrb[0].mxu0
      %v2892 = vadd.f32 0.0, %v2891
      %v2893 = vpop.f32.mrb[0].mxu0
      %v2894 = vadd.f32 0.0, %v2893
      %2895 = vmatprep.mubr.bf16.mxu0 0
      %2896 = vmatmul.mubr.bf16.gmra.mrb[0].mxu0 %v1065
      %v2897 = vpop.f32.mrb[0].mxu0
      %v2898 = vadd.f32 0.0, %v2897
      %v2899 = vpop.f32.mrb[0].mxu0
      %v2900 = vadd.f32 0.0, %v2899
      %v2901 = vpop.f32.mrb[0].mxu0
      %v2902 = vadd.f32 0.0, %v2901
      %v2903 = vpop.f32.mrb[0].mxu0
      %v2904 = vadd.f32 0.0, %v2903
      %2905 = vmatprep.mubr.bf16.mxu0 0
      %2906 = vmatmul.mubr.bf16.gmra.mrb[0].mxu0 %v1068
      %v2907 = vpop.f32.mrb[0].mxu0
      %v2908 = vadd.f32 0.0, %v2907
      %v2909 = vpop.f32.mrb[0].mxu0
      %v2910 = vadd.f32 0.0, %v2909
      %v2911 = vpop.f32.mrb[0].mxu0
      %v2912 = vadd.f32 0.0, %v2911
      %v2913 = vpop.f32.mrb[0].mxu0
      %v2914 = vadd.f32 0.0, %v2913
      %2915 = vmatprep.mubr.bf16.mxu0 0
      %2916 = vmatmul.mubr.bf16.gmra.mrb[0].mxu0 %v1071
      %v2917 = vpop.f32.mrb[0].mxu0
      %v2918 = vadd.f32 0.0, %v2917
      %v2919 = vpop.f32.mrb[0].mxu0
      %v2920 = vadd.f32 0.0, %v2919
      %v2921 = vpop.f32.mrb[0].mxu0
      %v2922 = vadd.f32 0.0, %v2921
      %v2923 = vpop.f32.mrb[0].mxu0
      %v2924 = vadd.f32 0.0, %v2923
      %2925 = vmatprep.mubr.bf16.mxu0 0
      %2926 = vmatmul.mubr.bf16.gmra.mrb[0].mxu0 %v1074
      %v2927 = vpop.f32.mrb[0].mxu0
      %v2928 = vadd.f32 0.0, %v2927
      %v2929 = vpop.f32.mrb[0].mxu0
      %v2930 = vadd.f32 0.0, %v2929
      %v2931 = vpop.f32.mrb[0].mxu0
      %v2932 = vadd.f32 0.0, %v2931
      %v2933 = vpop.f32.mrb[0].mxu0
      %v2934 = vadd.f32 0.0, %v2933
      %2935 = vmatprep.mubr.bf16.mxu0 0
      %2936 = vmatmul.mubr.bf16.gmra.mrb[0].mxu0 %v1077
      %v2937 = vpop.f32.mrb[0].mxu0
      %v2938 = vadd.f32 0.0, %v2937
      %v2939 = vpop.f32.mrb[0].mxu0
      %v2940 = vadd.f32 0.0, %v2939
      %v2941 = vpop.f32.mrb[0].mxu0
      %v2942 = vadd.f32 0.0, %v2941
      %v2943 = vpop.f32.mrb[0].mxu0
      %v2944 = vadd.f32 0.0, %v2943
      %2945 = vmatprep.mubr.bf16.mxu0 0
      %2946 = vmatmul.mubr.bf16.gmra.mrb[0].mxu0 %v1080
      %v2947 = vpop.f32.mrb[0].mxu0
      %v2948 = vadd.f32 0.0, %v2947
      %v2949 = vpop.f32.mrb[0].mxu0
      %v2950 = vadd.f32 0.0, %v2949
      %v2951 = vpop.f32.mrb[0].mxu0
      %v2952 = vadd.f32 0.0, %v2951
      %v2953 = vpop.f32.mrb[0].mxu0
      %v2954 = vadd.f32 0.0, %v2953
      %2955 = vmatprep.mubr.bf16.mxu0 0
      %2956 = vmatmul.mubr.bf16.gmra.mrb[0].mxu0 %v1083
      %v2957 = vpop.f32.mrb[0].mxu0
      %v2958 = vadd.f32 0.0, %v2957
      %v2959 = vpop.f32.mrb[0].mxu0
      %v2960 = vadd.f32 0.0, %v2959
      %v2961 = vpop.f32.mrb[0].mxu0
      %v2962 = vadd.f32 0.0, %v2961
      %v2963 = vpop.f32.mrb[0].mxu0
      %v2964 = vadd.f32 0.0, %v2963
      %2965 = vmatprep.mubr.bf16.mxu0 0
      %2966 = vmatmul.mubr.bf16.gmra.mrb[0].mxu0 %v1086
      %v2967 = vpop.f32.mrb[0].mxu0
      %v2968 = vadd.f32 0.0, %v2967
      %v2969 = vpop.f32.mrb[0].mxu0
      %v2970 = vadd.f32 0.0, %v2969
      %v2971 = vpop.f32.mrb[0].mxu0
      %v2972 = vadd.f32 0.0, %v2971
      %v2973 = vpop.f32.mrb[0].mxu0
      %v2974 = vadd.f32 0.0, %v2973
      %2975 = vmatprep.mubr.bf16.mxu0 0
      %2976 = vmatmul.mubr.bf16.gmra.mrb[0].mxu0 %v1089
      %v2977 = vpop.f32.mrb[0].mxu0
      %v2978 = vadd.f32 0.0, %v2977
      %v2979 = vpop.f32.mrb[0].mxu0
      %v2980 = vadd.f32 0.0, %v2979
      %v2981 = vpop.f32.mrb[0].mxu0
      %v2982 = vadd.f32 0.0, %v2981
      %v2983 = vpop.f32.mrb[0].mxu0
      %v2984 = vadd.f32 0.0, %v2983
      %2985 = vmatprep.mubr.bf16.mxu0 0
      %2986 = vmatmul.mubr.bf16.gmra.mrb[0].mxu0 %v1092
      %v2987 = vpop.f32.mrb[0].mxu0
      %v2988 = vadd.f32 0.0, %v2987
      %v2989 = vpop.f32.mrb[0].mxu0
      %v2990 = vadd.f32 0.0, %v2989
      %v2991 = vpop.f32.mrb[0].mxu0
      %v2992 = vadd.f32 0.0, %v2991
      %v2993 = vpop.f32.mrb[0].mxu0
      %v2994 = vadd.f32 0.0, %v2993
      %2995 = vmatprep.mubr.bf16.mxu0 0
      %2996 = vmatmul.mubr.bf16.gmra.mrb[0].mxu0 %v1095
      %v2997 = vpop.f32.mrb[0].mxu0
      %v2998 = vadd.f32 0.0, %v2997
      %v2999 = vpop.f32.mrb[0].mxu0
      %v3000 = vadd.f32 0.0, %v2999
      %v3001 = vpop.f32.mrb[0].mxu0
      %v3002 = vadd.f32 0.0, %v3001
      %v3003 = vpop.f32.mrb[0].mxu0
      %v3004 = vadd.f32 0.0, %v3003
      %3005 = vmatprep.mubr.bf16.mxu0 0
      %3006 = vmatmul.mubr.bf16.gmra.mrb[0].mxu0 %v1098
      %v3007 = vpop.f32.mrb[0].mxu0
      %v3008 = vadd.f32 0.0, %v3007
      %v3009 = vpop.f32.mrb[0].mxu0
      %v3010 = vadd.f32 0.0, %v3009
      %v3011 = vpop.f32.mrb[0].mxu0
      %v3012 = vadd.f32 0.0, %v3011
      %v3013 = vpop.f32.mrb[0].mxu0
      %v3014 = vadd.f32 0.0, %v3013
      %3015 = vmatprep.mubr.bf16.mxu0 0
      %3016 = vmatmul.mubr.bf16.gmra.mrb[0].mxu0 %v1101
      %v3017 = vpop.f32.mrb[0].mxu0
      %v3018 = vadd.f32 0.0, %v3017
      %v3019 = vpop.f32.mrb[0].mxu0
      %v3020 = vadd.f32 0.0, %v3019
      %v3021 = vpop.f32.mrb[0].mxu0
      %v3022 = vadd.f32 0.0, %v3021
      %v3023 = vpop.f32.mrb[0].mxu0
      %v3024 = vadd.f32 0.0, %v3023
      %3025 = vmatprep.mubr.bf16.mxu0 0
      %3026 = vmatmul.mubr.bf16.gmra.mrb[0].mxu0 %v1104
      %v3027 = vpop.f32.mrb[0].mxu0
      %v3028 = vadd.f32 0.0, %v3027
      %v3029 = vpop.f32.mrb[0].mxu0
      %v3030 = vadd.f32 0.0, %v3029
      %v3031 = vpop.f32.mrb[0].mxu0
      %v3032 = vadd.f32 0.0, %v3031
      %v3033 = vpop.f32.mrb[0].mxu0
      %v3034 = vadd.f32 0.0, %v3033
      %3035 = vmatprep.mubr.bf16.mxu0 0
      %3036 = vmatmul.mubr.bf16.gmra.mrb[0].mxu0 %v1107
      %v3037 = vpop.f32.mrb[0].mxu0
      %v3038 = vadd.f32 0.0, %v3037
      %v3039 = vpop.f32.mrb[0].mxu0
      %v3040 = vadd.f32 0.0, %v3039
      %v3041 = vpop.f32.mrb[0].mxu0
      %v3042 = vadd.f32 0.0, %v3041
      %v3043 = vpop.f32.mrb[0].mxu0
      %v3044 = vadd.f32 0.0, %v3043
      %3045 = vmatprep.mubr.bf16.mxu0 0
      %3046 = vmatmul.mubr.bf16.gmra.mrb[0].mxu0 %v1110
      %v3047 = vpop.f32.mrb[0].mxu0
      %v3048 = vadd.f32 0.0, %v3047
      %v3049 = vpop.f32.mrb[0].mxu0
      %v3050 = vadd.f32 0.0, %v3049
      %v3051 = vpop.f32.mrb[0].mxu0
      %v3052 = vadd.f32 0.0, %v3051
      %v3053 = vpop.f32.mrb[0].mxu0
      %v3054 = vadd.f32 0.0, %v3053
      %3055 = vmatprep.mubr.bf16.mxu0 0
      %3056 = vmatmul.mubr.bf16.gmra.mrb[0].mxu0 %v1113
      %v3057 = vpop.f32.mrb[0].mxu0
      %v3058 = vadd.f32 0.0, %v3057
      %v3059 = vpop.f32.mrb[0].mxu0
      %v3060 = vadd.f32 0.0, %v3059
      %v3061 = vpop.f32.mrb[0].mxu0
      %v3062 = vadd.f32 0.0, %v3061
      %v3063 = vpop.f32.mrb[0].mxu0
      %v3064 = vadd.f32 0.0, %v3063
      %3065 = vmatprep.mubr.bf16.mxu0 0
      %3066 = vmatmul.mubr.bf16.gmra.mrb[0].mxu0 %v1116
      %v3067 = vpop.f32.mrb[0].mxu0
      %v3068 = vadd.f32 0.0, %v3067
      %v3069 = vpop.f32.mrb[0].mxu0
      %v3070 = vadd.f32 0.0, %v3069
      %v3071 = vpop.f32.mrb[0].mxu0
      %v3072 = vadd.f32 0.0, %v3071
      %v3073 = vpop.f32.mrb[0].mxu0
      %v3074 = vadd.f32 0.0, %v3073
      %3075 = vmatprep.mubr.bf16.mxu0 0
      %3076 = vmatmul.mubr.bf16.gmra.mrb[0].mxu0 %v1119
      %v3077 = vpop.f32.mrb[0].mxu0
      %v3078 = vadd.f32 0.0, %v3077
      %v3079 = vpop.f32.mrb[0].mxu0
      %v3080 = vadd.f32 0.0, %v3079
      %v3081 = vpop.f32.mrb[0].mxu0
      %v3082 = vadd.f32 0.0, %v3081
      %v3083 = vpop.f32.mrb[0].mxu0
      %v3084 = vadd.f32 0.0, %v3083
      %3085 = vmatprep.mubr.bf16.mxu0 0
      %3086 = vmatmul.mubr.bf16.gmra.mrb[0].mxu0 %v1122
      %v3087 = vpop.f32.mrb[0].mxu0
      %v3088 = vadd.f32 0.0, %v3087
      %v3089 = vpop.f32.mrb[0].mxu0
      %v3090 = vadd.f32 0.0, %v3089
      %v3091 = vpop.f32.mrb[0].mxu0
      %v3092 = vadd.f32 0.0, %v3091
      %v3093 = vpop.f32.mrb[0].mxu0
      %v3094 = vadd.f32 0.0, %v3093
      %3095 = vmatprep.mubr.bf16.mxu0 0
      %3096 = vmatmul.mubr.bf16.gmra.mrb[0].mxu0 %v1125
      %v3097 = vpop.f32.mrb[0].mxu0
      %v3098 = vadd.f32 0.0, %v3097
      %v3099 = vpop.f32.mrb[0].mxu0
      %v3100 = vadd.f32 0.0, %v3099
      %v3101 = vpop.f32.mrb[0].mxu0
      %v3102 = vadd.f32 0.0, %v3101
      %v3103 = vpop.f32.mrb[0].mxu0
      %v3104 = vadd.f32 0.0, %v3103
      %3105 = vmatprep.mubr.bf16.mxu0 0
      %3106 = vmatmul.mubr.bf16.gmra.mrb[0].mxu0 %v1128
      %v3107 = vpop.f32.mrb[0].mxu0
      %v3108 = vadd.f32 0.0, %v3107
      %v3109 = vpop.f32.mrb[0].mxu0
      %v3110 = vadd.f32 0.0, %v3109
      %v3111 = vpop.f32.mrb[0].mxu0
      %v3112 = vadd.f32 0.0, %v3111
      %v3113 = vpop.f32.mrb[0].mxu0
      %v3114 = vadd.f32 0.0, %v3113
      %3115 = vmatprep.mubr.bf16.mxu0 0
      %3116 = vmatmul.mubr.bf16.gmra.mrb[0].mxu0 %v1131
      %v3117 = vpop.f32.mrb[0].mxu0
      %v3118 = vadd.f32 0.0, %v3117
      %v3119 = vpop.f32.mrb[0].mxu0
      %v3120 = vadd.f32 0.0, %v3119
      %v3121 = vpop.f32.mrb[0].mxu0
      %v3122 = vadd.f32 0.0, %v3121
      %v3123 = vpop.f32.mrb[0].mxu0
      %v3124 = vadd.f32 0.0, %v3123
      %3125 = vmatprep.mubr.bf16.mxu0 0
      %3126 = vmatmul.mubr.bf16.gmra.mrb[0].mxu0 %v1134
      %v3127 = vpop.f32.mrb[0].mxu0
      %v3128 = vadd.f32 0.0, %v3127
      %v3129 = vpop.f32.mrb[0].mxu0
      %v3130 = vadd.f32 0.0, %v3129
      %v3131 = vpop.f32.mrb[0].mxu0
      %v3132 = vadd.f32 0.0, %v3131
      %v3133 = vpop.f32.mrb[0].mxu0
      %v3134 = vadd.f32 0.0, %v3133
      %3135 = vmatprep.mubr.bf16.mxu0 0
      %3136 = vmatmul.mubr.bf16.gmra.mrb[0].mxu0 %v1137
      %v3137 = vpop.f32.mrb[0].mxu0
      %v3138 = vadd.f32 0.0, %v3137
      %v3139 = vpop.f32.mrb[0].mxu0
      %v3140 = vadd.f32 0.0, %v3139
      %v3141 = vpop.f32.mrb[0].mxu0
      %v3142 = vadd.f32 0.0, %v3141
      %v3143 = vpop.f32.mrb[0].mxu0
      %v3144 = vadd.f32 0.0, %v3143
      %3145 = vmatprep.mubr.bf16.mxu0 0
      %3146 = vmatmul.mubr.bf16.gmra.mrb[0].mxu0 %v1140
      %v3147 = vpop.f32.mrb[0].mxu0
      %v3148 = vadd.f32 0.0, %v3147
      %v3149 = vpop.f32.mrb[0].mxu0
      %v3150 = vadd.f32 0.0, %v3149
      %v3151 = vpop.f32.mrb[0].mxu0
      %v3152 = vadd.f32 0.0, %v3151
      %v3153 = vpop.f32.mrb[0].mxu0
      %v3154 = vadd.f32 0.0, %v3153
      %3155 = vmatprep.mubr.bf16.mxu0 0
      %3156 = vmatmul.mubr.bf16.gmra.mrb[0].mxu0 %v1143
      %v3157 = vpop.f32.mrb[0].mxu0
      %v3158 = vadd.f32 0.0, %v3157
      %v3159 = vpop.f32.mrb[0].mxu0
      %v3160 = vadd.f32 0.0, %v3159
      %v3161 = vpop.f32.mrb[0].mxu0
      %v3162 = vadd.f32 0.0, %v3161
      %v3163 = vpop.f32.mrb[0].mxu0
      %v3164 = vadd.f32 0.0, %v3163
      %3165 = vmatprep.mubr.bf16.mxu0 0
      %3166 = vmatmul.mubr.bf16.gmra.mrb[0].mxu0 %v1146
      %v3167 = vpop.f32.mrb[0].mxu0
      %v3168 = vadd.f32 0.0, %v3167
      %v3169 = vpop.f32.mrb[0].mxu0
      %v3170 = vadd.f32 0.0, %v3169
      %v3171 = vpop.f32.mrb[0].mxu0
      %v3172 = vadd.f32 0.0, %v3171
      %v3173 = vpop.f32.mrb[0].mxu0
      %v3174 = vadd.f32 0.0, %v3173
      %3175 = vmatprep.mubr.bf16.mxu0 0
      %3176 = vmatmul.mubr.bf16.gmra.mrb[0].mxu0 %v1149
      %v3177 = vpop.f32.mrb[0].mxu0
      %v3178 = vadd.f32 0.0, %v3177
      %v3179 = vpop.f32.mrb[0].mxu0
      %v3180 = vadd.f32 0.0, %v3179
      %v3181 = vpop.f32.mrb[0].mxu0
      %v3182 = vadd.f32 0.0, %v3181
      %v3183 = vpop.f32.mrb[0].mxu0
      %v3184 = vadd.f32 0.0, %v3183
      %3185 = vmatprep.mubr.bf16.mxu0 0
      %3186 = vmatmul.mubr.bf16.gmra.mrb[0].mxu0 %v1152
      %v3187 = vpop.f32.mrb[0].mxu0
      %v3188 = vadd.f32 0.0, %v3187
      %v3189 = vpop.f32.mrb[0].mxu0
      %v3190 = vadd.f32 0.0, %v3189
      %v3191 = vpop.f32.mrb[0].mxu0
      %v3192 = vadd.f32 0.0, %v3191
      %v3193 = vpop.f32.mrb[0].mxu0
      %v3194 = vadd.f32 0.0, %v3193
      %3195 = vmatprep.mubr.bf16.mxu0 0
      %3196 = vmatmul.mubr.bf16.gmra.mrb[0].mxu0 %v1155
      %v3197 = vpop.f32.mrb[0].mxu0
      %v3198 = vadd.f32 0.0, %v3197
      %v3199 = vpop.f32.mrb[0].mxu0
      %v3200 = vadd.f32 0.0, %v3199
      %v3201 = vpop.f32.mrb[0].mxu0
      %v3202 = vadd.f32 0.0, %v3201
      %v3203 = vpop.f32.mrb[0].mxu0
      %v3204 = vadd.f32 0.0, %v3203
      %3205 = vmatprep.mubr.bf16.mxu0 0
      %3206 = vmatmul.mubr.bf16.gmra.mrb[0].mxu0 %v1158
      %v3207 = vpop.f32.mrb[0].mxu0
      %v3208 = vadd.f32 0.0, %v3207
      %v3209 = vpop.f32.mrb[0].mxu0
      %v3210 = vadd.f32 0.0, %v3209
      %v3211 = vpop.f32.mrb[0].mxu0
      %v3212 = vadd.f32 0.0, %v3211
      %v3213 = vpop.f32.mrb[0].mxu0
      %v3214 = vadd.f32 0.0, %v3213
      %3215 = vmatprep.mubr.bf16.mxu0 0
      %3216 = vmatmul.mubr.bf16.gmra.mrb[0].mxu0 %v1161
      %v3217 = vpop.f32.mrb[0].mxu0
      %v3218 = vadd.f32 0.0, %v3217
      %v3219 = vpop.f32.mrb[0].mxu0
      %v3220 = vadd.f32 0.0, %v3219
      %v3221 = vpop.f32.mrb[0].mxu0
      %v3222 = vadd.f32 0.0, %v3221
      %v3223 = vpop.f32.mrb[0].mxu0
      %v3224 = vadd.f32 0.0, %v3223
      %3225 = vmatprep.mubr.bf16.mxu0 0
      %3226 = vmatmul.mubr.bf16.gmra.mrb[0].mxu0 %v1164
      %v3227 = vpop.f32.mrb[0].mxu0
      %v3228 = vadd.f32 0.0, %v3227
      %v3229 = vpop.f32.mrb[0].mxu0
      %v3230 = vadd.f32 0.0, %v3229
      %v3231 = vpop.f32.mrb[0].mxu0
      %v3232 = vadd.f32 0.0, %v3231
      %v3233 = vpop.f32.mrb[0].mxu0
      %v3234 = vadd.f32 0.0, %v3233
      %3235 = vmatprep.mubr.bf16.mxu0 0
      %3236 = vmatmul.mubr.bf16.gmra.mrb[0].mxu0 %v1167
      %v3237 = vpop.f32.mrb[0].mxu0
      %v3238 = vadd.f32 0.0, %v3237
      %v3239 = vpop.f32.mrb[0].mxu0
      %v3240 = vadd.f32 0.0, %v3239
      %v3241 = vpop.f32.mrb[0].mxu0
      %v3242 = vadd.f32 0.0, %v3241
      %v3243 = vpop.f32.mrb[0].mxu0
      %v3244 = vadd.f32 0.0, %v3243
      %3245 = vmatprep.mubr.bf16.mxu0 0
      %3246 = vmatmul.mubr.bf16.gmra.mrb[0].mxu0 %v1170
      %v3247 = vpop.f32.mrb[0].mxu0
      %v3248 = vadd.f32 0.0, %v3247
      %v3249 = vpop.f32.mrb[0].mxu0
      %v3250 = vadd.f32 0.0, %v3249
      %v3251 = vpop.f32.mrb[0].mxu0
      %v3252 = vadd.f32 0.0, %v3251
      %v3253 = vpop.f32.mrb[0].mxu0
      %v3254 = vadd.f32 0.0, %v3253
      %3255 = vmatprep.mubr.bf16.mxu0 0
      %3256 = vmatmul.mubr.bf16.gmra.mrb[0].mxu0 %v1173
      %v3257 = vpop.f32.mrb[0].mxu0
      %v3258 = vadd.f32 0.0, %v3257
      %v3259 = vpop.f32.mrb[0].mxu0
      %v3260 = vadd.f32 0.0, %v3259
      %v3261 = vpop.f32.mrb[0].mxu0
      %v3262 = vadd.f32 0.0, %v3261
      %v3263 = vpop.f32.mrb[0].mxu0
      %v3264 = vadd.f32 0.0, %v3263
      %3265 = vmatprep.mubr.bf16.mxu0 0
      %3266 = vmatmul.mubr.bf16.gmra.mrb[0].mxu0 %v1176
      %v3267 = vpop.f32.mrb[0].mxu0
      %v3268 = vadd.f32 0.0, %v3267
      %v3269 = vpop.f32.mrb[0].mxu0
      %v3270 = vadd.f32 0.0, %v3269
      %v3271 = vpop.f32.mrb[0].mxu0
      %v3272 = vadd.f32 0.0, %v3271
      %v3273 = vpop.f32.mrb[0].mxu0
      %v3274 = vadd.f32 0.0, %v3273
      %3275 = vmatprep.mubr.bf16.mxu0 0
      %3276 = vmatmul.mubr.bf16.gmra.mrb[0].mxu0 %v1179
      %v3277 = vpop.f32.mrb[0].mxu0
      %v3278 = vadd.f32 0.0, %v3277
      %v3279 = vpop.f32.mrb[0].mxu0
      %v3280 = vadd.f32 0.0, %v3279
      %v3281 = vpop.f32.mrb[0].mxu0
      %v3282 = vadd.f32 0.0, %v3281
      %v3283 = vpop.f32.mrb[0].mxu0
      %v3284 = vadd.f32 0.0, %v3283
      %3285 = vmatprep.mubr.bf16.mxu0 0
      %3286 = vmatmul.mubr.bf16.gmra.mrb[0].mxu0 %v1182
      %v3287 = vpop.f32.mrb[0].mxu0
      %v3288 = vadd.f32 0.0, %v3287
      %v3289 = vpop.f32.mrb[0].mxu0
      %v3290 = vadd.f32 0.0, %v3289
      %v3291 = vpop.f32.mrb[0].mxu0
      %v3292 = vadd.f32 0.0, %v3291
      %v3293 = vpop.f32.mrb[0].mxu0
      %v3294 = vadd.f32 0.0, %v3293
      %3295 = vmatprep.mubr.bf16.mxu0 0
      %3296 = vmatmul.mubr.bf16.gmra.mrb[0].mxu0 %v1185
      %v3297 = vpop.f32.mrb[0].mxu0
      %v3298 = vadd.f32 0.0, %v3297
      %v3299 = vpop.f32.mrb[0].mxu0
      %v3300 = vadd.f32 0.0, %v3299
      %v3301 = vpop.f32.mrb[0].mxu0
      %v3302 = vadd.f32 0.0, %v3301
      %v3303 = vpop.f32.mrb[0].mxu0
      %v3304 = vadd.f32 0.0, %v3303
      %3305 = vmatprep.mubr.bf16.mxu0 0
      %3306 = vmatmul.mubr.bf16.gmra.mrb[0].mxu0 %v1188
      %v3307 = vpop.f32.mrb[0].mxu0
      %v3308 = vadd.f32 0.0, %v3307
      %v3309 = vpop.f32.mrb[0].mxu0
      %v3310 = vadd.f32 0.0, %v3309
      %v3311 = vpop.f32.mrb[0].mxu0
      %v3312 = vadd.f32 0.0, %v3311
      %v3313 = vpop.f32.mrb[0].mxu0
      %v3314 = vadd.f32 0.0, %v3313
      %3315 = vmatprep.mubr.bf16.mxu0 0
      %3316 = vmatmul.mubr.bf16.gmra.mrb[0].mxu0 %v1191
      %v3317 = vpop.f32.mrb[0].mxu0
      %v3318 = vadd.f32 0.0, %v3317
      %v3319 = vpop.f32.mrb[0].mxu0
      %v3320 = vadd.f32 0.0, %v3319
      %v3321 = vpop.f32.mrb[0].mxu0
      %v3322 = vadd.f32 0.0, %v3321
      %v3323 = vpop.f32.mrb[0].mxu0
      %v3324 = vadd.f32 0.0, %v3323
      %3325 = vmatprep.mubr.bf16.mxu0 0
      %3326 = vmatmul.mubr.bf16.gmra.mrb[0].mxu0 %v1194
      %v3327 = vpop.f32.mrb[0].mxu0
      %v3328 = vadd.f32 0.0, %v3327
      %v3329 = vpop.f32.mrb[0].mxu0
      %v3330 = vadd.f32 0.0, %v3329
      %v3331 = vpop.f32.mrb[0].mxu0
      %v3332 = vadd.f32 0.0, %v3331
      %v3333 = vpop.f32.mrb[0].mxu0
      %v3334 = vadd.f32 0.0, %v3333
      %3335 = vmatprep.mubr.bf16.mxu0 0
      %3336 = vmatmul.mubr.bf16.gmra.mrb[0].mxu0 %v1197
      %v3337 = vpop.f32.mrb[0].mxu0
      %v3338 = vadd.f32 0.0, %v3337
      %v3339 = vpop.f32.mrb[0].mxu0
      %v3340 = vadd.f32 0.0, %v3339
      %v3341 = vpop.f32.mrb[0].mxu0
      %v3342 = vadd.f32 0.0, %v3341
      %v3343 = vpop.f32.mrb[0].mxu0
      %v3344 = vadd.f32 0.0, %v3343
      %3345 = vmatprep.mubr.bf16.mxu0 0
      %3346 = vmatmul.mubr.bf16.gmra.mrb[0].mxu0 %v1200
      %v3347 = vpop.f32.mrb[0].mxu0
      %v3348 = vadd.f32 0.0, %v3347
      %v3349 = vpop.f32.mrb[0].mxu0
      %v3350 = vadd.f32 0.0, %v3349
      %v3351 = vpop.f32.mrb[0].mxu0
      %v3352 = vadd.f32 0.0, %v3351
      %v3353 = vpop.f32.mrb[0].mxu0
      %v3354 = vadd.f32 0.0, %v3353
      %3355 = vmatprep.mubr.bf16.mxu0 0
      %3356 = vmatmul.mubr.bf16.gmra.mrb[0].mxu0 %v1203
      %v3357 = vpop.f32.mrb[0].mxu0
      %v3358 = vadd.f32 0.0, %v3357
      %v3359 = vpop.f32.mrb[0].mxu0
      %v3360 = vadd.f32 0.0, %v3359
      %v3361 = vpop.f32.mrb[0].mxu0
      %v3362 = vadd.f32 0.0, %v3361
      %v3363 = vpop.f32.mrb[0].mxu0
      %v3364 = vadd.f32 0.0, %v3363
      %3365 = vmatprep.mubr.bf16.mxu0 0
      %3366 = vmatmul.mubr.bf16.gmra.mrb[0].mxu0 %v1206
      %v3367 = vpop.f32.mrb[0].mxu0
      %v3368 = vadd.f32 0.0, %v3367
      %v3369 = vpop.f32.mrb[0].mxu0
      %v3370 = vadd.f32 0.0, %v3369
      %v3371 = vpop.f32.mrb[0].mxu0
      %v3372 = vadd.f32 0.0, %v3371
      %v3373 = vpop.f32.mrb[0].mxu0
      %v3374 = vadd.f32 0.0, %v3373
      %3375 = vmatprep.mubr.bf16.mxu0 0
      %3376 = vmatmul.mubr.bf16.gmra.mrb[0].mxu0 %v1209
      %v3377 = vpop.f32.mrb[0].mxu0
      %v3378 = vadd.f32 0.0, %v3377
      %v3379 = vpop.f32.mrb[0].mxu0
      %v3380 = vadd.f32 0.0, %v3379
      %v3381 = vpop.f32.mrb[0].mxu0
      %v3382 = vadd.f32 0.0, %v3381
      %v3383 = vpop.f32.mrb[0].mxu0
      %v3384 = vadd.f32 0.0, %v3383
      %3385 = vmatprep.mubr.bf16.mxu0 0
      %3386 = vmatmul.mubr.bf16.gmra.mrb[0].mxu0 %v1212
      %v3387 = vpop.f32.mrb[0].mxu0
      %v3388 = vadd.f32 0.0, %v3387
      %v3389 = vpop.f32.mrb[0].mxu0
      %v3390 = vadd.f32 0.0, %v3389
      %v3391 = vpop.f32.mrb[0].mxu0
      %v3392 = vadd.f32 0.0, %v3391
      %v3393 = vpop.f32.mrb[0].mxu0
      %v3394 = vadd.f32 0.0, %v3393
      %3395 = vmatprep.mubr.bf16.mxu0 0
      %3396 = vmatmul.mubr.bf16.gmra.mrb[0].mxu0 %v1215
      %v3397 = vpop.f32.mrb[0].mxu0
      %v3398 = vadd.f32 0.0, %v3397
      %v3399 = vpop.f32.mrb[0].mxu0
      %v3400 = vadd.f32 0.0, %v3399
      %v3401 = vpop.f32.mrb[0].mxu0
      %v3402 = vadd.f32 0.0, %v3401
      %v3403 = vpop.f32.mrb[0].mxu0
      %v3404 = vadd.f32 0.0, %v3403
      %3405 = vmatprep.mubr.bf16.mxu0 0
      %3406 = vmatmul.mubr.bf16.gmra.mrb[0].mxu0 %v1218
      %v3407 = vpop.f32.mrb[0].mxu0
      %v3408 = vadd.f32 0.0, %v3407
      %v3409 = vpop.f32.mrb[0].mxu0
      %v3410 = vadd.f32 0.0, %v3409
      %v3411 = vpop.f32.mrb[0].mxu0
      %v3412 = vadd.f32 0.0, %v3411
      %v3413 = vpop.f32.mrb[0].mxu0
      %v3414 = vadd.f32 0.0, %v3413
      %3415 = vmatprep.mubr.bf16.mxu0 0
      %3416 = vmatmul.mubr.bf16.gmra.mrb[0].mxu0 %v1221
      %v3417 = vpop.f32.mrb[0].mxu0
      %v3418 = vadd.f32 0.0, %v3417
      %v3419 = vpop.f32.mrb[0].mxu0
      %v3420 = vadd.f32 0.0, %v3419
      %v3421 = vpop.f32.mrb[0].mxu0
      %v3422 = vadd.f32 0.0, %v3421
      %v3423 = vpop.f32.mrb[0].mxu0
      %v3424 = vadd.f32 0.0, %v3423
      %3425 = vmatprep.mubr.bf16.mxu0 0
      %3426 = vmatmul.mubr.bf16.gmra.mrb[0].mxu0 %v1224
      %v3427 = vpop.f32.mrb[0].mxu0
      %v3428 = vadd.f32 0.0, %v3427
      %v3429 = vpop.f32.mrb[0].mxu0
      %v3430 = vadd.f32 0.0, %v3429
      %v3431 = vpop.f32.mrb[0].mxu0
      %v3432 = vadd.f32 0.0, %v3431
      %v3433 = vpop.f32.mrb[0].mxu0
      %v3434 = vadd.f32 0.0, %v3433
      %3435 = vmatprep.mubr.bf16.mxu0 0
      %3436 = vmatmul.mubr.bf16.gmra.mrb[0].mxu0 %v1227
      %v3437 = vpop.f32.mrb[0].mxu0
      %v3438 = vadd.f32 0.0, %v3437
      %v3439 = vpop.f32.mrb[0].mxu0
      %v3440 = vadd.f32 0.0, %v3439
      %v3441 = vpop.f32.mrb[0].mxu0
      %v3442 = vadd.f32 0.0, %v3441
      %v3443 = vpop.f32.mrb[0].mxu0
      %v3444 = vadd.f32 0.0, %v3443
      %3445 = vmatprep.mubr.bf16.mxu0 0
      %3446 = vmatmul.mubr.bf16.gmra.mrb[0].mxu0 %v1230
      %v3447 = vpop.f32.mrb[0].mxu0
      %v3448 = vadd.f32 0.0, %v3447
      %v3449 = vpop.f32.mrb[0].mxu0
      %v3450 = vadd.f32 0.0, %v3449
      %v3451 = vpop.f32.mrb[0].mxu0
      %v3452 = vadd.f32 0.0, %v3451
      %v3453 = vpop.f32.mrb[0].mxu0
      %v3454 = vadd.f32 0.0, %v3453
      %3455 = vmatprep.mubr.bf16.mxu0 0
      %3456 = vmatmul.mubr.bf16.gmra.mrb[0].mxu0 %v1233
      %v3457 = vpop.f32.mrb[0].mxu0
      %v3458 = vadd.f32 0.0, %v3457
      %v3459 = vpop.f32.mrb[0].mxu0
      %v3460 = vadd.f32 0.0, %v3459
      %v3461 = vpop.f32.mrb[0].mxu0
      %v3462 = vadd.f32 0.0, %v3461
      %v3463 = vpop.f32.mrb[0].mxu0
      %v3464 = vadd.f32 0.0, %v3463
      %3465 = vmatprep.mubr.bf16.mxu0 0
      %3466 = vmatmul.mubr.bf16.gmra.mrb[0].mxu0 %v1236
      %v3467 = vpop.f32.mrb[0].mxu0
      %v3468 = vadd.f32 0.0, %v3467
      %v3469 = vpop.f32.mrb[0].mxu0
      %v3470 = vadd.f32 0.0, %v3469
      %v3471 = vpop.f32.mrb[0].mxu0
      %v3472 = vadd.f32 0.0, %v3471
      %v3473 = vpop.f32.mrb[0].mxu0
      %v3474 = vadd.f32 0.0, %v3473
      %3475 = vmatprep.mubr.bf16.mxu0 0
      %3476 = vmatmul.mubr.bf16.gmra.mrb[0].mxu0 %v1239
      %v3477 = vpop.f32.mrb[0].mxu0
      %v3478 = vadd.f32 0.0, %v3477
      %v3479 = vpop.f32.mrb[0].mxu0
      %v3480 = vadd.f32 0.0, %v3479
      %v3481 = vpop.f32.mrb[0].mxu0
      %v3482 = vadd.f32 0.0, %v3481
      %v3483 = vpop.f32.mrb[0].mxu0
      %v3484 = vadd.f32 0.0, %v3483
      %3485 = vmatprep.mubr.bf16.mxu0 0
      %3486 = vmatmul.mubr.bf16.gmra.mrb[0].mxu0 %v1242
      %v3487 = vpop.f32.mrb[0].mxu0
      %v3488 = vadd.f32 0.0, %v3487
      %v3489 = vpop.f32.mrb[0].mxu0
      %v3490 = vadd.f32 0.0, %v3489
      %v3491 = vpop.f32.mrb[0].mxu0
      %v3492 = vadd.f32 0.0, %v3491
      %v3493 = vpop.f32.mrb[0].mxu0
      %v3494 = vadd.f32 0.0, %v3493
      %3495 = vmatprep.mubr.bf16.mxu0 0
      %3496 = vmatmul.mubr.bf16.gmra.mrb[0].mxu0 %v1245
      %v3497 = vpop.f32.mrb[0].mxu0
      %v3498 = vadd.f32 0.0, %v3497
      %v3499 = vpop.f32.mrb[0].mxu0
      %v3500 = vadd.f32 0.0, %v3499
      %v3501 = vpop.f32.mrb[0].mxu0
      %v3502 = vadd.f32 0.0, %v3501
      %v3503 = vpop.f32.mrb[0].mxu0
      %v3504 = vadd.f32 0.0, %v3503
      %3505 = vdwg.mxu0
      %v3506 = vpack.c.bf16 %v2792, %v2788
      %v3507 = vpack.c.bf16 %v2794, %v2790
      %v3508 = vpack.c.bf16 %v2802, %v2798
      %v3509 = vpack.c.bf16 %v2804, %v2800
      %v3510 = vpack.c.bf16 %v2812, %v2808
      %v3511 = vpack.c.bf16 %v2814, %v2810
      %v3512 = vpack.c.bf16 %v2822, %v2818
      %v3513 = vpack.c.bf16 %v2824, %v2820
      %v3514 = vpack.c.bf16 %v2832, %v2828
      %v3515 = vpack.c.bf16 %v2834, %v2830
      %v3516 = vpack.c.bf16 %v2842, %v2838
      %v3517 = vpack.c.bf16 %v2844, %v2840
      %v3518 = vpack.c.bf16 %v2852, %v2848
      %v3519 = vpack.c.bf16 %v2854, %v2850
      %v3520 = vpack.c.bf16 %v2862, %v2858
      %v3521 = vpack.c.bf16 %v2864, %v2860
      %v3522 = vpack.c.bf16 %v2872, %v2868
      %v3523 = vpack.c.bf16 %v2874, %v2870
      %v3524 = vpack.c.bf16 %v2882, %v2878
      %v3525 = vpack.c.bf16 %v2884, %v2880
      %v3526 = vpack.c.bf16 %v2892, %v2888
      %v3527 = vpack.c.bf16 %v2894, %v2890
      %v3528 = vpack.c.bf16 %v2902, %v2898
      %v3529 = vpack.c.bf16 %v2904, %v2900
      %v3530 = vpack.c.bf16 %v2912, %v2908
      %v3531 = vpack.c.bf16 %v2914, %v2910
      %v3532 = vpack.c.bf16 %v2922, %v2918
      %v3533 = vpack.c.bf16 %v2924, %v2920
      %v3534 = vpack.c.bf16 %v2932, %v2928
      %v3535 = vpack.c.bf16 %v2934, %v2930
      %v3536 = vpack.c.bf16 %v2942, %v2938
      %v3537 = vpack.c.bf16 %v2944, %v2940
      %v3538 = vpack.c.bf16 %v2952, %v2948
      %v3539 = vpack.c.bf16 %v2954, %v2950
      %v3540 = vpack.c.bf16 %v2962, %v2958
      %v3541 = vpack.c.bf16 %v2964, %v2960
      %v3542 = vpack.c.bf16 %v2972, %v2968
      %v3543 = vpack.c.bf16 %v2974, %v2970
      %v3544 = vpack.c.bf16 %v2982, %v2978
      %v3545 = vpack.c.bf16 %v2984, %v2980
      %v3546 = vpack.c.bf16 %v2992, %v2988
      %v3547 = vpack.c.bf16 %v2994, %v2990
      %v3548 = vpack.c.bf16 %v3002, %v2998
      %v3549 = vpack.c.bf16 %v3004, %v3000
      %v3550 = vpack.c.bf16 %v3012, %v3008
      %v3551 = vpack.c.bf16 %v3014, %v3010
      %v3552 = vpack.c.bf16 %v3022, %v3018
      %v3553 = vpack.c.bf16 %v3024, %v3020
      %v3554 = vpack.c.bf16 %v3032, %v3028
      %v3555 = vpack.c.bf16 %v3034, %v3030
      %v3556 = vpack.c.bf16 %v3042, %v3038
      %v3557 = vpack.c.bf16 %v3044, %v3040
      %v3558 = vpack.c.bf16 %v3052, %v3048
      %v3559 = vpack.c.bf16 %v3054, %v3050
      %v3560 = vpack.c.bf16 %v3062, %v3058
      %v3561 = vpack.c.bf16 %v3064, %v3060
      %v3562 = vpack.c.bf16 %v3072, %v3068
      %v3563 = vpack.c.bf16 %v3074, %v3070
      %v3564 = vpack.c.bf16 %v3082, %v3078
      %v3565 = vpack.c.bf16 %v3084, %v3080
      %v3566 = vpack.c.bf16 %v3092, %v3088
      %v3567 = vpack.c.bf16 %v3094, %v3090
      %v3568 = vpack.c.bf16 %v3102, %v3098
      %v3569 = vpack.c.bf16 %v3104, %v3100
      %v3570 = vpack.c.bf16 %v3112, %v3108
      %v3571 = vpack.c.bf16 %v3114, %v3110
      %v3572 = vpack.c.bf16 %v3122, %v3118
      %v3573 = vpack.c.bf16 %v3124, %v3120
      %v3574 = vpack.c.bf16 %v3132, %v3128
      %v3575 = vpack.c.bf16 %v3134, %v3130
      %v3576 = vpack.c.bf16 %v3142, %v3138
      %v3577 = vpack.c.bf16 %v3144, %v3140
      %v3578 = vpack.c.bf16 %v3152, %v3148
      %v3579 = vpack.c.bf16 %v3154, %v3150
      %v3580 = vpack.c.bf16 %v3162, %v3158
      %v3581 = vpack.c.bf16 %v3164, %v3160
      %v3582 = vpack.c.bf16 %v3172, %v3168
      %v3583 = vpack.c.bf16 %v3174, %v3170
      %v3584 = vpack.c.bf16 %v3182, %v3178
      %v3585 = vpack.c.bf16 %v3184, %v3180
      %v3586 = vpack.c.bf16 %v3192, %v3188
      %v3587 = vpack.c.bf16 %v3194, %v3190
      %v3588 = vpack.c.bf16 %v3202, %v3198
      %v3589 = vpack.c.bf16 %v3204, %v3200
      %v3590 = vpack.c.bf16 %v3212, %v3208
      %v3591 = vpack.c.bf16 %v3214, %v3210
      %v3592 = vpack.c.bf16 %v3222, %v3218
      %v3593 = vpack.c.bf16 %v3224, %v3220
      %v3594 = vpack.c.bf16 %v3232, %v3228
      %v3595 = vpack.c.bf16 %v3234, %v3230
      %v3596 = vpack.c.bf16 %v3242, %v3238
      %v3597 = vpack.c.bf16 %v3244, %v3240
      %v3598 = vpack.c.bf16 %v3252, %v3248
      %v3599 = vpack.c.bf16 %v3254, %v3250
      %v3600 = vpack.c.bf16 %v3262, %v3258
      %v3601 = vpack.c.bf16 %v3264, %v3260
      %v3602 = vpack.c.bf16 %v3272, %v3268
      %v3603 = vpack.c.bf16 %v3274, %v3270
      %v3604 = vpack.c.bf16 %v3282, %v3278
      %v3605 = vpack.c.bf16 %v3284, %v3280
      %v3606 = vpack.c.bf16 %v3292, %v3288
      %v3607 = vpack.c.bf16 %v3294, %v3290
      %v3608 = vpack.c.bf16 %v3302, %v3298
      %v3609 = vpack.c.bf16 %v3304, %v3300
      %v3610 = vpack.c.bf16 %v3312, %v3308
      %v3611 = vpack.c.bf16 %v3314, %v3310
      %v3612 = vpack.c.bf16 %v3322, %v3318
      %v3613 = vpack.c.bf16 %v3324, %v3320
      %v3614 = vpack.c.bf16 %v3332, %v3328
      %v3615 = vpack.c.bf16 %v3334, %v3330
      %v3616 = vpack.c.bf16 %v3342, %v3338
      %v3617 = vpack.c.bf16 %v3344, %v3340
      %v3618 = vpack.c.bf16 %v3352, %v3348
      %v3619 = vpack.c.bf16 %v3354, %v3350
      %v3620 = vpack.c.bf16 %v3362, %v3358
      %v3621 = vpack.c.bf16 %v3364, %v3360
      %v3622 = vpack.c.bf16 %v3372, %v3368
      %v3623 = vpack.c.bf16 %v3374, %v3370
      %v3624 = vpack.c.bf16 %v3382, %v3378
      %v3625 = vpack.c.bf16 %v3384, %v3380
      %v3626 = vpack.c.bf16 %v3392, %v3388
      %v3627 = vpack.c.bf16 %v3394, %v3390
      %v3628 = vpack.c.bf16 %v3402, %v3398
      %v3629 = vpack.c.bf16 %v3404, %v3400
      %v3630 = vpack.c.bf16 %v3412, %v3408
      %v3631 = vpack.c.bf16 %v3414, %v3410
      %v3632 = vpack.c.bf16 %v3422, %v3418
      %v3633 = vpack.c.bf16 %v3424, %v3420
      %v3634 = vpack.c.bf16 %v3432, %v3428
      %v3635 = vpack.c.bf16 %v3434, %v3430
      %v3636 = vpack.c.bf16 %v3442, %v3438
      %v3637 = vpack.c.bf16 %v3444, %v3440
      %v3638 = vpack.c.bf16 %v3452, %v3448
      %v3639 = vpack.c.bf16 %v3454, %v3450
      %v3640 = vpack.c.bf16 %v3462, %v3458
      %v3641 = vpack.c.bf16 %v3464, %v3460
      %v3642 = vpack.c.bf16 %v3472, %v3468
      %v3643 = vpack.c.bf16 %v3474, %v3470
      %v3644 = vpack.c.bf16 %v3482, %v3478
      %v3645 = vpack.c.bf16 %v3484, %v3480
      %v3646 = vpack.c.bf16 %v3492, %v3488
      %v3647 = vpack.c.bf16 %v3494, %v3490
      %v3648 = vpack.c.bf16 %v3502, %v3498
      %v3649 = vpack.c.bf16 %v3504, %v3500
      %v3650 = vmul.f32 %v1282, %v2035
      %v3651 = vmul.f32 %v1284, %v2037
      %v3652 = vmul.f32 %v1286, %v2039
      %v3653 = vmul.f32 %v1288, %v2041
      %v3654 = vmul.f32 %v1292, %v2045
      %v3655 = vmul.f32 %v1294, %v2047
      %v3656 = vmul.f32 %v1296, %v2049
      %v3657 = vmul.f32 %v1298, %v2051
      %v3658 = vmul.f32 %v1302, %v2055
      %v3659 = vmul.f32 %v1304, %v2057
      %v3660 = vmul.f32 %v1306, %v2059
      %v3661 = vmul.f32 %v1308, %v2061
      %v3662 = vmul.f32 %v1312, %v2065
      %v3663 = vmul.f32 %v1314, %v2067
      %v3664 = vmul.f32 %v1316, %v2069
      %v3665 = vmul.f32 %v1318, %v2071
      %v3666 = vmul.f32 %v1322, %v2075
      %v3667 = vmul.f32 %v1324, %v2077
      %v3668 = vmul.f32 %v1326, %v2079
      %v3669 = vmul.f32 %v1328, %v2081
      %v3670 = vmul.f32 %v1332, %v2085
      %v3671 = vmul.f32 %v1334, %v2087
      %v3672 = vmul.f32 %v1336, %v2089
      %v3673 = vmul.f32 %v1338, %v2091
      %v3674 = vmul.f32 %v1342, %v2095
      %v3675 = vmul.f32 %v1344, %v2097
      %v3676 = vmul.f32 %v1346, %v2099
      %v3677 = vmul.f32 %v1348, %v2101
      %v3678 = vmul.f32 %v1352, %v2105
      %v3679 = vmul.f32 %v1354, %v2107
      %v3680 = vmul.f32 %v1356, %v2109
      %v3681 = vmul.f32 %v1358, %v2111
      %v3682 = vmul.f32 %v1362, %v2115
      %v3683 = vmul.f32 %v1364, %v2117
      %v3684 = vmul.f32 %v1366, %v2119
      %v3685 = vmul.f32 %v1368, %v2121
      %v3686 = vmul.f32 %v1372, %v2125
      %v3687 = vmul.f32 %v1374, %v2127
      %v3688 = vmul.f32 %v1376, %v2129
      %v3689 = vmul.f32 %v1378, %v2131
      %v3690 = vmul.f32 %v1382, %v2135
      %v3691 = vmul.f32 %v1384, %v2137
      %v3692 = vmul.f32 %v1386, %v2139
      %v3693 = vmul.f32 %v1388, %v2141
      %v3694 = vmul.f32 %v1392, %v2145
      %v3695 = vmul.f32 %v1394, %v2147
      %v3696 = vmul.f32 %v1396, %v2149
      %v3697 = vmul.f32 %v1398, %v2151
      %v3698 = vmul.f32 %v1402, %v2155
      %v3699 = vmul.f32 %v1404, %v2157
      %v3700 = vmul.f32 %v1406, %v2159
      %v3701 = vmul.f32 %v1408, %v2161
      %v3702 = vmul.f32 %v1412, %v2165
      %v3703 = vmul.f32 %v1414, %v2167
      %v3704 = vmul.f32 %v1416, %v2169
      %v3705 = vmul.f32 %v1418, %v2171
      %v3706 = vmul.f32 %v1422, %v2175
      %v3707 = vmul.f32 %v1424, %v2177
      %v3708 = vmul.f32 %v1426, %v2179
      %v3709 = vmul.f32 %v1428, %v2181
      %v3710 = vmul.f32 %v1432, %v2185
      %v3711 = vmul.f32 %v1434, %v2187
      %v3712 = vmul.f32 %v1436, %v2189
      %v3713 = vmul.f32 %v1438, %v2191
      %v3714 = vmul.f32 %v1442, %v2195
      %v3715 = vmul.f32 %v1444, %v2197
      %v3716 = vmul.f32 %v1446, %v2199
      %v3717 = vmul.f32 %v1448, %v2201
      %v3718 = vmul.f32 %v1452, %v2205
      %v3719 = vmul.f32 %v1454, %v2207
      %v3720 = vmul.f32 %v1456, %v2209
      %v3721 = vmul.f32 %v1458, %v2211
      %v3722 = vmul.f32 %v1462, %v2215
      %v3723 = vmul.f32 %v1464, %v2217
      %v3724 = vmul.f32 %v1466, %v2219
      %v3725 = vmul.f32 %v1468, %v2221
      %v3726 = vmul.f32 %v1472, %v2225
      %v3727 = vmul.f32 %v1474, %v2227
      %v3728 = vmul.f32 %v1476, %v2229
      %v3729 = vmul.f32 %v1478, %v2231
      %v3730 = vmul.f32 %v1482, %v2235
      %v3731 = vmul.f32 %v1484, %v2237
      %v3732 = vmul.f32 %v1486, %v2239
      %v3733 = vmul.f32 %v1488, %v2241
      %v3734 = vmul.f32 %v1492, %v2245
      %v3735 = vmul.f32 %v1494, %v2247
      %v3736 = vmul.f32 %v1496, %v2249
      %v3737 = vmul.f32 %v1498, %v2251
      %v3738 = vmul.f32 %v1502, %v2255
      %v3739 = vmul.f32 %v1504, %v2257
      %v3740 = vmul.f32 %v1506, %v2259
      %v3741 = vmul.f32 %v1508, %v2261
      %v3742 = vmul.f32 %v1512, %v2265
      %v3743 = vmul.f32 %v1514, %v2267
      %v3744 = vmul.f32 %v1516, %v2269
      %v3745 = vmul.f32 %v1518, %v2271
      %v3746 = vmul.f32 %v1522, %v2275
      %v3747 = vmul.f32 %v1524, %v2277
      %v3748 = vmul.f32 %v1526, %v2279
      %v3749 = vmul.f32 %v1528, %v2281
      %v3750 = vmul.f32 %v1532, %v2285
      %v3751 = vmul.f32 %v1534, %v2287
      %v3752 = vmul.f32 %v1536, %v2289
      %v3753 = vmul.f32 %v1538, %v2291
      %v3754 = vmul.f32 %v1542, %v2295
      %v3755 = vmul.f32 %v1544, %v2297
      %v3756 = vmul.f32 %v1546, %v2299
      %v3757 = vmul.f32 %v1548, %v2301
      %v3758 = vmul.f32 %v1552, %v2305
      %v3759 = vmul.f32 %v1554, %v2307
      %v3760 = vmul.f32 %v1556, %v2309
      %v3761 = vmul.f32 %v1558, %v2311
      %v3762 = vmul.f32 %v1562, %v2315
      %v3763 = vmul.f32 %v1564, %v2317
      %v3764 = vmul.f32 %v1566, %v2319
      %v3765 = vmul.f32 %v1568, %v2321
      %v3766 = vmul.f32 %v1572, %v2325
      %v3767 = vmul.f32 %v1574, %v2327
      %v3768 = vmul.f32 %v1576, %v2329
      %v3769 = vmul.f32 %v1578, %v2331
      %v3770 = vmul.f32 %v1582, %v2335
      %v3771 = vmul.f32 %v1584, %v2337
      %v3772 = vmul.f32 %v1586, %v2339
      %v3773 = vmul.f32 %v1588, %v2341
      %v3774 = vmul.f32 %v1592, %v2345
      %v3775 = vmul.f32 %v1594, %v2347
      %v3776 = vmul.f32 %v1596, %v2349
      %v3777 = vmul.f32 %v1598, %v2351
      %v3778 = vmul.f32 %v1602, %v2355
      %v3779 = vmul.f32 %v1604, %v2357
      %v3780 = vmul.f32 %v1606, %v2359
      %v3781 = vmul.f32 %v1608, %v2361
      %v3782 = vmul.f32 %v1612, %v2365
      %v3783 = vmul.f32 %v1614, %v2367
      %v3784 = vmul.f32 %v1616, %v2369
      %v3785 = vmul.f32 %v1618, %v2371
      %v3786 = vmul.f32 %v1622, %v2375
      %v3787 = vmul.f32 %v1624, %v2377
      %v3788 = vmul.f32 %v1626, %v2379
      %v3789 = vmul.f32 %v1628, %v2381
      %v3790 = vmul.f32 %v1632, %v2385
      %v3791 = vmul.f32 %v1634, %v2387
      %v3792 = vmul.f32 %v1636, %v2389
      %v3793 = vmul.f32 %v1638, %v2391
      %v3794 = vmul.f32 %v1642, %v2395
      %v3795 = vmul.f32 %v1644, %v2397
      %v3796 = vmul.f32 %v1646, %v2399
      %v3797 = vmul.f32 %v1648, %v2401
      %v3798 = vmul.f32 %v1652, %v2405
      %v3799 = vmul.f32 %v1654, %v2407
      %v3800 = vmul.f32 %v1656, %v2409
      %v3801 = vmul.f32 %v1658, %v2411
      %v3802 = vmul.f32 %v1662, %v2415
      %v3803 = vmul.f32 %v1664, %v2417
      %v3804 = vmul.f32 %v1666, %v2419
      %v3805 = vmul.f32 %v1668, %v2421
      %v3806 = vmul.f32 %v1672, %v2425
      %v3807 = vmul.f32 %v1674, %v2427
      %v3808 = vmul.f32 %v1676, %v2429
      %v3809 = vmul.f32 %v1678, %v2431
      %v3810 = vmul.f32 %v1682, %v2435
      %v3811 = vmul.f32 %v1684, %v2437
      %v3812 = vmul.f32 %v1686, %v2439
      %v3813 = vmul.f32 %v1688, %v2441
      %v3814 = vmul.f32 %v1692, %v2445
      %v3815 = vmul.f32 %v1694, %v2447
      %v3816 = vmul.f32 %v1696, %v2449
      %v3817 = vmul.f32 %v1698, %v2451
      %v3818 = vmul.f32 %v1702, %v2455
      %v3819 = vmul.f32 %v1704, %v2457
      %v3820 = vmul.f32 %v1706, %v2459
      %v3821 = vmul.f32 %v1708, %v2461
      %v3822 = vmul.f32 %v1712, %v2465
      %v3823 = vmul.f32 %v1714, %v2467
      %v3824 = vmul.f32 %v1716, %v2469
      %v3825 = vmul.f32 %v1718, %v2471
      %v3826 = vmul.f32 %v1722, %v2475
      %v3827 = vmul.f32 %v1724, %v2477
      %v3828 = vmul.f32 %v1726, %v2479
      %v3829 = vmul.f32 %v1728, %v2481
      %v3830 = vmul.f32 %v1732, %v2485
      %v3831 = vmul.f32 %v1734, %v2487
      %v3832 = vmul.f32 %v1736, %v2489
      %v3833 = vmul.f32 %v1738, %v2491
      %v3834 = vmul.f32 %v1742, %v2495
      %v3835 = vmul.f32 %v1744, %v2497
      %v3836 = vmul.f32 %v1746, %v2499
      %v3837 = vmul.f32 %v1748, %v2501
      %v3838 = vmul.f32 %v1752, %v2505
      %v3839 = vmul.f32 %v1754, %v2507
      %v3840 = vmul.f32 %v1756, %v2509
      %v3841 = vmul.f32 %v1758, %v2511
      %v3842 = vmul.f32 %v1762, %v2515
      %v3843 = vmul.f32 %v1764, %v2517
      %v3844 = vmul.f32 %v1766, %v2519
      %v3845 = vmul.f32 %v1768, %v2521
      %v3846 = vmul.f32 %v1772, %v2525
      %v3847 = vmul.f32 %v1774, %v2527
      %v3848 = vmul.f32 %v1776, %v2529
      %v3849 = vmul.f32 %v1778, %v2531
      %v3850 = vmul.f32 %v1782, %v2535
      %v3851 = vmul.f32 %v1784, %v2537
      %v3852 = vmul.f32 %v1786, %v2539
      %v3853 = vmul.f32 %v1788, %v2541
      %v3854 = vmul.f32 %v1792, %v2545
      %v3855 = vmul.f32 %v1794, %v2547
      %v3856 = vmul.f32 %v1796, %v2549
      %v3857 = vmul.f32 %v1798, %v2551
      %v3858 = vmul.f32 %v1802, %v2555
      %v3859 = vmul.f32 %v1804, %v2557
      %v3860 = vmul.f32 %v1806, %v2559
      %v3861 = vmul.f32 %v1808, %v2561
      %v3862 = vmul.f32 %v1812, %v2565
      %v3863 = vmul.f32 %v1814, %v2567
      %v3864 = vmul.f32 %v1816, %v2569
      %v3865 = vmul.f32 %v1818, %v2571
      %v3866 = vmul.f32 %v1822, %v2575
      %v3867 = vmul.f32 %v1824, %v2577
      %v3868 = vmul.f32 %v1826, %v2579
      %v3869 = vmul.f32 %v1828, %v2581
      %v3870 = vmul.f32 %v1832, %v2585
      %v3871 = vmul.f32 %v1834, %v2587
      %v3872 = vmul.f32 %v1836, %v2589
      %v3873 = vmul.f32 %v1838, %v2591
      %v3874 = vmul.f32 %v1842, %v2595
      %v3875 = vmul.f32 %v1844, %v2597
      %v3876 = vmul.f32 %v1846, %v2599
      %v3877 = vmul.f32 %v1848, %v2601
      %v3878 = vmul.f32 %v1852, %v2605
      %v3879 = vmul.f32 %v1854, %v2607
      %v3880 = vmul.f32 %v1856, %v2609
      %v3881 = vmul.f32 %v1858, %v2611
      %v3882 = vmul.f32 %v1862, %v2615
      %v3883 = vmul.f32 %v1864, %v2617
      %v3884 = vmul.f32 %v1866, %v2619
      %v3885 = vmul.f32 %v1868, %v2621
      %v3886 = vmul.f32 %v1872, %v2625
      %v3887 = vmul.f32 %v1874, %v2627
      %v3888 = vmul.f32 %v1876, %v2629
      %v3889 = vmul.f32 %v1878, %v2631
      %v3890 = vmul.f32 %v1882, %v2635
      %v3891 = vmul.f32 %v1884, %v2637
      %v3892 = vmul.f32 %v1886, %v2639
      %v3893 = vmul.f32 %v1888, %v2641
      %v3894 = vmul.f32 %v1892, %v2645
      %v3895 = vmul.f32 %v1894, %v2647
      %v3896 = vmul.f32 %v1896, %v2649
      %v3897 = vmul.f32 %v1898, %v2651
      %v3898 = vmul.f32 %v1902, %v2655
      %v3899 = vmul.f32 %v1904, %v2657
      %v3900 = vmul.f32 %v1906, %v2659
      %v3901 = vmul.f32 %v1908, %v2661
      %v3902 = vmul.f32 %v1912, %v2665
      %v3903 = vmul.f32 %v1914, %v2667
      %v3904 = vmul.f32 %v1916, %v2669
      %v3905 = vmul.f32 %v1918, %v2671
      %v3906 = vmul.f32 %v1922, %v2675
      %v3907 = vmul.f32 %v1924, %v2677
      %v3908 = vmul.f32 %v1926, %v2679
      %v3909 = vmul.f32 %v1928, %v2681
      %v3910 = vmul.f32 %v1932, %v2685
      %v3911 = vmul.f32 %v1934, %v2687
      %v3912 = vmul.f32 %v1936, %v2689
      %v3913 = vmul.f32 %v1938, %v2691
      %v3914 = vmul.f32 %v1942, %v2695
      %v3915 = vmul.f32 %v1944, %v2697
      %v3916 = vmul.f32 %v1946, %v2699
      %v3917 = vmul.f32 %v1948, %v2701
      %v3918 = vmul.f32 %v1952, %v2705
      %v3919 = vmul.f32 %v1954, %v2707
      %v3920 = vmul.f32 %v1956, %v2709
      %v3921 = vmul.f32 %v1958, %v2711
      %v3922 = vmul.f32 %v1962, %v2715
      %v3923 = vmul.f32 %v1964, %v2717
      %v3924 = vmul.f32 %v1966, %v2719
      %v3925 = vmul.f32 %v1968, %v2721
      %v3926 = vmul.f32 %v1972, %v2725
      %v3927 = vmul.f32 %v1974, %v2727
      %v3928 = vmul.f32 %v1976, %v2729
      %v3929 = vmul.f32 %v1978, %v2731
      %v3930 = vmul.f32 %v1982, %v2735
      %v3931 = vmul.f32 %v1984, %v2737
      %v3932 = vmul.f32 %v1986, %v2739
      %v3933 = vmul.f32 %v1988, %v2741
      %v3934 = vmul.f32 %v1992, %v2745
      %v3935 = vmul.f32 %v1994, %v2747
      %v3936 = vmul.f32 %v1996, %v2749
      %v3937 = vmul.f32 %v1998, %v2751
      %v3938 = vpack.c.bf16 %v3652, %v3650
      %v3939 = vpack.c.bf16 %v3653, %v3651
      %v3940 = vpack.c.bf16 %v3656, %v3654
      %v3941 = vpack.c.bf16 %v3657, %v3655
      %v3942 = vpack.c.bf16 %v3660, %v3658
      %v3943 = vpack.c.bf16 %v3661, %v3659
      %v3944 = vpack.c.bf16 %v3664, %v3662
      %v3945 = vpack.c.bf16 %v3665, %v3663
      %v3946 = vpack.c.bf16 %v3668, %v3666
      %v3947 = vpack.c.bf16 %v3669, %v3667
      %v3948 = vpack.c.bf16 %v3672, %v3670
      %v3949 = vpack.c.bf16 %v3673, %v3671
      %v3950 = vpack.c.bf16 %v3676, %v3674
      %v3951 = vpack.c.bf16 %v3677, %v3675
      %v3952 = vpack.c.bf16 %v3680, %v3678
      %v3953 = vpack.c.bf16 %v3681, %v3679
      %v3954 = vpack.c.bf16 %v3684, %v3682
      %v3955 = vpack.c.bf16 %v3685, %v3683
      %v3956 = vpack.c.bf16 %v3688, %v3686
      %v3957 = vpack.c.bf16 %v3689, %v3687
      %v3958 = vpack.c.bf16 %v3692, %v3690
      %v3959 = vpack.c.bf16 %v3693, %v3691
      %v3960 = vpack.c.bf16 %v3696, %v3694
      %v3961 = vpack.c.bf16 %v3697, %v3695
      %v3962 = vpack.c.bf16 %v3700, %v3698
      %v3963 = vpack.c.bf16 %v3701, %v3699
      %v3964 = vpack.c.bf16 %v3704, %v3702
      %v3965 = vpack.c.bf16 %v3705, %v3703
      %v3966 = vpack.c.bf16 %v3708, %v3706
      %v3967 = vpack.c.bf16 %v3709, %v3707
      %v3968 = vpack.c.bf16 %v3712, %v3710
      %v3969 = vpack.c.bf16 %v3713, %v3711
      %v3970 = vpack.c.bf16 %v3716, %v3714
      %v3971 = vpack.c.bf16 %v3717, %v3715
      %v3972 = vpack.c.bf16 %v3720, %v3718
      %v3973 = vpack.c.bf16 %v3721, %v3719
      %v3974 = vpack.c.bf16 %v3724, %v3722
      %v3975 = vpack.c.bf16 %v3725, %v3723
      %v3976 = vpack.c.bf16 %v3728, %v3726
      %v3977 = vpack.c.bf16 %v3729, %v3727
      %v3978 = vpack.c.bf16 %v3732, %v3730
      %v3979 = vpack.c.bf16 %v3733, %v3731
      %v3980 = vpack.c.bf16 %v3736, %v3734
      %v3981 = vpack.c.bf16 %v3737, %v3735
      %v3982 = vpack.c.bf16 %v3740, %v3738
      %v3983 = vpack.c.bf16 %v3741, %v3739
      %v3984 = vpack.c.bf16 %v3744, %v3742
      %v3985 = vpack.c.bf16 %v3745, %v3743
      %v3986 = vpack.c.bf16 %v3748, %v3746
      %v3987 = vpack.c.bf16 %v3749, %v3747
      %v3988 = vpack.c.bf16 %v3752, %v3750
      %v3989 = vpack.c.bf16 %v3753, %v3751
      %v3990 = vpack.c.bf16 %v3756, %v3754
      %v3991 = vpack.c.bf16 %v3757, %v3755
      %v3992 = vpack.c.bf16 %v3760, %v3758
      %v3993 = vpack.c.bf16 %v3761, %v3759
      %v3994 = vpack.c.bf16 %v3764, %v3762
      %v3995 = vpack.c.bf16 %v3765, %v3763
      %v3996 = vpack.c.bf16 %v3768, %v3766
      %v3997 = vpack.c.bf16 %v3769, %v3767
      %v3998 = vpack.c.bf16 %v3772, %v3770
      %v3999 = vpack.c.bf16 %v3773, %v3771
      %v4000 = vpack.c.bf16 %v3776, %v3774
      %v4001 = vpack.c.bf16 %v3777, %v3775
      %v4002 = vpack.c.bf16 %v3780, %v3778
      %v4003 = vpack.c.bf16 %v3781, %v3779
      %v4004 = vpack.c.bf16 %v3784, %v3782
      %v4005 = vpack.c.bf16 %v3785, %v3783
      %v4006 = vpack.c.bf16 %v3788, %v3786
      %v4007 = vpack.c.bf16 %v3789, %v3787
      %v4008 = vpack.c.bf16 %v3792, %v3790
      %v4009 = vpack.c.bf16 %v3793, %v3791
      %v4010 = vpack.c.bf16 %v3796, %v3794
      %v4011 = vpack.c.bf16 %v3797, %v3795
      %v4012 = vpack.c.bf16 %v3800, %v3798
      %v4013 = vpack.c.bf16 %v3801, %v3799
      %v4014 = vpack.c.bf16 %v3804, %v3802
      %v4015 = vpack.c.bf16 %v3805, %v3803
      %v4016 = vpack.c.bf16 %v3808, %v3806
      %v4017 = vpack.c.bf16 %v3809, %v3807
      %v4018 = vpack.c.bf16 %v3812, %v3810
      %v4019 = vpack.c.bf16 %v3813, %v3811
      %v4020 = vpack.c.bf16 %v3816, %v3814
      %v4021 = vpack.c.bf16 %v3817, %v3815
      %v4022 = vpack.c.bf16 %v3820, %v3818
      %v4023 = vpack.c.bf16 %v3821, %v3819
      %v4024 = vpack.c.bf16 %v3824, %v3822
      %v4025 = vpack.c.bf16 %v3825, %v3823
      %v4026 = vpack.c.bf16 %v3828, %v3826
      %v4027 = vpack.c.bf16 %v3829, %v3827
      %v4028 = vpack.c.bf16 %v3832, %v3830
      %v4029 = vpack.c.bf16 %v3833, %v3831
      %v4030 = vpack.c.bf16 %v3836, %v3834
      %v4031 = vpack.c.bf16 %v3837, %v3835
      %v4032 = vpack.c.bf16 %v3840, %v3838
      %v4033 = vpack.c.bf16 %v3841, %v3839
      %v4034 = vpack.c.bf16 %v3844, %v3842
      %v4035 = vpack.c.bf16 %v3845, %v3843
      %v4036 = vpack.c.bf16 %v3848, %v3846
      %v4037 = vpack.c.bf16 %v3849, %v3847
      %v4038 = vpack.c.bf16 %v3852, %v3850
      %v4039 = vpack.c.bf16 %v3853, %v3851
      %v4040 = vpack.c.bf16 %v3856, %v3854
      %v4041 = vpack.c.bf16 %v3857, %v3855
      %v4042 = vpack.c.bf16 %v3860, %v3858
      %v4043 = vpack.c.bf16 %v3861, %v3859
      %v4044 = vpack.c.bf16 %v3864, %v3862
      %v4045 = vpack.c.bf16 %v3865, %v3863
      %v4046 = vpack.c.bf16 %v3868, %v3866
      %v4047 = vpack.c.bf16 %v3869, %v3867
      %v4048 = vpack.c.bf16 %v3872, %v3870
      %v4049 = vpack.c.bf16 %v3873, %v3871
      %v4050 = vpack.c.bf16 %v3876, %v3874
      %v4051 = vpack.c.bf16 %v3877, %v3875
      %v4052 = vpack.c.bf16 %v3880, %v3878
      %v4053 = vpack.c.bf16 %v3881, %v3879
      %v4054 = vpack.c.bf16 %v3884, %v3882
      %v4055 = vpack.c.bf16 %v3885, %v3883
      %v4056 = vpack.c.bf16 %v3888, %v3886
      %v4057 = vpack.c.bf16 %v3889, %v3887
      %v4058 = vpack.c.bf16 %v3892, %v3890
      %v4059 = vpack.c.bf16 %v3893, %v3891
      %v4060 = vpack.c.bf16 %v3896, %v3894
      %v4061 = vpack.c.bf16 %v3897, %v3895
      %v4062 = vpack.c.bf16 %v3900, %v3898
      %v4063 = vpack.c.bf16 %v3901, %v3899
      %v4064 = vpack.c.bf16 %v3904, %v3902
      %v4065 = vpack.c.bf16 %v3905, %v3903
      %v4066 = vpack.c.bf16 %v3908, %v3906
      %v4067 = vpack.c.bf16 %v3909, %v3907
      %v4068 = vpack.c.bf16 %v3912, %v3910
      %v4069 = vpack.c.bf16 %v3913, %v3911
      %v4070 = vpack.c.bf16 %v3916, %v3914
      %v4071 = vpack.c.bf16 %v3917, %v3915
      %v4072 = vpack.c.bf16 %v3920, %v3918
      %v4073 = vpack.c.bf16 %v3921, %v3919
      %v4074 = vpack.c.bf16 %v3924, %v3922
      %v4075 = vpack.c.bf16 %v3925, %v3923
      %v4076 = vpack.c.bf16 %v3928, %v3926
      %v4077 = vpack.c.bf16 %v3929, %v3927
      %v4078 = vpack.c.bf16 %v3932, %v3930
      %v4079 = vpack.c.bf16 %v3933, %v3931
      %v4080 = vpack.c.bf16 %v3936, %v3934
      %v4081 = vpack.c.bf16 %v3937, %v3935
      %v4082 = vld [vmem:[%s3] sm:$0xf]
      %v4083 = vld [vmem:[%s3 + $0x4] sm:$0xf]
      %v4084 = vld [vmem:[%s3 + $0x8] sm:$0xf]
      %v4085 = vld [vmem:[%s3 + $0xc] sm:$0xf]
      %v4086 = vld [vmem:[%s3 + $0x10] sm:$0xf]
      %v4087 = vld [vmem:[%s3 + $0x14] sm:$0xf]
      %v4088 = vld [vmem:[%s3 + $0x18] sm:$0xf]
      %v4089 = vld [vmem:[%s3 + $0x1c] sm:$0xf]
      %v4090 = vld [vmem:[%s3 + $0x20] sm:$0xf]
      %v4091 = vld [vmem:[%s3 + $0x24] sm:$0xf]
      %v4092 = vld [vmem:[%s3 + $0x28] sm:$0xf]
      %v4093 = vld [vmem:[%s3 + $0x2c] sm:$0xf]
      %v4094 = vld [vmem:[%s3 + $0x30] sm:$0xf]
      %v4095 = vld [vmem:[%s3 + $0x34] sm:$0xf]
      %v4096 = vld [vmem:[%s3 + $0x38] sm:$0xf]
      %v4097 = vld [vmem:[%s3 + $0x3c] sm:$0xf]
      %v4098 = vld [vmem:[%s3 + $0x40] sm:$0xf]
      %v4099 = vld [vmem:[%s3 + $0x44] sm:$0xf]
      %v4100 = vld [vmem:[%s3 + $0x48] sm:$0xf]
      %v4101 = vld [vmem:[%s3 + $0x4c] sm:$0xf]
      %v4102 = vld [vmem:[%s3 + $0x50] sm:$0xf]
      %v4103 = vld [vmem:[%s3 + $0x54] sm:$0xf]
      %v4104 = vld [vmem:[%s3 + $0x58] sm:$0xf]
      %v4105 = vld [vmem:[%s3 + $0x5c] sm:$0xf]
      %v4106 = vld [vmem:[%s3 + $0x60] sm:$0xf]
      %v4107 = vld [vmem:[%s3 + $0x64] sm:$0xf]
      %v4108 = vld [vmem:[%s3 + $0x68] sm:$0xf]
      %v4109 = vld [vmem:[%s3 + $0x6c] sm:$0xf]
      %v4110 = vld [vmem:[%s3 + $0x70] sm:$0xf]
      %v4111 = vld [vmem:[%s3 + $0x74] sm:$0xf]
      %v4112 = vld [vmem:[%s3 + $0x78] sm:$0xf]
      %v4113 = vld [vmem:[%s3 + $0x7c] sm:$0xf]
      %v4114 = vld [vmem:[%s1] sm:$0x1]
      %v4116 = vlaneseq
      %v4117 = vshrl.u32 %v4116, 7
      %v4118 = vsub.s32 0, %v4117
      %v4119 = vrot.slane %v4114, %v4118
      %v4153 = vunpack.c.l.b16 %v4082
      %v4154 = vunpack.c.l.b16 %v4083
      %v4155 = vunpack.c.l.b16 %v4084
      %v4156 = vunpack.c.l.b16 %v4085
      %v4157 = vunpack.c.l.b16 %v4086
      %v4158 = vunpack.c.l.b16 %v4087
      %v4159 = vunpack.c.l.b16 %v4088
      %v4160 = vunpack.c.l.b16 %v4089
      %v4161 = vunpack.c.l.b16 %v4090
      %v4162 = vunpack.c.l.b16 %v4091
      %v4163 = vunpack.c.l.b16 %v4092
      %v4164 = vunpack.c.l.b16 %v4093
      %v4165 = vunpack.c.l.b16 %v4094
      %v4166 = vunpack.c.l.b16 %v4095
      %v4167 = vunpack.c.l.b16 %v4096
      %v4168 = vunpack.c.l.b16 %v4097
      %v4169 = vunpack.c.l.b16 %v4098
      %v4170 = vunpack.c.l.b16 %v4099
      %v4171 = vunpack.c.l.b16 %v4100
      %v4172 = vunpack.c.l.b16 %v4101
      %v4173 = vunpack.c.l.b16 %v4102
      %v4174 = vunpack.c.l.b16 %v4103
      %v4175 = vunpack.c.l.b16 %v4104
      %v4176 = vunpack.c.l.b16 %v4105
      %v4177 = vunpack.c.l.b16 %v4106
      %v4178 = vunpack.c.l.b16 %v4107
      %v4179 = vunpack.c.l.b16 %v4108
      %v4180 = vunpack.c.l.b16 %v4109
      %v4181 = vunpack.c.l.b16 %v4110
      %v4182 = vunpack.c.l.b16 %v4111
      %v4183 = vunpack.c.l.b16 %v4112
      %v4184 = vunpack.c.l.b16 %v4113
      %v4185 = vpack.c.b16 %v4154, %v4153
      %v4186 = vpack.c.b16 %v4156, %v4155
      %v4187 = vpack.c.b16 %v4158, %v4157
      %v4188 = vpack.c.b16 %v4160, %v4159
      %v4189 = vpack.c.b16 %v4162, %v4161
      %v4190 = vpack.c.b16 %v4164, %v4163
      %v4191 = vpack.c.b16 %v4166, %v4165
      %v4192 = vpack.c.b16 %v4168, %v4167
      %v4193 = vpack.c.b16 %v4170, %v4169
      %v4194 = vpack.c.b16 %v4172, %v4171
      %v4195 = vpack.c.b16 %v4174, %v4173
      %v4196 = vpack.c.b16 %v4176, %v4175
      %v4197 = vpack.c.b16 %v4178, %v4177
      %v4198 = vpack.c.b16 %v4180, %v4179
      %v4199 = vpack.c.b16 %v4182, %v4181
      %v4200 = vpack.c.b16 %v4184, %v4183
      %4217 = vmatprep.subr.bf16.mxu0 0
      %4218 = vmatpush1.bf16.msra.mxu0 %v4185
      %4219 = vmatprep.subr.bf16.mxu0 0
      %4220 = vmatpush1.bf16.msra.mxu0 %v4186
      %4221 = vmatprep.subr.bf16.mxu0 0
      %4222 = vmatpush1.bf16.msra.mxu0 %v4187
      %4223 = vmatprep.subr.bf16.mxu0 0
      %4224 = vmatpush1.bf16.msra.mxu0 %v4188
      %4225 = vmatprep.subr.bf16.mxu0 0
      %4226 = vmatpush1.bf16.msra.mxu0 %v4189
      %4227 = vmatprep.subr.bf16.mxu0 0
      %4228 = vmatpush1.bf16.msra.mxu0 %v4190
      %4229 = vmatprep.subr.bf16.mxu0 0
      %4230 = vmatpush1.bf16.msra.mxu0 %v4191
      %4231 = vmatprep.subr.bf16.mxu0 0
      %4232 = vmatpush1.bf16.msra.mxu0 %v4192
      %4233 = vmatprep.subr.bf16.mxu0 0
      %4234 = vmatpush1.bf16.msra.mxu0 %v4193
      %4235 = vmatprep.subr.bf16.mxu0 0
      %4236 = vmatpush1.bf16.msra.mxu0 %v4194
      %4237 = vmatprep.subr.bf16.mxu0 0
      %4238 = vmatpush1.bf16.msra.mxu0 %v4195
      %4239 = vmatprep.subr.bf16.mxu0 0
      %4240 = vmatpush1.bf16.msra.mxu0 %v4196
      %4241 = vmatprep.subr.bf16.mxu0 0
      %4242 = vmatpush1.bf16.msra.mxu0 %v4197
      %4243 = vmatprep.subr.bf16.mxu0 0
      %4244 = vmatpush1.bf16.msra.mxu0 %v4198
      %4245 = vmatprep.subr.bf16.mxu0 0
      %4246 = vmatpush1.bf16.msra.mxu0 %v4199
      %4247 = vmatprep.subr.bf16.mxu0 0
      %4248 = vmatpush1.bf16.msra.mxu0 %v4200
      %4249 = vmatprep.mubr.bf16.mxu0 %v3939
      %4250 = vmatmul.mubr.bf16.gmra.mrb[0].mxu0 %v3938
      %v4251 = vpop.f32.mrb[0].mxu0
      %v4252 = vadd.f32 %v4119, %v4251
      %v4253 = vpop.f32.mrb[0].mxu0
      %v4254 = vpop.f32.mrb[0].mxu0
      %v4255 = vadd.f32 %v4119, %v4254
      %v4256 = vpop.f32.mrb[0].mxu0
      %4257 = vmatprep.mubr.bf16.mxu0 %v3941
      %4258 = vmatmul.mubr.bf16.gmra.mrb[0].mxu0 %v3940
      %v4259 = vpop.f32.mrb[0].mxu0
      %v4260 = vadd.f32 %v4119, %v4259
      %v4261 = vpop.f32.mrb[0].mxu0
      %v4262 = vpop.f32.mrb[0].mxu0
      %v4263 = vadd.f32 %v4119, %v4262
      %v4264 = vpop.f32.mrb[0].mxu0
      %4265 = vmatprep.mubr.bf16.mxu0 %v3943
      %4266 = vmatmul.mubr.bf16.gmra.mrb[0].mxu0 %v3942
      %v4267 = vpop.f32.mrb[0].mxu0
      %v4268 = vadd.f32 %v4119, %v4267
      %v4269 = vpop.f32.mrb[0].mxu0
      %v4270 = vpop.f32.mrb[0].mxu0
      %v4271 = vadd.f32 %v4119, %v4270
      %v4272 = vpop.f32.mrb[0].mxu0
      %4273 = vmatprep.mubr.bf16.mxu0 %v3945
      %4274 = vmatmul.mubr.bf16.gmra.mrb[0].mxu0 %v3944
      %v4275 = vpop.f32.mrb[0].mxu0
      %v4276 = vadd.f32 %v4119, %v4275
      %v4277 = vpop.f32.mrb[0].mxu0
      %v4278 = vpop.f32.mrb[0].mxu0
      %v4279 = vadd.f32 %v4119, %v4278
      %v4280 = vpop.f32.mrb[0].mxu0
      %4281 = vmatprep.mubr.bf16.mxu0 %v3947
      %4282 = vmatmul.mubr.bf16.gmra.mrb[0].mxu0 %v3946
      %v4283 = vpop.f32.mrb[0].mxu0
      %v4284 = vadd.f32 %v4119, %v4283
      %v4285 = vpop.f32.mrb[0].mxu0
      %v4286 = vpop.f32.mrb[0].mxu0
      %v4287 = vadd.f32 %v4119, %v4286
      %v4288 = vpop.f32.mrb[0].mxu0
      %4289 = vmatprep.mubr.bf16.mxu0 %v3949
      %4290 = vmatmul.mubr.bf16.gmra.mrb[0].mxu0 %v3948
      %v4291 = vpop.f32.mrb[0].mxu0
      %v4292 = vadd.f32 %v4119, %v4291
      %v4293 = vpop.f32.mrb[0].mxu0
      %v4294 = vpop.f32.mrb[0].mxu0
      %v4295 = vadd.f32 %v4119, %v4294
      %v4296 = vpop.f32.mrb[0].mxu0
      %4297 = vmatprep.mubr.bf16.mxu0 %v3951
      %4298 = vmatmul.mubr.bf16.gmra.mrb[0].mxu0 %v3950
      %v4299 = vpop.f32.mrb[0].mxu0
      %v4300 = vadd.f32 %v4119, %v4299
      %v4301 = vpop.f32.mrb[0].mxu0
      %v4302 = vpop.f32.mrb[0].mxu0
      %v4303 = vadd.f32 %v4119, %v4302
      %v4304 = vpop.f32.mrb[0].mxu0
      %4305 = vmatprep.mubr.bf16.mxu0 %v3953
      %4306 = vmatmul.mubr.bf16.gmra.mrb[0].mxu0 %v3952
      %v4307 = vpop.f32.mrb[0].mxu0
      %v4308 = vadd.f32 %v4119, %v4307
      %v4309 = vpop.f32.mrb[0].mxu0
      %v4310 = vpop.f32.mrb[0].mxu0
      %v4311 = vadd.f32 %v4119, %v4310
      %v4312 = vpop.f32.mrb[0].mxu0
      %4313 = vmatprep.mubr.bf16.mxu0 %v3955
      %4314 = vmatmul.mubr.bf16.gmra.mrb[0].mxu0 %v3954
      %v4315 = vpop.f32.mrb[0].mxu0
      %v4316 = vadd.f32 %v4119, %v4315
      %v4317 = vpop.f32.mrb[0].mxu0
      %v4318 = vpop.f32.mrb[0].mxu0
      %v4319 = vadd.f32 %v4119, %v4318
      %v4320 = vpop.f32.mrb[0].mxu0
      %4321 = vmatprep.mubr.bf16.mxu0 %v3957
      %4322 = vmatmul.mubr.bf16.gmra.mrb[0].mxu0 %v3956
      %v4323 = vpop.f32.mrb[0].mxu0
      %v4324 = vadd.f32 %v4119, %v4323
      %v4325 = vpop.f32.mrb[0].mxu0
      %v4326 = vpop.f32.mrb[0].mxu0
      %v4327 = vadd.f32 %v4119, %v4326
      %v4328 = vpop.f32.mrb[0].mxu0
      %4329 = vmatprep.mubr.bf16.mxu0 %v3959
      %4330 = vmatmul.mubr.bf16.gmra.mrb[0].mxu0 %v3958
      %v4331 = vpop.f32.mrb[0].mxu0
      %v4332 = vadd.f32 %v4119, %v4331
      %v4333 = vpop.f32.mrb[0].mxu0
      %v4334 = vpop.f32.mrb[0].mxu0
      %v4335 = vadd.f32 %v4119, %v4334
      %v4336 = vpop.f32.mrb[0].mxu0
      %4337 = vmatprep.mubr.bf16.mxu0 %v3961
      %4338 = vmatmul.mubr.bf16.gmra.mrb[0].mxu0 %v3960
      %v4339 = vpop.f32.mrb[0].mxu0
      %v4340 = vadd.f32 %v4119, %v4339
      %v4341 = vpop.f32.mrb[0].mxu0
      %v4342 = vpop.f32.mrb[0].mxu0
      %v4343 = vadd.f32 %v4119, %v4342
      %v4344 = vpop.f32.mrb[0].mxu0
      %4345 = vmatprep.mubr.bf16.mxu0 %v3963
      %4346 = vmatmul.mubr.bf16.gmra.mrb[0].mxu0 %v3962
      %v4347 = vpop.f32.mrb[0].mxu0
      %v4348 = vadd.f32 %v4119, %v4347
      %v4349 = vpop.f32.mrb[0].mxu0
      %v4350 = vpop.f32.mrb[0].mxu0
      %v4351 = vadd.f32 %v4119, %v4350
      %v4352 = vpop.f32.mrb[0].mxu0
      %4353 = vmatprep.mubr.bf16.mxu0 %v3965
      %4354 = vmatmul.mubr.bf16.gmra.mrb[0].mxu0 %v3964
      %v4355 = vpop.f32.mrb[0].mxu0
      %v4356 = vadd.f32 %v4119, %v4355
      %v4357 = vpop.f32.mrb[0].mxu0
      %v4358 = vpop.f32.mrb[0].mxu0
      %v4359 = vadd.f32 %v4119, %v4358
      %v4360 = vpop.f32.mrb[0].mxu0
      %4361 = vmatprep.mubr.bf16.mxu0 %v3967
      %4362 = vmatmul.mubr.bf16.gmra.mrb[0].mxu0 %v3966
      %v4363 = vpop.f32.mrb[0].mxu0
      %v4364 = vadd.f32 %v4119, %v4363
      %v4365 = vpop.f32.mrb[0].mxu0
      %v4366 = vpop.f32.mrb[0].mxu0
      %v4367 = vadd.f32 %v4119, %v4366
      %v4368 = vpop.f32.mrb[0].mxu0
      %4369 = vmatprep.mubr.bf16.mxu0 %v3969
      %4370 = vmatmul.mubr.bf16.gmra.mrb[0].mxu0 %v3968
      %v4371 = vpop.f32.mrb[0].mxu0
      %v4372 = vadd.f32 %v4119, %v4371
      %v4373 = vpop.f32.mrb[0].mxu0
      %v4374 = vpop.f32.mrb[0].mxu0
      %v4375 = vadd.f32 %v4119, %v4374
      %v4376 = vpop.f32.mrb[0].mxu0
      %4377 = vmatprep.mubr.bf16.mxu0 %v3971
      %4378 = vmatmul.mubr.bf16.gmra.mrb[0].mxu0 %v3970
      %v4379 = vpop.f32.mrb[0].mxu0
      %v4380 = vadd.f32 %v4119, %v4379
      %v4381 = vpop.f32.mrb[0].mxu0
      %v4382 = vpop.f32.mrb[0].mxu0
      %v4383 = vadd.f32 %v4119, %v4382
      %v4384 = vpop.f32.mrb[0].mxu0
      %4385 = vmatprep.mubr.bf16.mxu0 %v3973
      %4386 = vmatmul.mubr.bf16.gmra.mrb[0].mxu0 %v3972
      %v4387 = vpop.f32.mrb[0].mxu0
      %v4388 = vadd.f32 %v4119, %v4387
      %v4389 = vpop.f32.mrb[0].mxu0
      %v4390 = vpop.f32.mrb[0].mxu0
      %v4391 = vadd.f32 %v4119, %v4390
      %v4392 = vpop.f32.mrb[0].mxu0
      %4393 = vmatprep.mubr.bf16.mxu0 %v3975
      %4394 = vmatmul.mubr.bf16.gmra.mrb[0].mxu0 %v3974
      %v4395 = vpop.f32.mrb[0].mxu0
      %v4396 = vadd.f32 %v4119, %v4395
      %v4397 = vpop.f32.mrb[0].mxu0
      %v4398 = vpop.f32.mrb[0].mxu0
      %v4399 = vadd.f32 %v4119, %v4398
      %v4400 = vpop.f32.mrb[0].mxu0
      %4401 = vmatprep.mubr.bf16.mxu0 %v3977
      %4402 = vmatmul.mubr.bf16.gmra.mrb[0].mxu0 %v3976
      %v4403 = vpop.f32.mrb[0].mxu0
      %v4404 = vadd.f32 %v4119, %v4403
      %v4405 = vpop.f32.mrb[0].mxu0
      %v4406 = vpop.f32.mrb[0].mxu0
      %v4407 = vadd.f32 %v4119, %v4406
      %v4408 = vpop.f32.mrb[0].mxu0
      %4409 = vmatprep.mubr.bf16.mxu0 %v3979
      %4410 = vmatmul.mubr.bf16.gmra.mrb[0].mxu0 %v3978
      %v4411 = vpop.f32.mrb[0].mxu0
      %v4412 = vadd.f32 %v4119, %v4411
      %v4413 = vpop.f32.mrb[0].mxu0
      %v4414 = vpop.f32.mrb[0].mxu0
      %v4415 = vadd.f32 %v4119, %v4414
      %v4416 = vpop.f32.mrb[0].mxu0
      %4417 = vmatprep.mubr.bf16.mxu0 %v3981
      %4418 = vmatmul.mubr.bf16.gmra.mrb[0].mxu0 %v3980
      %v4419 = vpop.f32.mrb[0].mxu0
      %v4420 = vadd.f32 %v4119, %v4419
      %v4421 = vpop.f32.mrb[0].mxu0
      %v4422 = vpop.f32.mrb[0].mxu0
      %v4423 = vadd.f32 %v4119, %v4422
      %v4424 = vpop.f32.mrb[0].mxu0
      %4425 = vmatprep.mubr.bf16.mxu0 %v3983
      %4426 = vmatmul.mubr.bf16.gmra.mrb[0].mxu0 %v3982
      %v4427 = vpop.f32.mrb[0].mxu0
      %v4428 = vadd.f32 %v4119, %v4427
      %v4429 = vpop.f32.mrb[0].mxu0
      %v4430 = vpop.f32.mrb[0].mxu0
      %v4431 = vadd.f32 %v4119, %v4430
      %v4432 = vpop.f32.mrb[0].mxu0
      %4433 = vmatprep.mubr.bf16.mxu0 %v3985
      %4434 = vmatmul.mubr.bf16.gmra.mrb[0].mxu0 %v3984
      %v4435 = vpop.f32.mrb[0].mxu0
      %v4436 = vadd.f32 %v4119, %v4435
      %v4437 = vpop.f32.mrb[0].mxu0
      %v4438 = vpop.f32.mrb[0].mxu0
      %v4439 = vadd.f32 %v4119, %v4438
      %v4440 = vpop.f32.mrb[0].mxu0
      %4441 = vmatprep.mubr.bf16.mxu0 %v3987
      %4442 = vmatmul.mubr.bf16.gmra.mrb[0].mxu0 %v3986
      %v4443 = vpop.f32.mrb[0].mxu0
      %v4444 = vadd.f32 %v4119, %v4443
      %v4445 = vpop.f32.mrb[0].mxu0
      %v4446 = vpop.f32.mrb[0].mxu0
      %v4447 = vadd.f32 %v4119, %v4446
      %v4448 = vpop.f32.mrb[0].mxu0
      %4449 = vmatprep.mubr.bf16.mxu0 %v3989
      %4450 = vmatmul.mubr.bf16.gmra.mrb[0].mxu0 %v3988
      %v4451 = vpop.f32.mrb[0].mxu0
      %v4452 = vadd.f32 %v4119, %v4451
      %v4453 = vpop.f32.mrb[0].mxu0
      %v4454 = vpop.f32.mrb[0].mxu0
      %v4455 = vadd.f32 %v4119, %v4454
      %v4456 = vpop.f32.mrb[0].mxu0
      %4457 = vmatprep.mubr.bf16.mxu0 %v3991
      %4458 = vmatmul.mubr.bf16.gmra.mrb[0].mxu0 %v3990
      %v4459 = vpop.f32.mrb[0].mxu0
      %v4460 = vadd.f32 %v4119, %v4459
      %v4461 = vpop.f32.mrb[0].mxu0
      %v4462 = vpop.f32.mrb[0].mxu0
      %v4463 = vadd.f32 %v4119, %v4462
      %v4464 = vpop.f32.mrb[0].mxu0
      %4465 = vmatprep.mubr.bf16.mxu0 %v3993
      %4466 = vmatmul.mubr.bf16.gmra.mrb[0].mxu0 %v3992
      %v4467 = vpop.f32.mrb[0].mxu0
      %v4468 = vadd.f32 %v4119, %v4467
      %v4469 = vpop.f32.mrb[0].mxu0
      %v4470 = vpop.f32.mrb[0].mxu0
      %v4471 = vadd.f32 %v4119, %v4470
      %v4472 = vpop.f32.mrb[0].mxu0
      %4473 = vmatprep.mubr.bf16.mxu0 %v3995
      %4474 = vmatmul.mubr.bf16.gmra.mrb[0].mxu0 %v3994
      %v4475 = vpop.f32.mrb[0].mxu0
      %v4476 = vadd.f32 %v4119, %v4475
      %v4477 = vpop.f32.mrb[0].mxu0
      %v4478 = vpop.f32.mrb[0].mxu0
      %v4479 = vadd.f32 %v4119, %v4478
      %v4480 = vpop.f32.mrb[0].mxu0
      %4481 = vmatprep.mubr.bf16.mxu0 %v3997
      %4482 = vmatmul.mubr.bf16.gmra.mrb[0].mxu0 %v3996
      %v4483 = vpop.f32.mrb[0].mxu0
      %v4484 = vadd.f32 %v4119, %v4483
      %v4485 = vpop.f32.mrb[0].mxu0
      %v4486 = vpop.f32.mrb[0].mxu0
      %v4487 = vadd.f32 %v4119, %v4486
      %v4488 = vpop.f32.mrb[0].mxu0
      %4489 = vmatprep.mubr.bf16.mxu0 %v3999
      %4490 = vmatmul.mubr.bf16.gmra.mrb[0].mxu0 %v3998
      %v4491 = vpop.f32.mrb[0].mxu0
      %v4492 = vadd.f32 %v4119, %v4491
      %v4493 = vpop.f32.mrb[0].mxu0
      %v4494 = vpop.f32.mrb[0].mxu0
      %v4495 = vadd.f32 %v4119, %v4494
      %v4496 = vpop.f32.mrb[0].mxu0
      %4497 = vmatprep.mubr.bf16.mxu0 %v4001
      %4498 = vmatmul.mubr.bf16.gmra.mrb[0].mxu0 %v4000
      %v4499 = vpop.f32.mrb[0].mxu0
      %v4500 = vadd.f32 %v4119, %v4499
      %v4501 = vpop.f32.mrb[0].mxu0
      %v4502 = vpop.f32.mrb[0].mxu0
      %v4503 = vadd.f32 %v4119, %v4502
      %v4504 = vpop.f32.mrb[0].mxu0
      %4505 = vmatprep.mubr.bf16.mxu0 %v4003
      %4506 = vmatmul.mubr.bf16.gmra.mrb[0].mxu0 %v4002
      %v4507 = vpop.f32.mrb[0].mxu0
      %v4508 = vadd.f32 %v4119, %v4507
      %v4509 = vpop.f32.mrb[0].mxu0
      %v4510 = vpop.f32.mrb[0].mxu0
      %v4511 = vadd.f32 %v4119, %v4510
      %v4512 = vpop.f32.mrb[0].mxu0
      %4513 = vmatprep.mubr.bf16.mxu0 %v4005
      %4514 = vmatmul.mubr.bf16.gmra.mrb[0].mxu0 %v4004
      %v4515 = vpop.f32.mrb[0].mxu0
      %v4516 = vadd.f32 %v4119, %v4515
      %v4517 = vpop.f32.mrb[0].mxu0
      %v4518 = vpop.f32.mrb[0].mxu0
      %v4519 = vadd.f32 %v4119, %v4518
      %v4520 = vpop.f32.mrb[0].mxu0
      %4521 = vmatprep.mubr.bf16.mxu0 %v4007
      %4522 = vmatmul.mubr.bf16.gmra.mrb[0].mxu0 %v4006
      %v4523 = vpop.f32.mrb[0].mxu0
      %v4524 = vadd.f32 %v4119, %v4523
      %v4525 = vpop.f32.mrb[0].mxu0
      %v4526 = vpop.f32.mrb[0].mxu0
      %v4527 = vadd.f32 %v4119, %v4526
      %v4528 = vpop.f32.mrb[0].mxu0
      %4529 = vmatprep.mubr.bf16.mxu0 %v4009
      %4530 = vmatmul.mubr.bf16.gmra.mrb[0].mxu0 %v4008
      %v4531 = vpop.f32.mrb[0].mxu0
      %v4532 = vadd.f32 %v4119, %v4531
      %v4533 = vpop.f32.mrb[0].mxu0
      %v4534 = vpop.f32.mrb[0].mxu0
      %v4535 = vadd.f32 %v4119, %v4534
      %v4536 = vpop.f32.mrb[0].mxu0
      %4537 = vmatprep.mubr.bf16.mxu0 %v4011
      %4538 = vmatmul.mubr.bf16.gmra.mrb[0].mxu0 %v4010
      %v4539 = vpop.f32.mrb[0].mxu0
      %v4540 = vadd.f32 %v4119, %v4539
      %v4541 = vpop.f32.mrb[0].mxu0
      %v4542 = vpop.f32.mrb[0].mxu0
      %v4543 = vadd.f32 %v4119, %v4542
      %v4544 = vpop.f32.mrb[0].mxu0
      %4545 = vmatprep.mubr.bf16.mxu0 %v4013
      %4546 = vmatmul.mubr.bf16.gmra.mrb[0].mxu0 %v4012
      %v4547 = vpop.f32.mrb[0].mxu0
      %v4548 = vadd.f32 %v4119, %v4547
      %v4549 = vpop.f32.mrb[0].mxu0
      %v4550 = vpop.f32.mrb[0].mxu0
      %v4551 = vadd.f32 %v4119, %v4550
      %v4552 = vpop.f32.mrb[0].mxu0
      %4553 = vmatprep.mubr.bf16.mxu0 %v4015
      %4554 = vmatmul.mubr.bf16.gmra.mrb[0].mxu0 %v4014
      %v4555 = vpop.f32.mrb[0].mxu0
      %v4556 = vadd.f32 %v4119, %v4555
      %v4557 = vpop.f32.mrb[0].mxu0
      %v4558 = vpop.f32.mrb[0].mxu0
      %v4559 = vadd.f32 %v4119, %v4558
      %v4560 = vpop.f32.mrb[0].mxu0
      %4561 = vmatprep.mubr.bf16.mxu0 %v4017
      %4562 = vmatmul.mubr.bf16.gmra.mrb[0].mxu0 %v4016
      %v4563 = vpop.f32.mrb[0].mxu0
      %v4564 = vadd.f32 %v4119, %v4563
      %v4565 = vpop.f32.mrb[0].mxu0
      %v4566 = vpop.f32.mrb[0].mxu0
      %v4567 = vadd.f32 %v4119, %v4566
      %v4568 = vpop.f32.mrb[0].mxu0
      %4569 = vmatprep.mubr.bf16.mxu0 %v4019
      %4570 = vmatmul.mubr.bf16.gmra.mrb[0].mxu0 %v4018
      %v4571 = vpop.f32.mrb[0].mxu0
      %v4572 = vadd.f32 %v4119, %v4571
      %v4573 = vpop.f32.mrb[0].mxu0
      %v4574 = vpop.f32.mrb[0].mxu0
      %v4575 = vadd.f32 %v4119, %v4574
      %v4576 = vpop.f32.mrb[0].mxu0
      %4577 = vmatprep.mubr.bf16.mxu0 %v4021
      %4578 = vmatmul.mubr.bf16.gmra.mrb[0].mxu0 %v4020
      %v4579 = vpop.f32.mrb[0].mxu0
      %v4580 = vadd.f32 %v4119, %v4579
      %v4581 = vpop.f32.mrb[0].mxu0
      %v4582 = vpop.f32.mrb[0].mxu0
      %v4583 = vadd.f32 %v4119, %v4582
      %v4584 = vpop.f32.mrb[0].mxu0
      %4585 = vmatprep.mubr.bf16.mxu0 %v4023
      %4586 = vmatmul.mubr.bf16.gmra.mrb[0].mxu0 %v4022
      %v4587 = vpop.f32.mrb[0].mxu0
      %v4588 = vadd.f32 %v4119, %v4587
      %v4589 = vpop.f32.mrb[0].mxu0
      %v4590 = vpop.f32.mrb[0].mxu0
      %v4591 = vadd.f32 %v4119, %v4590
      %v4592 = vpop.f32.mrb[0].mxu0
      %4593 = vmatprep.mubr.bf16.mxu0 %v4025
      %4594 = vmatmul.mubr.bf16.gmra.mrb[0].mxu0 %v4024
      %v4595 = vpop.f32.mrb[0].mxu0
      %v4596 = vadd.f32 %v4119, %v4595
      %v4597 = vpop.f32.mrb[0].mxu0
      %v4598 = vpop.f32.mrb[0].mxu0
      %v4599 = vadd.f32 %v4119, %v4598
      %v4600 = vpop.f32.mrb[0].mxu0
      %4601 = vmatprep.mubr.bf16.mxu0 %v4027
      %4602 = vmatmul.mubr.bf16.gmra.mrb[0].mxu0 %v4026
      %v4603 = vpop.f32.mrb[0].mxu0
      %v4604 = vadd.f32 %v4119, %v4603
      %v4605 = vpop.f32.mrb[0].mxu0
      %v4606 = vpop.f32.mrb[0].mxu0
      %v4607 = vadd.f32 %v4119, %v4606
      %v4608 = vpop.f32.mrb[0].mxu0
      %4609 = vmatprep.mubr.bf16.mxu0 %v4029
      %4610 = vmatmul.mubr.bf16.gmra.mrb[0].mxu0 %v4028
      %v4611 = vpop.f32.mrb[0].mxu0
      %v4612 = vadd.f32 %v4119, %v4611
      %v4613 = vpop.f32.mrb[0].mxu0
      %v4614 = vpop.f32.mrb[0].mxu0
      %v4615 = vadd.f32 %v4119, %v4614
      %v4616 = vpop.f32.mrb[0].mxu0
      %4617 = vmatprep.mubr.bf16.mxu0 %v4031
      %4618 = vmatmul.mubr.bf16.gmra.mrb[0].mxu0 %v4030
      %v4619 = vpop.f32.mrb[0].mxu0
      %v4620 = vadd.f32 %v4119, %v4619
      %v4621 = vpop.f32.mrb[0].mxu0
      %v4622 = vpop.f32.mrb[0].mxu0
      %v4623 = vadd.f32 %v4119, %v4622
      %v4624 = vpop.f32.mrb[0].mxu0
      %4625 = vmatprep.mubr.bf16.mxu0 %v4033
      %4626 = vmatmul.mubr.bf16.gmra.mrb[0].mxu0 %v4032
      %v4627 = vpop.f32.mrb[0].mxu0
      %v4628 = vadd.f32 %v4119, %v4627
      %v4629 = vpop.f32.mrb[0].mxu0
      %v4630 = vpop.f32.mrb[0].mxu0
      %v4631 = vadd.f32 %v4119, %v4630
      %v4632 = vpop.f32.mrb[0].mxu0
      %4633 = vmatprep.mubr.bf16.mxu0 %v4035
      %4634 = vmatmul.mubr.bf16.gmra.mrb[0].mxu0 %v4034
      %v4635 = vpop.f32.mrb[0].mxu0
      %v4636 = vadd.f32 %v4119, %v4635
      %v4637 = vpop.f32.mrb[0].mxu0
      %v4638 = vpop.f32.mrb[0].mxu0
      %v4639 = vadd.f32 %v4119, %v4638
      %v4640 = vpop.f32.mrb[0].mxu0
      %4641 = vmatprep.mubr.bf16.mxu0 %v4037
      %4642 = vmatmul.mubr.bf16.gmra.mrb[0].mxu0 %v4036
      %v4643 = vpop.f32.mrb[0].mxu0
      %v4644 = vadd.f32 %v4119, %v4643
      %v4645 = vpop.f32.mrb[0].mxu0
      %v4646 = vpop.f32.mrb[0].mxu0
      %v4647 = vadd.f32 %v4119, %v4646
      %v4648 = vpop.f32.mrb[0].mxu0
      %4649 = vmatprep.mubr.bf16.mxu0 %v4039
      %4650 = vmatmul.mubr.bf16.gmra.mrb[0].mxu0 %v4038
      %v4651 = vpop.f32.mrb[0].mxu0
      %v4652 = vadd.f32 %v4119, %v4651
      %v4653 = vpop.f32.mrb[0].mxu0
      %v4654 = vpop.f32.mrb[0].mxu0
      %v4655 = vadd.f32 %v4119, %v4654
      %v4656 = vpop.f32.mrb[0].mxu0
      %4657 = vmatprep.mubr.bf16.mxu0 %v4041
      %4658 = vmatmul.mubr.bf16.gmra.mrb[0].mxu0 %v4040
      %v4659 = vpop.f32.mrb[0].mxu0
      %v4660 = vadd.f32 %v4119, %v4659
      %v4661 = vpop.f32.mrb[0].mxu0
      %v4662 = vpop.f32.mrb[0].mxu0
      %v4663 = vadd.f32 %v4119, %v4662
      %v4664 = vpop.f32.mrb[0].mxu0
      %4665 = vmatprep.mubr.bf16.mxu0 %v4043
      %4666 = vmatmul.mubr.bf16.gmra.mrb[0].mxu0 %v4042
      %v4667 = vpop.f32.mrb[0].mxu0
      %v4668 = vadd.f32 %v4119, %v4667
      %v4669 = vpop.f32.mrb[0].mxu0
      %v4670 = vpop.f32.mrb[0].mxu0
      %v4671 = vadd.f32 %v4119, %v4670
      %v4672 = vpop.f32.mrb[0].mxu0
      %4673 = vmatprep.mubr.bf16.mxu0 %v4045
      %4674 = vmatmul.mubr.bf16.gmra.mrb[0].mxu0 %v4044
      %v4675 = vpop.f32.mrb[0].mxu0
      %v4676 = vadd.f32 %v4119, %v4675
      %v4677 = vpop.f32.mrb[0].mxu0
      %v4678 = vpop.f32.mrb[0].mxu0
      %v4679 = vadd.f32 %v4119, %v4678
      %v4680 = vpop.f32.mrb[0].mxu0
      %4681 = vmatprep.mubr.bf16.mxu0 %v4047
      %4682 = vmatmul.mubr.bf16.gmra.mrb[0].mxu0 %v4046
      %v4683 = vpop.f32.mrb[0].mxu0
      %v4684 = vadd.f32 %v4119, %v4683
      %v4685 = vpop.f32.mrb[0].mxu0
      %v4686 = vpop.f32.mrb[0].mxu0
      %v4687 = vadd.f32 %v4119, %v4686
      %v4688 = vpop.f32.mrb[0].mxu0
      %4689 = vmatprep.mubr.bf16.mxu0 %v4049
      %4690 = vmatmul.mubr.bf16.gmra.mrb[0].mxu0 %v4048
      %v4691 = vpop.f32.mrb[0].mxu0
      %v4692 = vadd.f32 %v4119, %v4691
      %v4693 = vpop.f32.mrb[0].mxu0
      %v4694 = vpop.f32.mrb[0].mxu0
      %v4695 = vadd.f32 %v4119, %v4694
      %v4696 = vpop.f32.mrb[0].mxu0
      %4697 = vmatprep.mubr.bf16.mxu0 %v4051
      %4698 = vmatmul.mubr.bf16.gmra.mrb[0].mxu0 %v4050
      %v4699 = vpop.f32.mrb[0].mxu0
      %v4700 = vadd.f32 %v4119, %v4699
      %v4701 = vpop.f32.mrb[0].mxu0
      %v4702 = vpop.f32.mrb[0].mxu0
      %v4703 = vadd.f32 %v4119, %v4702
      %v4704 = vpop.f32.mrb[0].mxu0
      %4705 = vmatprep.mubr.bf16.mxu0 %v4053
      %4706 = vmatmul.mubr.bf16.gmra.mrb[0].mxu0 %v4052
      %v4707 = vpop.f32.mrb[0].mxu0
      %v4708 = vadd.f32 %v4119, %v4707
      %v4709 = vpop.f32.mrb[0].mxu0
      %v4710 = vpop.f32.mrb[0].mxu0
      %v4711 = vadd.f32 %v4119, %v4710
      %v4712 = vpop.f32.mrb[0].mxu0
      %4713 = vmatprep.mubr.bf16.mxu0 %v4055
      %4714 = vmatmul.mubr.bf16.gmra.mrb[0].mxu0 %v4054
      %v4715 = vpop.f32.mrb[0].mxu0
      %v4716 = vadd.f32 %v4119, %v4715
      %v4717 = vpop.f32.mrb[0].mxu0
      %v4718 = vpop.f32.mrb[0].mxu0
      %v4719 = vadd.f32 %v4119, %v4718
      %v4720 = vpop.f32.mrb[0].mxu0
      %4721 = vmatprep.mubr.bf16.mxu0 %v4057
      %4722 = vmatmul.mubr.bf16.gmra.mrb[0].mxu0 %v4056
      %v4723 = vpop.f32.mrb[0].mxu0
      %v4724 = vadd.f32 %v4119, %v4723
      %v4725 = vpop.f32.mrb[0].mxu0
      %v4726 = vpop.f32.mrb[0].mxu0
      %v4727 = vadd.f32 %v4119, %v4726
      %v4728 = vpop.f32.mrb[0].mxu0
      %4729 = vmatprep.mubr.bf16.mxu0 %v4059
      %4730 = vmatmul.mubr.bf16.gmra.mrb[0].mxu0 %v4058
      %v4731 = vpop.f32.mrb[0].mxu0
      %v4732 = vadd.f32 %v4119, %v4731
      %v4733 = vpop.f32.mrb[0].mxu0
      %v4734 = vpop.f32.mrb[0].mxu0
      %v4735 = vadd.f32 %v4119, %v4734
      %v4736 = vpop.f32.mrb[0].mxu0
      %4737 = vmatprep.mubr.bf16.mxu0 %v4061
      %4738 = vmatmul.mubr.bf16.gmra.mrb[0].mxu0 %v4060
      %v4739 = vpop.f32.mrb[0].mxu0
      %v4740 = vadd.f32 %v4119, %v4739
      %v4741 = vpop.f32.mrb[0].mxu0
      %v4742 = vpop.f32.mrb[0].mxu0
      %v4743 = vadd.f32 %v4119, %v4742
      %v4744 = vpop.f32.mrb[0].mxu0
      %4745 = vmatprep.mubr.bf16.mxu0 %v4063
      %4746 = vmatmul.mubr.bf16.gmra.mrb[0].mxu0 %v4062
      %v4747 = vpop.f32.mrb[0].mxu0
      %v4748 = vadd.f32 %v4119, %v4747
      %v4749 = vpop.f32.mrb[0].mxu0
      %v4750 = vpop.f32.mrb[0].mxu0
      %v4751 = vadd.f32 %v4119, %v4750
      %v4752 = vpop.f32.mrb[0].mxu0
      %4753 = vmatprep.mubr.bf16.mxu0 %v4065
      %4754 = vmatmul.mubr.bf16.gmra.mrb[0].mxu0 %v4064
      %v4755 = vpop.f32.mrb[0].mxu0
      %v4756 = vadd.f32 %v4119, %v4755
      %v4757 = vpop.f32.mrb[0].mxu0
      %v4758 = vpop.f32.mrb[0].mxu0
      %v4759 = vadd.f32 %v4119, %v4758
      %v4760 = vpop.f32.mrb[0].mxu0
      %4761 = vmatprep.mubr.bf16.mxu0 %v4067
      %4762 = vmatmul.mubr.bf16.gmra.mrb[0].mxu0 %v4066
      %v4763 = vpop.f32.mrb[0].mxu0
      %v4764 = vadd.f32 %v4119, %v4763
      %v4765 = vpop.f32.mrb[0].mxu0
      %v4766 = vpop.f32.mrb[0].mxu0
      %v4767 = vadd.f32 %v4119, %v4766
      %v4768 = vpop.f32.mrb[0].mxu0
      %4769 = vmatprep.mubr.bf16.mxu0 %v4069
      %4770 = vmatmul.mubr.bf16.gmra.mrb[0].mxu0 %v4068
      %v4771 = vpop.f32.mrb[0].mxu0
      %v4772 = vadd.f32 %v4119, %v4771
      %v4773 = vpop.f32.mrb[0].mxu0
      %v4774 = vpop.f32.mrb[0].mxu0
      %v4775 = vadd.f32 %v4119, %v4774
      %v4776 = vpop.f32.mrb[0].mxu0
      %4777 = vmatprep.mubr.bf16.mxu0 %v4071
      %4778 = vmatmul.mubr.bf16.gmra.mrb[0].mxu0 %v4070
      %v4779 = vpop.f32.mrb[0].mxu0
      %v4780 = vadd.f32 %v4119, %v4779
      %v4781 = vpop.f32.mrb[0].mxu0
      %v4782 = vpop.f32.mrb[0].mxu0
      %v4783 = vadd.f32 %v4119, %v4782
      %v4784 = vpop.f32.mrb[0].mxu0
      %4785 = vmatprep.mubr.bf16.mxu0 %v4073
      %4786 = vmatmul.mubr.bf16.gmra.mrb[0].mxu0 %v4072
      %v4787 = vpop.f32.mrb[0].mxu0
      %v4788 = vadd.f32 %v4119, %v4787
      %v4789 = vpop.f32.mrb[0].mxu0
      %v4790 = vpop.f32.mrb[0].mxu0
      %v4791 = vadd.f32 %v4119, %v4790
      %v4792 = vpop.f32.mrb[0].mxu0
      %4793 = vmatprep.mubr.bf16.mxu0 %v4075
      %4794 = vmatmul.mubr.bf16.gmra.mrb[0].mxu0 %v4074
      %v4795 = vpop.f32.mrb[0].mxu0
      %v4796 = vadd.f32 %v4119, %v4795
      %v4797 = vpop.f32.mrb[0].mxu0
      %v4798 = vpop.f32.mrb[0].mxu0
      %v4799 = vadd.f32 %v4119, %v4798
      %v4800 = vpop.f32.mrb[0].mxu0
      %4801 = vmatprep.mubr.bf16.mxu0 %v4077
      %4802 = vmatmul.mubr.bf16.gmra.mrb[0].mxu0 %v4076
      %v4803 = vpop.f32.mrb[0].mxu0
      %v4804 = vadd.f32 %v4119, %v4803
      %v4805 = vpop.f32.mrb[0].mxu0
      %v4806 = vpop.f32.mrb[0].mxu0
      %v4807 = vadd.f32 %v4119, %v4806
      %v4808 = vpop.f32.mrb[0].mxu0
      %4809 = vmatprep.mubr.bf16.mxu0 %v4079
      %4810 = vmatmul.mubr.bf16.gmra.mrb[0].mxu0 %v4078
      %v4811 = vpop.f32.mrb[0].mxu0
      %v4812 = vadd.f32 %v4119, %v4811
      %v4813 = vpop.f32.mrb[0].mxu0
      %v4814 = vpop.f32.mrb[0].mxu0
      %v4815 = vadd.f32 %v4119, %v4814
      %v4816 = vpop.f32.mrb[0].mxu0
      %4817 = vmatprep.mubr.bf16.mxu0 %v4081
      %4818 = vmatmul.mubr.bf16.gmra.mrb[0].mxu0 %v4080
      %v4819 = vpop.f32.mrb[0].mxu0
      %v4820 = vadd.f32 %v4119, %v4819
      %v4821 = vpop.f32.mrb[0].mxu0
      %v4822 = vpop.f32.mrb[0].mxu0
      %v4823 = vadd.f32 %v4119, %v4822
      %v4824 = vpop.f32.mrb[0].mxu0
      %4825 = vdwg.mxu0
      %vm4826 = vcmask 130048
      %v4827 = vsel %vm4826, %v4252, -inf
      %4828 = vmax.xlane.f32.xlu0 %v4827
      %v4829 = vpop.xlane.xlu0 %4828
      %v4830 = vsel %vm4826, %v4255, -inf
      %4831 = vmax.xlane.f32.xlu0 %v4830
      %v4832 = vpop.xlane.xlu0 %4831
      %v4833 = vsel %vm4826, %v4260, -inf
      %4834 = vmax.xlane.f32.xlu0 %v4833
      %v4835 = vpop.xlane.xlu0 %4834
      %v4836 = vsel %vm4826, %v4263, -inf
      %4837 = vmax.xlane.f32.xlu0 %v4836
      %v4838 = vpop.xlane.xlu0 %4837
      %v4839 = vsel %vm4826, %v4268, -inf
      %4840 = vmax.xlane.f32.xlu0 %v4839
      %v4841 = vpop.xlane.xlu0 %4840
      %v4842 = vsel %vm4826, %v4271, -inf
      %4843 = vmax.xlane.f32.xlu0 %v4842
      %v4844 = vpop.xlane.xlu0 %4843
      %v4845 = vsel %vm4826, %v4276, -inf
      %4846 = vmax.xlane.f32.xlu0 %v4845
      %v4847 = vpop.xlane.xlu0 %4846
      %v4848 = vsel %vm4826, %v4279, -inf
      %4849 = vmax.xlane.f32.xlu0 %v4848
      %v4850 = vpop.xlane.xlu0 %4849
      %v4851 = vsel %vm4826, %v4284, -inf
      %4852 = vmax.xlane.f32.xlu0 %v4851
      %v4853 = vpop.xlane.xlu0 %4852
      %v4854 = vsel %vm4826, %v4287, -inf
      %4855 = vmax.xlane.f32.xlu0 %v4854
      %v4856 = vpop.xlane.xlu0 %4855
      %v4857 = vsel %vm4826, %v4292, -inf
      %4858 = vmax.xlane.f32.xlu0 %v4857
      %v4859 = vpop.xlane.xlu0 %4858
      %v4860 = vsel %vm4826, %v4295, -inf
      %4861 = vmax.xlane.f32.xlu0 %v4860
      %v4862 = vpop.xlane.xlu0 %4861
      %v4863 = vsel %vm4826, %v4300, -inf
      %4864 = vmax.xlane.f32.xlu0 %v4863
      %v4865 = vpop.xlane.xlu0 %4864
      %v4866 = vsel %vm4826, %v4303, -inf
      %4867 = vmax.xlane.f32.xlu0 %v4866
      %v4868 = vpop.xlane.xlu0 %4867
      %v4869 = vsel %vm4826, %v4308, -inf
      %4870 = vmax.xlane.f32.xlu0 %v4869
      %v4871 = vpop.xlane.xlu0 %4870
      %v4872 = vsel %vm4826, %v4311, -inf
      %4873 = vmax.xlane.f32.xlu0 %v4872
      %v4874 = vpop.xlane.xlu0 %4873
      %v4875 = vsel %vm4826, %v4316, -inf
      %4876 = vmax.xlane.f32.xlu0 %v4875
      %v4877 = vpop.xlane.xlu0 %4876
      %v4878 = vsel %vm4826, %v4319, -inf
      %4879 = vmax.xlane.f32.xlu0 %v4878
      %v4880 = vpop.xlane.xlu0 %4879
      %v4881 = vsel %vm4826, %v4324, -inf
      %4882 = vmax.xlane.f32.xlu0 %v4881
      %v4883 = vpop.xlane.xlu0 %4882
      %v4884 = vsel %vm4826, %v4327, -inf
      %4885 = vmax.xlane.f32.xlu0 %v4884
      %v4886 = vpop.xlane.xlu0 %4885
      %v4887 = vsel %vm4826, %v4332, -inf
      %4888 = vmax.xlane.f32.xlu0 %v4887
      %v4889 = vpop.xlane.xlu0 %4888
      %v4890 = vsel %vm4826, %v4335, -inf
      %4891 = vmax.xlane.f32.xlu0 %v4890
      %v4892 = vpop.xlane.xlu0 %4891
      %v4893 = vsel %vm4826, %v4340, -inf
      %4894 = vmax.xlane.f32.xlu0 %v4893
      %v4895 = vpop.xlane.xlu0 %4894
      %v4896 = vsel %vm4826, %v4343, -inf
      %4897 = vmax.xlane.f32.xlu0 %v4896
      %v4898 = vpop.xlane.xlu0 %4897
      %v4899 = vsel %vm4826, %v4348, -inf
      %4900 = vmax.xlane.f32.xlu0 %v4899
      %v4901 = vpop.xlane.xlu0 %4900
      %v4902 = vsel %vm4826, %v4351, -inf
      %4903 = vmax.xlane.f32.xlu0 %v4902
      %v4904 = vpop.xlane.xlu0 %4903
      %v4905 = vsel %vm4826, %v4356, -inf
      %4906 = vmax.xlane.f32.xlu0 %v4905
      %v4907 = vpop.xlane.xlu0 %4906
      %v4908 = vsel %vm4826, %v4359, -inf
      %4909 = vmax.xlane.f32.xlu0 %v4908
      %v4910 = vpop.xlane.xlu0 %4909
      %v4911 = vsel %vm4826, %v4364, -inf
      %4912 = vmax.xlane.f32.xlu0 %v4911
      %v4913 = vpop.xlane.xlu0 %4912
      %v4914 = vsel %vm4826, %v4367, -inf
      %4915 = vmax.xlane.f32.xlu0 %v4914
      %v4916 = vpop.xlane.xlu0 %4915
      %v4917 = vsel %vm4826, %v4372, -inf
      %4918 = vmax.xlane.f32.xlu0 %v4917
      %v4919 = vpop.xlane.xlu0 %4918
      %v4920 = vsel %vm4826, %v4375, -inf
      %4921 = vmax.xlane.f32.xlu0 %v4920
      %v4922 = vpop.xlane.xlu0 %4921
      %v4923 = vsel %vm4826, %v4380, -inf
      %4924 = vmax.xlane.f32.xlu0 %v4923
      %v4925 = vpop.xlane.xlu0 %4924
      %v4926 = vsel %vm4826, %v4383, -inf
      %4927 = vmax.xlane.f32.xlu0 %v4926
      %v4928 = vpop.xlane.xlu0 %4927
      %v4929 = vsel %vm4826, %v4388, -inf
      %4930 = vmax.xlane.f32.xlu0 %v4929
      %v4931 = vpop.xlane.xlu0 %4930
      %v4932 = vsel %vm4826, %v4391, -inf
      %4933 = vmax.xlane.f32.xlu0 %v4932
      %v4934 = vpop.xlane.xlu0 %4933
      %v4935 = vsel %vm4826, %v4396, -inf
      %4936 = vmax.xlane.f32.xlu0 %v4935
      %v4937 = vpop.xlane.xlu0 %4936
      %v4938 = vsel %vm4826, %v4399, -inf
      %4939 = vmax.xlane.f32.xlu0 %v4938
      %v4940 = vpop.xlane.xlu0 %4939
      %v4941 = vsel %vm4826, %v4404, -inf
      %4942 = vmax.xlane.f32.xlu0 %v4941
      %v4943 = vpop.xlane.xlu0 %4942
      %v4944 = vsel %vm4826, %v4407, -inf
      %4945 = vmax.xlane.f32.xlu0 %v4944
      %v4946 = vpop.xlane.xlu0 %4945
      %v4947 = vsel %vm4826, %v4412, -inf
      %4948 = vmax.xlane.f32.xlu0 %v4947
      %v4949 = vpop.xlane.xlu0 %4948
      %v4950 = vsel %vm4826, %v4415, -inf
      %4951 = vmax.xlane.f32.xlu0 %v4950
      %v4952 = vpop.xlane.xlu0 %4951
      %v4953 = vsel %vm4826, %v4420, -inf
      %4954 = vmax.xlane.f32.xlu0 %v4953
      %v4955 = vpop.xlane.xlu0 %4954
      %v4956 = vsel %vm4826, %v4423, -inf
      %4957 = vmax.xlane.f32.xlu0 %v4956
      %v4958 = vpop.xlane.xlu0 %4957
      %v4959 = vsel %vm4826, %v4428, -inf
      %4960 = vmax.xlane.f32.xlu0 %v4959
      %v4961 = vpop.xlane.xlu0 %4960
      %v4962 = vsel %vm4826, %v4431, -inf
      %4963 = vmax.xlane.f32.xlu0 %v4962
      %v4964 = vpop.xlane.xlu0 %4963
      %v4965 = vsel %vm4826, %v4436, -inf
      %4966 = vmax.xlane.f32.xlu0 %v4965
      %v4967 = vpop.xlane.xlu0 %4966
      %v4968 = vsel %vm4826, %v4439, -inf
      %4969 = vmax.xlane.f32.xlu0 %v4968
      %v4970 = vpop.xlane.xlu0 %4969
      %v4971 = vsel %vm4826, %v4444, -inf
      %4972 = vmax.xlane.f32.xlu0 %v4971
      %v4973 = vpop.xlane.xlu0 %4972
      %v4974 = vsel %vm4826, %v4447, -inf
      %4975 = vmax.xlane.f32.xlu0 %v4974
      %v4976 = vpop.xlane.xlu0 %4975
      %v4977 = vsel %vm4826, %v4452, -inf
      %4978 = vmax.xlane.f32.xlu0 %v4977
      %v4979 = vpop.xlane.xlu0 %4978
      %v4980 = vsel %vm4826, %v4455, -inf
      %4981 = vmax.xlane.f32.xlu0 %v4980
      %v4982 = vpop.xlane.xlu0 %4981
      %v4983 = vsel %vm4826, %v4460, -inf
      %4984 = vmax.xlane.f32.xlu0 %v4983
      %v4985 = vpop.xlane.xlu0 %4984
      %v4986 = vsel %vm4826, %v4463, -inf
      %4987 = vmax.xlane.f32.xlu0 %v4986
      %v4988 = vpop.xlane.xlu0 %4987
      %v4989 = vsel %vm4826, %v4468, -inf
      %4990 = vmax.xlane.f32.xlu0 %v4989
      %v4991 = vpop.xlane.xlu0 %4990
      %v4992 = vsel %vm4826, %v4471, -inf
      %4993 = vmax.xlane.f32.xlu0 %v4992
      %v4994 = vpop.xlane.xlu0 %4993
      %v4995 = vsel %vm4826, %v4476, -inf
      %4996 = vmax.xlane.f32.xlu0 %v4995
      %v4997 = vpop.xlane.xlu0 %4996
      %v4998 = vsel %vm4826, %v4479, -inf
      %4999 = vmax.xlane.f32.xlu0 %v4998
      %v5000 = vpop.xlane.xlu0 %4999
      %v5001 = vsel %vm4826, %v4484, -inf
      %5002 = vmax.xlane.f32.xlu0 %v5001
      %v5003 = vpop.xlane.xlu0 %5002
      %v5004 = vsel %vm4826, %v4487, -inf
      %5005 = vmax.xlane.f32.xlu0 %v5004
      %v5006 = vpop.xlane.xlu0 %5005
      %v5007 = vsel %vm4826, %v4492, -inf
      %5008 = vmax.xlane.f32.xlu0 %v5007
      %v5009 = vpop.xlane.xlu0 %5008
      %v5010 = vsel %vm4826, %v4495, -inf
      %5011 = vmax.xlane.f32.xlu0 %v5010
      %v5012 = vpop.xlane.xlu0 %5011
      %v5013 = vsel %vm4826, %v4500, -inf
      %5014 = vmax.xlane.f32.xlu0 %v5013
      %v5015 = vpop.xlane.xlu0 %5014
      %v5016 = vsel %vm4826, %v4503, -inf
      %5017 = vmax.xlane.f32.xlu0 %v5016
      %v5018 = vpop.xlane.xlu0 %5017
      %v5019 = vsel %vm4826, %v4508, -inf
      %5020 = vmax.xlane.f32.xlu0 %v5019
      %v5021 = vpop.xlane.xlu0 %5020
      %v5022 = vsel %vm4826, %v4511, -inf
      %5023 = vmax.xlane.f32.xlu0 %v5022
      %v5024 = vpop.xlane.xlu0 %5023
      %v5025 = vsel %vm4826, %v4516, -inf
      %5026 = vmax.xlane.f32.xlu0 %v5025
      %v5027 = vpop.xlane.xlu0 %5026
      %v5028 = vsel %vm4826, %v4519, -inf
      %5029 = vmax.xlane.f32.xlu0 %v5028
      %v5030 = vpop.xlane.xlu0 %5029
      %v5031 = vsel %vm4826, %v4524, -inf
      %5032 = vmax.xlane.f32.xlu0 %v5031
      %v5033 = vpop.xlane.xlu0 %5032
      %v5034 = vsel %vm4826, %v4527, -inf
      %5035 = vmax.xlane.f32.xlu0 %v5034
      %v5036 = vpop.xlane.xlu0 %5035
      %v5037 = vsel %vm4826, %v4532, -inf
      %5038 = vmax.xlane.f32.xlu0 %v5037
      %v5039 = vpop.xlane.xlu0 %5038
      %v5040 = vsel %vm4826, %v4535, -inf
      %5041 = vmax.xlane.f32.xlu0 %v5040
      %v5042 = vpop.xlane.xlu0 %5041
      %v5043 = vsel %vm4826, %v4540, -inf
      %5044 = vmax.xlane.f32.xlu0 %v5043
      %v5045 = vpop.xlane.xlu0 %5044
      %v5046 = vsel %vm4826, %v4543, -inf
      %5047 = vmax.xlane.f32.xlu0 %v5046
      %v5048 = vpop.xlane.xlu0 %5047
      %v5049 = vsel %vm4826, %v4548, -inf
      %5050 = vmax.xlane.f32.xlu0 %v5049
      %v5051 = vpop.xlane.xlu0 %5050
      %v5052 = vsel %vm4826, %v4551, -inf
      %5053 = vmax.xlane.f32.xlu0 %v5052
      %v5054 = vpop.xlane.xlu0 %5053
      %v5055 = vsel %vm4826, %v4556, -inf
      %5056 = vmax.xlane.f32.xlu0 %v5055
      %v5057 = vpop.xlane.xlu0 %5056
      %v5058 = vsel %vm4826, %v4559, -inf
      %5059 = vmax.xlane.f32.xlu0 %v5058
      %v5060 = vpop.xlane.xlu0 %5059
      %v5061 = vsel %vm4826, %v4564, -inf
      %5062 = vmax.xlane.f32.xlu0 %v5061
      %v5063 = vpop.xlane.xlu0 %5062
      %v5064 = vsel %vm4826, %v4567, -inf
      %5065 = vmax.xlane.f32.xlu0 %v5064
      %v5066 = vpop.xlane.xlu0 %5065
      %v5067 = vsel %vm4826, %v4572, -inf
      %5068 = vmax.xlane.f32.xlu0 %v5067
      %v5069 = vpop.xlane.xlu0 %5068
      %v5070 = vsel %vm4826, %v4575, -inf
      %5071 = vmax.xlane.f32.xlu0 %v5070
      %v5072 = vpop.xlane.xlu0 %5071
      %v5073 = vsel %vm4826, %v4580, -inf
      %5074 = vmax.xlane.f32.xlu0 %v5073
      %v5075 = vpop.xlane.xlu0 %5074
      %v5076 = vsel %vm4826, %v4583, -inf
      %5077 = vmax.xlane.f32.xlu0 %v5076
      %v5078 = vpop.xlane.xlu0 %5077
      %v5079 = vsel %vm4826, %v4588, -inf
      %5080 = vmax.xlane.f32.xlu0 %v5079
      %v5081 = vpop.xlane.xlu0 %5080
      %v5082 = vsel %vm4826, %v4591, -inf
      %5083 = vmax.xlane.f32.xlu0 %v5082
      %v5084 = vpop.xlane.xlu0 %5083
      %v5085 = vsel %vm4826, %v4596, -inf
      %5086 = vmax.xlane.f32.xlu0 %v5085
      %v5087 = vpop.xlane.xlu0 %5086
      %v5088 = vsel %vm4826, %v4599, -inf
      %5089 = vmax.xlane.f32.xlu0 %v5088
      %v5090 = vpop.xlane.xlu0 %5089
      %v5091 = vsel %vm4826, %v4604, -inf
      %5092 = vmax.xlane.f32.xlu0 %v5091
      %v5093 = vpop.xlane.xlu0 %5092
      %v5094 = vsel %vm4826, %v4607, -inf
      %5095 = vmax.xlane.f32.xlu0 %v5094
      %v5096 = vpop.xlane.xlu0 %5095
      %v5097 = vsel %vm4826, %v4612, -inf
      %5098 = vmax.xlane.f32.xlu0 %v5097
      %v5099 = vpop.xlane.xlu0 %5098
      %v5100 = vsel %vm4826, %v4615, -inf
      %5101 = vmax.xlane.f32.xlu0 %v5100
      %v5102 = vpop.xlane.xlu0 %5101
      %v5103 = vsel %vm4826, %v4620, -inf
      %5104 = vmax.xlane.f32.xlu0 %v5103
      %v5105 = vpop.xlane.xlu0 %5104
      %v5106 = vsel %vm4826, %v4623, -inf
      %5107 = vmax.xlane.f32.xlu0 %v5106
      %v5108 = vpop.xlane.xlu0 %5107
      %v5109 = vsel %vm4826, %v4628, -inf
      %5110 = vmax.xlane.f32.xlu0 %v5109
      %v5111 = vpop.xlane.xlu0 %5110
      %v5112 = vsel %vm4826, %v4631, -inf
      %5113 = vmax.xlane.f32.xlu0 %v5112
      %v5114 = vpop.xlane.xlu0 %5113
      %v5115 = vsel %vm4826, %v4636, -inf
      %5116 = vmax.xlane.f32.xlu0 %v5115
      %v5117 = vpop.xlane.xlu0 %5116
      %v5118 = vsel %vm4826, %v4639, -inf
      %5119 = vmax.xlane.f32.xlu0 %v5118
      %v5120 = vpop.xlane.xlu0 %5119
      %v5121 = vsel %vm4826, %v4644, -inf
      %5122 = vmax.xlane.f32.xlu0 %v5121
      %v5123 = vpop.xlane.xlu0 %5122
      %v5124 = vsel %vm4826, %v4647, -inf
      %5125 = vmax.xlane.f32.xlu0 %v5124
      %v5126 = vpop.xlane.xlu0 %5125
      %v5127 = vsel %vm4826, %v4652, -inf
      %5128 = vmax.xlane.f32.xlu0 %v5127
      %v5129 = vpop.xlane.xlu0 %5128
      %v5130 = vsel %vm4826, %v4655, -inf
      %5131 = vmax.xlane.f32.xlu0 %v5130
      %v5132 = vpop.xlane.xlu0 %5131
      %v5133 = vsel %vm4826, %v4660, -inf
      %5134 = vmax.xlane.f32.xlu0 %v5133
      %v5135 = vpop.xlane.xlu0 %5134
      %v5136 = vsel %vm4826, %v4663, -inf
      %5137 = vmax.xlane.f32.xlu0 %v5136
      %v5138 = vpop.xlane.xlu0 %5137
      %v5139 = vsel %vm4826, %v4668, -inf
      %5140 = vmax.xlane.f32.xlu0 %v5139
      %v5141 = vpop.xlane.xlu0 %5140
      %v5142 = vsel %vm4826, %v4671, -inf
      %5143 = vmax.xlane.f32.xlu0 %v5142
      %v5144 = vpop.xlane.xlu0 %5143
      %v5145 = vsel %vm4826, %v4676, -inf
      %5146 = vmax.xlane.f32.xlu0 %v5145
      %v5147 = vpop.xlane.xlu0 %5146
      %v5148 = vsel %vm4826, %v4679, -inf
      %5149 = vmax.xlane.f32.xlu0 %v5148
      %v5150 = vpop.xlane.xlu0 %5149
      %v5151 = vsel %vm4826, %v4684, -inf
      %5152 = vmax.xlane.f32.xlu0 %v5151
      %v5153 = vpop.xlane.xlu0 %5152
      %v5154 = vsel %vm4826, %v4687, -inf
      %5155 = vmax.xlane.f32.xlu0 %v5154
      %v5156 = vpop.xlane.xlu0 %5155
      %v5157 = vsel %vm4826, %v4692, -inf
      %5158 = vmax.xlane.f32.xlu0 %v5157
      %v5159 = vpop.xlane.xlu0 %5158
      %v5160 = vsel %vm4826, %v4695, -inf
      %5161 = vmax.xlane.f32.xlu0 %v5160
      %v5162 = vpop.xlane.xlu0 %5161
      %v5163 = vsel %vm4826, %v4700, -inf
      %5164 = vmax.xlane.f32.xlu0 %v5163
      %v5165 = vpop.xlane.xlu0 %5164
      %v5166 = vsel %vm4826, %v4703, -inf
      %5167 = vmax.xlane.f32.xlu0 %v5166
      %v5168 = vpop.xlane.xlu0 %5167
      %v5169 = vsel %vm4826, %v4708, -inf
      %5170 = vmax.xlane.f32.xlu0 %v5169
      %v5171 = vpop.xlane.xlu0 %5170
      %v5172 = vsel %vm4826, %v4711, -inf
      %5173 = vmax.xlane.f32.xlu0 %v5172
      %v5174 = vpop.xlane.xlu0 %5173
      %v5175 = vsel %vm4826, %v4716, -inf
      %5176 = vmax.xlane.f32.xlu0 %v5175
      %v5177 = vpop.xlane.xlu0 %5176
      %v5178 = vsel %vm4826, %v4719, -inf
      %5179 = vmax.xlane.f32.xlu0 %v5178
      %v5180 = vpop.xlane.xlu0 %5179
      %v5181 = vsel %vm4826, %v4724, -inf
      %5182 = vmax.xlane.f32.xlu0 %v5181
      %v5183 = vpop.xlane.xlu0 %5182
      %v5184 = vsel %vm4826, %v4727, -inf
      %5185 = vmax.xlane.f32.xlu0 %v5184
      %v5186 = vpop.xlane.xlu0 %5185
      %v5187 = vsel %vm4826, %v4732, -inf
      %5188 = vmax.xlane.f32.xlu0 %v5187
      %v5189 = vpop.xlane.xlu0 %5188
      %v5190 = vsel %vm4826, %v4735, -inf
      %5191 = vmax.xlane.f32.xlu0 %v5190
      %v5192 = vpop.xlane.xlu0 %5191
      %v5193 = vsel %vm4826, %v4740, -inf
      %5194 = vmax.xlane.f32.xlu0 %v5193
      %v5195 = vpop.xlane.xlu0 %5194
      %v5196 = vsel %vm4826, %v4743, -inf
      %5197 = vmax.xlane.f32.xlu0 %v5196
      %v5198 = vpop.xlane.xlu0 %5197
      %v5199 = vsel %vm4826, %v4748, -inf
      %5200 = vmax.xlane.f32.xlu0 %v5199
      %v5201 = vpop.xlane.xlu0 %5200
      %v5202 = vsel %vm4826, %v4751, -inf
      %5203 = vmax.xlane.f32.xlu0 %v5202
      %v5204 = vpop.xlane.xlu0 %5203
      %v5205 = vsel %vm4826, %v4756, -inf
      %5206 = vmax.xlane.f32.xlu0 %v5205
      %v5207 = vpop.xlane.xlu0 %5206
      %v5208 = vsel %vm4826, %v4759, -inf
      %5209 = vmax.xlane.f32.xlu0 %v5208
      %v5210 = vpop.xlane.xlu0 %5209
      %v5211 = vsel %vm4826, %v4764, -inf
      %5212 = vmax.xlane.f32.xlu0 %v5211
      %v5213 = vpop.xlane.xlu0 %5212
      %v5214 = vsel %vm4826, %v4767, -inf
      %5215 = vmax.xlane.f32.xlu0 %v5214
      %v5216 = vpop.xlane.xlu0 %5215
      %v5217 = vsel %vm4826, %v4772, -inf
      %5218 = vmax.xlane.f32.xlu0 %v5217
      %v5219 = vpop.xlane.xlu0 %5218
      %v5220 = vsel %vm4826, %v4775, -inf
      %5221 = vmax.xlane.f32.xlu0 %v5220
      %v5222 = vpop.xlane.xlu0 %5221
      %v5223 = vsel %vm4826, %v4780, -inf
      %5224 = vmax.xlane.f32.xlu0 %v5223
      %v5225 = vpop.xlane.xlu0 %5224
      %v5226 = vsel %vm4826, %v4783, -inf
      %5227 = vmax.xlane.f32.xlu0 %v5226
      %v5228 = vpop.xlane.xlu0 %5227
      %v5229 = vsel %vm4826, %v4788, -inf
      %5230 = vmax.xlane.f32.xlu0 %v5229
      %v5231 = vpop.xlane.xlu0 %5230
      %v5232 = vsel %vm4826, %v4791, -inf
      %5233 = vmax.xlane.f32.xlu0 %v5232
      %v5234 = vpop.xlane.xlu0 %5233
      %v5235 = vsel %vm4826, %v4796, -inf
      %5236 = vmax.xlane.f32.xlu0 %v5235
      %v5237 = vpop.xlane.xlu0 %5236
      %v5238 = vsel %vm4826, %v4799, -inf
      %5239 = vmax.xlane.f32.xlu0 %v5238
      %v5240 = vpop.xlane.xlu0 %5239
      %v5241 = vsel %vm4826, %v4804, -inf
      %5242 = vmax.xlane.f32.xlu0 %v5241
      %v5243 = vpop.xlane.xlu0 %5242
      %v5244 = vsel %vm4826, %v4807, -inf
      %5245 = vmax.xlane.f32.xlu0 %v5244
      %v5246 = vpop.xlane.xlu0 %5245
      %v5247 = vsel %vm4826, %v4812, -inf
      %5248 = vmax.xlane.f32.xlu0 %v5247
      %v5249 = vpop.xlane.xlu0 %5248
      %v5250 = vsel %vm4826, %v4815, -inf
      %5251 = vmax.xlane.f32.xlu0 %v5250
      %v5252 = vpop.xlane.xlu0 %5251
      %v5253 = vsel %vm4826, %v4820, -inf
      %5254 = vmax.xlane.f32.xlu0 %v5253
      %v5255 = vpop.xlane.xlu0 %5254
      %v5256 = vsel %vm4826, %v4823, -inf
      %5257 = vmax.xlane.f32.xlu0 %v5256
      %v5258 = vpop.xlane.xlu0 %5257
      %v5259 = vsub.f32 %v4252, %v4829
      %v5260 = vsub.f32 %v4255, %v4832
      %v5261 = vsub.f32 %v4260, %v4835
      %v5262 = vsub.f32 %v4263, %v4838
      %v5263 = vsub.f32 %v4268, %v4841
      %v5264 = vsub.f32 %v4271, %v4844
      %v5265 = vsub.f32 %v4276, %v4847
      %v5266 = vsub.f32 %v4279, %v4850
      %v5267 = vsub.f32 %v4284, %v4853
      %v5268 = vsub.f32 %v4287, %v4856
      %v5269 = vsub.f32 %v4292, %v4859
      %v5270 = vsub.f32 %v4295, %v4862
      %v5271 = vsub.f32 %v4300, %v4865
      %v5272 = vsub.f32 %v4303, %v4868
      %v5273 = vsub.f32 %v4308, %v4871
      %v5274 = vsub.f32 %v4311, %v4874
      %v5275 = vsub.f32 %v4316, %v4877
      %v5276 = vsub.f32 %v4319, %v4880
      %v5277 = vsub.f32 %v4324, %v4883
      %v5278 = vsub.f32 %v4327, %v4886
      %v5279 = vsub.f32 %v4332, %v4889
      %v5280 = vsub.f32 %v4335, %v4892
      %v5281 = vsub.f32 %v4340, %v4895
      %v5282 = vsub.f32 %v4343, %v4898
      %v5283 = vsub.f32 %v4348, %v4901
      %v5284 = vsub.f32 %v4351, %v4904
      %v5285 = vsub.f32 %v4356, %v4907
      %v5286 = vsub.f32 %v4359, %v4910
      %v5287 = vsub.f32 %v4364, %v4913
      %v5288 = vsub.f32 %v4367, %v4916
      %v5289 = vsub.f32 %v4372, %v4919
      %v5290 = vsub.f32 %v4375, %v4922
      %v5291 = vsub.f32 %v4380, %v4925
      %v5292 = vsub.f32 %v4383, %v4928
      %v5293 = vsub.f32 %v4388, %v4931
      %v5294 = vsub.f32 %v4391, %v4934
      %v5295 = vsub.f32 %v4396, %v4937
      %v5296 = vsub.f32 %v4399, %v4940
      %v5297 = vsub.f32 %v4404, %v4943
      %v5298 = vsub.f32 %v4407, %v4946
      %v5299 = vsub.f32 %v4412, %v4949
      %v5300 = vsub.f32 %v4415, %v4952
      %v5301 = vsub.f32 %v4420, %v4955
      %v5302 = vsub.f32 %v4423, %v4958
      %v5303 = vsub.f32 %v4428, %v4961
      %v5304 = vsub.f32 %v4431, %v4964
      %v5305 = vsub.f32 %v4436, %v4967
      %v5306 = vsub.f32 %v4439, %v4970
      %v5307 = vsub.f32 %v4444, %v4973
      %v5308 = vsub.f32 %v4447, %v4976
      %v5309 = vsub.f32 %v4452, %v4979
      %v5310 = vsub.f32 %v4455, %v4982
      %v5311 = vsub.f32 %v4460, %v4985
      %v5312 = vsub.f32 %v4463, %v4988
      %v5313 = vsub.f32 %v4468, %v4991
      %v5314 = vsub.f32 %v4471, %v4994
      %v5315 = vsub.f32 %v4476, %v4997
      %v5316 = vsub.f32 %v4479, %v5000
      %v5317 = vsub.f32 %v4484, %v5003
      %v5318 = vsub.f32 %v4487, %v5006
      %v5319 = vsub.f32 %v4492, %v5009
      %v5320 = vsub.f32 %v4495, %v5012
      %v5321 = vsub.f32 %v4500, %v5015
      %v5322 = vsub.f32 %v4503, %v5018
      %v5323 = vsub.f32 %v4508, %v5021
      %v5324 = vsub.f32 %v4511, %v5024
      %v5325 = vsub.f32 %v4516, %v5027
      %v5326 = vsub.f32 %v4519, %v5030
      %v5327 = vsub.f32 %v4524, %v5033
      %v5328 = vsub.f32 %v4527, %v5036
      %v5329 = vsub.f32 %v4532, %v5039
      %v5330 = vsub.f32 %v4535, %v5042
      %v5331 = vsub.f32 %v4540, %v5045
      %v5332 = vsub.f32 %v4543, %v5048
      %v5333 = vsub.f32 %v4548, %v5051
      %v5334 = vsub.f32 %v4551, %v5054
      %v5335 = vsub.f32 %v4556, %v5057
      %v5336 = vsub.f32 %v4559, %v5060
      %v5337 = vsub.f32 %v4564, %v5063
      %v5338 = vsub.f32 %v4567, %v5066
      %v5339 = vsub.f32 %v4572, %v5069
      %v5340 = vsub.f32 %v4575, %v5072
      %v5341 = vsub.f32 %v4580, %v5075
      %v5342 = vsub.f32 %v4583, %v5078
      %v5343 = vsub.f32 %v4588, %v5081
      %v5344 = vsub.f32 %v4591, %v5084
      %v5345 = vsub.f32 %v4596, %v5087
      %v5346 = vsub.f32 %v4599, %v5090
      %v5347 = vsub.f32 %v4604, %v5093
      %v5348 = vsub.f32 %v4607, %v5096
      %v5349 = vsub.f32 %v4612, %v5099
      %v5350 = vsub.f32 %v4615, %v5102
      %v5351 = vsub.f32 %v4620, %v5105
      %v5352 = vsub.f32 %v4623, %v5108
      %v5353 = vsub.f32 %v4628, %v5111
      %v5354 = vsub.f32 %v4631, %v5114
      %v5355 = vsub.f32 %v4636, %v5117
      %v5356 = vsub.f32 %v4639, %v5120
      %v5357 = vsub.f32 %v4644, %v5123
      %v5358 = vsub.f32 %v4647, %v5126
      %v5359 = vsub.f32 %v4652, %v5129
      %v5360 = vsub.f32 %v4655, %v5132
      %v5361 = vsub.f32 %v4660, %v5135
      %v5362 = vsub.f32 %v4663, %v5138
      %v5363 = vsub.f32 %v4668, %v5141
      %v5364 = vsub.f32 %v4671, %v5144
      %v5365 = vsub.f32 %v4676, %v5147
      %v5366 = vsub.f32 %v4679, %v5150
      %v5367 = vsub.f32 %v4684, %v5153
      %v5368 = vsub.f32 %v4687, %v5156
      %v5369 = vsub.f32 %v4692, %v5159
      %v5370 = vsub.f32 %v4695, %v5162
      %v5371 = vsub.f32 %v4700, %v5165
      %v5372 = vsub.f32 %v4703, %v5168
      %v5373 = vsub.f32 %v4708, %v5171
      %v5374 = vsub.f32 %v4711, %v5174
      %v5375 = vsub.f32 %v4716, %v5177
      %v5376 = vsub.f32 %v4719, %v5180
      %v5377 = vsub.f32 %v4724, %v5183
      %v5378 = vsub.f32 %v4727, %v5186
      %v5379 = vsub.f32 %v4732, %v5189
      %v5380 = vsub.f32 %v4735, %v5192
      %v5381 = vsub.f32 %v4740, %v5195
      %v5382 = vsub.f32 %v4743, %v5198
      %v5383 = vsub.f32 %v4748, %v5201
      %v5384 = vsub.f32 %v4751, %v5204
      %v5385 = vsub.f32 %v4756, %v5207
      %v5386 = vsub.f32 %v4759, %v5210
      %v5387 = vsub.f32 %v4764, %v5213
      %v5388 = vsub.f32 %v4767, %v5216
      %v5389 = vsub.f32 %v4772, %v5219
      %v5390 = vsub.f32 %v4775, %v5222
      %v5391 = vsub.f32 %v4780, %v5225
      %v5392 = vsub.f32 %v4783, %v5228
      %v5393 = vsub.f32 %v4788, %v5231
      %v5394 = vsub.f32 %v4791, %v5234
      %v5395 = vsub.f32 %v4796, %v5237
      %v5396 = vsub.f32 %v4799, %v5240
      %v5397 = vsub.f32 %v4804, %v5243
      %v5398 = vsub.f32 %v4807, %v5246
      %v5399 = vsub.f32 %v4812, %v5249
      %v5400 = vsub.f32 %v4815, %v5252
      %v5401 = vsub.f32 %v4820, %v5255
      %v5402 = vsub.f32 %v4823, %v5258
      %v5403 = vmul.f32 %v5259, 1.442695
      %v5404 = vpow.pop %v5403
      %v5405 = vmul.f32 %v5260, 1.442695
      %v5406 = vpow.pop %v5405
      %v5407 = vmul.f32 %v5261, 1.442695
      %v5408 = vpow.pop %v5407
      %v5409 = vmul.f32 %v5262, 1.442695
      %v5410 = vpow.pop %v5409
      %v5411 = vmul.f32 %v5263, 1.442695
      %v5412 = vpow.pop %v5411
      %v5413 = vmul.f32 %v5264, 1.442695
      %v5414 = vpow.pop %v5413
      %v5415 = vmul.f32 %v5265, 1.442695
      %v5416 = vpow.pop %v5415
      %v5417 = vmul.f32 %v5266, 1.442695
      %v5418 = vpow.pop %v5417
      %v5419 = vmul.f32 %v5267, 1.442695
      %v5420 = vpow.pop %v5419
      %v5421 = vmul.f32 %v5268, 1.442695
      %v5422 = vpow.pop %v5421
      %v5423 = vmul.f32 %v5269, 1.442695
      %v5424 = vpow.pop %v5423
      %v5425 = vmul.f32 %v5270, 1.442695
      %v5426 = vpow.pop %v5425
      %v5427 = vmul.f32 %v5271, 1.442695
      %v5428 = vpow.pop %v5427
      %v5429 = vmul.f32 %v5272, 1.442695
      %v5430 = vpow.pop %v5429
      %v5431 = vmul.f32 %v5273, 1.442695
      %v5432 = vpow.pop %v5431
      %v5433 = vmul.f32 %v5274, 1.442695
      %v5434 = vpow.pop %v5433
      %v5435 = vmul.f32 %v5275, 1.442695
      %v5436 = vpow.pop %v5435
      %v5437 = vmul.f32 %v5276, 1.442695
      %v5438 = vpow.pop %v5437
      %v5439 = vmul.f32 %v5277, 1.442695
      %v5440 = vpow.pop %v5439
      %v5441 = vmul.f32 %v5278, 1.442695
      %v5442 = vpow.pop %v5441
      %v5443 = vmul.f32 %v5279, 1.442695
      %v5444 = vpow.pop %v5443
      %v5445 = vmul.f32 %v5280, 1.442695
      %v5446 = vpow.pop %v5445
      %v5447 = vmul.f32 %v5281, 1.442695
      %v5448 = vpow.pop %v5447
      %v5449 = vmul.f32 %v5282, 1.442695
      %v5450 = vpow.pop %v5449
      %v5451 = vmul.f32 %v5283, 1.442695
      %v5452 = vpow.pop %v5451
      %v5453 = vmul.f32 %v5284, 1.442695
      %v5454 = vpow.pop %v5453
      %v5455 = vmul.f32 %v5285, 1.442695
      %v5456 = vpow.pop %v5455
      %v5457 = vmul.f32 %v5286, 1.442695
      %v5458 = vpow.pop %v5457
      %v5459 = vmul.f32 %v5287, 1.442695
      %v5460 = vpow.pop %v5459
      %v5461 = vmul.f32 %v5288, 1.442695
      %v5462 = vpow.pop %v5461
      %v5463 = vmul.f32 %v5289, 1.442695
      %v5464 = vpow.pop %v5463
      %v5465 = vmul.f32 %v5290, 1.442695
      %v5466 = vpow.pop %v5465
      %v5467 = vmul.f32 %v5291, 1.442695
      %v5468 = vpow.pop %v5467
      %v5469 = vmul.f32 %v5292, 1.442695
      %v5470 = vpow.pop %v5469
      %v5471 = vmul.f32 %v5293, 1.442695
      %v5472 = vpow.pop %v5471
      %v5473 = vmul.f32 %v5294, 1.442695
      %v5474 = vpow.pop %v5473
      %v5475 = vmul.f32 %v5295, 1.442695
      %v5476 = vpow.pop %v5475
      %v5477 = vmul.f32 %v5296, 1.442695
      %v5478 = vpow.pop %v5477
      %v5479 = vmul.f32 %v5297, 1.442695
      %v5480 = vpow.pop %v5479
      %v5481 = vmul.f32 %v5298, 1.442695
      %v5482 = vpow.pop %v5481
      %v5483 = vmul.f32 %v5299, 1.442695
      %v5484 = vpow.pop %v5483
      %v5485 = vmul.f32 %v5300, 1.442695
      %v5486 = vpow.pop %v5485
      %v5487 = vmul.f32 %v5301, 1.442695
      %v5488 = vpow.pop %v5487
      %v5489 = vmul.f32 %v5302, 1.442695
      %v5490 = vpow.pop %v5489
      %v5491 = vmul.f32 %v5303, 1.442695
      %v5492 = vpow.pop %v5491
      %v5493 = vmul.f32 %v5304, 1.442695
      %v5494 = vpow.pop %v5493
      %v5495 = vmul.f32 %v5305, 1.442695
      %v5496 = vpow.pop %v5495
      %v5497 = vmul.f32 %v5306, 1.442695
      %v5498 = vpow.pop %v5497
      %v5499 = vmul.f32 %v5307, 1.442695
      %v5500 = vpow.pop %v5499
      %v5501 = vmul.f32 %v5308, 1.442695
      %v5502 = vpow.pop %v5501
      %v5503 = vmul.f32 %v5309, 1.442695
      %v5504 = vpow.pop %v5503
      %v5505 = vmul.f32 %v5310, 1.442695
      %v5506 = vpow.pop %v5505
      %v5507 = vmul.f32 %v5311, 1.442695
      %v5508 = vpow.pop %v5507
      %v5509 = vmul.f32 %v5312, 1.442695
      %v5510 = vpow.pop %v5509
      %v5511 = vmul.f32 %v5313, 1.442695
      %v5512 = vpow.pop %v5511
      %v5513 = vmul.f32 %v5314, 1.442695
      %v5514 = vpow.pop %v5513
      %v5515 = vmul.f32 %v5315, 1.442695
      %v5516 = vpow.pop %v5515
      %v5517 = vmul.f32 %v5316, 1.442695
      %v5518 = vpow.pop %v5517
      %v5519 = vmul.f32 %v5317, 1.442695
      %v5520 = vpow.pop %v5519
      %v5521 = vmul.f32 %v5318, 1.442695
      %v5522 = vpow.pop %v5521
      %v5523 = vmul.f32 %v5319, 1.442695
      %v5524 = vpow.pop %v5523
      %v5525 = vmul.f32 %v5320, 1.442695
      %v5526 = vpow.pop %v5525
      %v5527 = vmul.f32 %v5321, 1.442695
      %v5528 = vpow.pop %v5527
      %v5529 = vmul.f32 %v5322, 1.442695
      %v5530 = vpow.pop %v5529
      %v5531 = vmul.f32 %v5323, 1.442695
      %v5532 = vpow.pop %v5531
      %v5533 = vmul.f32 %v5324, 1.442695
      %v5534 = vpow.pop %v5533
      %v5535 = vmul.f32 %v5325, 1.442695
      %v5536 = vpow.pop %v5535
      %v5537 = vmul.f32 %v5326, 1.442695
      %v5538 = vpow.pop %v5537
      %v5539 = vmul.f32 %v5327, 1.442695
      %v5540 = vpow.pop %v5539
      %v5541 = vmul.f32 %v5328, 1.442695
      %v5542 = vpow.pop %v5541
      %v5543 = vmul.f32 %v5329, 1.442695
      %v5544 = vpow.pop %v5543
      %v5545 = vmul.f32 %v5330, 1.442695
      %v5546 = vpow.pop %v5545
      %v5547 = vmul.f32 %v5331, 1.442695
      %v5548 = vpow.pop %v5547
      %v5549 = vmul.f32 %v5332, 1.442695
      %v5550 = vpow.pop %v5549
      %v5551 = vmul.f32 %v5333, 1.442695
      %v5552 = vpow.pop %v5551
      %v5553 = vmul.f32 %v5334, 1.442695
      %v5554 = vpow.pop %v5553
      %v5555 = vmul.f32 %v5335, 1.442695
      %v5556 = vpow.pop %v5555
      %v5557 = vmul.f32 %v5336, 1.442695
      %v5558 = vpow.pop %v5557
      %v5559 = vmul.f32 %v5337, 1.442695
      %v5560 = vpow.pop %v5559
      %v5561 = vmul.f32 %v5338, 1.442695
      %v5562 = vpow.pop %v5561
      %v5563 = vmul.f32 %v5339, 1.442695
      %v5564 = vpow.pop %v5563
      %v5565 = vmul.f32 %v5340, 1.442695
      %v5566 = vpow.pop %v5565
      %v5567 = vmul.f32 %v5341, 1.442695
      %v5568 = vpow.pop %v5567
      %v5569 = vmul.f32 %v5342, 1.442695
      %v5570 = vpow.pop %v5569
      %v5571 = vmul.f32 %v5343, 1.442695
      %v5572 = vpow.pop %v5571
      %v5573 = vmul.f32 %v5344, 1.442695
      %v5574 = vpow.pop %v5573
      %v5575 = vmul.f32 %v5345, 1.442695
      %v5576 = vpow.pop %v5575
      %v5577 = vmul.f32 %v5346, 1.442695
      %v5578 = vpow.pop %v5577
      %v5579 = vmul.f32 %v5347, 1.442695
      %v5580 = vpow.pop %v5579
      %v5581 = vmul.f32 %v5348, 1.442695
      %v5582 = vpow.pop %v5581
      %v5583 = vmul.f32 %v5349, 1.442695
      %v5584 = vpow.pop %v5583
      %v5585 = vmul.f32 %v5350, 1.442695
      %v5586 = vpow.pop %v5585
      %v5587 = vmul.f32 %v5351, 1.442695
      %v5588 = vpow.pop %v5587
      %v5589 = vmul.f32 %v5352, 1.442695
      %v5590 = vpow.pop %v5589
      %v5591 = vmul.f32 %v5353, 1.442695
      %v5592 = vpow.pop %v5591
      %v5593 = vmul.f32 %v5354, 1.442695
      %v5594 = vpow.pop %v5593
      %v5595 = vmul.f32 %v5355, 1.442695
      %v5596 = vpow.pop %v5595
      %v5597 = vmul.f32 %v5356, 1.442695
      %v5598 = vpow.pop %v5597
      %v5599 = vmul.f32 %v5357, 1.442695
      %v5600 = vpow.pop %v5599
      %v5601 = vmul.f32 %v5358, 1.442695
      %v5602 = vpow.pop %v5601
      %v5603 = vmul.f32 %v5359, 1.442695
      %v5604 = vpow.pop %v5603
      %v5605 = vmul.f32 %v5360, 1.442695
      %v5606 = vpow.pop %v5605
      %v5607 = vmul.f32 %v5361, 1.442695
      %v5608 = vpow.pop %v5607
      %v5609 = vmul.f32 %v5362, 1.442695
      %v5610 = vpow.pop %v5609
      %v5611 = vmul.f32 %v5363, 1.442695
      %v5612 = vpow.pop %v5611
      %v5613 = vmul.f32 %v5364, 1.442695
      %v5614 = vpow.pop %v5613
      %v5615 = vmul.f32 %v5365, 1.442695
      %v5616 = vpow.pop %v5615
      %v5617 = vmul.f32 %v5366, 1.442695
      %v5618 = vpow.pop %v5617
      %v5619 = vmul.f32 %v5367, 1.442695
      %v5620 = vpow.pop %v5619
      %v5621 = vmul.f32 %v5368, 1.442695
      %v5622 = vpow.pop %v5621
      %v5623 = vmul.f32 %v5369, 1.442695
      %v5624 = vpow.pop %v5623
      %v5625 = vmul.f32 %v5370, 1.442695
      %v5626 = vpow.pop %v5625
      %v5627 = vmul.f32 %v5371, 1.442695
      %v5628 = vpow.pop %v5627
      %v5629 = vmul.f32 %v5372, 1.442695
      %v5630 = vpow.pop %v5629
      %v5631 = vmul.f32 %v5373, 1.442695
      %v5632 = vpow.pop %v5631
      %v5633 = vmul.f32 %v5374, 1.442695
      %v5634 = vpow.pop %v5633
      %v5635 = vmul.f32 %v5375, 1.442695
      %v5636 = vpow.pop %v5635
      %v5637 = vmul.f32 %v5376, 1.442695
      %v5638 = vpow.pop %v5637
      %v5639 = vmul.f32 %v5377, 1.442695
      %v5640 = vpow.pop %v5639
      %v5641 = vmul.f32 %v5378, 1.442695
      %v5642 = vpow.pop %v5641
      %v5643 = vmul.f32 %v5379, 1.442695
      %v5644 = vpow.pop %v5643
      %v5645 = vmul.f32 %v5380, 1.442695
      %v5646 = vpow.pop %v5645
      %v5647 = vmul.f32 %v5381, 1.442695
      %v5648 = vpow.pop %v5647
      %v5649 = vmul.f32 %v5382, 1.442695
      %v5650 = vpow.pop %v5649
      %v5651 = vmul.f32 %v5383, 1.442695
      %v5652 = vpow.pop %v5651
      %v5653 = vmul.f32 %v5384, 1.442695
      %v5654 = vpow.pop %v5653
      %v5655 = vmul.f32 %v5385, 1.442695
      %v5656 = vpow.pop %v5655
      %v5657 = vmul.f32 %v5386, 1.442695
      %v5658 = vpow.pop %v5657
      %v5659 = vmul.f32 %v5387, 1.442695
      %v5660 = vpow.pop %v5659
      %v5661 = vmul.f32 %v5388, 1.442695
      %v5662 = vpow.pop %v5661
      %v5663 = vmul.f32 %v5389, 1.442695
      %v5664 = vpow.pop %v5663
      %v5665 = vmul.f32 %v5390, 1.442695
      %v5666 = vpow.pop %v5665
      %v5667 = vmul.f32 %v5391, 1.442695
      %v5668 = vpow.pop %v5667
      %v5669 = vmul.f32 %v5392, 1.442695
      %v5670 = vpow.pop %v5669
      %v5671 = vmul.f32 %v5393, 1.442695
      %v5672 = vpow.pop %v5671
      %v5673 = vmul.f32 %v5394, 1.442695
      %v5674 = vpow.pop %v5673
      %v5675 = vmul.f32 %v5395, 1.442695
      %v5676 = vpow.pop %v5675
      %v5677 = vmul.f32 %v5396, 1.442695
      %v5678 = vpow.pop %v5677
      %v5679 = vmul.f32 %v5397, 1.442695
      %v5680 = vpow.pop %v5679
      %v5681 = vmul.f32 %v5398, 1.442695
      %v5682 = vpow.pop %v5681
      %v5683 = vmul.f32 %v5399, 1.442695
      %v5684 = vpow.pop %v5683
      %v5685 = vmul.f32 %v5400, 1.442695
      %v5686 = vpow.pop %v5685
      %v5687 = vmul.f32 %v5401, 1.442695
      %v5688 = vpow.pop %v5687
      %v5689 = vmul.f32 %v5402, 1.442695
      %v5690 = vpow.pop %v5689
      %v5691 = vpack.c.bf16 %v5406, %v5404
      %v5692 = vpack.c.bf16 %v5410, %v5408
      %v5693 = vpack.c.bf16 %v5414, %v5412
      %v5694 = vpack.c.bf16 %v5418, %v5416
      %v5695 = vpack.c.bf16 %v5422, %v5420
      %v5696 = vpack.c.bf16 %v5426, %v5424
      %v5697 = vpack.c.bf16 %v5430, %v5428
      %v5698 = vpack.c.bf16 %v5434, %v5432
      %v5699 = vpack.c.bf16 %v5438, %v5436
      %v5700 = vpack.c.bf16 %v5442, %v5440
      %v5701 = vpack.c.bf16 %v5446, %v5444
      %v5702 = vpack.c.bf16 %v5450, %v5448
      %v5703 = vpack.c.bf16 %v5454, %v5452
      %v5704 = vpack.c.bf16 %v5458, %v5456
      %v5705 = vpack.c.bf16 %v5462, %v5460
      %v5706 = vpack.c.bf16 %v5466, %v5464
      %v5707 = vpack.c.bf16 %v5470, %v5468
      %v5708 = vpack.c.bf16 %v5474, %v5472
      %v5709 = vpack.c.bf16 %v5478, %v5476
      %v5710 = vpack.c.bf16 %v5482, %v5480
      %v5711 = vpack.c.bf16 %v5486, %v5484
      %v5712 = vpack.c.bf16 %v5490, %v5488
      %v5713 = vpack.c.bf16 %v5494, %v5492
      %v5714 = vpack.c.bf16 %v5498, %v5496
      %v5715 = vpack.c.bf16 %v5502, %v5500
      %v5716 = vpack.c.bf16 %v5506, %v5504
      %v5717 = vpack.c.bf16 %v5510, %v5508
      %v5718 = vpack.c.bf16 %v5514, %v5512
      %v5719 = vpack.c.bf16 %v5518, %v5516
      %v5720 = vpack.c.bf16 %v5522, %v5520
      %v5721 = vpack.c.bf16 %v5526, %v5524
      %v5722 = vpack.c.bf16 %v5530, %v5528
      %v5723 = vpack.c.bf16 %v5534, %v5532
      %v5724 = vpack.c.bf16 %v5538, %v5536
      %v5725 = vpack.c.bf16 %v5542, %v5540
      %v5726 = vpack.c.bf16 %v5546, %v5544
      %v5727 = vpack.c.bf16 %v5550, %v5548
      %v5728 = vpack.c.bf16 %v5554, %v5552
      %v5729 = vpack.c.bf16 %v5558, %v5556
      %v5730 = vpack.c.bf16 %v5562, %v5560
      %v5731 = vpack.c.bf16 %v5566, %v5564
      %v5732 = vpack.c.bf16 %v5570, %v5568
      %v5733 = vpack.c.bf16 %v5574, %v5572
      %v5734 = vpack.c.bf16 %v5578, %v5576
      %v5735 = vpack.c.bf16 %v5582, %v5580
      %v5736 = vpack.c.bf16 %v5586, %v5584
      %v5737 = vpack.c.bf16 %v5590, %v5588
      %v5738 = vpack.c.bf16 %v5594, %v5592
      %v5739 = vpack.c.bf16 %v5598, %v5596
      %v5740 = vpack.c.bf16 %v5602, %v5600
      %v5741 = vpack.c.bf16 %v5606, %v5604
      %v5742 = vpack.c.bf16 %v5610, %v5608
      %v5743 = vpack.c.bf16 %v5614, %v5612
      %v5744 = vpack.c.bf16 %v5618, %v5616
      %v5745 = vpack.c.bf16 %v5622, %v5620
      %v5746 = vpack.c.bf16 %v5626, %v5624
      %v5747 = vpack.c.bf16 %v5630, %v5628
      %v5748 = vpack.c.bf16 %v5634, %v5632
      %v5749 = vpack.c.bf16 %v5638, %v5636
      %v5750 = vpack.c.bf16 %v5642, %v5640
      %v5751 = vpack.c.bf16 %v5646, %v5644
      %v5752 = vpack.c.bf16 %v5650, %v5648
      %v5753 = vpack.c.bf16 %v5654, %v5652
      %v5754 = vpack.c.bf16 %v5658, %v5656
      %v5755 = vpack.c.bf16 %v5662, %v5660
      %v5756 = vpack.c.bf16 %v5666, %v5664
      %v5757 = vpack.c.bf16 %v5670, %v5668
      %v5758 = vpack.c.bf16 %v5674, %v5672
      %v5759 = vpack.c.bf16 %v5678, %v5676
      %v5760 = vpack.c.bf16 %v5682, %v5680
      %v5761 = vpack.c.bf16 %v5686, %v5684
      %v5762 = vpack.c.bf16 %v5690, %v5688
      %v5763 = vld [vmem:[%s4] sm:$0xf]
      %v5764 = vld [vmem:[%s4 + $0x4] sm:$0xf]
      %v5767 = vunpack.c.l.b16 %v5763
      %v5768 = vunpack.c.l.b16 %v5764
      %v5769 = vpack.c.b16 %v5768, %v5767
      %v5772 = vsel %vm4826, %v5691, 0
      %v5775 = vsel %vm4826, %v5692, 0
      %v5778 = vsel %vm4826, %v5693, 0
      %v5781 = vsel %vm4826, %v5694, 0
      %v5784 = vsel %vm4826, %v5695, 0
      %v5787 = vsel %vm4826, %v5696, 0
      %v5790 = vsel %vm4826, %v5697, 0
      %v5793 = vsel %vm4826, %v5698, 0
      %v5796 = vsel %vm4826, %v5699, 0
      %v5799 = vsel %vm4826, %v5700, 0
      %v5802 = vsel %vm4826, %v5701, 0
      %v5805 = vsel %vm4826, %v5702, 0
      %v5808 = vsel %vm4826, %v5703, 0
      %v5811 = vsel %vm4826, %v5704, 0
      %v5814 = vsel %vm4826, %v5705, 0
      %v5817 = vsel %vm4826, %v5706, 0
      %v5820 = vsel %vm4826, %v5707, 0
      %v5823 = vsel %vm4826, %v5708, 0
      %v5826 = vsel %vm4826, %v5709, 0
      %v5829 = vsel %vm4826, %v5710, 0
      %v5832 = vsel %vm4826, %v5711, 0
      %v5835 = vsel %vm4826, %v5712, 0
      %v5838 = vsel %vm4826, %v5713, 0
      %v5841 = vsel %vm4826, %v5714, 0
      %v5844 = vsel %vm4826, %v5715, 0
      %v5847 = vsel %vm4826, %v5716, 0
      %v5850 = vsel %vm4826, %v5717, 0
      %v5853 = vsel %vm4826, %v5718, 0
      %v5856 = vsel %vm4826, %v5719, 0
      %v5859 = vsel %vm4826, %v5720, 0
      %v5862 = vsel %vm4826, %v5721, 0
      %v5865 = vsel %vm4826, %v5722, 0
      %v5868 = vsel %vm4826, %v5723, 0
      %v5871 = vsel %vm4826, %v5724, 0
      %v5874 = vsel %vm4826, %v5725, 0
      %v5877 = vsel %vm4826, %v5726, 0
      %v5880 = vsel %vm4826, %v5727, 0
      %v5883 = vsel %vm4826, %v5728, 0
      %v5886 = vsel %vm4826, %v5729, 0
      %v5889 = vsel %vm4826, %v5730, 0
      %v5892 = vsel %vm4826, %v5731, 0
      %v5895 = vsel %vm4826, %v5732, 0
      %v5898 = vsel %vm4826, %v5733, 0
      %v5901 = vsel %vm4826, %v5734, 0
      %v5904 = vsel %vm4826, %v5735, 0
      %v5907 = vsel %vm4826, %v5736, 0
      %v5910 = vsel %vm4826, %v5737, 0
      %v5913 = vsel %vm4826, %v5738, 0
      %v5916 = vsel %vm4826, %v5739, 0
      %v5919 = vsel %vm4826, %v5740, 0
      %v5922 = vsel %vm4826, %v5741, 0
      %v5925 = vsel %vm4826, %v5742, 0
      %v5928 = vsel %vm4826, %v5743, 0
      %v5931 = vsel %vm4826, %v5744, 0
      %v5934 = vsel %vm4826, %v5745, 0
      %v5937 = vsel %vm4826, %v5746, 0
      %v5940 = vsel %vm4826, %v5747, 0
      %v5943 = vsel %vm4826, %v5748, 0
      %v5946 = vsel %vm4826, %v5749, 0
      %v5949 = vsel %vm4826, %v5750, 0
      %v5952 = vsel %vm4826, %v5751, 0
      %v5955 = vsel %vm4826, %v5752, 0
      %v5958 = vsel %vm4826, %v5753, 0
      %v5961 = vsel %vm4826, %v5754, 0
      %v5964 = vsel %vm4826, %v5755, 0
      %v5967 = vsel %vm4826, %v5756, 0
      %v5970 = vsel %vm4826, %v5757, 0
      %v5973 = vsel %vm4826, %v5758, 0
      %v5976 = vsel %vm4826, %v5759, 0
      %v5979 = vsel %vm4826, %v5760, 0
      %v5982 = vsel %vm4826, %v5761, 0
      %v5985 = vsel %vm4826, %v5762, 0
      %5987 = vmatprep.subr.bf16.mxu0 0
      %5988 = vmatpush1.bf16.msra.mxu0 %v5769
      %5989 = vmatprep.subr.bf16.mxu0 0
      %5990 = vmatpush1.bf16.msra.mxu0 0
      %5991 = vmatprep.subr.bf16.mxu0 0
      %5992 = vmatpush1.bf16.msra.mxu0 0
      %5993 = vmatprep.subr.bf16.mxu0 0
      %5994 = vmatpush1.bf16.msra.mxu0 0
      %5995 = vmatprep.subr.bf16.mxu0 0
      %5996 = vmatpush1.bf16.msra.mxu0 0
      %5997 = vmatprep.subr.bf16.mxu0 0
      %5998 = vmatpush1.bf16.msra.mxu0 0
      %5999 = vmatprep.subr.bf16.mxu0 0
      %6000 = vmatpush1.bf16.msra.mxu0 0
      %6001 = vmatprep.subr.bf16.mxu0 0
      %6002 = vmatpush1.bf16.msra.mxu0 0
      %6003 = vmatprep.subr.bf16.mxu0 0
      %6004 = vmatpush1.bf16.msra.mxu0 0
      %6005 = vmatprep.subr.bf16.mxu0 0
      %6006 = vmatpush1.bf16.msra.mxu0 0
      %6007 = vmatprep.subr.bf16.mxu0 0
      %6008 = vmatpush1.bf16.msra.mxu0 0
      %6009 = vmatprep.subr.bf16.mxu0 0
      %6010 = vmatpush1.bf16.msra.mxu0 0
      %6011 = vmatprep.subr.bf16.mxu0 0
      %6012 = vmatpush1.bf16.msra.mxu0 0
      %6013 = vmatprep.subr.bf16.mxu0 0
      %6014 = vmatpush1.bf16.msra.mxu0 0
      %6015 = vmatprep.subr.bf16.mxu0 0
      %6016 = vmatpush1.bf16.msra.mxu0 0
      %6017 = vmatprep.subr.bf16.mxu0 0
      %6018 = vmatpush1.bf16.msra.mxu0 0
      %6019 = vmatprep.mubr.bf16.mxu0 0
      %6020 = vmatmul.mubr.bf16.gmra.mrb[0].mxu0 %v5772
      %v6021 = vpop.f32.mrb[0].mxu0
      %v6022 = vadd.f32 0.0, %v6021
      %v6023 = vpop.f32.mrb[0].mxu0
      %v6024 = vpop.f32.mrb[0].mxu0
      %v6025 = vadd.f32 0.0, %v6024
      %v6026 = vpop.f32.mrb[0].mxu0
      %6027 = vmatprep.mubr.bf16.mxu0 0
      %6028 = vmatmul.mubr.bf16.gmra.mrb[0].mxu0 %v5775
      %v6029 = vpop.f32.mrb[0].mxu0
      %v6030 = vadd.f32 0.0, %v6029
      %v6031 = vpop.f32.mrb[0].mxu0
      %v6032 = vpop.f32.mrb[0].mxu0
      %v6033 = vadd.f32 0.0, %v6032
      %v6034 = vpop.f32.mrb[0].mxu0
      %6035 = vmatprep.mubr.bf16.mxu0 0
      %6036 = vmatmul.mubr.bf16.gmra.mrb[0].mxu0 %v5778
      %v6037 = vpop.f32.mrb[0].mxu0
      %v6038 = vadd.f32 0.0, %v6037
      %v6039 = vpop.f32.mrb[0].mxu0
      %v6040 = vpop.f32.mrb[0].mxu0
      %v6041 = vadd.f32 0.0, %v6040
      %v6042 = vpop.f32.mrb[0].mxu0
      %6043 = vmatprep.mubr.bf16.mxu0 0
      %6044 = vmatmul.mubr.bf16.gmra.mrb[0].mxu0 %v5781
      %v6045 = vpop.f32.mrb[0].mxu0
      %v6046 = vadd.f32 0.0, %v6045
      %v6047 = vpop.f32.mrb[0].mxu0
      %v6048 = vpop.f32.mrb[0].mxu0
      %v6049 = vadd.f32 0.0, %v6048
      %v6050 = vpop.f32.mrb[0].mxu0
      %6051 = vmatprep.mubr.bf16.mxu0 0
      %6052 = vmatmul.mubr.bf16.gmra.mrb[0].mxu0 %v5784
      %v6053 = vpop.f32.mrb[0].mxu0
      %v6054 = vadd.f32 0.0, %v6053
      %v6055 = vpop.f32.mrb[0].mxu0
      %v6056 = vpop.f32.mrb[0].mxu0
      %v6057 = vadd.f32 0.0, %v6056
      %v6058 = vpop.f32.mrb[0].mxu0
      %6059 = vmatprep.mubr.bf16.mxu0 0
      %6060 = vmatmul.mubr.bf16.gmra.mrb[0].mxu0 %v5787
      %v6061 = vpop.f32.mrb[0].mxu0
      %v6062 = vadd.f32 0.0, %v6061
      %v6063 = vpop.f32.mrb[0].mxu0
      %v6064 = vpop.f32.mrb[0].mxu0
      %v6065 = vadd.f32 0.0, %v6064
      %v6066 = vpop.f32.mrb[0].mxu0
      %6067 = vmatprep.mubr.bf16.mxu0 0
      %6068 = vmatmul.mubr.bf16.gmra.mrb[0].mxu0 %v5790
      %v6069 = vpop.f32.mrb[0].mxu0
      %v6070 = vadd.f32 0.0, %v6069
      %v6071 = vpop.f32.mrb[0].mxu0
      %v6072 = vpop.f32.mrb[0].mxu0
      %v6073 = vadd.f32 0.0, %v6072
      %v6074 = vpop.f32.mrb[0].mxu0
      %6075 = vmatprep.mubr.bf16.mxu0 0
      %6076 = vmatmul.mubr.bf16.gmra.mrb[0].mxu0 %v5793
      %v6077 = vpop.f32.mrb[0].mxu0
      %v6078 = vadd.f32 0.0, %v6077
      %v6079 = vpop.f32.mrb[0].mxu0
      %v6080 = vpop.f32.mrb[0].mxu0
      %v6081 = vadd.f32 0.0, %v6080
      %v6082 = vpop.f32.mrb[0].mxu0
      %6083 = vmatprep.mubr.bf16.mxu0 0
      %6084 = vmatmul.mubr.bf16.gmra.mrb[0].mxu0 %v5796
      %v6085 = vpop.f32.mrb[0].mxu0
      %v6086 = vadd.f32 0.0, %v6085
      %v6087 = vpop.f32.mrb[0].mxu0
      %v6088 = vpop.f32.mrb[0].mxu0
      %v6089 = vadd.f32 0.0, %v6088
      %v6090 = vpop.f32.mrb[0].mxu0
      %6091 = vmatprep.mubr.bf16.mxu0 0
      %6092 = vmatmul.mubr.bf16.gmra.mrb[0].mxu0 %v5799
      %v6093 = vpop.f32.mrb[0].mxu0
      %v6094 = vadd.f32 0.0, %v6093
      %v6095 = vpop.f32.mrb[0].mxu0
      %v6096 = vpop.f32.mrb[0].mxu0
      %v6097 = vadd.f32 0.0, %v6096
      %v6098 = vpop.f32.mrb[0].mxu0
      %6099 = vmatprep.mubr.bf16.mxu0 0
      %6100 = vmatmul.mubr.bf16.gmra.mrb[0].mxu0 %v5802
      %v6101 = vpop.f32.mrb[0].mxu0
      %v6102 = vadd.f32 0.0, %v6101
      %v6103 = vpop.f32.mrb[0].mxu0
      %v6104 = vpop.f32.mrb[0].mxu0
      %v6105 = vadd.f32 0.0, %v6104
      %v6106 = vpop.f32.mrb[0].mxu0
      %6107 = vmatprep.mubr.bf16.mxu0 0
      %6108 = vmatmul.mubr.bf16.gmra.mrb[0].mxu0 %v5805
      %v6109 = vpop.f32.mrb[0].mxu0
      %v6110 = vadd.f32 0.0, %v6109
      %v6111 = vpop.f32.mrb[0].mxu0
      %v6112 = vpop.f32.mrb[0].mxu0
      %v6113 = vadd.f32 0.0, %v6112
      %v6114 = vpop.f32.mrb[0].mxu0
      %6115 = vmatprep.mubr.bf16.mxu0 0
      %6116 = vmatmul.mubr.bf16.gmra.mrb[0].mxu0 %v5808
      %v6117 = vpop.f32.mrb[0].mxu0
      %v6118 = vadd.f32 0.0, %v6117
      %v6119 = vpop.f32.mrb[0].mxu0
      %v6120 = vpop.f32.mrb[0].mxu0
      %v6121 = vadd.f32 0.0, %v6120
      %v6122 = vpop.f32.mrb[0].mxu0
      %6123 = vmatprep.mubr.bf16.mxu0 0
      %6124 = vmatmul.mubr.bf16.gmra.mrb[0].mxu0 %v5811
      %v6125 = vpop.f32.mrb[0].mxu0
      %v6126 = vadd.f32 0.0, %v6125
      %v6127 = vpop.f32.mrb[0].mxu0
      %v6128 = vpop.f32.mrb[0].mxu0
      %v6129 = vadd.f32 0.0, %v6128
      %v6130 = vpop.f32.mrb[0].mxu0
      %6131 = vmatprep.mubr.bf16.mxu0 0
      %6132 = vmatmul.mubr.bf16.gmra.mrb[0].mxu0 %v5814
      %v6133 = vpop.f32.mrb[0].mxu0
      %v6134 = vadd.f32 0.0, %v6133
      %v6135 = vpop.f32.mrb[0].mxu0
      %v6136 = vpop.f32.mrb[0].mxu0
      %v6137 = vadd.f32 0.0, %v6136
      %v6138 = vpop.f32.mrb[0].mxu0
      %6139 = vmatprep.mubr.bf16.mxu0 0
      %6140 = vmatmul.mubr.bf16.gmra.mrb[0].mxu0 %v5817
      %v6141 = vpop.f32.mrb[0].mxu0
      %v6142 = vadd.f32 0.0, %v6141
      %v6143 = vpop.f32.mrb[0].mxu0
      %v6144 = vpop.f32.mrb[0].mxu0
      %v6145 = vadd.f32 0.0, %v6144
      %v6146 = vpop.f32.mrb[0].mxu0
      %6147 = vmatprep.mubr.bf16.mxu0 0
      %6148 = vmatmul.mubr.bf16.gmra.mrb[0].mxu0 %v5820
      %v6149 = vpop.f32.mrb[0].mxu0
      %v6150 = vadd.f32 0.0, %v6149
      %v6151 = vpop.f32.mrb[0].mxu0
      %v6152 = vpop.f32.mrb[0].mxu0
      %v6153 = vadd.f32 0.0, %v6152
      %v6154 = vpop.f32.mrb[0].mxu0
      %6155 = vmatprep.mubr.bf16.mxu0 0
      %6156 = vmatmul.mubr.bf16.gmra.mrb[0].mxu0 %v5823
      %v6157 = vpop.f32.mrb[0].mxu0
      %v6158 = vadd.f32 0.0, %v6157
      %v6159 = vpop.f32.mrb[0].mxu0
      %v6160 = vpop.f32.mrb[0].mxu0
      %v6161 = vadd.f32 0.0, %v6160
      %v6162 = vpop.f32.mrb[0].mxu0
      %6163 = vmatprep.mubr.bf16.mxu0 0
      %6164 = vmatmul.mubr.bf16.gmra.mrb[0].mxu0 %v5826
      %v6165 = vpop.f32.mrb[0].mxu0
      %v6166 = vadd.f32 0.0, %v6165
      %v6167 = vpop.f32.mrb[0].mxu0
      %v6168 = vpop.f32.mrb[0].mxu0
      %v6169 = vadd.f32 0.0, %v6168
      %v6170 = vpop.f32.mrb[0].mxu0
      %6171 = vmatprep.mubr.bf16.mxu0 0
      %6172 = vmatmul.mubr.bf16.gmra.mrb[0].mxu0 %v5829
      %v6173 = vpop.f32.mrb[0].mxu0
      %v6174 = vadd.f32 0.0, %v6173
      %v6175 = vpop.f32.mrb[0].mxu0
      %v6176 = vpop.f32.mrb[0].mxu0
      %v6177 = vadd.f32 0.0, %v6176
      %v6178 = vpop.f32.mrb[0].mxu0
      %6179 = vmatprep.mubr.bf16.mxu0 0
      %6180 = vmatmul.mubr.bf16.gmra.mrb[0].mxu0 %v5832
      %v6181 = vpop.f32.mrb[0].mxu0
      %v6182 = vadd.f32 0.0, %v6181
      %v6183 = vpop.f32.mrb[0].mxu0
      %v6184 = vpop.f32.mrb[0].mxu0
      %v6185 = vadd.f32 0.0, %v6184
      %v6186 = vpop.f32.mrb[0].mxu0
      %6187 = vmatprep.mubr.bf16.mxu0 0
      %6188 = vmatmul.mubr.bf16.gmra.mrb[0].mxu0 %v5835
      %v6189 = vpop.f32.mrb[0].mxu0
      %v6190 = vadd.f32 0.0, %v6189
      %v6191 = vpop.f32.mrb[0].mxu0
      %v6192 = vpop.f32.mrb[0].mxu0
      %v6193 = vadd.f32 0.0, %v6192
      %v6194 = vpop.f32.mrb[0].mxu0
      %6195 = vmatprep.mubr.bf16.mxu0 0
      %6196 = vmatmul.mubr.bf16.gmra.mrb[0].mxu0 %v5838
      %v6197 = vpop.f32.mrb[0].mxu0
      %v6198 = vadd.f32 0.0, %v6197
      %v6199 = vpop.f32.mrb[0].mxu0
      %v6200 = vpop.f32.mrb[0].mxu0
      %v6201 = vadd.f32 0.0, %v6200
      %v6202 = vpop.f32.mrb[0].mxu0
      %6203 = vmatprep.mubr.bf16.mxu0 0
      %6204 = vmatmul.mubr.bf16.gmra.mrb[0].mxu0 %v5841
      %v6205 = vpop.f32.mrb[0].mxu0
      %v6206 = vadd.f32 0.0, %v6205
      %v6207 = vpop.f32.mrb[0].mxu0
      %v6208 = vpop.f32.mrb[0].mxu0
      %v6209 = vadd.f32 0.0, %v6208
      %v6210 = vpop.f32.mrb[0].mxu0
      %6211 = vmatprep.mubr.bf16.mxu0 0
      %6212 = vmatmul.mubr.bf16.gmra.mrb[0].mxu0 %v5844
      %v6213 = vpop.f32.mrb[0].mxu0
      %v6214 = vadd.f32 0.0, %v6213
      %v6215 = vpop.f32.mrb[0].mxu0
      %v6216 = vpop.f32.mrb[0].mxu0
      %v6217 = vadd.f32 0.0, %v6216
      %v6218 = vpop.f32.mrb[0].mxu0
      %6219 = vmatprep.mubr.bf16.mxu0 0
      %6220 = vmatmul.mubr.bf16.gmra.mrb[0].mxu0 %v5847
      %v6221 = vpop.f32.mrb[0].mxu0
      %v6222 = vadd.f32 0.0, %v6221
      %v6223 = vpop.f32.mrb[0].mxu0
      %v6224 = vpop.f32.mrb[0].mxu0
      %v6225 = vadd.f32 0.0, %v6224
      %v6226 = vpop.f32.mrb[0].mxu0
      %6227 = vmatprep.mubr.bf16.mxu0 0
      %6228 = vmatmul.mubr.bf16.gmra.mrb[0].mxu0 %v5850
      %v6229 = vpop.f32.mrb[0].mxu0
      %v6230 = vadd.f32 0.0, %v6229
      %v6231 = vpop.f32.mrb[0].mxu0
      %v6232 = vpop.f32.mrb[0].mxu0
      %v6233 = vadd.f32 0.0, %v6232
      %v6234 = vpop.f32.mrb[0].mxu0
      %6235 = vmatprep.mubr.bf16.mxu0 0
      %6236 = vmatmul.mubr.bf16.gmra.mrb[0].mxu0 %v5853
      %v6237 = vpop.f32.mrb[0].mxu0
      %v6238 = vadd.f32 0.0, %v6237
      %v6239 = vpop.f32.mrb[0].mxu0
      %v6240 = vpop.f32.mrb[0].mxu0
      %v6241 = vadd.f32 0.0, %v6240
      %v6242 = vpop.f32.mrb[0].mxu0
      %6243 = vmatprep.mubr.bf16.mxu0 0
      %6244 = vmatmul.mubr.bf16.gmra.mrb[0].mxu0 %v5856
      %v6245 = vpop.f32.mrb[0].mxu0
      %v6246 = vadd.f32 0.0, %v6245
      %v6247 = vpop.f32.mrb[0].mxu0
      %v6248 = vpop.f32.mrb[0].mxu0
      %v6249 = vadd.f32 0.0, %v6248
      %v6250 = vpop.f32.mrb[0].mxu0
      %6251 = vmatprep.mubr.bf16.mxu0 0
      %6252 = vmatmul.mubr.bf16.gmra.mrb[0].mxu0 %v5859
      %v6253 = vpop.f32.mrb[0].mxu0
      %v6254 = vadd.f32 0.0, %v6253
      %v6255 = vpop.f32.mrb[0].mxu0
      %v6256 = vpop.f32.mrb[0].mxu0
      %v6257 = vadd.f32 0.0, %v6256
      %v6258 = vpop.f32.mrb[0].mxu0
      %6259 = vmatprep.mubr.bf16.mxu0 0
      %6260 = vmatmul.mubr.bf16.gmra.mrb[0].mxu0 %v5862
      %v6261 = vpop.f32.mrb[0].mxu0
      %v6262 = vadd.f32 0.0, %v6261
      %v6263 = vpop.f32.mrb[0].mxu0
      %v6264 = vpop.f32.mrb[0].mxu0
      %v6265 = vadd.f32 0.0, %v6264
      %v6266 = vpop.f32.mrb[0].mxu0
      %6267 = vmatprep.mubr.bf16.mxu0 0
      %6268 = vmatmul.mubr.bf16.gmra.mrb[0].mxu0 %v5865
      %v6269 = vpop.f32.mrb[0].mxu0
      %v6270 = vadd.f32 0.0, %v6269
      %v6271 = vpop.f32.mrb[0].mxu0
      %v6272 = vpop.f32.mrb[0].mxu0
      %v6273 = vadd.f32 0.0, %v6272
      %v6274 = vpop.f32.mrb[0].mxu0
      %6275 = vmatprep.mubr.bf16.mxu0 0
      %6276 = vmatmul.mubr.bf16.gmra.mrb[0].mxu0 %v5868
      %v6277 = vpop.f32.mrb[0].mxu0
      %v6278 = vadd.f32 0.0, %v6277
      %v6279 = vpop.f32.mrb[0].mxu0
      %v6280 = vpop.f32.mrb[0].mxu0
      %v6281 = vadd.f32 0.0, %v6280
      %v6282 = vpop.f32.mrb[0].mxu0
      %6283 = vmatprep.mubr.bf16.mxu0 0
      %6284 = vmatmul.mubr.bf16.gmra.mrb[0].mxu0 %v5871
      %v6285 = vpop.f32.mrb[0].mxu0
      %v6286 = vadd.f32 0.0, %v6285
      %v6287 = vpop.f32.mrb[0].mxu0
      %v6288 = vpop.f32.mrb[0].mxu0
      %v6289 = vadd.f32 0.0, %v6288
      %v6290 = vpop.f32.mrb[0].mxu0
      %6291 = vmatprep.mubr.bf16.mxu0 0
      %6292 = vmatmul.mubr.bf16.gmra.mrb[0].mxu0 %v5874
      %v6293 = vpop.f32.mrb[0].mxu0
      %v6294 = vadd.f32 0.0, %v6293
      %v6295 = vpop.f32.mrb[0].mxu0
      %v6296 = vpop.f32.mrb[0].mxu0
      %v6297 = vadd.f32 0.0, %v6296
      %v6298 = vpop.f32.mrb[0].mxu0
      %6299 = vmatprep.mubr.bf16.mxu0 0
      %6300 = vmatmul.mubr.bf16.gmra.mrb[0].mxu0 %v5877
      %v6301 = vpop.f32.mrb[0].mxu0
      %v6302 = vadd.f32 0.0, %v6301
      %v6303 = vpop.f32.mrb[0].mxu0
      %v6304 = vpop.f32.mrb[0].mxu0
      %v6305 = vadd.f32 0.0, %v6304
      %v6306 = vpop.f32.mrb[0].mxu0
      %6307 = vmatprep.mubr.bf16.mxu0 0
      %6308 = vmatmul.mubr.bf16.gmra.mrb[0].mxu0 %v5880
      %v6309 = vpop.f32.mrb[0].mxu0
      %v6310 = vadd.f32 0.0, %v6309
      %v6311 = vpop.f32.mrb[0].mxu0
      %v6312 = vpop.f32.mrb[0].mxu0
      %v6313 = vadd.f32 0.0, %v6312
      %v6314 = vpop.f32.mrb[0].mxu0
      %6315 = vmatprep.mubr.bf16.mxu0 0
      %6316 = vmatmul.mubr.bf16.gmra.mrb[0].mxu0 %v5883
      %v6317 = vpop.f32.mrb[0].mxu0
      %v6318 = vadd.f32 0.0, %v6317
      %v6319 = vpop.f32.mrb[0].mxu0
      %v6320 = vpop.f32.mrb[0].mxu0
      %v6321 = vadd.f32 0.0, %v6320
      %v6322 = vpop.f32.mrb[0].mxu0
      %6323 = vmatprep.mubr.bf16.mxu0 0
      %6324 = vmatmul.mubr.bf16.gmra.mrb[0].mxu0 %v5886
      %v6325 = vpop.f32.mrb[0].mxu0
      %v6326 = vadd.f32 0.0, %v6325
      %v6327 = vpop.f32.mrb[0].mxu0
      %v6328 = vpop.f32.mrb[0].mxu0
      %v6329 = vadd.f32 0.0, %v6328
      %v6330 = vpop.f32.mrb[0].mxu0
      %6331 = vmatprep.mubr.bf16.mxu0 0
      %6332 = vmatmul.mubr.bf16.gmra.mrb[0].mxu0 %v5889
      %v6333 = vpop.f32.mrb[0].mxu0
      %v6334 = vadd.f32 0.0, %v6333
      %v6335 = vpop.f32.mrb[0].mxu0
      %v6336 = vpop.f32.mrb[0].mxu0
      %v6337 = vadd.f32 0.0, %v6336
      %v6338 = vpop.f32.mrb[0].mxu0
      %6339 = vmatprep.mubr.bf16.mxu0 0
      %6340 = vmatmul.mubr.bf16.gmra.mrb[0].mxu0 %v5892
      %v6341 = vpop.f32.mrb[0].mxu0
      %v6342 = vadd.f32 0.0, %v6341
      %v6343 = vpop.f32.mrb[0].mxu0
      %v6344 = vpop.f32.mrb[0].mxu0
      %v6345 = vadd.f32 0.0, %v6344
      %v6346 = vpop.f32.mrb[0].mxu0
      %6347 = vmatprep.mubr.bf16.mxu0 0
      %6348 = vmatmul.mubr.bf16.gmra.mrb[0].mxu0 %v5895
      %v6349 = vpop.f32.mrb[0].mxu0
      %v6350 = vadd.f32 0.0, %v6349
      %v6351 = vpop.f32.mrb[0].mxu0
      %v6352 = vpop.f32.mrb[0].mxu0
      %v6353 = vadd.f32 0.0, %v6352
      %v6354 = vpop.f32.mrb[0].mxu0
      %6355 = vmatprep.mubr.bf16.mxu0 0
      %6356 = vmatmul.mubr.bf16.gmra.mrb[0].mxu0 %v5898
      %v6357 = vpop.f32.mrb[0].mxu0
      %v6358 = vadd.f32 0.0, %v6357
      %v6359 = vpop.f32.mrb[0].mxu0
      %v6360 = vpop.f32.mrb[0].mxu0
      %v6361 = vadd.f32 0.0, %v6360
      %v6362 = vpop.f32.mrb[0].mxu0
      %6363 = vmatprep.mubr.bf16.mxu0 0
      %6364 = vmatmul.mubr.bf16.gmra.mrb[0].mxu0 %v5901
      %v6365 = vpop.f32.mrb[0].mxu0
      %v6366 = vadd.f32 0.0, %v6365
      %v6367 = vpop.f32.mrb[0].mxu0
      %v6368 = vpop.f32.mrb[0].mxu0
      %v6369 = vadd.f32 0.0, %v6368
      %v6370 = vpop.f32.mrb[0].mxu0
      %6371 = vmatprep.mubr.bf16.mxu0 0
      %6372 = vmatmul.mubr.bf16.gmra.mrb[0].mxu0 %v5904
      %v6373 = vpop.f32.mrb[0].mxu0
      %v6374 = vadd.f32 0.0, %v6373
      %v6375 = vpop.f32.mrb[0].mxu0
      %v6376 = vpop.f32.mrb[0].mxu0
      %v6377 = vadd.f32 0.0, %v6376
      %v6378 = vpop.f32.mrb[0].mxu0
      %6379 = vmatprep.mubr.bf16.mxu0 0
      %6380 = vmatmul.mubr.bf16.gmra.mrb[0].mxu0 %v5907
      %v6381 = vpop.f32.mrb[0].mxu0
      %v6382 = vadd.f32 0.0, %v6381
      %v6383 = vpop.f32.mrb[0].mxu0
      %v6384 = vpop.f32.mrb[0].mxu0
      %v6385 = vadd.f32 0.0, %v6384
      %v6386 = vpop.f32.mrb[0].mxu0
      %6387 = vmatprep.mubr.bf16.mxu0 0
      %6388 = vmatmul.mubr.bf16.gmra.mrb[0].mxu0 %v5910
      %v6389 = vpop.f32.mrb[0].mxu0
      %v6390 = vadd.f32 0.0, %v6389
      %v6391 = vpop.f32.mrb[0].mxu0
      %v6392 = vpop.f32.mrb[0].mxu0
      %v6393 = vadd.f32 0.0, %v6392
      %v6394 = vpop.f32.mrb[0].mxu0
      %6395 = vmatprep.mubr.bf16.mxu0 0
      %6396 = vmatmul.mubr.bf16.gmra.mrb[0].mxu0 %v5913
      %v6397 = vpop.f32.mrb[0].mxu0
      %v6398 = vadd.f32 0.0, %v6397
      %v6399 = vpop.f32.mrb[0].mxu0
      %v6400 = vpop.f32.mrb[0].mxu0
      %v6401 = vadd.f32 0.0, %v6400
      %v6402 = vpop.f32.mrb[0].mxu0
      %6403 = vmatprep.mubr.bf16.mxu0 0
      %6404 = vmatmul.mubr.bf16.gmra.mrb[0].mxu0 %v5916
      %v6405 = vpop.f32.mrb[0].mxu0
      %v6406 = vadd.f32 0.0, %v6405
      %v6407 = vpop.f32.mrb[0].mxu0
      %v6408 = vpop.f32.mrb[0].mxu0
      %v6409 = vadd.f32 0.0, %v6408
      %v6410 = vpop.f32.mrb[0].mxu0
      %6411 = vmatprep.mubr.bf16.mxu0 0
      %6412 = vmatmul.mubr.bf16.gmra.mrb[0].mxu0 %v5919
      %v6413 = vpop.f32.mrb[0].mxu0
      %v6414 = vadd.f32 0.0, %v6413
      %v6415 = vpop.f32.mrb[0].mxu0
      %v6416 = vpop.f32.mrb[0].mxu0
      %v6417 = vadd.f32 0.0, %v6416
      %v6418 = vpop.f32.mrb[0].mxu0
      %6419 = vmatprep.mubr.bf16.mxu0 0
      %6420 = vmatmul.mubr.bf16.gmra.mrb[0].mxu0 %v5922
      %v6421 = vpop.f32.mrb[0].mxu0
      %v6422 = vadd.f32 0.0, %v6421
      %v6423 = vpop.f32.mrb[0].mxu0
      %v6424 = vpop.f32.mrb[0].mxu0
      %v6425 = vadd.f32 0.0, %v6424
      %v6426 = vpop.f32.mrb[0].mxu0
      %6427 = vmatprep.mubr.bf16.mxu0 0
      %6428 = vmatmul.mubr.bf16.gmra.mrb[0].mxu0 %v5925
      %v6429 = vpop.f32.mrb[0].mxu0
      %v6430 = vadd.f32 0.0, %v6429
      %v6431 = vpop.f32.mrb[0].mxu0
      %v6432 = vpop.f32.mrb[0].mxu0
      %v6433 = vadd.f32 0.0, %v6432
      %v6434 = vpop.f32.mrb[0].mxu0
      %6435 = vmatprep.mubr.bf16.mxu0 0
      %6436 = vmatmul.mubr.bf16.gmra.mrb[0].mxu0 %v5928
      %v6437 = vpop.f32.mrb[0].mxu0
      %v6438 = vadd.f32 0.0, %v6437
      %v6439 = vpop.f32.mrb[0].mxu0
      %v6440 = vpop.f32.mrb[0].mxu0
      %v6441 = vadd.f32 0.0, %v6440
      %v6442 = vpop.f32.mrb[0].mxu0
      %6443 = vmatprep.mubr.bf16.mxu0 0
      %6444 = vmatmul.mubr.bf16.gmra.mrb[0].mxu0 %v5931
      %v6445 = vpop.f32.mrb[0].mxu0
      %v6446 = vadd.f32 0.0, %v6445
      %v6447 = vpop.f32.mrb[0].mxu0
      %v6448 = vpop.f32.mrb[0].mxu0
      %v6449 = vadd.f32 0.0, %v6448
      %v6450 = vpop.f32.mrb[0].mxu0
      %6451 = vmatprep.mubr.bf16.mxu0 0
      %6452 = vmatmul.mubr.bf16.gmra.mrb[0].mxu0 %v5934
      %v6453 = vpop.f32.mrb[0].mxu0
      %v6454 = vadd.f32 0.0, %v6453
      %v6455 = vpop.f32.mrb[0].mxu0
      %v6456 = vpop.f32.mrb[0].mxu0
      %v6457 = vadd.f32 0.0, %v6456
      %v6458 = vpop.f32.mrb[0].mxu0
      %6459 = vmatprep.mubr.bf16.mxu0 0
      %6460 = vmatmul.mubr.bf16.gmra.mrb[0].mxu0 %v5937
      %v6461 = vpop.f32.mrb[0].mxu0
      %v6462 = vadd.f32 0.0, %v6461
      %v6463 = vpop.f32.mrb[0].mxu0
      %v6464 = vpop.f32.mrb[0].mxu0
      %v6465 = vadd.f32 0.0, %v6464
      %v6466 = vpop.f32.mrb[0].mxu0
      %6467 = vmatprep.mubr.bf16.mxu0 0
      %6468 = vmatmul.mubr.bf16.gmra.mrb[0].mxu0 %v5940
      %v6469 = vpop.f32.mrb[0].mxu0
      %v6470 = vadd.f32 0.0, %v6469
      %v6471 = vpop.f32.mrb[0].mxu0
      %v6472 = vpop.f32.mrb[0].mxu0
      %v6473 = vadd.f32 0.0, %v6472
      %v6474 = vpop.f32.mrb[0].mxu0
      %6475 = vmatprep.mubr.bf16.mxu0 0
      %6476 = vmatmul.mubr.bf16.gmra.mrb[0].mxu0 %v5943
      %v6477 = vpop.f32.mrb[0].mxu0
      %v6478 = vadd.f32 0.0, %v6477
      %v6479 = vpop.f32.mrb[0].mxu0
      %v6480 = vpop.f32.mrb[0].mxu0
      %v6481 = vadd.f32 0.0, %v6480
      %v6482 = vpop.f32.mrb[0].mxu0
      %6483 = vmatprep.mubr.bf16.mxu0 0
      %6484 = vmatmul.mubr.bf16.gmra.mrb[0].mxu0 %v5946
      %v6485 = vpop.f32.mrb[0].mxu0
      %v6486 = vadd.f32 0.0, %v6485
      %v6487 = vpop.f32.mrb[0].mxu0
      %v6488 = vpop.f32.mrb[0].mxu0
      %v6489 = vadd.f32 0.0, %v6488
      %v6490 = vpop.f32.mrb[0].mxu0
      %6491 = vmatprep.mubr.bf16.mxu0 0
      %6492 = vmatmul.mubr.bf16.gmra.mrb[0].mxu0 %v5949
      %v6493 = vpop.f32.mrb[0].mxu0
      %v6494 = vadd.f32 0.0, %v6493
      %v6495 = vpop.f32.mrb[0].mxu0
      %v6496 = vpop.f32.mrb[0].mxu0
      %v6497 = vadd.f32 0.0, %v6496
      %v6498 = vpop.f32.mrb[0].mxu0
      %6499 = vmatprep.mubr.bf16.mxu0 0
      %6500 = vmatmul.mubr.bf16.gmra.mrb[0].mxu0 %v5952
      %v6501 = vpop.f32.mrb[0].mxu0
      %v6502 = vadd.f32 0.0, %v6501
      %v6503 = vpop.f32.mrb[0].mxu0
      %v6504 = vpop.f32.mrb[0].mxu0
      %v6505 = vadd.f32 0.0, %v6504
      %v6506 = vpop.f32.mrb[0].mxu0
      %6507 = vmatprep.mubr.bf16.mxu0 0
      %6508 = vmatmul.mubr.bf16.gmra.mrb[0].mxu0 %v5955
      %v6509 = vpop.f32.mrb[0].mxu0
      %v6510 = vadd.f32 0.0, %v6509
      %v6511 = vpop.f32.mrb[0].mxu0
      %v6512 = vpop.f32.mrb[0].mxu0
      %v6513 = vadd.f32 0.0, %v6512
      %v6514 = vpop.f32.mrb[0].mxu0
      %6515 = vmatprep.mubr.bf16.mxu0 0
      %6516 = vmatmul.mubr.bf16.gmra.mrb[0].mxu0 %v5958
      %v6517 = vpop.f32.mrb[0].mxu0
      %v6518 = vadd.f32 0.0, %v6517
      %v6519 = vpop.f32.mrb[0].mxu0
      %v6520 = vpop.f32.mrb[0].mxu0
      %v6521 = vadd.f32 0.0, %v6520
      %v6522 = vpop.f32.mrb[0].mxu0
      %6523 = vmatprep.mubr.bf16.mxu0 0
      %6524 = vmatmul.mubr.bf16.gmra.mrb[0].mxu0 %v5961
      %v6525 = vpop.f32.mrb[0].mxu0
      %v6526 = vadd.f32 0.0, %v6525
      %v6527 = vpop.f32.mrb[0].mxu0
      %v6528 = vpop.f32.mrb[0].mxu0
      %v6529 = vadd.f32 0.0, %v6528
      %v6530 = vpop.f32.mrb[0].mxu0
      %6531 = vmatprep.mubr.bf16.mxu0 0
      %6532 = vmatmul.mubr.bf16.gmra.mrb[0].mxu0 %v5964
      %v6533 = vpop.f32.mrb[0].mxu0
      %v6534 = vadd.f32 0.0, %v6533
      %v6535 = vpop.f32.mrb[0].mxu0
      %v6536 = vpop.f32.mrb[0].mxu0
      %v6537 = vadd.f32 0.0, %v6536
      %v6538 = vpop.f32.mrb[0].mxu0
      %6539 = vmatprep.mubr.bf16.mxu0 0
      %6540 = vmatmul.mubr.bf16.gmra.mrb[0].mxu0 %v5967
      %v6541 = vpop.f32.mrb[0].mxu0
      %v6542 = vadd.f32 0.0, %v6541
      %v6543 = vpop.f32.mrb[0].mxu0
      %v6544 = vpop.f32.mrb[0].mxu0
      %v6545 = vadd.f32 0.0, %v6544
      %v6546 = vpop.f32.mrb[0].mxu0
      %6547 = vmatprep.mubr.bf16.mxu0 0
      %6548 = vmatmul.mubr.bf16.gmra.mrb[0].mxu0 %v5970
      %v6549 = vpop.f32.mrb[0].mxu0
      %v6550 = vadd.f32 0.0, %v6549
      %v6551 = vpop.f32.mrb[0].mxu0
      %v6552 = vpop.f32.mrb[0].mxu0
      %v6553 = vadd.f32 0.0, %v6552
      %v6554 = vpop.f32.mrb[0].mxu0
      %6555 = vmatprep.mubr.bf16.mxu0 0
      %6556 = vmatmul.mubr.bf16.gmra.mrb[0].mxu0 %v5973
      %v6557 = vpop.f32.mrb[0].mxu0
      %v6558 = vadd.f32 0.0, %v6557
      %v6559 = vpop.f32.mrb[0].mxu0
      %v6560 = vpop.f32.mrb[0].mxu0
      %v6561 = vadd.f32 0.0, %v6560
      %v6562 = vpop.f32.mrb[0].mxu0
      %6563 = vmatprep.mubr.bf16.mxu0 0
      %6564 = vmatmul.mubr.bf16.gmra.mrb[0].mxu0 %v5976
      %v6565 = vpop.f32.mrb[0].mxu0
      %v6566 = vadd.f32 0.0, %v6565
      %v6567 = vpop.f32.mrb[0].mxu0
      %v6568 = vpop.f32.mrb[0].mxu0
      %v6569 = vadd.f32 0.0, %v6568
      %v6570 = vpop.f32.mrb[0].mxu0
      %6571 = vmatprep.mubr.bf16.mxu0 0
      %6572 = vmatmul.mubr.bf16.gmra.mrb[0].mxu0 %v5979
      %v6573 = vpop.f32.mrb[0].mxu0
      %v6574 = vadd.f32 0.0, %v6573
      %v6575 = vpop.f32.mrb[0].mxu0
      %v6576 = vpop.f32.mrb[0].mxu0
      %v6577 = vadd.f32 0.0, %v6576
      %v6578 = vpop.f32.mrb[0].mxu0
      %6579 = vmatprep.mubr.bf16.mxu0 0
      %6580 = vmatmul.mubr.bf16.gmra.mrb[0].mxu0 %v5982
      %v6581 = vpop.f32.mrb[0].mxu0
      %v6582 = vadd.f32 0.0, %v6581
      %v6583 = vpop.f32.mrb[0].mxu0
      %v6584 = vpop.f32.mrb[0].mxu0
      %v6585 = vadd.f32 0.0, %v6584
      %v6586 = vpop.f32.mrb[0].mxu0
      %6587 = vmatprep.mubr.bf16.mxu0 0
      %6588 = vmatmul.mubr.bf16.gmra.mrb[0].mxu0 %v5985
      %v6589 = vpop.f32.mrb[0].mxu0
      %v6590 = vadd.f32 0.0, %v6589
      %v6591 = vpop.f32.mrb[0].mxu0
      %v6592 = vpop.f32.mrb[0].mxu0
      %v6593 = vadd.f32 0.0, %v6592
      %v6594 = vpop.f32.mrb[0].mxu0
      %6595 = vdwg.mxu0
      %v6596 = vrcp.pop %v6022
      %v6597 = vrcp.pop %v6025
      %v6598 = vrcp.pop %v6030
      %v6599 = vrcp.pop %v6033
      %v6600 = vrcp.pop %v6038
      %v6601 = vrcp.pop %v6041
      %v6602 = vrcp.pop %v6046
      %v6603 = vrcp.pop %v6049
      %v6604 = vrcp.pop %v6054
      %v6605 = vrcp.pop %v6057
      %v6606 = vrcp.pop %v6062
      %v6607 = vrcp.pop %v6065
      %v6608 = vrcp.pop %v6070
      %v6609 = vrcp.pop %v6073
      %v6610 = vrcp.pop %v6078
      %v6611 = vrcp.pop %v6081
      %v6612 = vrcp.pop %v6086
      %v6613 = vrcp.pop %v6089
      %v6614 = vrcp.pop %v6094
      %v6615 = vrcp.pop %v6097
      %v6616 = vrcp.pop %v6102
      %v6617 = vrcp.pop %v6105
      %v6618 = vrcp.pop %v6110
      %v6619 = vrcp.pop %v6113
      %v6620 = vrcp.pop %v6118
      %v6621 = vrcp.pop %v6121
      %v6622 = vrcp.pop %v6126
      %v6623 = vrcp.pop %v6129
      %v6624 = vrcp.pop %v6134
      %v6625 = vrcp.pop %v6137
      %v6626 = vrcp.pop %v6142
      %v6627 = vrcp.pop %v6145
      %v6628 = vrcp.pop %v6150
      %v6629 = vrcp.pop %v6153
      %v6630 = vrcp.pop %v6158
      %v6631 = vrcp.pop %v6161
      %v6632 = vrcp.pop %v6166
      %v6633 = vrcp.pop %v6169
      %v6634 = vrcp.pop %v6174
      %v6635 = vrcp.pop %v6177
      %v6636 = vrcp.pop %v6182
      %v6637 = vrcp.pop %v6185
      %v6638 = vrcp.pop %v6190
      %v6639 = vrcp.pop %v6193
      %v6640 = vrcp.pop %v6198
      %v6641 = vrcp.pop %v6201
      %v6642 = vrcp.pop %v6206
      %v6643 = vrcp.pop %v6209
      %v6644 = vrcp.pop %v6214
      %v6645 = vrcp.pop %v6217
      %v6646 = vrcp.pop %v6222
      %v6647 = vrcp.pop %v6225
      %v6648 = vrcp.pop %v6230
      %v6649 = vrcp.pop %v6233
      %v6650 = vrcp.pop %v6238
      %v6651 = vrcp.pop %v6241
      %v6652 = vrcp.pop %v6246
      %v6653 = vrcp.pop %v6249
      %v6654 = vrcp.pop %v6254
      %v6655 = vrcp.pop %v6257
      %v6656 = vrcp.pop %v6262
      %v6657 = vrcp.pop %v6265
      %v6658 = vrcp.pop %v6270
      %v6659 = vrcp.pop %v6273
      %v6660 = vrcp.pop %v6278
      %v6661 = vrcp.pop %v6281
      %v6662 = vrcp.pop %v6286
      %v6663 = vrcp.pop %v6289
      %v6664 = vrcp.pop %v6294
      %v6665 = vrcp.pop %v6297
      %v6666 = vrcp.pop %v6302
      %v6667 = vrcp.pop %v6305
      %v6668 = vrcp.pop %v6310
      %v6669 = vrcp.pop %v6313
      %v6670 = vrcp.pop %v6318
      %v6671 = vrcp.pop %v6321
      %v6672 = vrcp.pop %v6326
      %v6673 = vrcp.pop %v6329
      %v6674 = vrcp.pop %v6334
      %v6675 = vrcp.pop %v6337
      %v6676 = vrcp.pop %v6342
      %v6677 = vrcp.pop %v6345
      %v6678 = vrcp.pop %v6350
      %v6679 = vrcp.pop %v6353
      %v6680 = vrcp.pop %v6358
      %v6681 = vrcp.pop %v6361
      %v6682 = vrcp.pop %v6366
      %v6683 = vrcp.pop %v6369
      %v6684 = vrcp.pop %v6374
      %v6685 = vrcp.pop %v6377
      %v6686 = vrcp.pop %v6382
      %v6687 = vrcp.pop %v6385
      %v6688 = vrcp.pop %v6390
      %v6689 = vrcp.pop %v6393
      %v6690 = vrcp.pop %v6398
      %v6691 = vrcp.pop %v6401
      %v6692 = vrcp.pop %v6406
      %v6693 = vrcp.pop %v6409
      %v6694 = vrcp.pop %v6414
      %v6695 = vrcp.pop %v6417
      %v6696 = vrcp.pop %v6422
      %v6697 = vrcp.pop %v6425
      %v6698 = vrcp.pop %v6430
      %v6699 = vrcp.pop %v6433
      %v6700 = vrcp.pop %v6438
      %v6701 = vrcp.pop %v6441
      %v6702 = vrcp.pop %v6446
      %v6703 = vrcp.pop %v6449
      %v6704 = vrcp.pop %v6454
      %v6705 = vrcp.pop %v6457
      %v6706 = vrcp.pop %v6462
      %v6707 = vrcp.pop %v6465
      %v6708 = vrcp.pop %v6470
      %v6709 = vrcp.pop %v6473
      %v6710 = vrcp.pop %v6478
      %v6711 = vrcp.pop %v6481
      %v6712 = vrcp.pop %v6486
      %v6713 = vrcp.pop %v6489
      %v6714 = vrcp.pop %v6494
      %v6715 = vrcp.pop %v6497
      %v6716 = vrcp.pop %v6502
      %v6717 = vrcp.pop %v6505
      %v6718 = vrcp.pop %v6510
      %v6719 = vrcp.pop %v6513
      %v6720 = vrcp.pop %v6518
      %v6721 = vrcp.pop %v6521
      %v6722 = vrcp.pop %v6526
      %v6723 = vrcp.pop %v6529
      %v6724 = vrcp.pop %v6534
      %v6725 = vrcp.pop %v6537
      %v6726 = vrcp.pop %v6542
      %v6727 = vrcp.pop %v6545
      %v6728 = vrcp.pop %v6550
      %v6729 = vrcp.pop %v6553
      %v6730 = vrcp.pop %v6558
      %v6731 = vrcp.pop %v6561
      %v6732 = vrcp.pop %v6566
      %v6733 = vrcp.pop %v6569
      %v6734 = vrcp.pop %v6574
      %v6735 = vrcp.pop %v6577
      %v6736 = vrcp.pop %v6582
      %v6737 = vrcp.pop %v6585
      %v6738 = vrcp.pop %v6590
      %v6739 = vrcp.pop %v6593
      %v6740 = vmul.f32 %v5404, %v6596
      %v6741 = vmul.f32 %v5406, %v6597
      %v6742 = vmul.f32 %v5408, %v6598
      %v6743 = vmul.f32 %v5410, %v6599
      %v6744 = vmul.f32 %v5412, %v6600
      %v6745 = vmul.f32 %v5414, %v6601
      %v6746 = vmul.f32 %v5416, %v6602
      %v6747 = vmul.f32 %v5418, %v6603
      %v6748 = vmul.f32 %v5420, %v6604
      %v6749 = vmul.f32 %v5422, %v6605
      %v6750 = vmul.f32 %v5424, %v6606
      %v6751 = vmul.f32 %v5426, %v6607
      %v6752 = vmul.f32 %v5428, %v6608
      %v6753 = vmul.f32 %v5430, %v6609
      %v6754 = vmul.f32 %v5432, %v6610
      %v6755 = vmul.f32 %v5434, %v6611
      %v6756 = vmul.f32 %v5436, %v6612
      %v6757 = vmul.f32 %v5438, %v6613
      %v6758 = vmul.f32 %v5440, %v6614
      %v6759 = vmul.f32 %v5442, %v6615
      %v6760 = vmul.f32 %v5444, %v6616
      %v6761 = vmul.f32 %v5446, %v6617
      %v6762 = vmul.f32 %v5448, %v6618
      %v6763 = vmul.f32 %v5450, %v6619
      %v6764 = vmul.f32 %v5452, %v6620
      %v6765 = vmul.f32 %v5454, %v6621
      %v6766 = vmul.f32 %v5456, %v6622
      %v6767 = vmul.f32 %v5458, %v6623
      %v6768 = vmul.f32 %v5460, %v6624
      %v6769 = vmul.f32 %v5462, %v6625
      %v6770 = vmul.f32 %v5464, %v6626
      %v6771 = vmul.f32 %v5466, %v6627
      %v6772 = vmul.f32 %v5468, %v6628
      %v6773 = vmul.f32 %v5470, %v6629
      %v6774 = vmul.f32 %v5472, %v6630
      %v6775 = vmul.f32 %v5474, %v6631
      %v6776 = vmul.f32 %v5476, %v6632
      %v6777 = vmul.f32 %v5478, %v6633
      %v6778 = vmul.f32 %v5480, %v6634
      %v6779 = vmul.f32 %v5482, %v6635
      %v6780 = vmul.f32 %v5484, %v6636
      %v6781 = vmul.f32 %v5486, %v6637
      %v6782 = vmul.f32 %v5488, %v6638
      %v6783 = vmul.f32 %v5490, %v6639
      %v6784 = vmul.f32 %v5492, %v6640
      %v6785 = vmul.f32 %v5494, %v6641
      %v6786 = vmul.f32 %v5496, %v6642
      %v6787 = vmul.f32 %v5498, %v6643
      %v6788 = vmul.f32 %v5500, %v6644
      %v6789 = vmul.f32 %v5502, %v6645
      %v6790 = vmul.f32 %v5504, %v6646
      %v6791 = vmul.f32 %v5506, %v6647
      %v6792 = vmul.f32 %v5508, %v6648
      %v6793 = vmul.f32 %v5510, %v6649
      %v6794 = vmul.f32 %v5512, %v6650
      %v6795 = vmul.f32 %v5514, %v6651
      %v6796 = vmul.f32 %v5516, %v6652
      %v6797 = vmul.f32 %v5518, %v6653
      %v6798 = vmul.f32 %v5520, %v6654
      %v6799 = vmul.f32 %v5522, %v6655
      %v6800 = vmul.f32 %v5524, %v6656
      %v6801 = vmul.f32 %v5526, %v6657
      %v6802 = vmul.f32 %v5528, %v6658
      %v6803 = vmul.f32 %v5530, %v6659
      %v6804 = vmul.f32 %v5532, %v6660
      %v6805 = vmul.f32 %v5534, %v6661
      %v6806 = vmul.f32 %v5536, %v6662
      %v6807 = vmul.f32 %v5538, %v6663
      %v6808 = vmul.f32 %v5540, %v6664
      %v6809 = vmul.f32 %v5542, %v6665
      %v6810 = vmul.f32 %v5544, %v6666
      %v6811 = vmul.f32 %v5546, %v6667
      %v6812 = vmul.f32 %v5548, %v6668
      %v6813 = vmul.f32 %v5550, %v6669
      %v6814 = vmul.f32 %v5552, %v6670
      %v6815 = vmul.f32 %v5554, %v6671
      %v6816 = vmul.f32 %v5556, %v6672
      %v6817 = vmul.f32 %v5558, %v6673
      %v6818 = vmul.f32 %v5560, %v6674
      %v6819 = vmul.f32 %v5562, %v6675
      %v6820 = vmul.f32 %v5564, %v6676
      %v6821 = vmul.f32 %v5566, %v6677
      %v6822 = vmul.f32 %v5568, %v6678
      %v6823 = vmul.f32 %v5570, %v6679
      %v6824 = vmul.f32 %v5572, %v6680
      %v6825 = vmul.f32 %v5574, %v6681
      %v6826 = vmul.f32 %v5576, %v6682
      %v6827 = vmul.f32 %v5578, %v6683
      %v6828 = vmul.f32 %v5580, %v6684
      %v6829 = vmul.f32 %v5582, %v6685
      %v6830 = vmul.f32 %v5584, %v6686
      %v6831 = vmul.f32 %v5586, %v6687
      %v6832 = vmul.f32 %v5588, %v6688
      %v6833 = vmul.f32 %v5590, %v6689
      %v6834 = vmul.f32 %v5592, %v6690
      %v6835 = vmul.f32 %v5594, %v6691
      %v6836 = vmul.f32 %v5596, %v6692
      %v6837 = vmul.f32 %v5598, %v6693
      %v6838 = vmul.f32 %v5600, %v6694
      %v6839 = vmul.f32 %v5602, %v6695
      %v6840 = vmul.f32 %v5604, %v6696
      %v6841 = vmul.f32 %v5606, %v6697
      %v6842 = vmul.f32 %v5608, %v6698
      %v6843 = vmul.f32 %v5610, %v6699
      %v6844 = vmul.f32 %v5612, %v6700
      %v6845 = vmul.f32 %v5614, %v6701
      %v6846 = vmul.f32 %v5616, %v6702
      %v6847 = vmul.f32 %v5618, %v6703
      %v6848 = vmul.f32 %v5620, %v6704
      %v6849 = vmul.f32 %v5622, %v6705
      %v6850 = vmul.f32 %v5624, %v6706
      %v6851 = vmul.f32 %v5626, %v6707
      %v6852 = vmul.f32 %v5628, %v6708
      %v6853 = vmul.f32 %v5630, %v6709
      %v6854 = vmul.f32 %v5632, %v6710
      %v6855 = vmul.f32 %v5634, %v6711
      %v6856 = vmul.f32 %v5636, %v6712
      %v6857 = vmul.f32 %v5638, %v6713
      %v6858 = vmul.f32 %v5640, %v6714
      %v6859 = vmul.f32 %v5642, %v6715
      %v6860 = vmul.f32 %v5644, %v6716
      %v6861 = vmul.f32 %v5646, %v6717
      %v6862 = vmul.f32 %v5648, %v6718
      %v6863 = vmul.f32 %v5650, %v6719
      %v6864 = vmul.f32 %v5652, %v6720
      %v6865 = vmul.f32 %v5654, %v6721
      %v6866 = vmul.f32 %v5656, %v6722
      %v6867 = vmul.f32 %v5658, %v6723
      %v6868 = vmul.f32 %v5660, %v6724
      %v6869 = vmul.f32 %v5662, %v6725
      %v6870 = vmul.f32 %v5664, %v6726
      %v6871 = vmul.f32 %v5666, %v6727
      %v6872 = vmul.f32 %v5668, %v6728
      %v6873 = vmul.f32 %v5670, %v6729
      %v6874 = vmul.f32 %v5672, %v6730
      %v6875 = vmul.f32 %v5674, %v6731
      %v6876 = vmul.f32 %v5676, %v6732
      %v6877 = vmul.f32 %v5678, %v6733
      %v6878 = vmul.f32 %v5680, %v6734
      %v6879 = vmul.f32 %v5682, %v6735
      %v6880 = vmul.f32 %v5684, %v6736
      %v6881 = vmul.f32 %v5686, %v6737
      %v6882 = vmul.f32 %v5688, %v6738
      %v6883 = vmul.f32 %v5690, %v6739
      %v6884 = vpack.c.bf16 %v6741, %v6740
      %v6885 = vpack.c.bf16 %v6743, %v6742
      %v6886 = vpack.c.bf16 %v6745, %v6744
      %v6887 = vpack.c.bf16 %v6747, %v6746
      %v6888 = vpack.c.bf16 %v6749, %v6748
      %v6889 = vpack.c.bf16 %v6751, %v6750
      %v6890 = vpack.c.bf16 %v6753, %v6752
      %v6891 = vpack.c.bf16 %v6755, %v6754
      %v6892 = vpack.c.bf16 %v6757, %v6756
      %v6893 = vpack.c.bf16 %v6759, %v6758
      %v6894 = vpack.c.bf16 %v6761, %v6760
      %v6895 = vpack.c.bf16 %v6763, %v6762
      %v6896 = vpack.c.bf16 %v6765, %v6764
      %v6897 = vpack.c.bf16 %v6767, %v6766
      %v6898 = vpack.c.bf16 %v6769, %v6768
      %v6899 = vpack.c.bf16 %v6771, %v6770
      %v6900 = vpack.c.bf16 %v6773, %v6772
      %v6901 = vpack.c.bf16 %v6775, %v6774
      %v6902 = vpack.c.bf16 %v6777, %v6776
      %v6903 = vpack.c.bf16 %v6779, %v6778
      %v6904 = vpack.c.bf16 %v6781, %v6780
      %v6905 = vpack.c.bf16 %v6783, %v6782
      %v6906 = vpack.c.bf16 %v6785, %v6784
      %v6907 = vpack.c.bf16 %v6787, %v6786
      %v6908 = vpack.c.bf16 %v6789, %v6788
      %v6909 = vpack.c.bf16 %v6791, %v6790
      %v6910 = vpack.c.bf16 %v6793, %v6792
      %v6911 = vpack.c.bf16 %v6795, %v6794
      %v6912 = vpack.c.bf16 %v6797, %v6796
      %v6913 = vpack.c.bf16 %v6799, %v6798
      %v6914 = vpack.c.bf16 %v6801, %v6800
      %v6915 = vpack.c.bf16 %v6803, %v6802
      %v6916 = vpack.c.bf16 %v6805, %v6804
      %v6917 = vpack.c.bf16 %v6807, %v6806
      %v6918 = vpack.c.bf16 %v6809, %v6808
      %v6919 = vpack.c.bf16 %v6811, %v6810
      %v6920 = vpack.c.bf16 %v6813, %v6812
      %v6921 = vpack.c.bf16 %v6815, %v6814
      %v6922 = vpack.c.bf16 %v6817, %v6816
      %v6923 = vpack.c.bf16 %v6819, %v6818
      %v6924 = vpack.c.bf16 %v6821, %v6820
      %v6925 = vpack.c.bf16 %v6823, %v6822
      %v6926 = vpack.c.bf16 %v6825, %v6824
      %v6927 = vpack.c.bf16 %v6827, %v6826
      %v6928 = vpack.c.bf16 %v6829, %v6828
      %v6929 = vpack.c.bf16 %v6831, %v6830
      %v6930 = vpack.c.bf16 %v6833, %v6832
      %v6931 = vpack.c.bf16 %v6835, %v6834
      %v6932 = vpack.c.bf16 %v6837, %v6836
      %v6933 = vpack.c.bf16 %v6839, %v6838
      %v6934 = vpack.c.bf16 %v6841, %v6840
      %v6935 = vpack.c.bf16 %v6843, %v6842
      %v6936 = vpack.c.bf16 %v6845, %v6844
      %v6937 = vpack.c.bf16 %v6847, %v6846
      %v6938 = vpack.c.bf16 %v6849, %v6848
      %v6939 = vpack.c.bf16 %v6851, %v6850
      %v6940 = vpack.c.bf16 %v6853, %v6852
      %v6941 = vpack.c.bf16 %v6855, %v6854
      %v6942 = vpack.c.bf16 %v6857, %v6856
      %v6943 = vpack.c.bf16 %v6859, %v6858
      %v6944 = vpack.c.bf16 %v6861, %v6860
      %v6945 = vpack.c.bf16 %v6863, %v6862
      %v6946 = vpack.c.bf16 %v6865, %v6864
      %v6947 = vpack.c.bf16 %v6867, %v6866
      %v6948 = vpack.c.bf16 %v6869, %v6868
      %v6949 = vpack.c.bf16 %v6871, %v6870
      %v6950 = vpack.c.bf16 %v6873, %v6872
      %v6951 = vpack.c.bf16 %v6875, %v6874
      %v6952 = vpack.c.bf16 %v6877, %v6876
      %v6953 = vpack.c.bf16 %v6879, %v6878
      %v6954 = vpack.c.bf16 %v6881, %v6880
      %v6955 = vpack.c.bf16 %v6883, %v6882
      %v6956 = vld [vmem:[%s5] sm:$0xff]
      %v6957 = vld [vmem:[%s5 + $0x8] sm:$0xff]
      %v6960 = vunpack.c.l.b16 %v6956
      %v6961 = vunpack.c.h.b16 %v6956
      %v6962 = vunpack.c.l.b16 %v6957
      %v6963 = vunpack.c.h.b16 %v6957
      %v6964 = vpack.c.b16 %v6962, %v6960
      %v6965 = vpack.c.b16 %v6963, %v6961
      %v6969 = vsel %vm4826, %v6884, 0
      %v6972 = vsel %vm4826, %v6885, 0
      %v6975 = vsel %vm4826, %v6886, 0
      %v6978 = vsel %vm4826, %v6887, 0
      %v6981 = vsel %vm4826, %v6888, 0
      %v6984 = vsel %vm4826, %v6889, 0
      %v6987 = vsel %vm4826, %v6890, 0
      %v6990 = vsel %vm4826, %v6891, 0
      %v6993 = vsel %vm4826, %v6892, 0
      %v6996 = vsel %vm4826, %v6893, 0
      %v6999 = vsel %vm4826, %v6894, 0
      %v7002 = vsel %vm4826, %v6895, 0
      %v7005 = vsel %vm4826, %v6896, 0
      %v7008 = vsel %vm4826, %v6897, 0
      %v7011 = vsel %vm4826, %v6898, 0
      %v7014 = vsel %vm4826, %v6899, 0
      %v7017 = vsel %vm4826, %v6900, 0
      %v7020 = vsel %vm4826, %v6901, 0
      %v7023 = vsel %vm4826, %v6902, 0
      %v7026 = vsel %vm4826, %v6903, 0
      %v7029 = vsel %vm4826, %v6904, 0
      %v7032 = vsel %vm4826, %v6905, 0
      %v7035 = vsel %vm4826, %v6906, 0
      %v7038 = vsel %vm4826, %v6907, 0
      %v7041 = vsel %vm4826, %v6908, 0
      %v7044 = vsel %vm4826, %v6909, 0
      %v7047 = vsel %vm4826, %v6910, 0
      %v7050 = vsel %vm4826, %v6911, 0
      %v7053 = vsel %vm4826, %v6912, 0
      %v7056 = vsel %vm4826, %v6913, 0
      %v7059 = vsel %vm4826, %v6914, 0
      %v7062 = vsel %vm4826, %v6915, 0
      %v7065 = vsel %vm4826, %v6916, 0
      %v7068 = vsel %vm4826, %v6917, 0
      %v7071 = vsel %vm4826, %v6918, 0
      %v7074 = vsel %vm4826, %v6919, 0
      %v7077 = vsel %vm4826, %v6920, 0
      %v7080 = vsel %vm4826, %v6921, 0
      %v7083 = vsel %vm4826, %v6922, 0
      %v7086 = vsel %vm4826, %v6923, 0
      %v7089 = vsel %vm4826, %v6924, 0
      %v7092 = vsel %vm4826, %v6925, 0
      %v7095 = vsel %vm4826, %v6926, 0
      %v7098 = vsel %vm4826, %v6927, 0
      %v7101 = vsel %vm4826, %v6928, 0
      %v7104 = vsel %vm4826, %v6929, 0
      %v7107 = vsel %vm4826, %v6930, 0
      %v7110 = vsel %vm4826, %v6931, 0
      %v7113 = vsel %vm4826, %v6932, 0
      %v7116 = vsel %vm4826, %v6933, 0
      %v7119 = vsel %vm4826, %v6934, 0
      %v7122 = vsel %vm4826, %v6935, 0
      %v7125 = vsel %vm4826, %v6936, 0
      %v7128 = vsel %vm4826, %v6937, 0
      %v7131 = vsel %vm4826, %v6938, 0
      %v7134 = vsel %vm4826, %v6939, 0
      %v7137 = vsel %vm4826, %v6940, 0
      %v7140 = vsel %vm4826, %v6941, 0
      %v7143 = vsel %vm4826, %v6942, 0
      %v7146 = vsel %vm4826, %v6943, 0
      %v7149 = vsel %vm4826, %v6944, 0
      %v7152 = vsel %vm4826, %v6945, 0
      %v7155 = vsel %vm4826, %v6946, 0
      %v7158 = vsel %vm4826, %v6947, 0
      %v7161 = vsel %vm4826, %v6948, 0
      %v7164 = vsel %vm4826, %v6949, 0
      %v7167 = vsel %vm4826, %v6950, 0
      %v7170 = vsel %vm4826, %v6951, 0
      %v7173 = vsel %vm4826, %v6952, 0
      %v7176 = vsel %vm4826, %v6953, 0
      %v7179 = vsel %vm4826, %v6954, 0
      %v7182 = vsel %vm4826, %v6955, 0
      %7184 = vmatprep.subr.bf16.mxu0 %v6965
      %7185 = vmatpush1.bf16.msra.mxu0 %v6964
      %7186 = vmatprep.subr.bf16.mxu0 0
      %7187 = vmatpush1.bf16.msra.mxu0 0
      %7188 = vmatprep.subr.bf16.mxu0 0
      %7189 = vmatpush1.bf16.msra.mxu0 0
      %7190 = vmatprep.subr.bf16.mxu0 0
      %7191 = vmatpush1.bf16.msra.mxu0 0
      %7192 = vmatprep.subr.bf16.mxu0 0
      %7193 = vmatpush1.bf16.msra.mxu0 0
      %7194 = vmatprep.subr.bf16.mxu0 0
      %7195 = vmatpush1.bf16.msra.mxu0 0
      %7196 = vmatprep.subr.bf16.mxu0 0
      %7197 = vmatpush1.bf16.msra.mxu0 0
      %7198 = vmatprep.subr.bf16.mxu0 0
      %7199 = vmatpush1.bf16.msra.mxu0 0
      %7200 = vmatprep.subr.bf16.mxu0 0
      %7201 = vmatpush1.bf16.msra.mxu0 0
      %7202 = vmatprep.subr.bf16.mxu0 0
      %7203 = vmatpush1.bf16.msra.mxu0 0
      %7204 = vmatprep.subr.bf16.mxu0 0
      %7205 = vmatpush1.bf16.msra.mxu0 0
      %7206 = vmatprep.subr.bf16.mxu0 0
      %7207 = vmatpush1.bf16.msra.mxu0 0
      %7208 = vmatprep.subr.bf16.mxu0 0
      %7209 = vmatpush1.bf16.msra.mxu0 0
      %7210 = vmatprep.subr.bf16.mxu0 0
      %7211 = vmatpush1.bf16.msra.mxu0 0
      %7212 = vmatprep.subr.bf16.mxu0 0
      %7213 = vmatpush1.bf16.msra.mxu0 0
      %7214 = vmatprep.subr.bf16.mxu0 0
      %7215 = vmatpush1.bf16.msra.mxu0 0
      %7216 = vmatprep.mubr.bf16.mxu0 0
      %7217 = vmatmul.mubr.bf16.gmra.mrb[0].mxu0 %v6969
      %v7218 = vpop.f32.mrb[0].mxu0
      %v7219 = vadd.f32 0.0, %v7218
      %v7220 = vpop.f32.mrb[0].mxu0
      %v7221 = vadd.f32 0.0, %v7220
      %v7222 = vpop.f32.mrb[0].mxu0
      %v7223 = vadd.f32 0.0, %v7222
      %v7224 = vpop.f32.mrb[0].mxu0
      %v7225 = vadd.f32 0.0, %v7224
      %7226 = vmatprep.mubr.bf16.mxu0 0
      %7227 = vmatmul.mubr.bf16.gmra.mrb[0].mxu0 %v6972
      %v7228 = vpop.f32.mrb[0].mxu0
      %v7229 = vadd.f32 0.0, %v7228
      %v7230 = vpop.f32.mrb[0].mxu0
      %v7231 = vadd.f32 0.0, %v7230
      %v7232 = vpop.f32.mrb[0].mxu0
      %v7233 = vadd.f32 0.0, %v7232
      %v7234 = vpop.f32.mrb[0].mxu0
      %v7235 = vadd.f32 0.0, %v7234
      %7236 = vmatprep.mubr.bf16.mxu0 0
      %7237 = vmatmul.mubr.bf16.gmra.mrb[0].mxu0 %v6975
      %v7238 = vpop.f32.mrb[0].mxu0
      %v7239 = vadd.f32 0.0, %v7238
      %v7240 = vpop.f32.mrb[0].mxu0
      %v7241 = vadd.f32 0.0, %v7240
      %v7242 = vpop.f32.mrb[0].mxu0
      %v7243 = vadd.f32 0.0, %v7242
      %v7244 = vpop.f32.mrb[0].mxu0
      %v7245 = vadd.f32 0.0, %v7244
      %7246 = vmatprep.mubr.bf16.mxu0 0
      %7247 = vmatmul.mubr.bf16.gmra.mrb[0].mxu0 %v6978
      %v7248 = vpop.f32.mrb[0].mxu0
      %v7249 = vadd.f32 0.0, %v7248
      %v7250 = vpop.f32.mrb[0].mxu0
      %v7251 = vadd.f32 0.0, %v7250
      %v7252 = vpop.f32.mrb[0].mxu0
      %v7253 = vadd.f32 0.0, %v7252
      %v7254 = vpop.f32.mrb[0].mxu0
      %v7255 = vadd.f32 0.0, %v7254
      %7256 = vmatprep.mubr.bf16.mxu0 0
      %7257 = vmatmul.mubr.bf16.gmra.mrb[0].mxu0 %v6981
      %v7258 = vpop.f32.mrb[0].mxu0
      %v7259 = vadd.f32 0.0, %v7258
      %v7260 = vpop.f32.mrb[0].mxu0
      %v7261 = vadd.f32 0.0, %v7260
      %v7262 = vpop.f32.mrb[0].mxu0
      %v7263 = vadd.f32 0.0, %v7262
      %v7264 = vpop.f32.mrb[0].mxu0
      %v7265 = vadd.f32 0.0, %v7264
      %7266 = vmatprep.mubr.bf16.mxu0 0
      %7267 = vmatmul.mubr.bf16.gmra.mrb[0].mxu0 %v6984
      %v7268 = vpop.f32.mrb[0].mxu0
      %v7269 = vadd.f32 0.0, %v7268
      %v7270 = vpop.f32.mrb[0].mxu0
      %v7271 = vadd.f32 0.0, %v7270
      %v7272 = vpop.f32.mrb[0].mxu0
      %v7273 = vadd.f32 0.0, %v7272
      %v7274 = vpop.f32.mrb[0].mxu0
      %v7275 = vadd.f32 0.0, %v7274
      %7276 = vmatprep.mubr.bf16.mxu0 0
      %7277 = vmatmul.mubr.bf16.gmra.mrb[0].mxu0 %v6987
      %v7278 = vpop.f32.mrb[0].mxu0
      %v7279 = vadd.f32 0.0, %v7278
      %v7280 = vpop.f32.mrb[0].mxu0
      %v7281 = vadd.f32 0.0, %v7280
      %v7282 = vpop.f32.mrb[0].mxu0
      %v7283 = vadd.f32 0.0, %v7282
      %v7284 = vpop.f32.mrb[0].mxu0
      %v7285 = vadd.f32 0.0, %v7284
      %7286 = vmatprep.mubr.bf16.mxu0 0
      %7287 = vmatmul.mubr.bf16.gmra.mrb[0].mxu0 %v6990
      %v7288 = vpop.f32.mrb[0].mxu0
      %v7289 = vadd.f32 0.0, %v7288
      %v7290 = vpop.f32.mrb[0].mxu0
      %v7291 = vadd.f32 0.0, %v7290
      %v7292 = vpop.f32.mrb[0].mxu0
      %v7293 = vadd.f32 0.0, %v7292
      %v7294 = vpop.f32.mrb[0].mxu0
      %v7295 = vadd.f32 0.0, %v7294
      %7296 = vmatprep.mubr.bf16.mxu0 0
      %7297 = vmatmul.mubr.bf16.gmra.mrb[0].mxu0 %v6993
      %v7298 = vpop.f32.mrb[0].mxu0
      %v7299 = vadd.f32 0.0, %v7298
      %v7300 = vpop.f32.mrb[0].mxu0
      %v7301 = vadd.f32 0.0, %v7300
      %v7302 = vpop.f32.mrb[0].mxu0
      %v7303 = vadd.f32 0.0, %v7302
      %v7304 = vpop.f32.mrb[0].mxu0
      %v7305 = vadd.f32 0.0, %v7304
      %7306 = vmatprep.mubr.bf16.mxu0 0
      %7307 = vmatmul.mubr.bf16.gmra.mrb[0].mxu0 %v6996
      %v7308 = vpop.f32.mrb[0].mxu0
      %v7309 = vadd.f32 0.0, %v7308
      %v7310 = vpop.f32.mrb[0].mxu0
      %v7311 = vadd.f32 0.0, %v7310
      %v7312 = vpop.f32.mrb[0].mxu0
      %v7313 = vadd.f32 0.0, %v7312
      %v7314 = vpop.f32.mrb[0].mxu0
      %v7315 = vadd.f32 0.0, %v7314
      %7316 = vmatprep.mubr.bf16.mxu0 0
      %7317 = vmatmul.mubr.bf16.gmra.mrb[0].mxu0 %v6999
      %v7318 = vpop.f32.mrb[0].mxu0
      %v7319 = vadd.f32 0.0, %v7318
      %v7320 = vpop.f32.mrb[0].mxu0
      %v7321 = vadd.f32 0.0, %v7320
      %v7322 = vpop.f32.mrb[0].mxu0
      %v7323 = vadd.f32 0.0, %v7322
      %v7324 = vpop.f32.mrb[0].mxu0
      %v7325 = vadd.f32 0.0, %v7324
      %7326 = vmatprep.mubr.bf16.mxu0 0
      %7327 = vmatmul.mubr.bf16.gmra.mrb[0].mxu0 %v7002
      %v7328 = vpop.f32.mrb[0].mxu0
      %v7329 = vadd.f32 0.0, %v7328
      %v7330 = vpop.f32.mrb[0].mxu0
      %v7331 = vadd.f32 0.0, %v7330
      %v7332 = vpop.f32.mrb[0].mxu0
      %v7333 = vadd.f32 0.0, %v7332
      %v7334 = vpop.f32.mrb[0].mxu0
      %v7335 = vadd.f32 0.0, %v7334
      %7336 = vmatprep.mubr.bf16.mxu0 0
      %7337 = vmatmul.mubr.bf16.gmra.mrb[0].mxu0 %v7005
      %v7338 = vpop.f32.mrb[0].mxu0
      %v7339 = vadd.f32 0.0, %v7338
      %v7340 = vpop.f32.mrb[0].mxu0
      %v7341 = vadd.f32 0.0, %v7340
      %v7342 = vpop.f32.mrb[0].mxu0
      %v7343 = vadd.f32 0.0, %v7342
      %v7344 = vpop.f32.mrb[0].mxu0
      %v7345 = vadd.f32 0.0, %v7344
      %7346 = vmatprep.mubr.bf16.mxu0 0
      %7347 = vmatmul.mubr.bf16.gmra.mrb[0].mxu0 %v7008
      %v7348 = vpop.f32.mrb[0].mxu0
      %v7349 = vadd.f32 0.0, %v7348
      %v7350 = vpop.f32.mrb[0].mxu0
      %v7351 = vadd.f32 0.0, %v7350
      %v7352 = vpop.f32.mrb[0].mxu0
      %v7353 = vadd.f32 0.0, %v7352
      %v7354 = vpop.f32.mrb[0].mxu0
      %v7355 = vadd.f32 0.0, %v7354
      %7356 = vmatprep.mubr.bf16.mxu0 0
      %7357 = vmatmul.mubr.bf16.gmra.mrb[0].mxu0 %v7011
      %v7358 = vpop.f32.mrb[0].mxu0
      %v7359 = vadd.f32 0.0, %v7358
      %v7360 = vpop.f32.mrb[0].mxu0
      %v7361 = vadd.f32 0.0, %v7360
      %v7362 = vpop.f32.mrb[0].mxu0
      %v7363 = vadd.f32 0.0, %v7362
      %v7364 = vpop.f32.mrb[0].mxu0
      %v7365 = vadd.f32 0.0, %v7364
      %7366 = vmatprep.mubr.bf16.mxu0 0
      %7367 = vmatmul.mubr.bf16.gmra.mrb[0].mxu0 %v7014
      %v7368 = vpop.f32.mrb[0].mxu0
      %v7369 = vadd.f32 0.0, %v7368
      %v7370 = vpop.f32.mrb[0].mxu0
      %v7371 = vadd.f32 0.0, %v7370
      %v7372 = vpop.f32.mrb[0].mxu0
      %v7373 = vadd.f32 0.0, %v7372
      %v7374 = vpop.f32.mrb[0].mxu0
      %v7375 = vadd.f32 0.0, %v7374
      %7376 = vmatprep.mubr.bf16.mxu0 0
      %7377 = vmatmul.mubr.bf16.gmra.mrb[0].mxu0 %v7017
      %v7378 = vpop.f32.mrb[0].mxu0
      %v7379 = vadd.f32 0.0, %v7378
      %v7380 = vpop.f32.mrb[0].mxu0
      %v7381 = vadd.f32 0.0, %v7380
      %v7382 = vpop.f32.mrb[0].mxu0
      %v7383 = vadd.f32 0.0, %v7382
      %v7384 = vpop.f32.mrb[0].mxu0
      %v7385 = vadd.f32 0.0, %v7384
      %7386 = vmatprep.mubr.bf16.mxu0 0
      %7387 = vmatmul.mubr.bf16.gmra.mrb[0].mxu0 %v7020
      %v7388 = vpop.f32.mrb[0].mxu0
      %v7389 = vadd.f32 0.0, %v7388
      %v7390 = vpop.f32.mrb[0].mxu0
      %v7391 = vadd.f32 0.0, %v7390
      %v7392 = vpop.f32.mrb[0].mxu0
      %v7393 = vadd.f32 0.0, %v7392
      %v7394 = vpop.f32.mrb[0].mxu0
      %v7395 = vadd.f32 0.0, %v7394
      %7396 = vmatprep.mubr.bf16.mxu0 0
      %7397 = vmatmul.mubr.bf16.gmra.mrb[0].mxu0 %v7023
      %v7398 = vpop.f32.mrb[0].mxu0
      %v7399 = vadd.f32 0.0, %v7398
      %v7400 = vpop.f32.mrb[0].mxu0
      %v7401 = vadd.f32 0.0, %v7400
      %v7402 = vpop.f32.mrb[0].mxu0
      %v7403 = vadd.f32 0.0, %v7402
      %v7404 = vpop.f32.mrb[0].mxu0
      %v7405 = vadd.f32 0.0, %v7404
      %7406 = vmatprep.mubr.bf16.mxu0 0
      %7407 = vmatmul.mubr.bf16.gmra.mrb[0].mxu0 %v7026
      %v7408 = vpop.f32.mrb[0].mxu0
      %v7409 = vadd.f32 0.0, %v7408
      %v7410 = vpop.f32.mrb[0].mxu0
      %v7411 = vadd.f32 0.0, %v7410
      %v7412 = vpop.f32.mrb[0].mxu0
      %v7413 = vadd.f32 0.0, %v7412
      %v7414 = vpop.f32.mrb[0].mxu0
      %v7415 = vadd.f32 0.0, %v7414
      %7416 = vmatprep.mubr.bf16.mxu0 0
      %7417 = vmatmul.mubr.bf16.gmra.mrb[0].mxu0 %v7029
      %v7418 = vpop.f32.mrb[0].mxu0
      %v7419 = vadd.f32 0.0, %v7418
      %v7420 = vpop.f32.mrb[0].mxu0
      %v7421 = vadd.f32 0.0, %v7420
      %v7422 = vpop.f32.mrb[0].mxu0
      %v7423 = vadd.f32 0.0, %v7422
      %v7424 = vpop.f32.mrb[0].mxu0
      %v7425 = vadd.f32 0.0, %v7424
      %7426 = vmatprep.mubr.bf16.mxu0 0
      %7427 = vmatmul.mubr.bf16.gmra.mrb[0].mxu0 %v7032
      %v7428 = vpop.f32.mrb[0].mxu0
      %v7429 = vadd.f32 0.0, %v7428
      %v7430 = vpop.f32.mrb[0].mxu0
      %v7431 = vadd.f32 0.0, %v7430
      %v7432 = vpop.f32.mrb[0].mxu0
      %v7433 = vadd.f32 0.0, %v7432
      %v7434 = vpop.f32.mrb[0].mxu0
      %v7435 = vadd.f32 0.0, %v7434
      %7436 = vmatprep.mubr.bf16.mxu0 0
      %7437 = vmatmul.mubr.bf16.gmra.mrb[0].mxu0 %v7035
      %v7438 = vpop.f32.mrb[0].mxu0
      %v7439 = vadd.f32 0.0, %v7438
      %v7440 = vpop.f32.mrb[0].mxu0
      %v7441 = vadd.f32 0.0, %v7440
      %v7442 = vpop.f32.mrb[0].mxu0
      %v7443 = vadd.f32 0.0, %v7442
      %v7444 = vpop.f32.mrb[0].mxu0
      %v7445 = vadd.f32 0.0, %v7444
      %7446 = vmatprep.mubr.bf16.mxu0 0
      %7447 = vmatmul.mubr.bf16.gmra.mrb[0].mxu0 %v7038
      %v7448 = vpop.f32.mrb[0].mxu0
      %v7449 = vadd.f32 0.0, %v7448
      %v7450 = vpop.f32.mrb[0].mxu0
      %v7451 = vadd.f32 0.0, %v7450
      %v7452 = vpop.f32.mrb[0].mxu0
      %v7453 = vadd.f32 0.0, %v7452
      %v7454 = vpop.f32.mrb[0].mxu0
      %v7455 = vadd.f32 0.0, %v7454
      %7456 = vmatprep.mubr.bf16.mxu0 0
      %7457 = vmatmul.mubr.bf16.gmra.mrb[0].mxu0 %v7041
      %v7458 = vpop.f32.mrb[0].mxu0
      %v7459 = vadd.f32 0.0, %v7458
      %v7460 = vpop.f32.mrb[0].mxu0
      %v7461 = vadd.f32 0.0, %v7460
      %v7462 = vpop.f32.mrb[0].mxu0
      %v7463 = vadd.f32 0.0, %v7462
      %v7464 = vpop.f32.mrb[0].mxu0
      %v7465 = vadd.f32 0.0, %v7464
      %7466 = vmatprep.mubr.bf16.mxu0 0
      %7467 = vmatmul.mubr.bf16.gmra.mrb[0].mxu0 %v7044
      %v7468 = vpop.f32.mrb[0].mxu0
      %v7469 = vadd.f32 0.0, %v7468
      %v7470 = vpop.f32.mrb[0].mxu0
      %v7471 = vadd.f32 0.0, %v7470
      %v7472 = vpop.f32.mrb[0].mxu0
      %v7473 = vadd.f32 0.0, %v7472
      %v7474 = vpop.f32.mrb[0].mxu0
      %v7475 = vadd.f32 0.0, %v7474
      %7476 = vmatprep.mubr.bf16.mxu0 0
      %7477 = vmatmul.mubr.bf16.gmra.mrb[0].mxu0 %v7047
      %v7478 = vpop.f32.mrb[0].mxu0
      %v7479 = vadd.f32 0.0, %v7478
      %v7480 = vpop.f32.mrb[0].mxu0
      %v7481 = vadd.f32 0.0, %v7480
      %v7482 = vpop.f32.mrb[0].mxu0
      %v7483 = vadd.f32 0.0, %v7482
      %v7484 = vpop.f32.mrb[0].mxu0
      %v7485 = vadd.f32 0.0, %v7484
      %7486 = vmatprep.mubr.bf16.mxu0 0
      %7487 = vmatmul.mubr.bf16.gmra.mrb[0].mxu0 %v7050
      %v7488 = vpop.f32.mrb[0].mxu0
      %v7489 = vadd.f32 0.0, %v7488
      %v7490 = vpop.f32.mrb[0].mxu0
      %v7491 = vadd.f32 0.0, %v7490
      %v7492 = vpop.f32.mrb[0].mxu0
      %v7493 = vadd.f32 0.0, %v7492
      %v7494 = vpop.f32.mrb[0].mxu0
      %v7495 = vadd.f32 0.0, %v7494
      %7496 = vmatprep.mubr.bf16.mxu0 0
      %7497 = vmatmul.mubr.bf16.gmra.mrb[0].mxu0 %v7053
      %v7498 = vpop.f32.mrb[0].mxu0
      %v7499 = vadd.f32 0.0, %v7498
      %v7500 = vpop.f32.mrb[0].mxu0
      %v7501 = vadd.f32 0.0, %v7500
      %v7502 = vpop.f32.mrb[0].mxu0
      %v7503 = vadd.f32 0.0, %v7502
      %v7504 = vpop.f32.mrb[0].mxu0
      %v7505 = vadd.f32 0.0, %v7504
      %7506 = vmatprep.mubr.bf16.mxu0 0
      %7507 = vmatmul.mubr.bf16.gmra.mrb[0].mxu0 %v7056
      %v7508 = vpop.f32.mrb[0].mxu0
      %v7509 = vadd.f32 0.0, %v7508
      %v7510 = vpop.f32.mrb[0].mxu0
      %v7511 = vadd.f32 0.0, %v7510
      %v7512 = vpop.f32.mrb[0].mxu0
      %v7513 = vadd.f32 0.0, %v7512
      %v7514 = vpop.f32.mrb[0].mxu0
      %v7515 = vadd.f32 0.0, %v7514
      %7516 = vmatprep.mubr.bf16.mxu0 0
      %7517 = vmatmul.mubr.bf16.gmra.mrb[0].mxu0 %v7059
      %v7518 = vpop.f32.mrb[0].mxu0
      %v7519 = vadd.f32 0.0, %v7518
      %v7520 = vpop.f32.mrb[0].mxu0
      %v7521 = vadd.f32 0.0, %v7520
      %v7522 = vpop.f32.mrb[0].mxu0
      %v7523 = vadd.f32 0.0, %v7522
      %v7524 = vpop.f32.mrb[0].mxu0
      %v7525 = vadd.f32 0.0, %v7524
      %7526 = vmatprep.mubr.bf16.mxu0 0
      %7527 = vmatmul.mubr.bf16.gmra.mrb[0].mxu0 %v7062
      %v7528 = vpop.f32.mrb[0].mxu0
      %v7529 = vadd.f32 0.0, %v7528
      %v7530 = vpop.f32.mrb[0].mxu0
      %v7531 = vadd.f32 0.0, %v7530
      %v7532 = vpop.f32.mrb[0].mxu0
      %v7533 = vadd.f32 0.0, %v7532
      %v7534 = vpop.f32.mrb[0].mxu0
      %v7535 = vadd.f32 0.0, %v7534
      %7536 = vmatprep.mubr.bf16.mxu0 0
      %7537 = vmatmul.mubr.bf16.gmra.mrb[0].mxu0 %v7065
      %v7538 = vpop.f32.mrb[0].mxu0
      %v7539 = vadd.f32 0.0, %v7538
      %v7540 = vpop.f32.mrb[0].mxu0
      %v7541 = vadd.f32 0.0, %v7540
      %v7542 = vpop.f32.mrb[0].mxu0
      %v7543 = vadd.f32 0.0, %v7542
      %v7544 = vpop.f32.mrb[0].mxu0
      %v7545 = vadd.f32 0.0, %v7544
      %7546 = vmatprep.mubr.bf16.mxu0 0
      %7547 = vmatmul.mubr.bf16.gmra.mrb[0].mxu0 %v7068
      %v7548 = vpop.f32.mrb[0].mxu0
      %v7549 = vadd.f32 0.0, %v7548
      %v7550 = vpop.f32.mrb[0].mxu0
      %v7551 = vadd.f32 0.0, %v7550
      %v7552 = vpop.f32.mrb[0].mxu0
      %v7553 = vadd.f32 0.0, %v7552
      %v7554 = vpop.f32.mrb[0].mxu0
      %v7555 = vadd.f32 0.0, %v7554
      %7556 = vmatprep.mubr.bf16.mxu0 0
      %7557 = vmatmul.mubr.bf16.gmra.mrb[0].mxu0 %v7071
      %v7558 = vpop.f32.mrb[0].mxu0
      %v7559 = vadd.f32 0.0, %v7558
      %v7560 = vpop.f32.mrb[0].mxu0
      %v7561 = vadd.f32 0.0, %v7560
      %v7562 = vpop.f32.mrb[0].mxu0
      %v7563 = vadd.f32 0.0, %v7562
      %v7564 = vpop.f32.mrb[0].mxu0
      %v7565 = vadd.f32 0.0, %v7564
      %7566 = vmatprep.mubr.bf16.mxu0 0
      %7567 = vmatmul.mubr.bf16.gmra.mrb[0].mxu0 %v7074
      %v7568 = vpop.f32.mrb[0].mxu0
      %v7569 = vadd.f32 0.0, %v7568
      %v7570 = vpop.f32.mrb[0].mxu0
      %v7571 = vadd.f32 0.0, %v7570
      %v7572 = vpop.f32.mrb[0].mxu0
      %v7573 = vadd.f32 0.0, %v7572
      %v7574 = vpop.f32.mrb[0].mxu0
      %v7575 = vadd.f32 0.0, %v7574
      %7576 = vmatprep.mubr.bf16.mxu0 0
      %7577 = vmatmul.mubr.bf16.gmra.mrb[0].mxu0 %v7077
      %v7578 = vpop.f32.mrb[0].mxu0
      %v7579 = vadd.f32 0.0, %v7578
      %v7580 = vpop.f32.mrb[0].mxu0
      %v7581 = vadd.f32 0.0, %v7580
      %v7582 = vpop.f32.mrb[0].mxu0
      %v7583 = vadd.f32 0.0, %v7582
      %v7584 = vpop.f32.mrb[0].mxu0
      %v7585 = vadd.f32 0.0, %v7584
      %7586 = vmatprep.mubr.bf16.mxu0 0
      %7587 = vmatmul.mubr.bf16.gmra.mrb[0].mxu0 %v7080
      %v7588 = vpop.f32.mrb[0].mxu0
      %v7589 = vadd.f32 0.0, %v7588
      %v7590 = vpop.f32.mrb[0].mxu0
      %v7591 = vadd.f32 0.0, %v7590
      %v7592 = vpop.f32.mrb[0].mxu0
      %v7593 = vadd.f32 0.0, %v7592
      %v7594 = vpop.f32.mrb[0].mxu0
      %v7595 = vadd.f32 0.0, %v7594
      %7596 = vmatprep.mubr.bf16.mxu0 0
      %7597 = vmatmul.mubr.bf16.gmra.mrb[0].mxu0 %v7083
      %v7598 = vpop.f32.mrb[0].mxu0
      %v7599 = vadd.f32 0.0, %v7598
      %v7600 = vpop.f32.mrb[0].mxu0
      %v7601 = vadd.f32 0.0, %v7600
      %v7602 = vpop.f32.mrb[0].mxu0
      %v7603 = vadd.f32 0.0, %v7602
      %v7604 = vpop.f32.mrb[0].mxu0
      %v7605 = vadd.f32 0.0, %v7604
      %7606 = vmatprep.mubr.bf16.mxu0 0
      %7607 = vmatmul.mubr.bf16.gmra.mrb[0].mxu0 %v7086
      %v7608 = vpop.f32.mrb[0].mxu0
      %v7609 = vadd.f32 0.0, %v7608
      %v7610 = vpop.f32.mrb[0].mxu0
      %v7611 = vadd.f32 0.0, %v7610
      %v7612 = vpop.f32.mrb[0].mxu0
      %v7613 = vadd.f32 0.0, %v7612
      %v7614 = vpop.f32.mrb[0].mxu0
      %v7615 = vadd.f32 0.0, %v7614
      %7616 = vmatprep.mubr.bf16.mxu0 0
      %7617 = vmatmul.mubr.bf16.gmra.mrb[0].mxu0 %v7089
      %v7618 = vpop.f32.mrb[0].mxu0
      %v7619 = vadd.f32 0.0, %v7618
      %v7620 = vpop.f32.mrb[0].mxu0
      %v7621 = vadd.f32 0.0, %v7620
      %v7622 = vpop.f32.mrb[0].mxu0
      %v7623 = vadd.f32 0.0, %v7622
      %v7624 = vpop.f32.mrb[0].mxu0
      %v7625 = vadd.f32 0.0, %v7624
      %7626 = vmatprep.mubr.bf16.mxu0 0
      %7627 = vmatmul.mubr.bf16.gmra.mrb[0].mxu0 %v7092
      %v7628 = vpop.f32.mrb[0].mxu0
      %v7629 = vadd.f32 0.0, %v7628
      %v7630 = vpop.f32.mrb[0].mxu0
      %v7631 = vadd.f32 0.0, %v7630
      %v7632 = vpop.f32.mrb[0].mxu0
      %v7633 = vadd.f32 0.0, %v7632
      %v7634 = vpop.f32.mrb[0].mxu0
      %v7635 = vadd.f32 0.0, %v7634
      %7636 = vmatprep.mubr.bf16.mxu0 0
      %7637 = vmatmul.mubr.bf16.gmra.mrb[0].mxu0 %v7095
      %v7638 = vpop.f32.mrb[0].mxu0
      %v7639 = vadd.f32 0.0, %v7638
      %v7640 = vpop.f32.mrb[0].mxu0
      %v7641 = vadd.f32 0.0, %v7640
      %v7642 = vpop.f32.mrb[0].mxu0
      %v7643 = vadd.f32 0.0, %v7642
      %v7644 = vpop.f32.mrb[0].mxu0
      %v7645 = vadd.f32 0.0, %v7644
      %7646 = vmatprep.mubr.bf16.mxu0 0
      %7647 = vmatmul.mubr.bf16.gmra.mrb[0].mxu0 %v7098
      %v7648 = vpop.f32.mrb[0].mxu0
      %v7649 = vadd.f32 0.0, %v7648
      %v7650 = vpop.f32.mrb[0].mxu0
      %v7651 = vadd.f32 0.0, %v7650
      %v7652 = vpop.f32.mrb[0].mxu0
      %v7653 = vadd.f32 0.0, %v7652
      %v7654 = vpop.f32.mrb[0].mxu0
      %v7655 = vadd.f32 0.0, %v7654
      %7656 = vmatprep.mubr.bf16.mxu0 0
      %7657 = vmatmul.mubr.bf16.gmra.mrb[0].mxu0 %v7101
      %v7658 = vpop.f32.mrb[0].mxu0
      %v7659 = vadd.f32 0.0, %v7658
      %v7660 = vpop.f32.mrb[0].mxu0
      %v7661 = vadd.f32 0.0, %v7660
      %v7662 = vpop.f32.mrb[0].mxu0
      %v7663 = vadd.f32 0.0, %v7662
      %v7664 = vpop.f32.mrb[0].mxu0
      %v7665 = vadd.f32 0.0, %v7664
      %7666 = vmatprep.mubr.bf16.mxu0 0
      %7667 = vmatmul.mubr.bf16.gmra.mrb[0].mxu0 %v7104
      %v7668 = vpop.f32.mrb[0].mxu0
      %v7669 = vadd.f32 0.0, %v7668
      %v7670 = vpop.f32.mrb[0].mxu0
      %v7671 = vadd.f32 0.0, %v7670
      %v7672 = vpop.f32.mrb[0].mxu0
      %v7673 = vadd.f32 0.0, %v7672
      %v7674 = vpop.f32.mrb[0].mxu0
      %v7675 = vadd.f32 0.0, %v7674
      %7676 = vmatprep.mubr.bf16.mxu0 0
      %7677 = vmatmul.mubr.bf16.gmra.mrb[0].mxu0 %v7107
      %v7678 = vpop.f32.mrb[0].mxu0
      %v7679 = vadd.f32 0.0, %v7678
      %v7680 = vpop.f32.mrb[0].mxu0
      %v7681 = vadd.f32 0.0, %v7680
      %v7682 = vpop.f32.mrb[0].mxu0
      %v7683 = vadd.f32 0.0, %v7682
      %v7684 = vpop.f32.mrb[0].mxu0
      %v7685 = vadd.f32 0.0, %v7684
      %7686 = vmatprep.mubr.bf16.mxu0 0
      %7687 = vmatmul.mubr.bf16.gmra.mrb[0].mxu0 %v7110
      %v7688 = vpop.f32.mrb[0].mxu0
      %v7689 = vadd.f32 0.0, %v7688
      %v7690 = vpop.f32.mrb[0].mxu0
      %v7691 = vadd.f32 0.0, %v7690
      %v7692 = vpop.f32.mrb[0].mxu0
      %v7693 = vadd.f32 0.0, %v7692
      %v7694 = vpop.f32.mrb[0].mxu0
      %v7695 = vadd.f32 0.0, %v7694
      %7696 = vmatprep.mubr.bf16.mxu0 0
      %7697 = vmatmul.mubr.bf16.gmra.mrb[0].mxu0 %v7113
      %v7698 = vpop.f32.mrb[0].mxu0
      %v7699 = vadd.f32 0.0, %v7698
      %v7700 = vpop.f32.mrb[0].mxu0
      %v7701 = vadd.f32 0.0, %v7700
      %v7702 = vpop.f32.mrb[0].mxu0
      %v7703 = vadd.f32 0.0, %v7702
      %v7704 = vpop.f32.mrb[0].mxu0
      %v7705 = vadd.f32 0.0, %v7704
      %7706 = vmatprep.mubr.bf16.mxu0 0
      %7707 = vmatmul.mubr.bf16.gmra.mrb[0].mxu0 %v7116
      %v7708 = vpop.f32.mrb[0].mxu0
      %v7709 = vadd.f32 0.0, %v7708
      %v7710 = vpop.f32.mrb[0].mxu0
      %v7711 = vadd.f32 0.0, %v7710
      %v7712 = vpop.f32.mrb[0].mxu0
      %v7713 = vadd.f32 0.0, %v7712
      %v7714 = vpop.f32.mrb[0].mxu0
      %v7715 = vadd.f32 0.0, %v7714
      %7716 = vmatprep.mubr.bf16.mxu0 0
      %7717 = vmatmul.mubr.bf16.gmra.mrb[0].mxu0 %v7119
      %v7718 = vpop.f32.mrb[0].mxu0
      %v7719 = vadd.f32 0.0, %v7718
      %v7720 = vpop.f32.mrb[0].mxu0
      %v7721 = vadd.f32 0.0, %v7720
      %v7722 = vpop.f32.mrb[0].mxu0
      %v7723 = vadd.f32 0.0, %v7722
      %v7724 = vpop.f32.mrb[0].mxu0
      %v7725 = vadd.f32 0.0, %v7724
      %7726 = vmatprep.mubr.bf16.mxu0 0
      %7727 = vmatmul.mubr.bf16.gmra.mrb[0].mxu0 %v7122
      %v7728 = vpop.f32.mrb[0].mxu0
      %v7729 = vadd.f32 0.0, %v7728
      %v7730 = vpop.f32.mrb[0].mxu0
      %v7731 = vadd.f32 0.0, %v7730
      %v7732 = vpop.f32.mrb[0].mxu0
      %v7733 = vadd.f32 0.0, %v7732
      %v7734 = vpop.f32.mrb[0].mxu0
      %v7735 = vadd.f32 0.0, %v7734
      %7736 = vmatprep.mubr.bf16.mxu0 0
      %7737 = vmatmul.mubr.bf16.gmra.mrb[0].mxu0 %v7125
      %v7738 = vpop.f32.mrb[0].mxu0
      %v7739 = vadd.f32 0.0, %v7738
      %v7740 = vpop.f32.mrb[0].mxu0
      %v7741 = vadd.f32 0.0, %v7740
      %v7742 = vpop.f32.mrb[0].mxu0
      %v7743 = vadd.f32 0.0, %v7742
      %v7744 = vpop.f32.mrb[0].mxu0
      %v7745 = vadd.f32 0.0, %v7744
      %7746 = vmatprep.mubr.bf16.mxu0 0
      %7747 = vmatmul.mubr.bf16.gmra.mrb[0].mxu0 %v7128
      %v7748 = vpop.f32.mrb[0].mxu0
      %v7749 = vadd.f32 0.0, %v7748
      %v7750 = vpop.f32.mrb[0].mxu0
      %v7751 = vadd.f32 0.0, %v7750
      %v7752 = vpop.f32.mrb[0].mxu0
      %v7753 = vadd.f32 0.0, %v7752
      %v7754 = vpop.f32.mrb[0].mxu0
      %v7755 = vadd.f32 0.0, %v7754
      %7756 = vmatprep.mubr.bf16.mxu0 0
      %7757 = vmatmul.mubr.bf16.gmra.mrb[0].mxu0 %v7131
      %v7758 = vpop.f32.mrb[0].mxu0
      %v7759 = vadd.f32 0.0, %v7758
      %v7760 = vpop.f32.mrb[0].mxu0
      %v7761 = vadd.f32 0.0, %v7760
      %v7762 = vpop.f32.mrb[0].mxu0
      %v7763 = vadd.f32 0.0, %v7762
      %v7764 = vpop.f32.mrb[0].mxu0
      %v7765 = vadd.f32 0.0, %v7764
      %7766 = vmatprep.mubr.bf16.mxu0 0
      %7767 = vmatmul.mubr.bf16.gmra.mrb[0].mxu0 %v7134
      %v7768 = vpop.f32.mrb[0].mxu0
      %v7769 = vadd.f32 0.0, %v7768
      %v7770 = vpop.f32.mrb[0].mxu0
      %v7771 = vadd.f32 0.0, %v7770
      %v7772 = vpop.f32.mrb[0].mxu0
      %v7773 = vadd.f32 0.0, %v7772
      %v7774 = vpop.f32.mrb[0].mxu0
      %v7775 = vadd.f32 0.0, %v7774
      %7776 = vmatprep.mubr.bf16.mxu0 0
      %7777 = vmatmul.mubr.bf16.gmra.mrb[0].mxu0 %v7137
      %v7778 = vpop.f32.mrb[0].mxu0
      %v7779 = vadd.f32 0.0, %v7778
      %v7780 = vpop.f32.mrb[0].mxu0
      %v7781 = vadd.f32 0.0, %v7780
      %v7782 = vpop.f32.mrb[0].mxu0
      %v7783 = vadd.f32 0.0, %v7782
      %v7784 = vpop.f32.mrb[0].mxu0
      %v7785 = vadd.f32 0.0, %v7784
      %7786 = vmatprep.mubr.bf16.mxu0 0
      %7787 = vmatmul.mubr.bf16.gmra.mrb[0].mxu0 %v7140
      %v7788 = vpop.f32.mrb[0].mxu0
      %v7789 = vadd.f32 0.0, %v7788
      %v7790 = vpop.f32.mrb[0].mxu0
      %v7791 = vadd.f32 0.0, %v7790
      %v7792 = vpop.f32.mrb[0].mxu0
      %v7793 = vadd.f32 0.0, %v7792
      %v7794 = vpop.f32.mrb[0].mxu0
      %v7795 = vadd.f32 0.0, %v7794
      %7796 = vmatprep.mubr.bf16.mxu0 0
      %7797 = vmatmul.mubr.bf16.gmra.mrb[0].mxu0 %v7143
      %v7798 = vpop.f32.mrb[0].mxu0
      %v7799 = vadd.f32 0.0, %v7798
      %v7800 = vpop.f32.mrb[0].mxu0
      %v7801 = vadd.f32 0.0, %v7800
      %v7802 = vpop.f32.mrb[0].mxu0
      %v7803 = vadd.f32 0.0, %v7802
      %v7804 = vpop.f32.mrb[0].mxu0
      %v7805 = vadd.f32 0.0, %v7804
      %7806 = vmatprep.mubr.bf16.mxu0 0
      %7807 = vmatmul.mubr.bf16.gmra.mrb[0].mxu0 %v7146
      %v7808 = vpop.f32.mrb[0].mxu0
      %v7809 = vadd.f32 0.0, %v7808
      %v7810 = vpop.f32.mrb[0].mxu0
      %v7811 = vadd.f32 0.0, %v7810
      %v7812 = vpop.f32.mrb[0].mxu0
      %v7813 = vadd.f32 0.0, %v7812
      %v7814 = vpop.f32.mrb[0].mxu0
      %v7815 = vadd.f32 0.0, %v7814
      %7816 = vmatprep.mubr.bf16.mxu0 0
      %7817 = vmatmul.mubr.bf16.gmra.mrb[0].mxu0 %v7149
      %v7818 = vpop.f32.mrb[0].mxu0
      %v7819 = vadd.f32 0.0, %v7818
      %v7820 = vpop.f32.mrb[0].mxu0
      %v7821 = vadd.f32 0.0, %v7820
      %v7822 = vpop.f32.mrb[0].mxu0
      %v7823 = vadd.f32 0.0, %v7822
      %v7824 = vpop.f32.mrb[0].mxu0
      %v7825 = vadd.f32 0.0, %v7824
      %7826 = vmatprep.mubr.bf16.mxu0 0
      %7827 = vmatmul.mubr.bf16.gmra.mrb[0].mxu0 %v7152
      %v7828 = vpop.f32.mrb[0].mxu0
      %v7829 = vadd.f32 0.0, %v7828
      %v7830 = vpop.f32.mrb[0].mxu0
      %v7831 = vadd.f32 0.0, %v7830
      %v7832 = vpop.f32.mrb[0].mxu0
      %v7833 = vadd.f32 0.0, %v7832
      %v7834 = vpop.f32.mrb[0].mxu0
      %v7835 = vadd.f32 0.0, %v7834
      %7836 = vmatprep.mubr.bf16.mxu0 0
      %7837 = vmatmul.mubr.bf16.gmra.mrb[0].mxu0 %v7155
      %v7838 = vpop.f32.mrb[0].mxu0
      %v7839 = vadd.f32 0.0, %v7838
      %v7840 = vpop.f32.mrb[0].mxu0
      %v7841 = vadd.f32 0.0, %v7840
      %v7842 = vpop.f32.mrb[0].mxu0
      %v7843 = vadd.f32 0.0, %v7842
      %v7844 = vpop.f32.mrb[0].mxu0
      %v7845 = vadd.f32 0.0, %v7844
      %7846 = vmatprep.mubr.bf16.mxu0 0
      %7847 = vmatmul.mubr.bf16.gmra.mrb[0].mxu0 %v7158
      %v7848 = vpop.f32.mrb[0].mxu0
      %v7849 = vadd.f32 0.0, %v7848
      %v7850 = vpop.f32.mrb[0].mxu0
      %v7851 = vadd.f32 0.0, %v7850
      %v7852 = vpop.f32.mrb[0].mxu0
      %v7853 = vadd.f32 0.0, %v7852
      %v7854 = vpop.f32.mrb[0].mxu0
      %v7855 = vadd.f32 0.0, %v7854
      %7856 = vmatprep.mubr.bf16.mxu0 0
      %7857 = vmatmul.mubr.bf16.gmra.mrb[0].mxu0 %v7161
      %v7858 = vpop.f32.mrb[0].mxu0
      %v7859 = vadd.f32 0.0, %v7858
      %v7860 = vpop.f32.mrb[0].mxu0
      %v7861 = vadd.f32 0.0, %v7860
      %v7862 = vpop.f32.mrb[0].mxu0
      %v7863 = vadd.f32 0.0, %v7862
      %v7864 = vpop.f32.mrb[0].mxu0
      %v7865 = vadd.f32 0.0, %v7864
      %7866 = vmatprep.mubr.bf16.mxu0 0
      %7867 = vmatmul.mubr.bf16.gmra.mrb[0].mxu0 %v7164
      %v7868 = vpop.f32.mrb[0].mxu0
      %v7869 = vadd.f32 0.0, %v7868
      %v7870 = vpop.f32.mrb[0].mxu0
      %v7871 = vadd.f32 0.0, %v7870
      %v7872 = vpop.f32.mrb[0].mxu0
      %v7873 = vadd.f32 0.0, %v7872
      %v7874 = vpop.f32.mrb[0].mxu0
      %v7875 = vadd.f32 0.0, %v7874
      %7876 = vmatprep.mubr.bf16.mxu0 0
      %7877 = vmatmul.mubr.bf16.gmra.mrb[0].mxu0 %v7167
      %v7878 = vpop.f32.mrb[0].mxu0
      %v7879 = vadd.f32 0.0, %v7878
      %v7880 = vpop.f32.mrb[0].mxu0
      %v7881 = vadd.f32 0.0, %v7880
      %v7882 = vpop.f32.mrb[0].mxu0
      %v7883 = vadd.f32 0.0, %v7882
      %v7884 = vpop.f32.mrb[0].mxu0
      %v7885 = vadd.f32 0.0, %v7884
      %7886 = vmatprep.mubr.bf16.mxu0 0
      %7887 = vmatmul.mubr.bf16.gmra.mrb[0].mxu0 %v7170
      %v7888 = vpop.f32.mrb[0].mxu0
      %v7889 = vadd.f32 0.0, %v7888
      %v7890 = vpop.f32.mrb[0].mxu0
      %v7891 = vadd.f32 0.0, %v7890
      %v7892 = vpop.f32.mrb[0].mxu0
      %v7893 = vadd.f32 0.0, %v7892
      %v7894 = vpop.f32.mrb[0].mxu0
      %v7895 = vadd.f32 0.0, %v7894
      %7896 = vmatprep.mubr.bf16.mxu0 0
      %7897 = vmatmul.mubr.bf16.gmra.mrb[0].mxu0 %v7173
      %v7898 = vpop.f32.mrb[0].mxu0
      %v7899 = vadd.f32 0.0, %v7898
      %v7900 = vpop.f32.mrb[0].mxu0
      %v7901 = vadd.f32 0.0, %v7900
      %v7902 = vpop.f32.mrb[0].mxu0
      %v7903 = vadd.f32 0.0, %v7902
      %v7904 = vpop.f32.mrb[0].mxu0
      %v7905 = vadd.f32 0.0, %v7904
      %7906 = vmatprep.mubr.bf16.mxu0 0
      %7907 = vmatmul.mubr.bf16.gmra.mrb[0].mxu0 %v7176
      %v7908 = vpop.f32.mrb[0].mxu0
      %v7909 = vadd.f32 0.0, %v7908
      %v7910 = vpop.f32.mrb[0].mxu0
      %v7911 = vadd.f32 0.0, %v7910
      %v7912 = vpop.f32.mrb[0].mxu0
      %v7913 = vadd.f32 0.0, %v7912
      %v7914 = vpop.f32.mrb[0].mxu0
      %v7915 = vadd.f32 0.0, %v7914
      %7916 = vmatprep.mubr.bf16.mxu0 0
      %7917 = vmatmul.mubr.bf16.gmra.mrb[0].mxu0 %v7179
      %v7918 = vpop.f32.mrb[0].mxu0
      %v7919 = vadd.f32 0.0, %v7918
      %v7920 = vpop.f32.mrb[0].mxu0
      %v7921 = vadd.f32 0.0, %v7920
      %v7922 = vpop.f32.mrb[0].mxu0
      %v7923 = vadd.f32 0.0, %v7922
      %v7924 = vpop.f32.mrb[0].mxu0
      %v7925 = vadd.f32 0.0, %v7924
      %7926 = vmatprep.mubr.bf16.mxu0 0
      %7927 = vmatmul.mubr.bf16.gmra.mrb[0].mxu0 %v7182
      %v7928 = vpop.f32.mrb[0].mxu0
      %v7929 = vadd.f32 0.0, %v7928
      %v7930 = vpop.f32.mrb[0].mxu0
      %v7931 = vadd.f32 0.0, %v7930
      %v7932 = vpop.f32.mrb[0].mxu0
      %v7933 = vadd.f32 0.0, %v7932
      %v7934 = vpop.f32.mrb[0].mxu0
      %v7935 = vadd.f32 0.0, %v7934
      %7936 = vdwg.mxu0
      %v7937 = vpack.c.bf16 %v7223, %v7219
      %v7938 = vpack.c.bf16 %v7225, %v7221
      %v7939 = vpack.c.bf16 %v7233, %v7229
      %v7940 = vpack.c.bf16 %v7235, %v7231
      %v7941 = vpack.c.bf16 %v7243, %v7239
      %v7942 = vpack.c.bf16 %v7245, %v7241
      %v7943 = vpack.c.bf16 %v7253, %v7249
      %v7944 = vpack.c.bf16 %v7255, %v7251
      %v7945 = vpack.c.bf16 %v7263, %v7259
      %v7946 = vpack.c.bf16 %v7265, %v7261
      %v7947 = vpack.c.bf16 %v7273, %v7269
      %v7948 = vpack.c.bf16 %v7275, %v7271
      %v7949 = vpack.c.bf16 %v7283, %v7279
      %v7950 = vpack.c.bf16 %v7285, %v7281
      %v7951 = vpack.c.bf16 %v7293, %v7289
      %v7952 = vpack.c.bf16 %v7295, %v7291
      %v7953 = vpack.c.bf16 %v7303, %v7299
      %v7954 = vpack.c.bf16 %v7305, %v7301
      %v7955 = vpack.c.bf16 %v7313, %v7309
      %v7956 = vpack.c.bf16 %v7315, %v7311
      %v7957 = vpack.c.bf16 %v7323, %v7319
      %v7958 = vpack.c.bf16 %v7325, %v7321
      %v7959 = vpack.c.bf16 %v7333, %v7329
      %v7960 = vpack.c.bf16 %v7335, %v7331
      %v7961 = vpack.c.bf16 %v7343, %v7339
      %v7962 = vpack.c.bf16 %v7345, %v7341
      %v7963 = vpack.c.bf16 %v7353, %v7349
      %v7964 = vpack.c.bf16 %v7355, %v7351
      %v7965 = vpack.c.bf16 %v7363, %v7359
      %v7966 = vpack.c.bf16 %v7365, %v7361
      %v7967 = vpack.c.bf16 %v7373, %v7369
      %v7968 = vpack.c.bf16 %v7375, %v7371
      %v7969 = vpack.c.bf16 %v7383, %v7379
      %v7970 = vpack.c.bf16 %v7385, %v7381
      %v7971 = vpack.c.bf16 %v7393, %v7389
      %v7972 = vpack.c.bf16 %v7395, %v7391
      %v7973 = vpack.c.bf16 %v7403, %v7399
      %v7974 = vpack.c.bf16 %v7405, %v7401
      %v7975 = vpack.c.bf16 %v7413, %v7409
      %v7976 = vpack.c.bf16 %v7415, %v7411
      %v7977 = vpack.c.bf16 %v7423, %v7419
      %v7978 = vpack.c.bf16 %v7425, %v7421
      %v7979 = vpack.c.bf16 %v7433, %v7429
      %v7980 = vpack.c.bf16 %v7435, %v7431
      %v7981 = vpack.c.bf16 %v7443, %v7439
      %v7982 = vpack.c.bf16 %v7445, %v7441
      %v7983 = vpack.c.bf16 %v7453, %v7449
      %v7984 = vpack.c.bf16 %v7455, %v7451
      %v7985 = vpack.c.bf16 %v7463, %v7459
      %v7986 = vpack.c.bf16 %v7465, %v7461
      %v7987 = vpack.c.bf16 %v7473, %v7469
      %v7988 = vpack.c.bf16 %v7475, %v7471
      %v7989 = vpack.c.bf16 %v7483, %v7479
      %v7990 = vpack.c.bf16 %v7485, %v7481
      %v7991 = vpack.c.bf16 %v7493, %v7489
      %v7992 = vpack.c.bf16 %v7495, %v7491
      %v7993 = vpack.c.bf16 %v7503, %v7499
      %v7994 = vpack.c.bf16 %v7505, %v7501
      %v7995 = vpack.c.bf16 %v7513, %v7509
      %v7996 = vpack.c.bf16 %v7515, %v7511
      %v7997 = vpack.c.bf16 %v7523, %v7519
      %v7998 = vpack.c.bf16 %v7525, %v7521
      %v7999 = vpack.c.bf16 %v7533, %v7529
      %v8000 = vpack.c.bf16 %v7535, %v7531
      %v8001 = vpack.c.bf16 %v7543, %v7539
      %v8002 = vpack.c.bf16 %v7545, %v7541
      %v8003 = vpack.c.bf16 %v7553, %v7549
      %v8004 = vpack.c.bf16 %v7555, %v7551
      %v8005 = vpack.c.bf16 %v7563, %v7559
      %v8006 = vpack.c.bf16 %v7565, %v7561
      %v8007 = vpack.c.bf16 %v7573, %v7569
      %v8008 = vpack.c.bf16 %v7575, %v7571
      %v8009 = vpack.c.bf16 %v7583, %v7579
      %v8010 = vpack.c.bf16 %v7585, %v7581
      %v8011 = vpack.c.bf16 %v7593, %v7589
      %v8012 = vpack.c.bf16 %v7595, %v7591
      %v8013 = vpack.c.bf16 %v7603, %v7599
      %v8014 = vpack.c.bf16 %v7605, %v7601
      %v8015 = vpack.c.bf16 %v7613, %v7609
      %v8016 = vpack.c.bf16 %v7615, %v7611
      %v8017 = vpack.c.bf16 %v7623, %v7619
      %v8018 = vpack.c.bf16 %v7625, %v7621
      %v8019 = vpack.c.bf16 %v7633, %v7629
      %v8020 = vpack.c.bf16 %v7635, %v7631
      %v8021 = vpack.c.bf16 %v7643, %v7639
      %v8022 = vpack.c.bf16 %v7645, %v7641
      %v8023 = vpack.c.bf16 %v7653, %v7649
      %v8024 = vpack.c.bf16 %v7655, %v7651
      %v8025 = vpack.c.bf16 %v7663, %v7659
      %v8026 = vpack.c.bf16 %v7665, %v7661
      %v8027 = vpack.c.bf16 %v7673, %v7669
      %v8028 = vpack.c.bf16 %v7675, %v7671
      %v8029 = vpack.c.bf16 %v7683, %v7679
      %v8030 = vpack.c.bf16 %v7685, %v7681
      %v8031 = vpack.c.bf16 %v7693, %v7689
      %v8032 = vpack.c.bf16 %v7695, %v7691
      %v8033 = vpack.c.bf16 %v7703, %v7699
      %v8034 = vpack.c.bf16 %v7705, %v7701
      %v8035 = vpack.c.bf16 %v7713, %v7709
      %v8036 = vpack.c.bf16 %v7715, %v7711
      %v8037 = vpack.c.bf16 %v7723, %v7719
      %v8038 = vpack.c.bf16 %v7725, %v7721
      %v8039 = vpack.c.bf16 %v7733, %v7729
      %v8040 = vpack.c.bf16 %v7735, %v7731
      %v8041 = vpack.c.bf16 %v7743, %v7739
      %v8042 = vpack.c.bf16 %v7745, %v7741
      %v8043 = vpack.c.bf16 %v7753, %v7749
      %v8044 = vpack.c.bf16 %v7755, %v7751
      %v8045 = vpack.c.bf16 %v7763, %v7759
      %v8046 = vpack.c.bf16 %v7765, %v7761
      %v8047 = vpack.c.bf16 %v7773, %v7769
      %v8048 = vpack.c.bf16 %v7775, %v7771
      %v8049 = vpack.c.bf16 %v7783, %v7779
      %v8050 = vpack.c.bf16 %v7785, %v7781
      %v8051 = vpack.c.bf16 %v7793, %v7789
      %v8052 = vpack.c.bf16 %v7795, %v7791
      %v8053 = vpack.c.bf16 %v7803, %v7799
      %v8054 = vpack.c.bf16 %v7805, %v7801
      %v8055 = vpack.c.bf16 %v7813, %v7809
      %v8056 = vpack.c.bf16 %v7815, %v7811
      %v8057 = vpack.c.bf16 %v7823, %v7819
      %v8058 = vpack.c.bf16 %v7825, %v7821
      %v8059 = vpack.c.bf16 %v7833, %v7829
      %v8060 = vpack.c.bf16 %v7835, %v7831
      %v8061 = vpack.c.bf16 %v7843, %v7839
      %v8062 = vpack.c.bf16 %v7845, %v7841
      %v8063 = vpack.c.bf16 %v7853, %v7849
      %v8064 = vpack.c.bf16 %v7855, %v7851
      %v8065 = vpack.c.bf16 %v7863, %v7859
      %v8066 = vpack.c.bf16 %v7865, %v7861
      %v8067 = vpack.c.bf16 %v7873, %v7869
      %v8068 = vpack.c.bf16 %v7875, %v7871
      %v8069 = vpack.c.bf16 %v7883, %v7879
      %v8070 = vpack.c.bf16 %v7885, %v7881
      %v8071 = vpack.c.bf16 %v7893, %v7889
      %v8072 = vpack.c.bf16 %v7895, %v7891
      %v8073 = vpack.c.bf16 %v7903, %v7899
      %v8074 = vpack.c.bf16 %v7905, %v7901
      %v8075 = vpack.c.bf16 %v7913, %v7909
      %v8076 = vpack.c.bf16 %v7915, %v7911
      %v8077 = vpack.c.bf16 %v7923, %v7919
      %v8078 = vpack.c.bf16 %v7925, %v7921
      %v8079 = vpack.c.bf16 %v7933, %v7929
      %v8080 = vpack.c.bf16 %v7935, %v7931
      %v8081 = vmul.bf16 %v7937, %v3506
      %v8082 = vmul.bf16 %v7938, %v3507
      %v8083 = vmul.bf16 %v7939, %v3508
      %v8084 = vmul.bf16 %v7940, %v3509
      %v8085 = vmul.bf16 %v7941, %v3510
      %v8086 = vmul.bf16 %v7942, %v3511
      %v8087 = vmul.bf16 %v7943, %v3512
      %v8088 = vmul.bf16 %v7944, %v3513
      %v8089 = vmul.bf16 %v7945, %v3514
      %v8090 = vmul.bf16 %v7946, %v3515
      %v8091 = vmul.bf16 %v7947, %v3516
      %v8092 = vmul.bf16 %v7948, %v3517
      %v8093 = vmul.bf16 %v7949, %v3518
      %v8094 = vmul.bf16 %v7950, %v3519
      %v8095 = vmul.bf16 %v7951, %v3520
      %v8096 = vmul.bf16 %v7952, %v3521
      %v8097 = vmul.bf16 %v7953, %v3522
      %v8098 = vmul.bf16 %v7954, %v3523
      %v8099 = vmul.bf16 %v7955, %v3524
      %v8100 = vmul.bf16 %v7956, %v3525
      %v8101 = vmul.bf16 %v7957, %v3526
      %v8102 = vmul.bf16 %v7958, %v3527
      %v8103 = vmul.bf16 %v7959, %v3528
      %v8104 = vmul.bf16 %v7960, %v3529
      %v8105 = vmul.bf16 %v7961, %v3530
      %v8106 = vmul.bf16 %v7962, %v3531
      %v8107 = vmul.bf16 %v7963, %v3532
      %v8108 = vmul.bf16 %v7964, %v3533
      %v8109 = vmul.bf16 %v7965, %v3534
      %v8110 = vmul.bf16 %v7966, %v3535
      %v8111 = vmul.bf16 %v7967, %v3536
      %v8112 = vmul.bf16 %v7968, %v3537
      %v8113 = vmul.bf16 %v7969, %v3538
      %v8114 = vmul.bf16 %v7970, %v3539
      %v8115 = vmul.bf16 %v7971, %v3540
      %v8116 = vmul.bf16 %v7972, %v3541
      %v8117 = vmul.bf16 %v7973, %v3542
      %v8118 = vmul.bf16 %v7974, %v3543
      %v8119 = vmul.bf16 %v7975, %v3544
      %v8120 = vmul.bf16 %v7976, %v3545
      %v8121 = vmul.bf16 %v7977, %v3546
      %v8122 = vmul.bf16 %v7978, %v3547
      %v8123 = vmul.bf16 %v7979, %v3548
      %v8124 = vmul.bf16 %v7980, %v3549
      %v8125 = vmul.bf16 %v7981, %v3550
      %v8126 = vmul.bf16 %v7982, %v3551
      %v8127 = vmul.bf16 %v7983, %v3552
      %v8128 = vmul.bf16 %v7984, %v3553
      %v8129 = vmul.bf16 %v7985, %v3554
      %v8130 = vmul.bf16 %v7986, %v3555
      %v8131 = vmul.bf16 %v7987, %v3556
      %v8132 = vmul.bf16 %v7988, %v3557
      %v8133 = vmul.bf16 %v7989, %v3558
      %v8134 = vmul.bf16 %v7990, %v3559
      %v8135 = vmul.bf16 %v7991, %v3560
      %v8136 = vmul.bf16 %v7992, %v3561
      %v8137 = vmul.bf16 %v7993, %v3562
      %v8138 = vmul.bf16 %v7994, %v3563
      %v8139 = vmul.bf16 %v7995, %v3564
      %v8140 = vmul.bf16 %v7996, %v3565
      %v8141 = vmul.bf16 %v7997, %v3566
      %v8142 = vmul.bf16 %v7998, %v3567
      %v8143 = vmul.bf16 %v7999, %v3568
      %v8144 = vmul.bf16 %v8000, %v3569
      %v8145 = vmul.bf16 %v8001, %v3570
      %v8146 = vmul.bf16 %v8002, %v3571
      %v8147 = vmul.bf16 %v8003, %v3572
      %v8148 = vmul.bf16 %v8004, %v3573
      %v8149 = vmul.bf16 %v8005, %v3574
      %v8150 = vmul.bf16 %v8006, %v3575
      %v8151 = vmul.bf16 %v8007, %v3576
      %v8152 = vmul.bf16 %v8008, %v3577
      %v8153 = vmul.bf16 %v8009, %v3578
      %v8154 = vmul.bf16 %v8010, %v3579
      %v8155 = vmul.bf16 %v8011, %v3580
      %v8156 = vmul.bf16 %v8012, %v3581
      %v8157 = vmul.bf16 %v8013, %v3582
      %v8158 = vmul.bf16 %v8014, %v3583
      %v8159 = vmul.bf16 %v8015, %v3584
      %v8160 = vmul.bf16 %v8016, %v3585
      %v8161 = vmul.bf16 %v8017, %v3586
      %v8162 = vmul.bf16 %v8018, %v3587
      %v8163 = vmul.bf16 %v8019, %v3588
      %v8164 = vmul.bf16 %v8020, %v3589
      %v8165 = vmul.bf16 %v8021, %v3590
      %v8166 = vmul.bf16 %v8022, %v3591
      %v8167 = vmul.bf16 %v8023, %v3592
      %v8168 = vmul.bf16 %v8024, %v3593
      %v8169 = vmul.bf16 %v8025, %v3594
      %v8170 = vmul.bf16 %v8026, %v3595
      %v8171 = vmul.bf16 %v8027, %v3596
      %v8172 = vmul.bf16 %v8028, %v3597
      %v8173 = vmul.bf16 %v8029, %v3598
      %v8174 = vmul.bf16 %v8030, %v3599
      %v8175 = vmul.bf16 %v8031, %v3600
      %v8176 = vmul.bf16 %v8032, %v3601
      %v8177 = vmul.bf16 %v8033, %v3602
      %v8178 = vmul.bf16 %v8034, %v3603
      %v8179 = vmul.bf16 %v8035, %v3604
      %v8180 = vmul.bf16 %v8036, %v3605
      %v8181 = vmul.bf16 %v8037, %v3606
      %v8182 = vmul.bf16 %v8038, %v3607
      %v8183 = vmul.bf16 %v8039, %v3608
      %v8184 = vmul.bf16 %v8040, %v3609
      %v8185 = vmul.bf16 %v8041, %v3610
      %v8186 = vmul.bf16 %v8042, %v3611
      %v8187 = vmul.bf16 %v8043, %v3612
      %v8188 = vmul.bf16 %v8044, %v3613
      %v8189 = vmul.bf16 %v8045, %v3614
      %v8190 = vmul.bf16 %v8046, %v3615
      %v8191 = vmul.bf16 %v8047, %v3616
      %v8192 = vmul.bf16 %v8048, %v3617
      %v8193 = vmul.bf16 %v8049, %v3618
      %v8194 = vmul.bf16 %v8050, %v3619
      %v8195 = vmul.bf16 %v8051, %v3620
      %v8196 = vmul.bf16 %v8052, %v3621
      %v8197 = vmul.bf16 %v8053, %v3622
      %v8198 = vmul.bf16 %v8054, %v3623
      %v8199 = vmul.bf16 %v8055, %v3624
      %v8200 = vmul.bf16 %v8056, %v3625
      %v8201 = vmul.bf16 %v8057, %v3626
      %v8202 = vmul.bf16 %v8058, %v3627
      %v8203 = vmul.bf16 %v8059, %v3628
      %v8204 = vmul.bf16 %v8060, %v3629
      %v8205 = vmul.bf16 %v8061, %v3630
      %v8206 = vmul.bf16 %v8062, %v3631
      %v8207 = vmul.bf16 %v8063, %v3632
      %v8208 = vmul.bf16 %v8064, %v3633
      %v8209 = vmul.bf16 %v8065, %v3634
      %v8210 = vmul.bf16 %v8066, %v3635
      %v8211 = vmul.bf16 %v8067, %v3636
      %v8212 = vmul.bf16 %v8068, %v3637
      %v8213 = vmul.bf16 %v8069, %v3638
      %v8214 = vmul.bf16 %v8070, %v3639
      %v8215 = vmul.bf16 %v8071, %v3640
      %v8216 = vmul.bf16 %v8072, %v3641
      %v8217 = vmul.bf16 %v8073, %v3642
      %v8218 = vmul.bf16 %v8074, %v3643
      %v8219 = vmul.bf16 %v8075, %v3644
      %v8220 = vmul.bf16 %v8076, %v3645
      %v8221 = vmul.bf16 %v8077, %v3646
      %v8222 = vmul.bf16 %v8078, %v3647
      %v8223 = vmul.bf16 %v8079, %v3648
      %v8224 = vmul.bf16 %v8080, %v3649
      %v8225 = vld [vmem:[%s6] sm:$0xf]
      %v8226 = vld [vmem:[%s6 + $0x4] sm:$0xf]
      %v8227 = vld [vmem:[%s6 + $0x8] sm:$0xf]
      %v8228 = vld [vmem:[%s6 + $0xc] sm:$0xf]
      %v8229 = vld [vmem:[%s6 + $0x10] sm:$0xf]
      %v8230 = vld [vmem:[%s6 + $0x14] sm:$0xf]
      %v8231 = vld [vmem:[%s6 + $0x18] sm:$0xf]
      %v8232 = vld [vmem:[%s6 + $0x1c] sm:$0xf]
      %v8233 = vld [vmem:[%s6 + $0x20] sm:$0xf]
      %v8234 = vld [vmem:[%s6 + $0x24] sm:$0xf]
      %v8235 = vld [vmem:[%s6 + $0x28] sm:$0xf]
      %v8236 = vld [vmem:[%s6 + $0x2c] sm:$0xf]
      %v8237 = vld [vmem:[%s6 + $0x30] sm:$0xf]
      %v8238 = vld [vmem:[%s6 + $0x34] sm:$0xf]
      %v8239 = vld [vmem:[%s6 + $0x38] sm:$0xf]
      %v8240 = vld [vmem:[%s6 + $0x3c] sm:$0xf]
      %v8241 = vld [vmem:[%s6 + $0x40] sm:$0xf]
      %v8242 = vld [vmem:[%s6 + $0x44] sm:$0xf]
      %v8243 = vld [vmem:[%s6 + $0x48] sm:$0xf]
      %v8244 = vld [vmem:[%s6 + $0x4c] sm:$0xf]
      %v8245 = vld [vmem:[%s6 + $0x50] sm:$0xf]
      %v8246 = vld [vmem:[%s6 + $0x54] sm:$0xf]
      %v8247 = vld [vmem:[%s6 + $0x58] sm:$0xf]
      %v8248 = vld [vmem:[%s6 + $0x5c] sm:$0xf]
      %v8249 = vld [vmem:[%s6 + $0x60] sm:$0xf]
      %v8250 = vld [vmem:[%s6 + $0x64] sm:$0xf]
      %v8251 = vld [vmem:[%s6 + $0x68] sm:$0xf]
      %v8252 = vld [vmem:[%s6 + $0x6c] sm:$0xf]
      %v8253 = vld [vmem:[%s6 + $0x70] sm:$0xf]
      %v8254 = vld [vmem:[%s6 + $0x74] sm:$0xf]
      %v8255 = vld [vmem:[%s6 + $0x78] sm:$0xf]
      %v8256 = vld [vmem:[%s6 + $0x7c] sm:$0xf]
      %v8257 = vld [vmem:[%s7] sm:$0x1]
      %v8259 = vlaneseq
      %v8260 = vshrl.u32 %v8259, 7
      %v8261 = vsub.s32 0, %v8260
      %v8262 = vrot.slane %v8257, %v8261
      %v8296 = vunpack.c.l.b16 %v8225
      %v8297 = vunpack.c.l.b16 %v8226
      %v8298 = vunpack.c.l.b16 %v8227
      %v8299 = vunpack.c.l.b16 %v8228
      %v8300 = vunpack.c.l.b16 %v8229
      %v8301 = vunpack.c.l.b16 %v8230
      %v8302 = vunpack.c.l.b16 %v8231
      %v8303 = vunpack.c.l.b16 %v8232
      %v8304 = vunpack.c.l.b16 %v8233
      %v8305 = vunpack.c.l.b16 %v8234
      %v8306 = vunpack.c.l.b16 %v8235
      %v8307 = vunpack.c.l.b16 %v8236
      %v8308 = vunpack.c.l.b16 %v8237
      %v8309 = vunpack.c.l.b16 %v8238
      %v8310 = vunpack.c.l.b16 %v8239
      %v8311 = vunpack.c.l.b16 %v8240
      %v8312 = vunpack.c.l.b16 %v8241
      %v8313 = vunpack.c.l.b16 %v8242
      %v8314 = vunpack.c.l.b16 %v8243
      %v8315 = vunpack.c.l.b16 %v8244
      %v8316 = vunpack.c.l.b16 %v8245
      %v8317 = vunpack.c.l.b16 %v8246
      %v8318 = vunpack.c.l.b16 %v8247
      %v8319 = vunpack.c.l.b16 %v8248
      %v8320 = vunpack.c.l.b16 %v8249
      %v8321 = vunpack.c.l.b16 %v8250
      %v8322 = vunpack.c.l.b16 %v8251
      %v8323 = vunpack.c.l.b16 %v8252
      %v8324 = vunpack.c.l.b16 %v8253
      %v8325 = vunpack.c.l.b16 %v8254
      %v8326 = vunpack.c.l.b16 %v8255
      %v8327 = vunpack.c.l.b16 %v8256
      %v8328 = vpack.c.b16 %v8297, %v8296
      %v8329 = vpack.c.b16 %v8299, %v8298
      %v8330 = vpack.c.b16 %v8301, %v8300
      %v8331 = vpack.c.b16 %v8303, %v8302
      %v8332 = vpack.c.b16 %v8305, %v8304
      %v8333 = vpack.c.b16 %v8307, %v8306
      %v8334 = vpack.c.b16 %v8309, %v8308
      %v8335 = vpack.c.b16 %v8311, %v8310
      %v8336 = vpack.c.b16 %v8313, %v8312
      %v8337 = vpack.c.b16 %v8315, %v8314
      %v8338 = vpack.c.b16 %v8317, %v8316
      %v8339 = vpack.c.b16 %v8319, %v8318
      %v8340 = vpack.c.b16 %v8321, %v8320
      %v8341 = vpack.c.b16 %v8323, %v8322
      %v8342 = vpack.c.b16 %v8325, %v8324
      %v8343 = vpack.c.b16 %v8327, %v8326
      %8360 = vmatprep.subr.bf16.mxu0 0
      %8361 = vmatpush1.bf16.msra.mxu0 %v8328
      %8362 = vmatprep.subr.bf16.mxu0 0
      %8363 = vmatpush1.bf16.msra.mxu0 %v8329
      %8364 = vmatprep.subr.bf16.mxu0 0
      %8365 = vmatpush1.bf16.msra.mxu0 %v8330
      %8366 = vmatprep.subr.bf16.mxu0 0
      %8367 = vmatpush1.bf16.msra.mxu0 %v8331
      %8368 = vmatprep.subr.bf16.mxu0 0
      %8369 = vmatpush1.bf16.msra.mxu0 %v8332
      %8370 = vmatprep.subr.bf16.mxu0 0
      %8371 = vmatpush1.bf16.msra.mxu0 %v8333
      %8372 = vmatprep.subr.bf16.mxu0 0
      %8373 = vmatpush1.bf16.msra.mxu0 %v8334
      %8374 = vmatprep.subr.bf16.mxu0 0
      %8375 = vmatpush1.bf16.msra.mxu0 %v8335
      %8376 = vmatprep.subr.bf16.mxu0 0
      %8377 = vmatpush1.bf16.msra.mxu0 %v8336
      %8378 = vmatprep.subr.bf16.mxu0 0
      %8379 = vmatpush1.bf16.msra.mxu0 %v8337
      %8380 = vmatprep.subr.bf16.mxu0 0
      %8381 = vmatpush1.bf16.msra.mxu0 %v8338
      %8382 = vmatprep.subr.bf16.mxu0 0
      %8383 = vmatpush1.bf16.msra.mxu0 %v8339
      %8384 = vmatprep.subr.bf16.mxu0 0
      %8385 = vmatpush1.bf16.msra.mxu0 %v8340
      %8386 = vmatprep.subr.bf16.mxu0 0
      %8387 = vmatpush1.bf16.msra.mxu0 %v8341
      %8388 = vmatprep.subr.bf16.mxu0 0
      %8389 = vmatpush1.bf16.msra.mxu0 %v8342
      %8390 = vmatprep.subr.bf16.mxu0 0
      %8391 = vmatpush1.bf16.msra.mxu0 %v8343
      %8392 = vmatprep.mubr.bf16.mxu0 %v8082
      %8393 = vmatmul.mubr.bf16.gmra.mrb[0].mxu0 %v8081
      %v8394 = vpop.f32.mrb[0].mxu0
      %v8395 = vadd.f32 %v8262, %v8394
      %v8396 = vpop.f32.mrb[0].mxu0
      %v8397 = vpop.f32.mrb[0].mxu0
      %v8398 = vadd.f32 %v8262, %v8397
      %v8399 = vpop.f32.mrb[0].mxu0
      %8400 = vmatprep.mubr.bf16.mxu0 %v8084
      %8401 = vmatmul.mubr.bf16.gmra.mrb[0].mxu0 %v8083
      %v8402 = vpop.f32.mrb[0].mxu0
      %v8403 = vadd.f32 %v8262, %v8402
      %v8404 = vpop.f32.mrb[0].mxu0
      %v8405 = vpop.f32.mrb[0].mxu0
      %v8406 = vadd.f32 %v8262, %v8405
      %v8407 = vpop.f32.mrb[0].mxu0
      %8408 = vmatprep.mubr.bf16.mxu0 %v8086
      %8409 = vmatmul.mubr.bf16.gmra.mrb[0].mxu0 %v8085
      %v8410 = vpop.f32.mrb[0].mxu0
      %v8411 = vadd.f32 %v8262, %v8410
      %v8412 = vpop.f32.mrb[0].mxu0
      %v8413 = vpop.f32.mrb[0].mxu0
      %v8414 = vadd.f32 %v8262, %v8413
      %v8415 = vpop.f32.mrb[0].mxu0
      %8416 = vmatprep.mubr.bf16.mxu0 %v8088
      %8417 = vmatmul.mubr.bf16.gmra.mrb[0].mxu0 %v8087
      %v8418 = vpop.f32.mrb[0].mxu0
      %v8419 = vadd.f32 %v8262, %v8418
      %v8420 = vpop.f32.mrb[0].mxu0
      %v8421 = vpop.f32.mrb[0].mxu0
      %v8422 = vadd.f32 %v8262, %v8421
      %v8423 = vpop.f32.mrb[0].mxu0
      %8424 = vmatprep.mubr.bf16.mxu0 %v8090
      %8425 = vmatmul.mubr.bf16.gmra.mrb[0].mxu0 %v8089
      %v8426 = vpop.f32.mrb[0].mxu0
      %v8427 = vadd.f32 %v8262, %v8426
      %v8428 = vpop.f32.mrb[0].mxu0
      %v8429 = vpop.f32.mrb[0].mxu0
      %v8430 = vadd.f32 %v8262, %v8429
      %v8431 = vpop.f32.mrb[0].mxu0
      %8432 = vmatprep.mubr.bf16.mxu0 %v8092
      %8433 = vmatmul.mubr.bf16.gmra.mrb[0].mxu0 %v8091
      %v8434 = vpop.f32.mrb[0].mxu0
      %v8435 = vadd.f32 %v8262, %v8434
      %v8436 = vpop.f32.mrb[0].mxu0
      %v8437 = vpop.f32.mrb[0].mxu0
      %v8438 = vadd.f32 %v8262, %v8437
      %v8439 = vpop.f32.mrb[0].mxu0
      %8440 = vmatprep.mubr.bf16.mxu0 %v8094
      %8441 = vmatmul.mubr.bf16.gmra.mrb[0].mxu0 %v8093
      %v8442 = vpop.f32.mrb[0].mxu0
      %v8443 = vadd.f32 %v8262, %v8442
      %v8444 = vpop.f32.mrb[0].mxu0
      %v8445 = vpop.f32.mrb[0].mxu0
      %v8446 = vadd.f32 %v8262, %v8445
      %v8447 = vpop.f32.mrb[0].mxu0
      %8448 = vmatprep.mubr.bf16.mxu0 %v8096
      %8449 = vmatmul.mubr.bf16.gmra.mrb[0].mxu0 %v8095
      %v8450 = vpop.f32.mrb[0].mxu0
      %v8451 = vadd.f32 %v8262, %v8450
      %v8452 = vpop.f32.mrb[0].mxu0
      %v8453 = vpop.f32.mrb[0].mxu0
      %v8454 = vadd.f32 %v8262, %v8453
      %v8455 = vpop.f32.mrb[0].mxu0
      %8456 = vmatprep.mubr.bf16.mxu0 %v8098
      %8457 = vmatmul.mubr.bf16.gmra.mrb[0].mxu0 %v8097
      %v8458 = vpop.f32.mrb[0].mxu0
      %v8459 = vadd.f32 %v8262, %v8458
      %v8460 = vpop.f32.mrb[0].mxu0
      %v8461 = vpop.f32.mrb[0].mxu0
      %v8462 = vadd.f32 %v8262, %v8461
      %v8463 = vpop.f32.mrb[0].mxu0
      %8464 = vmatprep.mubr.bf16.mxu0 %v8100
      %8465 = vmatmul.mubr.bf16.gmra.mrb[0].mxu0 %v8099
      %v8466 = vpop.f32.mrb[0].mxu0
      %v8467 = vadd.f32 %v8262, %v8466
      %v8468 = vpop.f32.mrb[0].mxu0
      %v8469 = vpop.f32.mrb[0].mxu0
      %v8470 = vadd.f32 %v8262, %v8469
      %v8471 = vpop.f32.mrb[0].mxu0
      %8472 = vmatprep.mubr.bf16.mxu0 %v8102
      %8473 = vmatmul.mubr.bf16.gmra.mrb[0].mxu0 %v8101
      %v8474 = vpop.f32.mrb[0].mxu0
      %v8475 = vadd.f32 %v8262, %v8474
      %v8476 = vpop.f32.mrb[0].mxu0
      %v8477 = vpop.f32.mrb[0].mxu0
      %v8478 = vadd.f32 %v8262, %v8477
      %v8479 = vpop.f32.mrb[0].mxu0
      %8480 = vmatprep.mubr.bf16.mxu0 %v8104
      %8481 = vmatmul.mubr.bf16.gmra.mrb[0].mxu0 %v8103
      %v8482 = vpop.f32.mrb[0].mxu0
      %v8483 = vadd.f32 %v8262, %v8482
      %v8484 = vpop.f32.mrb[0].mxu0
      %v8485 = vpop.f32.mrb[0].mxu0
      %v8486 = vadd.f32 %v8262, %v8485
      %v8487 = vpop.f32.mrb[0].mxu0
      %8488 = vmatprep.mubr.bf16.mxu0 %v8106
      %8489 = vmatmul.mubr.bf16.gmra.mrb[0].mxu0 %v8105
      %v8490 = vpop.f32.mrb[0].mxu0
      %v8491 = vadd.f32 %v8262, %v8490
      %v8492 = vpop.f32.mrb[0].mxu0
      %v8493 = vpop.f32.mrb[0].mxu0
      %v8494 = vadd.f32 %v8262, %v8493
      %v8495 = vpop.f32.mrb[0].mxu0
      %8496 = vmatprep.mubr.bf16.mxu0 %v8108
      %8497 = vmatmul.mubr.bf16.gmra.mrb[0].mxu0 %v8107
      %v8498 = vpop.f32.mrb[0].mxu0
      %v8499 = vadd.f32 %v8262, %v8498
      %v8500 = vpop.f32.mrb[0].mxu0
      %v8501 = vpop.f32.mrb[0].mxu0
      %v8502 = vadd.f32 %v8262, %v8501
      %v8503 = vpop.f32.mrb[0].mxu0
      %8504 = vmatprep.mubr.bf16.mxu0 %v8110
      %8505 = vmatmul.mubr.bf16.gmra.mrb[0].mxu0 %v8109
      %v8506 = vpop.f32.mrb[0].mxu0
      %v8507 = vadd.f32 %v8262, %v8506
      %v8508 = vpop.f32.mrb[0].mxu0
      %v8509 = vpop.f32.mrb[0].mxu0
      %v8510 = vadd.f32 %v8262, %v8509
      %v8511 = vpop.f32.mrb[0].mxu0
      %8512 = vmatprep.mubr.bf16.mxu0 %v8112
      %8513 = vmatmul.mubr.bf16.gmra.mrb[0].mxu0 %v8111
      %v8514 = vpop.f32.mrb[0].mxu0
      %v8515 = vadd.f32 %v8262, %v8514
      %v8516 = vpop.f32.mrb[0].mxu0
      %v8517 = vpop.f32.mrb[0].mxu0
      %v8518 = vadd.f32 %v8262, %v8517
      %v8519 = vpop.f32.mrb[0].mxu0
      %8520 = vmatprep.mubr.bf16.mxu0 %v8114
      %8521 = vmatmul.mubr.bf16.gmra.mrb[0].mxu0 %v8113
      %v8522 = vpop.f32.mrb[0].mxu0
      %v8523 = vadd.f32 %v8262, %v8522
      %v8524 = vpop.f32.mrb[0].mxu0
      %v8525 = vpop.f32.mrb[0].mxu0
      %v8526 = vadd.f32 %v8262, %v8525
      %v8527 = vpop.f32.mrb[0].mxu0
      %8528 = vmatprep.mubr.bf16.mxu0 %v8116
      %8529 = vmatmul.mubr.bf16.gmra.mrb[0].mxu0 %v8115
      %v8530 = vpop.f32.mrb[0].mxu0
      %v8531 = vadd.f32 %v8262, %v8530
      %v8532 = vpop.f32.mrb[0].mxu0
      %v8533 = vpop.f32.mrb[0].mxu0
      %v8534 = vadd.f32 %v8262, %v8533
      %v8535 = vpop.f32.mrb[0].mxu0
      %8536 = vmatprep.mubr.bf16.mxu0 %v8118
      %8537 = vmatmul.mubr.bf16.gmra.mrb[0].mxu0 %v8117
      %v8538 = vpop.f32.mrb[0].mxu0
      %v8539 = vadd.f32 %v8262, %v8538
      %v8540 = vpop.f32.mrb[0].mxu0
      %v8541 = vpop.f32.mrb[0].mxu0
      %v8542 = vadd.f32 %v8262, %v8541
      %v8543 = vpop.f32.mrb[0].mxu0
      %8544 = vmatprep.mubr.bf16.mxu0 %v8120
      %8545 = vmatmul.mubr.bf16.gmra.mrb[0].mxu0 %v8119
      %v8546 = vpop.f32.mrb[0].mxu0
      %v8547 = vadd.f32 %v8262, %v8546
      %v8548 = vpop.f32.mrb[0].mxu0
      %v8549 = vpop.f32.mrb[0].mxu0
      %v8550 = vadd.f32 %v8262, %v8549
      %v8551 = vpop.f32.mrb[0].mxu0
      %8552 = vmatprep.mubr.bf16.mxu0 %v8122
      %8553 = vmatmul.mubr.bf16.gmra.mrb[0].mxu0 %v8121
      %v8554 = vpop.f32.mrb[0].mxu0
      %v8555 = vadd.f32 %v8262, %v8554
      %v8556 = vpop.f32.mrb[0].mxu0
      %v8557 = vpop.f32.mrb[0].mxu0
      %v8558 = vadd.f32 %v8262, %v8557
      %v8559 = vpop.f32.mrb[0].mxu0
      %8560 = vmatprep.mubr.bf16.mxu0 %v8124
      %8561 = vmatmul.mubr.bf16.gmra.mrb[0].mxu0 %v8123
      %v8562 = vpop.f32.mrb[0].mxu0
      %v8563 = vadd.f32 %v8262, %v8562
      %v8564 = vpop.f32.mrb[0].mxu0
      %v8565 = vpop.f32.mrb[0].mxu0
      %v8566 = vadd.f32 %v8262, %v8565
      %v8567 = vpop.f32.mrb[0].mxu0
      %8568 = vmatprep.mubr.bf16.mxu0 %v8126
      %8569 = vmatmul.mubr.bf16.gmra.mrb[0].mxu0 %v8125
      %v8570 = vpop.f32.mrb[0].mxu0
      %v8571 = vadd.f32 %v8262, %v8570
      %v8572 = vpop.f32.mrb[0].mxu0
      %v8573 = vpop.f32.mrb[0].mxu0
      %v8574 = vadd.f32 %v8262, %v8573
      %v8575 = vpop.f32.mrb[0].mxu0
      %8576 = vmatprep.mubr.bf16.mxu0 %v8128
      %8577 = vmatmul.mubr.bf16.gmra.mrb[0].mxu0 %v8127
      %v8578 = vpop.f32.mrb[0].mxu0
      %v8579 = vadd.f32 %v8262, %v8578
      %v8580 = vpop.f32.mrb[0].mxu0
      %v8581 = vpop.f32.mrb[0].mxu0
      %v8582 = vadd.f32 %v8262, %v8581
      %v8583 = vpop.f32.mrb[0].mxu0
      %8584 = vmatprep.mubr.bf16.mxu0 %v8130
      %8585 = vmatmul.mubr.bf16.gmra.mrb[0].mxu0 %v8129
      %v8586 = vpop.f32.mrb[0].mxu0
      %v8587 = vadd.f32 %v8262, %v8586
      %v8588 = vpop.f32.mrb[0].mxu0
      %v8589 = vpop.f32.mrb[0].mxu0
      %v8590 = vadd.f32 %v8262, %v8589
      %v8591 = vpop.f32.mrb[0].mxu0
      %8592 = vmatprep.mubr.bf16.mxu0 %v8132
      %8593 = vmatmul.mubr.bf16.gmra.mrb[0].mxu0 %v8131
      %v8594 = vpop.f32.mrb[0].mxu0
      %v8595 = vadd.f32 %v8262, %v8594
      %v8596 = vpop.f32.mrb[0].mxu0
      %v8597 = vpop.f32.mrb[0].mxu0
      %v8598 = vadd.f32 %v8262, %v8597
      %v8599 = vpop.f32.mrb[0].mxu0
      %8600 = vmatprep.mubr.bf16.mxu0 %v8134
      %8601 = vmatmul.mubr.bf16.gmra.mrb[0].mxu0 %v8133
      %v8602 = vpop.f32.mrb[0].mxu0
      %v8603 = vadd.f32 %v8262, %v8602
      %v8604 = vpop.f32.mrb[0].mxu0
      %v8605 = vpop.f32.mrb[0].mxu0
      %v8606 = vadd.f32 %v8262, %v8605
      %v8607 = vpop.f32.mrb[0].mxu0
      %8608 = vmatprep.mubr.bf16.mxu0 %v8136
      %8609 = vmatmul.mubr.bf16.gmra.mrb[0].mxu0 %v8135
      %v8610 = vpop.f32.mrb[0].mxu0
      %v8611 = vadd.f32 %v8262, %v8610
      %v8612 = vpop.f32.mrb[0].mxu0
      %v8613 = vpop.f32.mrb[0].mxu0
      %v8614 = vadd.f32 %v8262, %v8613
      %v8615 = vpop.f32.mrb[0].mxu0
      %8616 = vmatprep.mubr.bf16.mxu0 %v8138
      %8617 = vmatmul.mubr.bf16.gmra.mrb[0].mxu0 %v8137
      %v8618 = vpop.f32.mrb[0].mxu0
      %v8619 = vadd.f32 %v8262, %v8618
      %v8620 = vpop.f32.mrb[0].mxu0
      %v8621 = vpop.f32.mrb[0].mxu0
      %v8622 = vadd.f32 %v8262, %v8621
      %v8623 = vpop.f32.mrb[0].mxu0
      %8624 = vmatprep.mubr.bf16.mxu0 %v8140
      %8625 = vmatmul.mubr.bf16.gmra.mrb[0].mxu0 %v8139
      %v8626 = vpop.f32.mrb[0].mxu0
      %v8627 = vadd.f32 %v8262, %v8626
      %v8628 = vpop.f32.mrb[0].mxu0
      %v8629 = vpop.f32.mrb[0].mxu0
      %v8630 = vadd.f32 %v8262, %v8629
      %v8631 = vpop.f32.mrb[0].mxu0
      %8632 = vmatprep.mubr.bf16.mxu0 %v8142
      %8633 = vmatmul.mubr.bf16.gmra.mrb[0].mxu0 %v8141
      %v8634 = vpop.f32.mrb[0].mxu0
      %v8635 = vadd.f32 %v8262, %v8634
      %v8636 = vpop.f32.mrb[0].mxu0
      %v8637 = vpop.f32.mrb[0].mxu0
      %v8638 = vadd.f32 %v8262, %v8637
      %v8639 = vpop.f32.mrb[0].mxu0
      %8640 = vmatprep.mubr.bf16.mxu0 %v8144
      %8641 = vmatmul.mubr.bf16.gmra.mrb[0].mxu0 %v8143
      %v8642 = vpop.f32.mrb[0].mxu0
      %v8643 = vadd.f32 %v8262, %v8642
      %v8644 = vpop.f32.mrb[0].mxu0
      %v8645 = vpop.f32.mrb[0].mxu0
      %v8646 = vadd.f32 %v8262, %v8645
      %v8647 = vpop.f32.mrb[0].mxu0
      %8648 = vmatprep.mubr.bf16.mxu0 %v8146
      %8649 = vmatmul.mubr.bf16.gmra.mrb[0].mxu0 %v8145
      %v8650 = vpop.f32.mrb[0].mxu0
      %v8651 = vadd.f32 %v8262, %v8650
      %v8652 = vpop.f32.mrb[0].mxu0
      %v8653 = vpop.f32.mrb[0].mxu0
      %v8654 = vadd.f32 %v8262, %v8653
      %v8655 = vpop.f32.mrb[0].mxu0
      %8656 = vmatprep.mubr.bf16.mxu0 %v8148
      %8657 = vmatmul.mubr.bf16.gmra.mrb[0].mxu0 %v8147
      %v8658 = vpop.f32.mrb[0].mxu0
      %v8659 = vadd.f32 %v8262, %v8658
      %v8660 = vpop.f32.mrb[0].mxu0
      %v8661 = vpop.f32.mrb[0].mxu0
      %v8662 = vadd.f32 %v8262, %v8661
      %v8663 = vpop.f32.mrb[0].mxu0
      %8664 = vmatprep.mubr.bf16.mxu0 %v8150
      %8665 = vmatmul.mubr.bf16.gmra.mrb[0].mxu0 %v8149
      %v8666 = vpop.f32.mrb[0].mxu0
      %v8667 = vadd.f32 %v8262, %v8666
      %v8668 = vpop.f32.mrb[0].mxu0
      %v8669 = vpop.f32.mrb[0].mxu0
      %v8670 = vadd.f32 %v8262, %v8669
      %v8671 = vpop.f32.mrb[0].mxu0
      %8672 = vmatprep.mubr.bf16.mxu0 %v8152
      %8673 = vmatmul.mubr.bf16.gmra.mrb[0].mxu0 %v8151
      %v8674 = vpop.f32.mrb[0].mxu0
      %v8675 = vadd.f32 %v8262, %v8674
      %v8676 = vpop.f32.mrb[0].mxu0
      %v8677 = vpop.f32.mrb[0].mxu0
      %v8678 = vadd.f32 %v8262, %v8677
      %v8679 = vpop.f32.mrb[0].mxu0
      %8680 = vmatprep.mubr.bf16.mxu0 %v8154
      %8681 = vmatmul.mubr.bf16.gmra.mrb[0].mxu0 %v8153
      %v8682 = vpop.f32.mrb[0].mxu0
      %v8683 = vadd.f32 %v8262, %v8682
      %v8684 = vpop.f32.mrb[0].mxu0
      %v8685 = vpop.f32.mrb[0].mxu0
      %v8686 = vadd.f32 %v8262, %v8685
      %v8687 = vpop.f32.mrb[0].mxu0
      %8688 = vmatprep.mubr.bf16.mxu0 %v8156
      %8689 = vmatmul.mubr.bf16.gmra.mrb[0].mxu0 %v8155
      %v8690 = vpop.f32.mrb[0].mxu0
      %v8691 = vadd.f32 %v8262, %v8690
      %v8692 = vpop.f32.mrb[0].mxu0
      %v8693 = vpop.f32.mrb[0].mxu0
      %v8694 = vadd.f32 %v8262, %v8693
      %v8695 = vpop.f32.mrb[0].mxu0
      %8696 = vmatprep.mubr.bf16.mxu0 %v8158
      %8697 = vmatmul.mubr.bf16.gmra.mrb[0].mxu0 %v8157
      %v8698 = vpop.f32.mrb[0].mxu0
      %v8699 = vadd.f32 %v8262, %v8698
      %v8700 = vpop.f32.mrb[0].mxu0
      %v8701 = vpop.f32.mrb[0].mxu0
      %v8702 = vadd.f32 %v8262, %v8701
      %v8703 = vpop.f32.mrb[0].mxu0
      %8704 = vmatprep.mubr.bf16.mxu0 %v8160
      %8705 = vmatmul.mubr.bf16.gmra.mrb[0].mxu0 %v8159
      %v8706 = vpop.f32.mrb[0].mxu0
      %v8707 = vadd.f32 %v8262, %v8706
      %v8708 = vpop.f32.mrb[0].mxu0
      %v8709 = vpop.f32.mrb[0].mxu0
      %v8710 = vadd.f32 %v8262, %v8709
      %v8711 = vpop.f32.mrb[0].mxu0
      %8712 = vmatprep.mubr.bf16.mxu0 %v8162
      %8713 = vmatmul.mubr.bf16.gmra.mrb[0].mxu0 %v8161
      %v8714 = vpop.f32.mrb[0].mxu0
      %v8715 = vadd.f32 %v8262, %v8714
      %v8716 = vpop.f32.mrb[0].mxu0
      %v8717 = vpop.f32.mrb[0].mxu0
      %v8718 = vadd.f32 %v8262, %v8717
      %v8719 = vpop.f32.mrb[0].mxu0
      %8720 = vmatprep.mubr.bf16.mxu0 %v8164
      %8721 = vmatmul.mubr.bf16.gmra.mrb[0].mxu0 %v8163
      %v8722 = vpop.f32.mrb[0].mxu0
      %v8723 = vadd.f32 %v8262, %v8722
      %v8724 = vpop.f32.mrb[0].mxu0
      %v8725 = vpop.f32.mrb[0].mxu0
      %v8726 = vadd.f32 %v8262, %v8725
      %v8727 = vpop.f32.mrb[0].mxu0
      %8728 = vmatprep.mubr.bf16.mxu0 %v8166
      %8729 = vmatmul.mubr.bf16.gmra.mrb[0].mxu0 %v8165
      %v8730 = vpop.f32.mrb[0].mxu0
      %v8731 = vadd.f32 %v8262, %v8730
      %v8732 = vpop.f32.mrb[0].mxu0
      %v8733 = vpop.f32.mrb[0].mxu0
      %v8734 = vadd.f32 %v8262, %v8733
      %v8735 = vpop.f32.mrb[0].mxu0
      %8736 = vmatprep.mubr.bf16.mxu0 %v8168
      %8737 = vmatmul.mubr.bf16.gmra.mrb[0].mxu0 %v8167
      %v8738 = vpop.f32.mrb[0].mxu0
      %v8739 = vadd.f32 %v8262, %v8738
      %v8740 = vpop.f32.mrb[0].mxu0
      %v8741 = vpop.f32.mrb[0].mxu0
      %v8742 = vadd.f32 %v8262, %v8741
      %v8743 = vpop.f32.mrb[0].mxu0
      %8744 = vmatprep.mubr.bf16.mxu0 %v8170
      %8745 = vmatmul.mubr.bf16.gmra.mrb[0].mxu0 %v8169
      %v8746 = vpop.f32.mrb[0].mxu0
      %v8747 = vadd.f32 %v8262, %v8746
      %v8748 = vpop.f32.mrb[0].mxu0
      %v8749 = vpop.f32.mrb[0].mxu0
      %v8750 = vadd.f32 %v8262, %v8749
      %v8751 = vpop.f32.mrb[0].mxu0
      %8752 = vmatprep.mubr.bf16.mxu0 %v8172
      %8753 = vmatmul.mubr.bf16.gmra.mrb[0].mxu0 %v8171
      %v8754 = vpop.f32.mrb[0].mxu0
      %v8755 = vadd.f32 %v8262, %v8754
      %v8756 = vpop.f32.mrb[0].mxu0
      %v8757 = vpop.f32.mrb[0].mxu0
      %v8758 = vadd.f32 %v8262, %v8757
      %v8759 = vpop.f32.mrb[0].mxu0
      %8760 = vmatprep.mubr.bf16.mxu0 %v8174
      %8761 = vmatmul.mubr.bf16.gmra.mrb[0].mxu0 %v8173
      %v8762 = vpop.f32.mrb[0].mxu0
      %v8763 = vadd.f32 %v8262, %v8762
      %v8764 = vpop.f32.mrb[0].mxu0
      %v8765 = vpop.f32.mrb[0].mxu0
      %v8766 = vadd.f32 %v8262, %v8765
      %v8767 = vpop.f32.mrb[0].mxu0
      %8768 = vmatprep.mubr.bf16.mxu0 %v8176
      %8769 = vmatmul.mubr.bf16.gmra.mrb[0].mxu0 %v8175
      %v8770 = vpop.f32.mrb[0].mxu0
      %v8771 = vadd.f32 %v8262, %v8770
      %v8772 = vpop.f32.mrb[0].mxu0
      %v8773 = vpop.f32.mrb[0].mxu0
      %v8774 = vadd.f32 %v8262, %v8773
      %v8775 = vpop.f32.mrb[0].mxu0
      %8776 = vmatprep.mubr.bf16.mxu0 %v8178
      %8777 = vmatmul.mubr.bf16.gmra.mrb[0].mxu0 %v8177
      %v8778 = vpop.f32.mrb[0].mxu0
      %v8779 = vadd.f32 %v8262, %v8778
      %v8780 = vpop.f32.mrb[0].mxu0
      %v8781 = vpop.f32.mrb[0].mxu0
      %v8782 = vadd.f32 %v8262, %v8781
      %v8783 = vpop.f32.mrb[0].mxu0
      %8784 = vmatprep.mubr.bf16.mxu0 %v8180
      %8785 = vmatmul.mubr.bf16.gmra.mrb[0].mxu0 %v8179
      %v8786 = vpop.f32.mrb[0].mxu0
      %v8787 = vadd.f32 %v8262, %v8786
      %v8788 = vpop.f32.mrb[0].mxu0
      %v8789 = vpop.f32.mrb[0].mxu0
      %v8790 = vadd.f32 %v8262, %v8789
      %v8791 = vpop.f32.mrb[0].mxu0
      %8792 = vmatprep.mubr.bf16.mxu0 %v8182
      %8793 = vmatmul.mubr.bf16.gmra.mrb[0].mxu0 %v8181
      %v8794 = vpop.f32.mrb[0].mxu0
      %v8795 = vadd.f32 %v8262, %v8794
      %v8796 = vpop.f32.mrb[0].mxu0
      %v8797 = vpop.f32.mrb[0].mxu0
      %v8798 = vadd.f32 %v8262, %v8797
      %v8799 = vpop.f32.mrb[0].mxu0
      %8800 = vmatprep.mubr.bf16.mxu0 %v8184
      %8801 = vmatmul.mubr.bf16.gmra.mrb[0].mxu0 %v8183
      %v8802 = vpop.f32.mrb[0].mxu0
      %v8803 = vadd.f32 %v8262, %v8802
      %v8804 = vpop.f32.mrb[0].mxu0
      %v8805 = vpop.f32.mrb[0].mxu0
      %v8806 = vadd.f32 %v8262, %v8805
      %v8807 = vpop.f32.mrb[0].mxu0
      %8808 = vmatprep.mubr.bf16.mxu0 %v8186
      %8809 = vmatmul.mubr.bf16.gmra.mrb[0].mxu0 %v8185
      %v8810 = vpop.f32.mrb[0].mxu0
      %v8811 = vadd.f32 %v8262, %v8810
      %v8812 = vpop.f32.mrb[0].mxu0
      %v8813 = vpop.f32.mrb[0].mxu0
      %v8814 = vadd.f32 %v8262, %v8813
      %v8815 = vpop.f32.mrb[0].mxu0
      %8816 = vmatprep.mubr.bf16.mxu0 %v8188
      %8817 = vmatmul.mubr.bf16.gmra.mrb[0].mxu0 %v8187
      %v8818 = vpop.f32.mrb[0].mxu0
      %v8819 = vadd.f32 %v8262, %v8818
      %v8820 = vpop.f32.mrb[0].mxu0
      %v8821 = vpop.f32.mrb[0].mxu0
      %v8822 = vadd.f32 %v8262, %v8821
      %v8823 = vpop.f32.mrb[0].mxu0
      %8824 = vmatprep.mubr.bf16.mxu0 %v8190
      %8825 = vmatmul.mubr.bf16.gmra.mrb[0].mxu0 %v8189
      %v8826 = vpop.f32.mrb[0].mxu0
      %v8827 = vadd.f32 %v8262, %v8826
      %v8828 = vpop.f32.mrb[0].mxu0
      %v8829 = vpop.f32.mrb[0].mxu0
      %v8830 = vadd.f32 %v8262, %v8829
      %v8831 = vpop.f32.mrb[0].mxu0
      %8832 = vmatprep.mubr.bf16.mxu0 %v8192
      %8833 = vmatmul.mubr.bf16.gmra.mrb[0].mxu0 %v8191
      %v8834 = vpop.f32.mrb[0].mxu0
      %v8835 = vadd.f32 %v8262, %v8834
      %v8836 = vpop.f32.mrb[0].mxu0
      %v8837 = vpop.f32.mrb[0].mxu0
      %v8838 = vadd.f32 %v8262, %v8837
      %v8839 = vpop.f32.mrb[0].mxu0
      %8840 = vmatprep.mubr.bf16.mxu0 %v8194
      %8841 = vmatmul.mubr.bf16.gmra.mrb[0].mxu0 %v8193
      %v8842 = vpop.f32.mrb[0].mxu0
      %v8843 = vadd.f32 %v8262, %v8842
      %v8844 = vpop.f32.mrb[0].mxu0
      %v8845 = vpop.f32.mrb[0].mxu0
      %v8846 = vadd.f32 %v8262, %v8845
      %v8847 = vpop.f32.mrb[0].mxu0
      %8848 = vmatprep.mubr.bf16.mxu0 %v8196
      %8849 = vmatmul.mubr.bf16.gmra.mrb[0].mxu0 %v8195
      %v8850 = vpop.f32.mrb[0].mxu0
      %v8851 = vadd.f32 %v8262, %v8850
      %v8852 = vpop.f32.mrb[0].mxu0
      %v8853 = vpop.f32.mrb[0].mxu0
      %v8854 = vadd.f32 %v8262, %v8853
      %v8855 = vpop.f32.mrb[0].mxu0
      %8856 = vmatprep.mubr.bf16.mxu0 %v8198
      %8857 = vmatmul.mubr.bf16.gmra.mrb[0].mxu0 %v8197
      %v8858 = vpop.f32.mrb[0].mxu0
      %v8859 = vadd.f32 %v8262, %v8858
      %v8860 = vpop.f32.mrb[0].mxu0
      %v8861 = vpop.f32.mrb[0].mxu0
      %v8862 = vadd.f32 %v8262, %v8861
      %v8863 = vpop.f32.mrb[0].mxu0
      %8864 = vmatprep.mubr.bf16.mxu0 %v8200
      %8865 = vmatmul.mubr.bf16.gmra.mrb[0].mxu0 %v8199
      %v8866 = vpop.f32.mrb[0].mxu0
      %v8867 = vadd.f32 %v8262, %v8866
      %v8868 = vpop.f32.mrb[0].mxu0
      %v8869 = vpop.f32.mrb[0].mxu0
      %v8870 = vadd.f32 %v8262, %v8869
      %v8871 = vpop.f32.mrb[0].mxu0
      %8872 = vmatprep.mubr.bf16.mxu0 %v8202
      %8873 = vmatmul.mubr.bf16.gmra.mrb[0].mxu0 %v8201
      %v8874 = vpop.f32.mrb[0].mxu0
      %v8875 = vadd.f32 %v8262, %v8874
      %v8876 = vpop.f32.mrb[0].mxu0
      %v8877 = vpop.f32.mrb[0].mxu0
      %v8878 = vadd.f32 %v8262, %v8877
      %v8879 = vpop.f32.mrb[0].mxu0
      %8880 = vmatprep.mubr.bf16.mxu0 %v8204
      %8881 = vmatmul.mubr.bf16.gmra.mrb[0].mxu0 %v8203
      %v8882 = vpop.f32.mrb[0].mxu0
      %v8883 = vadd.f32 %v8262, %v8882
      %v8884 = vpop.f32.mrb[0].mxu0
      %v8885 = vpop.f32.mrb[0].mxu0
      %v8886 = vadd.f32 %v8262, %v8885
      %v8887 = vpop.f32.mrb[0].mxu0
      %8888 = vmatprep.mubr.bf16.mxu0 %v8206
      %8889 = vmatmul.mubr.bf16.gmra.mrb[0].mxu0 %v8205
      %v8890 = vpop.f32.mrb[0].mxu0
      %v8891 = vadd.f32 %v8262, %v8890
      %v8892 = vpop.f32.mrb[0].mxu0
      %v8893 = vpop.f32.mrb[0].mxu0
      %v8894 = vadd.f32 %v8262, %v8893
      %v8895 = vpop.f32.mrb[0].mxu0
      %8896 = vmatprep.mubr.bf16.mxu0 %v8208
      %8897 = vmatmul.mubr.bf16.gmra.mrb[0].mxu0 %v8207
      %v8898 = vpop.f32.mrb[0].mxu0
      %v8899 = vadd.f32 %v8262, %v8898
      %v8900 = vpop.f32.mrb[0].mxu0
      %v8901 = vpop.f32.mrb[0].mxu0
      %v8902 = vadd.f32 %v8262, %v8901
      %v8903 = vpop.f32.mrb[0].mxu0
      %8904 = vmatprep.mubr.bf16.mxu0 %v8210
      %8905 = vmatmul.mubr.bf16.gmra.mrb[0].mxu0 %v8209
      %v8906 = vpop.f32.mrb[0].mxu0
      %v8907 = vadd.f32 %v8262, %v8906
      %v8908 = vpop.f32.mrb[0].mxu0
      %v8909 = vpop.f32.mrb[0].mxu0
      %v8910 = vadd.f32 %v8262, %v8909
      %v8911 = vpop.f32.mrb[0].mxu0
      %8912 = vmatprep.mubr.bf16.mxu0 %v8212
      %8913 = vmatmul.mubr.bf16.gmra.mrb[0].mxu0 %v8211
      %v8914 = vpop.f32.mrb[0].mxu0
      %v8915 = vadd.f32 %v8262, %v8914
      %v8916 = vpop.f32.mrb[0].mxu0
      %v8917 = vpop.f32.mrb[0].mxu0
      %v8918 = vadd.f32 %v8262, %v8917
      %v8919 = vpop.f32.mrb[0].mxu0
      %8920 = vmatprep.mubr.bf16.mxu0 %v8214
      %8921 = vmatmul.mubr.bf16.gmra.mrb[0].mxu0 %v8213
      %v8922 = vpop.f32.mrb[0].mxu0
      %v8923 = vadd.f32 %v8262, %v8922
      %v8924 = vpop.f32.mrb[0].mxu0
      %v8925 = vpop.f32.mrb[0].mxu0
      %v8926 = vadd.f32 %v8262, %v8925
      %v8927 = vpop.f32.mrb[0].mxu0
      %8928 = vmatprep.mubr.bf16.mxu0 %v8216
      %8929 = vmatmul.mubr.bf16.gmra.mrb[0].mxu0 %v8215
      %v8930 = vpop.f32.mrb[0].mxu0
      %v8931 = vadd.f32 %v8262, %v8930
      %v8932 = vpop.f32.mrb[0].mxu0
      %v8933 = vpop.f32.mrb[0].mxu0
      %v8934 = vadd.f32 %v8262, %v8933
      %v8935 = vpop.f32.mrb[0].mxu0
      %8936 = vmatprep.mubr.bf16.mxu0 %v8218
      %8937 = vmatmul.mubr.bf16.gmra.mrb[0].mxu0 %v8217
      %v8938 = vpop.f32.mrb[0].mxu0
      %v8939 = vadd.f32 %v8262, %v8938
      %v8940 = vpop.f32.mrb[0].mxu0
      %v8941 = vpop.f32.mrb[0].mxu0
      %v8942 = vadd.f32 %v8262, %v8941
      %v8943 = vpop.f32.mrb[0].mxu0
      %8944 = vmatprep.mubr.bf16.mxu0 %v8220
      %8945 = vmatmul.mubr.bf16.gmra.mrb[0].mxu0 %v8219
      %v8946 = vpop.f32.mrb[0].mxu0
      %v8947 = vadd.f32 %v8262, %v8946
      %v8948 = vpop.f32.mrb[0].mxu0
      %v8949 = vpop.f32.mrb[0].mxu0
      %v8950 = vadd.f32 %v8262, %v8949
      %v8951 = vpop.f32.mrb[0].mxu0
      %8952 = vmatprep.mubr.bf16.mxu0 %v8222
      %8953 = vmatmul.mubr.bf16.gmra.mrb[0].mxu0 %v8221
      %v8954 = vpop.f32.mrb[0].mxu0
      %v8955 = vadd.f32 %v8262, %v8954
      %v8956 = vpop.f32.mrb[0].mxu0
      %v8957 = vpop.f32.mrb[0].mxu0
      %v8958 = vadd.f32 %v8262, %v8957
      %v8959 = vpop.f32.mrb[0].mxu0
      %8960 = vmatprep.mubr.bf16.mxu0 %v8224
      %8961 = vmatmul.mubr.bf16.gmra.mrb[0].mxu0 %v8223
      %v8962 = vpop.f32.mrb[0].mxu0
      %v8963 = vadd.f32 %v8262, %v8962
      %v8964 = vpop.f32.mrb[0].mxu0
      %v8965 = vpop.f32.mrb[0].mxu0
      %v8966 = vadd.f32 %v8262, %v8965
      %v8967 = vpop.f32.mrb[0].mxu0
      %8968 = vdwg.mxu0
      %vm8969 = vcmask 261120
      %8970 = vst.msk [vmem:[%s307] sm:$0xff] %vm8969, %v8395
      %8971 = vst.msk [vmem:[%s307 + $0x8] sm:$0xff] %vm8969, %v8398
      %8972 = vst.msk [vmem:[%s307 + $0x10] sm:$0xff] %vm8969, %v8403
      %8973 = vst.msk [vmem:[%s307 + $0x18] sm:$0xff] %vm8969, %v8406
      %8974 = vst.msk [vmem:[%s307 + $0x20] sm:$0xff] %vm8969, %v8411
      %8975 = vst.msk [vmem:[%s307 + $0x28] sm:$0xff] %vm8969, %v8414
      %8976 = vst.msk [vmem:[%s307 + $0x30] sm:$0xff] %vm8969, %v8419
      %8977 = vst.msk [vmem:[%s307 + $0x38] sm:$0xff] %vm8969, %v8422
      %8978 = vst.msk [vmem:[%s307 + $0x40] sm:$0xff] %vm8969, %v8427
      %8979 = vst.msk [vmem:[%s307 + $0x48] sm:$0xff] %vm8969, %v8430
      %8980 = vst.msk [vmem:[%s307 + $0x50] sm:$0xff] %vm8969, %v8435
      %8981 = vst.msk [vmem:[%s307 + $0x58] sm:$0xff] %vm8969, %v8438
      %8982 = vst.msk [vmem:[%s307 + $0x60] sm:$0xff] %vm8969, %v8443
      %8983 = vst.msk [vmem:[%s307 + $0x68] sm:$0xff] %vm8969, %v8446
      %8984 = vst.msk [vmem:[%s307 + $0x70] sm:$0xff] %vm8969, %v8451
      %8985 = vst.msk [vmem:[%s307 + $0x78] sm:$0xff] %vm8969, %v8454
      %8986 = vst.msk [vmem:[%s307 + $0x80] sm:$0xff] %vm8969, %v8459
      %8987 = vst.msk [vmem:[%s307 + $0x88] sm:$0xff] %vm8969, %v8462
      %8988 = vst.msk [vmem:[%s307 + $0x90] sm:$0xff] %vm8969, %v8467
      %8989 = vst.msk [vmem:[%s307 + $0x98] sm:$0xff] %vm8969, %v8470
      %8990 = vst.msk [vmem:[%s307 + $0xa0] sm:$0xff] %vm8969, %v8475
      %8991 = vst.msk [vmem:[%s307 + $0xa8] sm:$0xff] %vm8969, %v8478
      %8992 = vst.msk [vmem:[%s307 + $0xb0] sm:$0xff] %vm8969, %v8483
      %8993 = vst.msk [vmem:[%s307 + $0xb8] sm:$0xff] %vm8969, %v8486
      %8994 = vst.msk [vmem:[%s307 + $0xc0] sm:$0xff] %vm8969, %v8491
      %8995 = vst.msk [vmem:[%s307 + $0xc8] sm:$0xff] %vm8969, %v8494
      %8996 = vst.msk [vmem:[%s307 + $0xd0] sm:$0xff] %vm8969, %v8499
      %8997 = vst.msk [vmem:[%s307 + $0xd8] sm:$0xff] %vm8969, %v8502
      %8998 = vst.msk [vmem:[%s307 + $0xe0] sm:$0xff] %vm8969, %v8507
      %8999 = vst.msk [vmem:[%s307 + $0xe8] sm:$0xff] %vm8969, %v8510
      %9000 = vst.msk [vmem:[%s307 + $0xf0] sm:$0xff] %vm8969, %v8515
      %9001 = vst.msk [vmem:[%s307 + $0xf8] sm:$0xff] %vm8969, %v8518
      %9002 = vst.msk [vmem:[%s307 + $0x100] sm:$0xff] %vm8969, %v8523
      %9003 = vst.msk [vmem:[%s307 + $0x108] sm:$0xff] %vm8969, %v8526
      %9004 = vst.msk [vmem:[%s307 + $0x110] sm:$0xff] %vm8969, %v8531
      %9005 = vst.msk [vmem:[%s307 + $0x118] sm:$0xff] %vm8969, %v8534
      %9006 = vst.msk [vmem:[%s307 + $0x120] sm:$0xff] %vm8969, %v8539
      %9007 = vst.msk [vmem:[%s307 + $0x128] sm:$0xff] %vm8969, %v8542
      %9008 = vst.msk [vmem:[%s307 + $0x130] sm:$0xff] %vm8969, %v8547
      %9009 = vst.msk [vmem:[%s307 + $0x138] sm:$0xff] %vm8969, %v8550
      %9010 = vst.msk [vmem:[%s307 + $0x140] sm:$0xff] %vm8969, %v8555
      %9011 = vst.msk [vmem:[%s307 + $0x148] sm:$0xff] %vm8969, %v8558
      %9012 = vst.msk [vmem:[%s307 + $0x150] sm:$0xff] %vm8969, %v8563
      %9013 = vst.msk [vmem:[%s307 + $0x158] sm:$0xff] %vm8969, %v8566
      %9014 = vst.msk [vmem:[%s307 + $0x160] sm:$0xff] %vm8969, %v8571
      %9015 = vst.msk [vmem:[%s307 + $0x168] sm:$0xff] %vm8969, %v8574
      %9016 = vst.msk [vmem:[%s307 + $0x170] sm:$0xff] %vm8969, %v8579
      %9017 = vst.msk [vmem:[%s307 + $0x178] sm:$0xff] %vm8969, %v8582
      %9018 = vst.msk [vmem:[%s307 + $0x180] sm:$0xff] %vm8969, %v8587
      %9019 = vst.msk [vmem:[%s307 + $0x188] sm:$0xff] %vm8969, %v8590
      %9020 = vst.msk [vmem:[%s307 + $0x190] sm:$0xff] %vm8969, %v8595
      %9021 = vst.msk [vmem:[%s307 + $0x198] sm:$0xff] %vm8969, %v8598
      %9022 = vst.msk [vmem:[%s307 + $0x1a0] sm:$0xff] %vm8969, %v8603
      %9023 = vst.msk [vmem:[%s307 + $0x1a8] sm:$0xff] %vm8969, %v8606
      %9024 = vst.msk [vmem:[%s307 + $0x1b0] sm:$0xff] %vm8969, %v8611
      %9025 = vst.msk [vmem:[%s307 + $0x1b8] sm:$0xff] %vm8969, %v8614
      %9026 = vst.msk [vmem:[%s307 + $0x1c0] sm:$0xff] %vm8969, %v8619
      %9027 = vst.msk [vmem:[%s307 + $0x1c8] sm:$0xff] %vm8969, %v8622
      %9028 = vst.msk [vmem:[%s307 + $0x1d0] sm:$0xff] %vm8969, %v8627
      %9029 = vst.msk [vmem:[%s307 + $0x1d8] sm:$0xff] %vm8969, %v8630
      %9030 = vst.msk [vmem:[%s307 + $0x1e0] sm:$0xff] %vm8969, %v8635
      %9031 = vst.msk [vmem:[%s307 + $0x1e8] sm:$0xff] %vm8969, %v8638
      %9032 = vst.msk [vmem:[%s307 + $0x1f0] sm:$0xff] %vm8969, %v8643
      %9033 = vst.msk [vmem:[%s307 + $0x1f8] sm:$0xff] %vm8969, %v8646
      %9034 = vst.msk [vmem:[%s307 + $0x200] sm:$0xff] %vm8969, %v8651
      %9035 = vst.msk [vmem:[%s307 + $0x208] sm:$0xff] %vm8969, %v8654
      %9036 = vst.msk [vmem:[%s307 + $0x210] sm:$0xff] %vm8969, %v8659
      %9037 = vst.msk [vmem:[%s307 + $0x218] sm:$0xff] %vm8969, %v8662
      %9038 = vst.msk [vmem:[%s307 + $0x220] sm:$0xff] %vm8969, %v8667
      %9039 = vst.msk [vmem:[%s307 + $0x228] sm:$0xff] %vm8969, %v8670
      %9040 = vst.msk [vmem:[%s307 + $0x230] sm:$0xff] %vm8969, %v8675
      %9041 = vst.msk [vmem:[%s307 + $0x238] sm:$0xff] %vm8969, %v8678
      %9042 = vst.msk [vmem:[%s307 + $0x240] sm:$0xff] %vm8969, %v8683
      %9043 = vst.msk [vmem:[%s307 + $0x248] sm:$0xff] %vm8969, %v8686
      %9044 = vst.msk [vmem:[%s307 + $0x250] sm:$0xff] %vm8969, %v8691
      %9045 = vst.msk [vmem:[%s307 + $0x258] sm:$0xff] %vm8969, %v8694
      %9046 = vst.msk [vmem:[%s307 + $0x260] sm:$0xff] %vm8969, %v8699
      %9047 = vst.msk [vmem:[%s307 + $0x268] sm:$0xff] %vm8969, %v8702
      %9048 = vst.msk [vmem:[%s307 + $0x270] sm:$0xff] %vm8969, %v8707
      %9049 = vst.msk [vmem:[%s307 + $0x278] sm:$0xff] %vm8969, %v8710
      %9050 = vst.msk [vmem:[%s307 + $0x280] sm:$0xff] %vm8969, %v8715
      %9051 = vst.msk [vmem:[%s307 + $0x288] sm:$0xff] %vm8969, %v8718
      %9052 = vst.msk [vmem:[%s307 + $0x290] sm:$0xff] %vm8969, %v8723
      %9053 = vst.msk [vmem:[%s307 + $0x298] sm:$0xff] %vm8969, %v8726
      %9054 = vst.msk [vmem:[%s307 + $0x2a0] sm:$0xff] %vm8969, %v8731
      %9055 = vst.msk [vmem:[%s307 + $0x2a8] sm:$0xff] %vm8969, %v8734
      %9056 = vst.msk [vmem:[%s307 + $0x2b0] sm:$0xff] %vm8969, %v8739
      %9057 = vst.msk [vmem:[%s307 + $0x2b8] sm:$0xff] %vm8969, %v8742
      %9058 = vst.msk [vmem:[%s307 + $0x2c0] sm:$0xff] %vm8969, %v8747
      %9059 = vst.msk [vmem:[%s307 + $0x2c8] sm:$0xff] %vm8969, %v8750
      %9060 = vst.msk [vmem:[%s307 + $0x2d0] sm:$0xff] %vm8969, %v8755
      %9061 = vst.msk [vmem:[%s307 + $0x2d8] sm:$0xff] %vm8969, %v8758
      %9062 = vst.msk [vmem:[%s307 + $0x2e0] sm:$0xff] %vm8969, %v8763
      %9063 = vst.msk [vmem:[%s307 + $0x2e8] sm:$0xff] %vm8969, %v8766
      %9064 = vst.msk [vmem:[%s307 + $0x2f0] sm:$0xff] %vm8969, %v8771
      %9065 = vst.msk [vmem:[%s307 + $0x2f8] sm:$0xff] %vm8969, %v8774
      %9066 = vst.msk [vmem:[%s307 + $0x300] sm:$0xff] %vm8969, %v8779
      %9067 = vst.msk [vmem:[%s307 + $0x308] sm:$0xff] %vm8969, %v8782
      %9068 = vst.msk [vmem:[%s307 + $0x310] sm:$0xff] %vm8969, %v8787
      %9069 = vst.msk [vmem:[%s307 + $0x318] sm:$0xff] %vm8969, %v8790
      %9070 = vst.msk [vmem:[%s307 + $0x320] sm:$0xff] %vm8969, %v8795
      %9071 = vst.msk [vmem:[%s307 + $0x328] sm:$0xff] %vm8969, %v8798
      %9072 = vst.msk [vmem:[%s307 + $0x330] sm:$0xff] %vm8969, %v8803
      %9073 = vst.msk [vmem:[%s307 + $0x338] sm:$0xff] %vm8969, %v8806
      %9074 = vst.msk [vmem:[%s307 + $0x340] sm:$0xff] %vm8969, %v8811
      %9075 = vst.msk [vmem:[%s307 + $0x348] sm:$0xff] %vm8969, %v8814
      %9076 = vst.msk [vmem:[%s307 + $0x350] sm:$0xff] %vm8969, %v8819
      %9077 = vst.msk [vmem:[%s307 + $0x358] sm:$0xff] %vm8969, %v8822
      %9078 = vst.msk [vmem:[%s307 + $0x360] sm:$0xff] %vm8969, %v8827
      %9079 = vst.msk [vmem:[%s307 + $0x368] sm:$0xff] %vm8969, %v8830
      %9080 = vst.msk [vmem:[%s307 + $0x370] sm:$0xff] %vm8969, %v8835
      %9081 = vst.msk [vmem:[%s307 + $0x378] sm:$0xff] %vm8969, %v8838
      %9082 = vst.msk [vmem:[%s307 + $0x380] sm:$0xff] %vm8969, %v8843
      %9083 = vst.msk [vmem:[%s307 + $0x388] sm:$0xff] %vm8969, %v8846
      %9084 = vst.msk [vmem:[%s307 + $0x390] sm:$0xff] %vm8969, %v8851
      %9085 = vst.msk [vmem:[%s307 + $0x398] sm:$0xff] %vm8969, %v8854
      %9086 = vst.msk [vmem:[%s307 + $0x3a0] sm:$0xff] %vm8969, %v8859
      %9087 = vst.msk [vmem:[%s307 + $0x3a8] sm:$0xff] %vm8969, %v8862
      %9088 = vst.msk [vmem:[%s307 + $0x3b0] sm:$0xff] %vm8969, %v8867
      %9089 = vst.msk [vmem:[%s307 + $0x3b8] sm:$0xff] %vm8969, %v8870
      %9090 = vst.msk [vmem:[%s307 + $0x3c0] sm:$0xff] %vm8969, %v8875
      %9091 = vst.msk [vmem:[%s307 + $0x3c8] sm:$0xff] %vm8969, %v8878
      %9092 = vst.msk [vmem:[%s307 + $0x3d0] sm:$0xff] %vm8969, %v8883
      %9093 = vst.msk [vmem:[%s307 + $0x3d8] sm:$0xff] %vm8969, %v8886
      %9094 = vst.msk [vmem:[%s307 + $0x3e0] sm:$0xff] %vm8969, %v8891
      %9095 = vst.msk [vmem:[%s307 + $0x3e8] sm:$0xff] %vm8969, %v8894
      %9096 = vst.msk [vmem:[%s307 + $0x3f0] sm:$0xff] %vm8969, %v8899
      %9097 = vst.msk [vmem:[%s307 + $0x3f8] sm:$0xff] %vm8969, %v8902
      %9098 = vst.msk [vmem:[%s307 + $0x400] sm:$0xff] %vm8969, %v8907
      %9099 = vst.msk [vmem:[%s307 + $0x408] sm:$0xff] %vm8969, %v8910
      %9100 = vst.msk [vmem:[%s307 + $0x410] sm:$0xff] %vm8969, %v8915
      %9101 = vst.msk [vmem:[%s307 + $0x418] sm:$0xff] %vm8969, %v8918
      %9102 = vst.msk [vmem:[%s307 + $0x420] sm:$0xff] %vm8969, %v8923
      %9103 = vst.msk [vmem:[%s307 + $0x428] sm:$0xff] %vm8969, %v8926
      %9104 = vst.msk [vmem:[%s307 + $0x430] sm:$0xff] %vm8969, %v8931
      %9105 = vst.msk [vmem:[%s307 + $0x438] sm:$0xff] %vm8969, %v8934
      %9106 = vst.msk [vmem:[%s307 + $0x440] sm:$0xff] %vm8969, %v8939
      %9107 = vst.msk [vmem:[%s307 + $0x448] sm:$0xff] %vm8969, %v8942
      %9108 = vst.msk [vmem:[%s307 + $0x450] sm:$0xff] %vm8969, %v8947
      %9109 = vst.msk [vmem:[%s307 + $0x458] sm:$0xff] %vm8969, %v8950
      %9110 = vst.msk [vmem:[%s307 + $0x460] sm:$0xff] %vm8969, %v8955
      %9111 = vst.msk [vmem:[%s307 + $0x468] sm:$0xff] %vm8969, %v8958
      %9112 = vst.msk [vmem:[%s307 + $0x470] sm:$0xff] %vm8969, %v8963
      %9113 = vst.msk [vmem:[%s307 + $0x478] sm:$0xff] %vm8969, %v8966
      %s9114 = smul.u32 144, %s19
      %p9115 = scmp.lt.s32.totalorder %s9114, 287
      %s9116 = scalar_select %p9115, %s9114, 287
      %s9117 = smul.addr %s9116, 8
      %s9118 = scalar_lea.vmem %s8, %s9117
      // Predicated region
      $region53: #{tpu_custom_call.1} parent=51 // pred_check
        %p9119 = pneg %p210
      $region54: #{tpu_custom_call.1} parent=51 // pred_check_branch
        %9121 = sbr.rel (%p9119) target = $region56
      $region55: #{tpu_custom_call.1} parent=51 // pred_region
        %s9122 = smul.u32 144, %s19
      $region56: #{tpu_custom_call.1} parent=51 // pred_fallthru
        _
    $region52: #{tpu_custom_call.1} parent=5 // pred_fallthru
      _
    %p9123 = scmp.le.s32.totalorder 2, %s14
    // Predicated region
    $region57: #{tpu_custom_call.1} parent=5 // pred_check
      %p9124 = pneg %p9123
    $region58: #{tpu_custom_call.1} parent=5 // pred_check_branch
      %9126 = sbr.rel (%p9124) target = $region60
    $region59: #{tpu_custom_call.1} parent=5 // pred_region
      %s9127 = ssub.s32 %s14, 2
      // Predicated region
      $region61: #{tpu_custom_call.1} parent=59 // pred_check
        %p9128 = pneg %p216
      $region62: #{tpu_custom_call.1} parent=59 // pred_check_branch
        %9130 = sbr.rel (%p9128) target = $region64
      $region63: #{tpu_custom_call.1} parent=59 // pred_region
        %s9131 = smul.u32 144, %s20
        %p9132 = scmp.lt.s32.totalorder %s9131, 287
        %s9133 = scalar_select %p9132, %s9131, 287
        %s9134 = smul.addr %s9133, 8
        %s9135 = scalar_lea.vmem %s8, %s9134
      $region64: #{tpu_custom_call.1} parent=59 // pred_fallthru
        _
    $region60: #{tpu_custom_call.1} parent=5 // pred_fallthru
      _
  $region6: #{tpu_custom_call.1} parent=0 // loop_footer
    %s18 = sadd.s32 1, %s14
  $region7: #{tpu_custom_call.1} parent=0 // loop_footer_branch
    %13 = sbr.rel target = $region3
  $region8: #{tpu_custom_call.1} parent=0 // loop_exit
    _

</llo_original>
